<compile_context>
chip_gen: v5e
topology: v5e:2x2
jax: 0.10.0
libtpu: 0.0.40
codegen_flags: <defaults>
</compile_context>

<pallas_src>
import functools

import jax
import jax.numpy as jnp
from jax.experimental import pallas as pl
from jax.experimental.pallas import tpu as pltpu


def _layer_norm(y, gamma, beta, eps=1e-5):
    mu = jnp.mean(y, axis=-1, keepdims=True)
    var = jnp.mean((y - mu) ** 2, axis=-1, keepdims=True)
    return (y - mu) * jax.lax.rsqrt(var + eps) * gamma + beta


def _emo_decoder_kernel(
    tgt_ref, mem_ref,
    wq_ref, wkv_ref, wo_ref, w1_ref, w2_ref, par_ref,
    out_ref,
    heads_ref,                      # VMEM scratch: (Bt*T, E), input dtype
    *, nhead: int,
):
    Bt, T, E = tgt_ref.shape
    S = mem_ref.shape[1]
    dff = w1_ref.shape[1]
    dh = E // nhead
    dtype = tgt_ref.dtype

    # Flatten batch*tokens into the matmul M dimension (per-token ops).
    xf = tgt_ref[...].reshape(Bt * T, E)          # native dtype (bf16-ready)
    mf = mem_ref[...].reshape(Bt * S, E)

    # Packed small params: rows = g2, be2, g3, be3, bq_s, bk, bv, bo, b2, b1.
    g2, be2 = par_ref[0:1, :E], par_ref[1:2, :E]
    g3, be3 = par_ref[2:3, :E], par_ref[3:4, :E]
    bq = par_ref[4:5, :E]
    bk, bv = par_ref[5:6, :E], par_ref[6:7, :E]
    bo = par_ref[7:8, :E]
    b2 = par_ref[8:9, :E]
    b1 = par_ref[9:10, :dff]

    # --- projections (MXU, f32 accumulation); scale folded into wq/bq.
    #     Cast back to the input dtype so the attention matmuls take the fast
    #     MXU path and q/k/v don't live as f32 (halves vreg/VMEM pressure). ---
    q = (jnp.dot(xf, wq_ref[...], preferred_element_type=jnp.float32)
         + bq).astype(dtype)
    kv = jnp.dot(mf, wkv_ref[...], preferred_element_type=jnp.float32)
    k = (kv[:, :E] + bk).astype(dtype)            # lane-tile-aligned split (E % 128 == 0)
    v = (kv[:, E:] + bv).astype(dtype)

    q3 = q.reshape(Bt, T, E)
    k3 = k.reshape(Bt, S, E)
    v3 = v.reshape(Bt, S, E)

    # --- multihead cross-attention: static head loop, Bt-batched matmuls.
    #     Each head writes its output slice into the VMEM slab; the output
    #     projection is a single K=E matmul afterwards. ---
    for h in range(nhead):
        lo = h * dh
        qh = q3[:, :, lo:lo + dh]                                  # (Bt, T, dh)
        kh = k3[:, :, lo:lo + dh]                                  # (Bt, S, dh)
        vh = v3[:, :, lo:lo + dh]                                  # (Bt, S, dh)
        s = jnp.einsum("btd,bsd->bts", qh, kh,
                       preferred_element_type=jnp.float32)         # (Bt, T, S)
        s = s - jnp.max(s, axis=-1, keepdims=True)
        p = jnp.exp(s)
        p = p * pl.reciprocal(jnp.sum(p, axis=-1, keepdims=True), approx=True)
        oh = jnp.einsum("bts,bsd->btd", p.astype(dtype), vh,
                        preferred_element_type=jnp.float32)         # (Bt, T, dh)
        heads_ref[:, lo:lo + dh] = oh.reshape(Bt * T, dh).astype(heads_ref.dtype)

    attn = jnp.dot(heads_ref[...], wo_ref[...],
                   preferred_element_type=jnp.float32) + bo          # (Bt*T, E)

    # --- residual + norm2 (dropout2 == identity) ---
    y = _layer_norm(xf.astype(jnp.float32) + attn, g2, be2)

    # --- FFN: linear2(relu(linear1(y))) (dropout == identity) ---
    ff = jnp.dot(y.astype(w1_ref.dtype), w1_ref[...],
                 preferred_element_type=jnp.float32) + b1
    ff = jnp.maximum(ff, 0.0)
    ff = jnp.dot(ff.astype(w2_ref.dtype), w2_ref[...],
                 preferred_element_type=jnp.float32) + b2

    # --- residual + norm3 (dropout3 == identity) ---
    out = _layer_norm(y + ff, g3, be3)
    out_ref[...] = out.reshape(Bt, T, E).astype(out_ref.dtype)


def _vmem_budget_bytes(frac=0.75, fallback=48 * 1024 * 1024):
    """~48 MiB on v7x (64 MiB/TC), ~96 MiB on v5e/v6e (128 MiB)."""
    try:
        cap = pltpu.get_tpu_info().vmem_capacity_bytes
        return max(32 * 1024 * 1024, min(int(cap * frac), 96 * 1024 * 1024))
    except Exception:
        return fallback


def _step_vmem_bytes(Bt, T, S, E, dff, itemsize):
    """Rough per-grid-step VMEM footprint estimate."""
    rows_t, rows_s = Bt * T, Bt * S
    io = itemsize * 2 * (rows_t * E + rows_s * E + rows_t * E)      # dbl-buffered tgt/mem/out
    weights = itemsize * (E * E + E * 2 * E + E * E + E * dff + dff * E)
    interm = 4 * (3 * rows_t * E + 2 * rows_s * E + rows_t * dff + Bt * T * S)
    scratch = itemsize * rows_t * E
    return io + weights + interm + scratch


def _pick_batch_block(B, T, S, E, dff, itemsize, *,
                      target_rows=512, num_cores=1, vmem_budget=None):
    """Largest divisor of B with <= target_rows flattened rows that fits the VMEM
    budget; keeps >= num_cores grid steps (pass num_cores=2 on v7x's 2 TCs)."""
    budget = vmem_budget if vmem_budget is not None else _vmem_budget_bytes()
    cap = max(1, min(B, max(1, target_rows // max(T, 1))))
    if num_cores > 1 and B >= num_cores:
        cap = min(cap, max(1, B // num_cores))
    bt = 1
    for cand in range(1, cap + 1):
        if B % cand == 0 and _step_vmem_bytes(cand, T, S, E, dff, itemsize) <= budget:
            bt = cand
    return bt


def prepare_params(params, nhead):
    """Offline param transform: fold attention scale into wq/bq, fuse K/V weights,
    pack all (1, E)/(1, dff) biases + layernorm params into one (10, P) tensor."""
    E = params["wq_t"].shape[0]
    dff = params["w1_t"].shape[1]
    dh = E // nhead
    scale = 1.0 / (dh ** 0.5)
    P = max(E, dff)

    def row(v):
        return jnp.pad(v, ((0, 0), (0, P - v.shape[1])))

    par = jnp.concatenate([
        row(params["g2"]), row(params["be2"]),
        row(params["g3"]), row(params["be3"]),
        row(params["bq"] * scale),
        row(params["bk"]), row(params["bv"]),
        row(params["bo"]), row(params["b2"]),
        row(params["b1"]),
    ], axis=0)                                                       # (10, P)

    return {
        "wq_s": params["wq_t"] * scale,
        "wkv": jnp.concatenate([params["wk_t"], params["wv_t"]], axis=1),  # (E, 2E)
        "wo": params["wo_t"],
        "w1": params["w1_t"],
        "w2": params["w2_t"],
        "par": par,
    }


def emo_decoder_layer(tgt, memory, prepped, nhead, *, batch_block=None, num_cores=1):
    """tgt: (B, T, E), memory: (B, S, E) -> (B, T, E)."""
    B, T, E = tgt.shape
    S = memory.shape[1]
    dff = prepped["w1"].shape[1]
    vmem_budget = _vmem_budget_bytes()
    if batch_block is not None:
        Bt = batch_block
    else:
        Bt = _pick_batch_block(B, T, S, E, dff, tgt.dtype.itemsize,
                               num_cores=num_cores, vmem_budget=vmem_budget)
    assert B % Bt == 0, "batch_block must divide B"
    grid = (B // Bt,)

    weight_args = (prepped["wq_s"], prepped["wkv"], prepped["wo"],
                   prepped["w1"], prepped["w2"], prepped["par"])

    kernel = functools.partial(_emo_decoder_kernel, nhead=nhead)
    out_shape = jax.ShapeDtypeStruct((B, T, E), tgt.dtype)

    def build(weight_pipeline_mode):
        def wspec(arr):
            # whole-array block, constant index across the batch grid
            if weight_pipeline_mode is None:
                return pl.BlockSpec(arr.shape, lambda b: (0, 0))
            return pl.BlockSpec(arr.shape, lambda b: (0, 0),
                                pipeline_mode=weight_pipeline_mode)

        return pl.pallas_call(
            kernel,
            out_shape=out_shape,
            grid_spec=pltpu.PrefetchScalarGridSpec(
                num_scalar_prefetch=0,
                grid=grid,
                in_specs=[
                    pl.BlockSpec((Bt, T, E), lambda b: (b, 0, 0)),   # tgt block
                    pl.BlockSpec((Bt, S, E), lambda b: (b, 0, 0)),   # memory block
                ] + [wspec(w) for w in weight_args],
                out_specs=pl.BlockSpec((Bt, T, E), lambda b: (b, 0, 0)),
                scratch_shapes=[pltpu.VMEM((Bt * T, E), tgt.dtype)],  # head-output slab
            ),
            compiler_params=pltpu.CompilerParams(
                dimension_semantics=("parallel",),
                vmem_limit_bytes=vmem_budget,
            ),
        )

    try:
        # Single-buffer the constant-index weight/bias blocks (saves VMEM on v7x).
        return build(pl.Buffered(1))(tgt, memory, *weight_args)
    except Exception:
        # TODO(synk): pl.Buffered(1) single-buffering rejected on this jax
        # version; fall back to default (double-buffered) weight blocks.
        return build(None)(tgt, memory, *weight_args)


def _reference(tgt, memory, params, nhead):
    """Pure-JAX reference mirroring PyTorch semantics (eval mode)."""
    B, T, E = tgt.shape
    dh = E // nhead
    scale = 1.0 / (dh ** 0.5)

    q = tgt @ params["wq_t"] + params["bq"]
    k = memory @ params["wk_t"] + params["bk"]
    v = memory @ params["wv_t"] + params["bv"]

    def split(a):  # (B, L, E) -> (B, H, L, dh)
        return a.reshape(B, a.shape[1], nhead, dh).transpose(0, 2, 1, 3)

    qh, kh, vh = split(q) * scale, split(k), split(v)
    s = jnp.einsum("bhtd,bhsd->bhts", qh, kh)
    p = jax.nn.softmax(s, axis=-1)
    o = jnp.einsum("bhts,bhsd->bhtd", p, vh).transpose(0, 2, 1, 3).reshape(B, T, E)
    attn = o @ params["wo_t"] + params["bo"]

    def ln(y, g, b):
        mu = jnp.mean(y, -1, keepdims=True)
        var = jnp.mean((y - mu) ** 2, -1, keepdims=True)
        return (y - mu) / jnp.sqrt(var + 1e-5) * g + b

    y = ln(tgt + attn, params["g2"], params["be2"])
    ff = jnp.maximum(y @ params["w1_t"] + params["b1"], 0.0) @ params["w2_t"] + params["b2"]
    return ln(y + ff, params["g3"], params["be3"])


if __name__ == "__main__":
    # E is a multiple of 128 so the kv split is tile-aligned and output stores
    # are lane-dense (unmasked vst).
    d_model, nhead, dim_feedforward = 128, 4, 256
    B, T, S = 8, 16, 16

    key = jax.random.PRNGKey(0)
    ks = jax.random.split(key, 16)

    def init(k, shape, fan_in):
        return (jax.random.normal(k, shape, jnp.float32) / jnp.sqrt(fan_in)).astype(jnp.float32)

    # All linear weights stored pre-transposed as (in, out) so the kernel does x @ W.
    params = {
        "wq_t": init(ks[0], (d_model, d_model), d_model),
        "wk_t": init(ks[1], (d_model, d_model), d_model),
        "wv_t": init(ks[2], (d_model, d_model), d_model),
        "wo_t": init(ks[3], (d_model, d_model), d_model),
        "bq": init(ks[4], (1, d_model), d_model),
        "bk": init(ks[5], (1, d_model), d_model),
        "bv": init(ks[6], (1, d_model), d_model),
        "bo": init(ks[7], (1, d_model), d_model),
        "w1_t": init(ks[8], (d_model, dim_feedforward), d_model),
        "b1": init(ks[9], (1, dim_feedforward), d_model),
        "w2_t": init(ks[10], (dim_feedforward, d_model), dim_feedforward),
        "b2": init(ks[11], (1, d_model), dim_feedforward),
        "g2": jnp.ones((1, d_model), jnp.float32),
        "be2": jnp.zeros((1, d_model), jnp.float32),
        "g3": jnp.ones((1, d_model), jnp.float32),
        "be3": jnp.zeros((1, d_model), jnp.float32),
    }

    tgt = jax.random.normal(ks[12], (B, T, d_model), jnp.float32)
    memory = jax.random.normal(ks[13], (B, S, d_model), jnp.float32)

    prepped = prepare_params(params, nhead)
    ref = _reference(tgt, memory, params, nhead)

    # 1) default (heuristic) batch block — typically a single big grid step here.
    out = jax.block_until_ready(emo_decoder_layer(tgt, memory, prepped, nhead))
    assert out.shape == (B, T, d_model)
    # tolerance accounts for the approximate (EUP) softmax reciprocal
    assert jnp.allclose(out, ref, rtol=5e-3, atol=5e-3), "mismatch vs reference (default block)"

    # 2) explicit smaller batch block — exercises the multi-step grid / scratch reuse.
    out2 = jax.block_until_ready(emo_decoder_layer(tgt, memory, prepped, nhead, batch_block=2))
    assert jnp.allclose(out2, ref, rtol=5e-3, atol=5e-3), "mismatch vs reference (Bt=2)"

    print("KERNEL_OK")
</pallas_src>

<mosaic_0001>
module attributes {stable_mosaic.version = 11 : i64} {
  func.func @_emo_decoder_kernel(%arg0: i32, %arg1: memref<8x16x128xf32, #tpu.memory_space<vmem>>, %arg2: memref<8x16x128xf32, #tpu.memory_space<vmem>>, %arg3: memref<128x128xf32, #tpu.memory_space<vmem>>, %arg4: memref<128x256xf32, #tpu.memory_space<vmem>>, %arg5: memref<128x128xf32, #tpu.memory_space<vmem>>, %arg6: memref<128x256xf32, #tpu.memory_space<vmem>>, %arg7: memref<256x128xf32, #tpu.memory_space<vmem>>, %arg8: memref<10x256xf32, #tpu.memory_space<vmem>>, %arg9: memref<8x16x128xf32, #tpu.memory_space<vmem>>, %arg10: memref<128x128xf32, #tpu.memory_space<vmem>>) attributes {dimension_semantics = [#tpu.dimension_semantics<parallel>], iteration_bounds = array<i64: 1>, scalar_prefetch = 0 : i64, scratch_operands = 1 : i64, tpu.core_type = #tpu.core_type<tc>, window_params = [{transform_indices = @transform_0, window_bounds = array<i64: 8, 16, 128>}, {transform_indices = @transform_1, window_bounds = array<i64: 8, 16, 128>}, {pipeline_mode = #tpu.pipeline_mode<synchronous>, transform_indices = @transform_2, window_bounds = array<i64: 128, 128>}, {pipeline_mode = #tpu.pipeline_mode<synchronous>, transform_indices = @transform_3, window_bounds = array<i64: 128, 256>}, {pipeline_mode = #tpu.pipeline_mode<synchronous>, transform_indices = @transform_4, window_bounds = array<i64: 128, 128>}, {pipeline_mode = #tpu.pipeline_mode<synchronous>, transform_indices = @transform_5, window_bounds = array<i64: 128, 256>}, {pipeline_mode = #tpu.pipeline_mode<synchronous>, transform_indices = @transform_6, window_bounds = array<i64: 256, 128>}, {pipeline_mode = #tpu.pipeline_mode<synchronous>, transform_indices = @transform_7, window_bounds = array<i64: 10, 256>}, {transform_indices = @transform_8, window_bounds = array<i64: 8, 16, 128>}]} {
    %c0 = arith.constant 0 : index
    %c0_0 = arith.constant 0 : index
    %c0_1 = arith.constant 0 : index
    %0 = vector.load %arg1[%c0, %c0_0, %c0_1] : memref<8x16x128xf32, #tpu.memory_space<vmem>>, vector<8x16x128xf32>
    %1 = vector.shape_cast %0 : vector<8x16x128xf32> to vector<128x128xf32>
    %c0_2 = arith.constant 0 : index
    %c0_3 = arith.constant 0 : index
    %c0_4 = arith.constant 0 : index
    %2 = vector.load %arg2[%c0_2, %c0_3, %c0_4] : memref<8x16x128xf32, #tpu.memory_space<vmem>>, vector<8x16x128xf32>
    %3 = vector.shape_cast %2 : vector<8x16x128xf32> to vector<128x128xf32>
    %c0_5 = arith.constant 0 : index
    %c0_6 = arith.constant 0 : index
    %4 = vector.load %arg8[%c0_5, %c0_6] : memref<10x256xf32, #tpu.memory_space<vmem>>, vector<1x128xf32>
    %c1 = arith.constant 1 : index
    %c0_7 = arith.constant 0 : index
    %5 = vector.load %arg8[%c1, %c0_7] : memref<10x256xf32, #tpu.memory_space<vmem>>, vector<1x128xf32>
    %c2 = arith.constant 2 : index
    %c0_8 = arith.constant 0 : index
    %6 = vector.load %arg8[%c2, %c0_8] : memref<10x256xf32, #tpu.memory_space<vmem>>, vector<1x128xf32>
    %c3 = arith.constant 3 : index
    %c0_9 = arith.constant 0 : index
    %7 = vector.load %arg8[%c3, %c0_9] : memref<10x256xf32, #tpu.memory_space<vmem>>, vector<1x128xf32>
    %c4 = arith.constant 4 : index
    %c0_10 = arith.constant 0 : index
    %8 = vector.load %arg8[%c4, %c0_10] : memref<10x256xf32, #tpu.memory_space<vmem>>, vector<1x128xf32>
    %c5 = arith.constant 5 : index
    %c0_11 = arith.constant 0 : index
    %9 = vector.load %arg8[%c5, %c0_11] : memref<10x256xf32, #tpu.memory_space<vmem>>, vector<1x128xf32>
    %c6 = arith.constant 6 : index
    %c0_12 = arith.constant 0 : index
    %10 = vector.load %arg8[%c6, %c0_12] : memref<10x256xf32, #tpu.memory_space<vmem>>, vector<1x128xf32>
    %c7 = arith.constant 7 : index
    %c0_13 = arith.constant 0 : index
    %11 = vector.load %arg8[%c7, %c0_13] : memref<10x256xf32, #tpu.memory_space<vmem>>, vector<1x128xf32>
    %c8 = arith.constant 8 : index
    %c0_14 = arith.constant 0 : index
    %12 = vector.load %arg8[%c8, %c0_14] : memref<10x256xf32, #tpu.memory_space<vmem>>, vector<1x128xf32>
    %c9 = arith.constant 9 : index
    %c0_15 = arith.constant 0 : index
    %13 = vector.load %arg8[%c9, %c0_15] : memref<10x256xf32, #tpu.memory_space<vmem>>, vector<1x256xf32>
    %c0_16 = arith.constant 0 : index
    %c0_17 = arith.constant 0 : index
    %14 = vector.load %arg3[%c0_16, %c0_17] : memref<128x128xf32, #tpu.memory_space<vmem>>, vector<128x128xf32>
    %cst = arith.constant dense<0.000000e+00> : vector<128x128xf32>
    %15 = tpu.matmul %1, %14, %cst {dimension_numbers = #tpu.dot_dimension_numbers<[1], [0], [0], [1], [0, 0, 1, 1], [], []>} : vector<128x128xf32>, vector<128x128xf32>, vector<128x128xf32> -> vector<128x128xf32>
    %16 = vector.broadcast %8 : vector<1x128xf32> to vector<128x128xf32>
    %17 = arith.addf %15, %16 : vector<128x128xf32>
    %c0_18 = arith.constant 0 : index
    %c0_19 = arith.constant 0 : index
    %18 = vector.load %arg4[%c0_18, %c0_19] : memref<128x256xf32, #tpu.memory_space<vmem>>, vector<128x256xf32>
    %cst_20 = arith.constant dense<0.000000e+00> : vector<128x256xf32>
    %19 = tpu.matmul %3, %18, %cst_20 {dimension_numbers = #tpu.dot_dimension_numbers<[1], [0], [0], [1], [0, 0, 1, 1], [], []>} : vector<128x128xf32>, vector<128x256xf32>, vector<128x256xf32> -> vector<128x256xf32>
    %20 = vector.extract_strided_slice %19 {offsets = [0, 0], sizes = [128, 128], strides = [1, 1]} : vector<128x256xf32> to vector<128x128xf32>
    %21 = vector.broadcast %9 : vector<1x128xf32> to vector<128x128xf32>
    %22 = arith.addf %20, %21 : vector<128x128xf32>
    %23 = vector.extract_strided_slice %19 {offsets = [0, 128], sizes = [128, 128], strides = [1, 1]} : vector<128x256xf32> to vector<128x128xf32>
    %24 = vector.broadcast %10 : vector<1x128xf32> to vector<128x128xf32>
    %25 = arith.addf %23, %24 : vector<128x128xf32>
    %26 = vector.shape_cast %17 : vector<128x128xf32> to vector<8x16x128xf32>
    %27 = vector.shape_cast %22 : vector<128x128xf32> to vector<8x16x128xf32>
    %28 = vector.shape_cast %25 : vector<128x128xf32> to vector<8x16x128xf32>
    %29 = vector.extract_strided_slice %26 {offsets = [0, 0, 0], sizes = [8, 16, 32], strides = [1, 1, 1]} : vector<8x16x128xf32> to vector<8x16x32xf32>
    %30 = vector.extract_strided_slice %27 {offsets = [0, 0, 0], sizes = [8, 16, 32], strides = [1, 1, 1]} : vector<8x16x128xf32> to vector<8x16x32xf32>
    %31 = vector.extract_strided_slice %28 {offsets = [0, 0, 0], sizes = [8, 16, 32], strides = [1, 1, 1]} : vector<8x16x128xf32> to vector<8x16x32xf32>
    "tpu.trace_start"() <{level = 10 : i32, message = "btd,bsd->bts"}> : () -> ()
    %cst_21 = arith.constant dense<0.000000e+00> : vector<8x16x16xf32>
    %32 = tpu.matmul %29, %30, %cst_21 {dimension_numbers = #tpu.dot_dimension_numbers<[2], [2], [1], [1], [0, 0, 0, 1, 1, 1], [0], [0]>} : vector<8x16x32xf32>, vector<8x16x32xf32>, vector<8x16x16xf32> -> vector<8x16x16xf32>
    "tpu.trace_stop"() : () -> ()
    %cst_22 = arith.constant dense<0xFF800000> : vector<8x16xf32>
    %33 = vector.multi_reduction <maximumf>, %32, %cst_22 [2] : vector<8x16x16xf32> to vector<8x16xf32>
    %34 = vector.shape_cast %33 : vector<8x16xf32> to vector<8x16x1xf32>
    %35 = vector.broadcast %34 : vector<8x16x1xf32> to vector<8x16x16xf32>
    %36 = arith.subf %32, %35 : vector<8x16x16xf32>
    %37 = math.exp %36 : vector<8x16x16xf32>
    %cst_23 = arith.constant dense<0.000000e+00> : vector<8x16xf32>
    %38 = vector.multi_reduction <add>, %37, %cst_23 [2] : vector<8x16x16xf32> to vector<8x16xf32>
    %39 = vector.shape_cast %38 : vector<8x16xf32> to vector<8x16x1xf32>
    %40 = tpu.reciprocal %39 {approx = true} : vector<8x16x1xf32> -> vector<8x16x1xf32>
    %41 = vector.broadcast %40 : vector<8x16x1xf32> to vector<8x16x16xf32>
    %42 = arith.mulf %37, %41 : vector<8x16x16xf32>
    "tpu.trace_start"() <{level = 10 : i32, message = "bts,bsd->btd"}> : () -> ()
    %cst_24 = arith.constant dense<0.000000e+00> : vector<8x16x32xf32>
    %43 = tpu.matmul %42, %31, %cst_24 {dimension_numbers = #tpu.dot_dimension_numbers<[2], [1], [1], [2], [0, 0, 0, 1, 1, 2], [0], [0]>} : vector<8x16x16xf32>, vector<8x16x32xf32>, vector<8x16x32xf32> -> vector<8x16x32xf32>
    "tpu.trace_stop"() : () -> ()
    %44 = vector.shape_cast %43 : vector<8x16x32xf32> to vector<128x32xf32>
    %c0_25 = arith.constant 0 : index
    %c0_26 = arith.constant 0 : index
    %45 = vector.load %arg10[%c0_25, %c0_26] : memref<128x128xf32, #tpu.memory_space<vmem>>, vector<128x32xf32>
    tpu.vector_store %arg10[%c0_25, %c0_26], %44 {strides = array<i32>} : memref<128x128xf32, #tpu.memory_space<vmem>>, vector<128x32xf32>,
    %46 = vector.extract_strided_slice %26 {offsets = [0, 0, 32], sizes = [8, 16, 32], strides = [1, 1, 1]} : vector<8x16x128xf32> to vector<8x16x32xf32>
    %47 = vector.extract_strided_slice %27 {offsets = [0, 0, 32], sizes = [8, 16, 32], strides = [1, 1, 1]} : vector<8x16x128xf32> to vector<8x16x32xf32>
    %48 = vector.extract_strided_slice %28 {offsets = [0, 0, 32], sizes = [8, 16, 32], strides = [1, 1, 1]} : vector<8x16x128xf32> to vector<8x16x32xf32>
    "tpu.trace_start"() <{level = 10 : i32, message = "btd,bsd->bts"}> : () -> ()
    %cst_27 = arith.constant dense<0.000000e+00> : vector<8x16x16xf32>
    %49 = tpu.matmul %46, %47, %cst_27 {dimension_numbers = #tpu.dot_dimension_numbers<[2], [2], [1], [1], [0, 0, 0, 1, 1, 1], [0], [0]>} : vector<8x16x32xf32>, vector<8x16x32xf32>, vector<8x16x16xf32> -> vector<8x16x16xf32>
    "tpu.trace_stop"() : () -> ()
    %cst_28 = arith.constant dense<0xFF800000> : vector<8x16xf32>
    %50 = vector.multi_reduction <maximumf>, %49, %cst_28 [2] : vector<8x16x16xf32> to vector<8x16xf32>
    %51 = vector.shape_cast %50 : vector<8x16xf32> to vector<8x16x1xf32>
    %52 = vector.broadcast %51 : vector<8x16x1xf32> to vector<8x16x16xf32>
    %53 = arith.subf %49, %52 : vector<8x16x16xf32>
    %54 = math.exp %53 : vector<8x16x16xf32>
    %cst_29 = arith.constant dense<0.000000e+00> : vector<8x16xf32>
    %55 = vector.multi_reduction <add>, %54, %cst_29 [2] : vector<8x16x16xf32> to vector<8x16xf32>
    %56 = vector.shape_cast %55 : vector<8x16xf32> to vector<8x16x1xf32>
    %57 = tpu.reciprocal %56 {approx = true} : vector<8x16x1xf32> -> vector<8x16x1xf32>
    %58 = vector.broadcast %57 : vector<8x16x1xf32> to vector<8x16x16xf32>
    %59 = arith.mulf %54, %58 : vector<8x16x16xf32>
    "tpu.trace_start"() <{level = 10 : i32, message = "bts,bsd->btd"}> : () -> ()
    %cst_30 = arith.constant dense<0.000000e+00> : vector<8x16x32xf32>
    %60 = tpu.matmul %59, %48, %cst_30 {dimension_numbers = #tpu.dot_dimension_numbers<[2], [1], [1], [2], [0, 0, 0, 1, 1, 2], [0], [0]>} : vector<8x16x16xf32>, vector<8x16x32xf32>, vector<8x16x32xf32> -> vector<8x16x32xf32>
    "tpu.trace_stop"() : () -> ()
    %61 = vector.shape_cast %60 : vector<8x16x32xf32> to vector<128x32xf32>
    %c0_31 = arith.constant 0 : index
    %c32 = arith.constant 32 : index
    %62 = vector.load %arg10[%c0_31, %c32] : memref<128x128xf32, #tpu.memory_space<vmem>>, vector<128x32xf32>
    tpu.vector_store %arg10[%c0_31, %c32], %61 {strides = array<i32>} : memref<128x128xf32, #tpu.memory_space<vmem>>, vector<128x32xf32>,
    %63 = vector.extract_strided_slice %26 {offsets = [0, 0, 64], sizes = [8, 16, 32], strides = [1, 1, 1]} : vector<8x16x128xf32> to vector<8x16x32xf32>
    %64 = vector.extract_strided_slice %27 {offsets = [0, 0, 64], sizes = [8, 16, 32], strides = [1, 1, 1]} : vector<8x16x128xf32> to vector<8x16x32xf32>
    %65 = vector.extract_strided_slice %28 {offsets = [0, 0, 64], sizes = [8, 16, 32], strides = [1, 1, 1]} : vector<8x16x128xf32> to vector<8x16x32xf32>
    "tpu.trace_start"() <{level = 10 : i32, message = "btd,bsd->bts"}> : () -> ()
    %cst_32 = arith.constant dense<0.000000e+00> : vector<8x16x16xf32>
    %66 = tpu.matmul %63, %64, %cst_32 {dimension_numbers = #tpu.dot_dimension_numbers<[2], [2], [1], [1], [0, 0, 0, 1, 1, 1], [0], [0]>} : vector<8x16x32xf32>, vector<8x16x32xf32>, vector<8x16x16xf32> -> vector<8x16x16xf32>
    "tpu.trace_stop"() : () -> ()
    %cst_33 = arith.constant dense<0xFF800000> : vector<8x16xf32>
    %67 = vector.multi_reduction <maximumf>, %66, %cst_33 [2] : vector<8x16x16xf32> to vector<8x16xf32>
    %68 = vector.shape_cast %67 : vector<8x16xf32> to vector<8x16x1xf32>
    %69 = vector.broadcast %68 : vector<8x16x1xf32> to vector<8x16x16xf32>
    %70 = arith.subf %66, %69 : vector<8x16x16xf32>
    %71 = math.exp %70 : vector<8x16x16xf32>
    %cst_34 = arith.constant dense<0.000000e+00> : vector<8x16xf32>
    %72 = vector.multi_reduction <add>, %71, %cst_34 [2] : vector<8x16x16xf32> to vector<8x16xf32>
    %73 = vector.shape_cast %72 : vector<8x16xf32> to vector<8x16x1xf32>
    %74 = tpu.reciprocal %73 {approx = true} : vector<8x16x1xf32> -> vector<8x16x1xf32>
    %75 = vector.broadcast %74 : vector<8x16x1xf32> to vector<8x16x16xf32>
    %76 = arith.mulf %71, %75 : vector<8x16x16xf32>
    "tpu.trace_start"() <{level = 10 : i32, message = "bts,bsd->btd"}> : () -> ()
    %cst_35 = arith.constant dense<0.000000e+00> : vector<8x16x32xf32>
    %77 = tpu.matmul %76, %65, %cst_35 {dimension_numbers = #tpu.dot_dimension_numbers<[2], [1], [1], [2], [0, 0, 0, 1, 1, 2], [0], [0]>} : vector<8x16x16xf32>, vector<8x16x32xf32>, vector<8x16x32xf32> -> vector<8x16x32xf32>
    "tpu.trace_stop"() : () -> ()
    %78 = vector.shape_cast %77 : vector<8x16x32xf32> to vector<128x32xf32>
    %c0_36 = arith.constant 0 : index
    %c64 = arith.constant 64 : index
    %79 = vector.load %arg10[%c0_36, %c64] : memref<128x128xf32, #tpu.memory_space<vmem>>, vector<128x32xf32>
    tpu.vector_store %arg10[%c0_36, %c64], %78 {strides = array<i32>} : memref<128x128xf32, #tpu.memory_space<vmem>>, vector<128x32xf32>,
    %80 = vector.extract_strided_slice %26 {offsets = [0, 0, 96], sizes = [8, 16, 32], strides = [1, 1, 1]} : vector<8x16x128xf32> to vector<8x16x32xf32>
    %81 = vector.extract_strided_slice %27 {offsets = [0, 0, 96], sizes = [8, 16, 32], strides = [1, 1, 1]} : vector<8x16x128xf32> to vector<8x16x32xf32>
    %82 = vector.extract_strided_slice %28 {offsets = [0, 0, 96], sizes = [8, 16, 32], strides = [1, 1, 1]} : vector<8x16x128xf32> to vector<8x16x32xf32>
    "tpu.trace_start"() <{level = 10 : i32, message = "btd,bsd->bts"}> : () -> ()
    %cst_37 = arith.constant dense<0.000000e+00> : vector<8x16x16xf32>
    %83 = tpu.matmul %80, %81, %cst_37 {dimension_numbers = #tpu.dot_dimension_numbers<[2], [2], [1], [1], [0, 0, 0, 1, 1, 1], [0], [0]>} : vector<8x16x32xf32>, vector<8x16x32xf32>, vector<8x16x16xf32> -> vector<8x16x16xf32>
    "tpu.trace_stop"() : () -> ()
    %cst_38 = arith.constant dense<0xFF800000> : vector<8x16xf32>
    %84 = vector.multi_reduction <maximumf>, %83, %cst_38 [2] : vector<8x16x16xf32> to vector<8x16xf32>
    %85 = vector.shape_cast %84 : vector<8x16xf32> to vector<8x16x1xf32>
    %86 = vector.broadcast %85 : vector<8x16x1xf32> to vector<8x16x16xf32>
    %87 = arith.subf %83, %86 : vector<8x16x16xf32>
    %88 = math.exp %87 : vector<8x16x16xf32>
    %cst_39 = arith.constant dense<0.000000e+00> : vector<8x16xf32>
    %89 = vector.multi_reduction <add>, %88, %cst_39 [2] : vector<8x16x16xf32> to vector<8x16xf32>
    %90 = vector.shape_cast %89 : vector<8x16xf32> to vector<8x16x1xf32>
    %91 = tpu.reciprocal %90 {approx = true} : vector<8x16x1xf32> -> vector<8x16x1xf32>
    %92 = vector.broadcast %91 : vector<8x16x1xf32> to vector<8x16x16xf32>
    %93 = arith.mulf %88, %92 : vector<8x16x16xf32>
    "tpu.trace_start"() <{level = 10 : i32, message = "bts,bsd->btd"}> : () -> ()
    %cst_40 = arith.constant dense<0.000000e+00> : vector<8x16x32xf32>
    %94 = tpu.matmul %93, %82, %cst_40 {dimension_numbers = #tpu.dot_dimension_numbers<[2], [1], [1], [2], [0, 0, 0, 1, 1, 2], [0], [0]>} : vector<8x16x16xf32>, vector<8x16x32xf32>, vector<8x16x32xf32> -> vector<8x16x32xf32>
    "tpu.trace_stop"() : () -> ()
    %95 = vector.shape_cast %94 : vector<8x16x32xf32> to vector<128x32xf32>
    %c0_41 = arith.constant 0 : index
    %c96 = arith.constant 96 : index
    %96 = vector.load %arg10[%c0_41, %c96] : memref<128x128xf32, #tpu.memory_space<vmem>>, vector<128x32xf32>
    tpu.vector_store %arg10[%c0_41, %c96], %95 {strides = array<i32>} : memref<128x128xf32, #tpu.memory_space<vmem>>, vector<128x32xf32>,
    %c0_42 = arith.constant 0 : index
    %c0_43 = arith.constant 0 : index
    %97 = vector.load %arg10[%c0_42, %c0_43] : memref<128x128xf32, #tpu.memory_space<vmem>>, vector<128x128xf32>
    %c0_44 = arith.constant 0 : index
    %c0_45 = arith.constant 0 : index
    %98 = vector.load %arg5[%c0_44, %c0_45] : memref<128x128xf32, #tpu.memory_space<vmem>>, vector<128x128xf32>
    %cst_46 = arith.constant dense<0.000000e+00> : vector<128x128xf32>
    %99 = tpu.matmul %97, %98, %cst_46 {dimension_numbers = #tpu.dot_dimension_numbers<[1], [0], [0], [1], [0, 0, 1, 1], [], []>} : vector<128x128xf32>, vector<128x128xf32>, vector<128x128xf32> -> vector<128x128xf32>
    %100 = vector.broadcast %11 : vector<1x128xf32> to vector<128x128xf32>
    %101 = arith.addf %99, %100 : vector<128x128xf32>
    %102 = arith.addf %1, %101 : vector<128x128xf32>
    %cst_47 = arith.constant dense<0.000000e+00> : vector<128xf32>
    %103 = vector.multi_reduction <add>, %102, %cst_47 [1] : vector<128x128xf32> to vector<128xf32>
    %104 = vector.shape_cast %103 : vector<128xf32> to vector<128x1xf32>
    %cst_48 = arith.constant 1.280000e+02 : f32
    %105 = vector.broadcast %cst_48 : f32 to vector<128x1xf32>
    %106 = arith.divf %104, %105 : vector<128x1xf32>
    %107 = vector.broadcast %106 : vector<128x1xf32> to vector<128x128xf32>
    %108 = arith.subf %102, %107 : vector<128x128xf32>
    %109 = arith.mulf %108, %108 : vector<128x128xf32>
    %cst_49 = arith.constant dense<0.000000e+00> : vector<128xf32>
    %110 = vector.multi_reduction <add>, %109, %cst_49 [1] : vector<128x128xf32> to vector<128xf32>
    %111 = vector.shape_cast %110 : vector<128xf32> to vector<128x1xf32>
    %cst_50 = arith.constant 1.280000e+02 : f32
    %112 = vector.broadcast %cst_50 : f32 to vector<128x1xf32>
    %113 = arith.divf %111, %112 : vector<128x1xf32>
    %114 = vector.broadcast %106 : vector<128x1xf32> to vector<128x128xf32>
    %115 = arith.subf %102, %114 : vector<128x128xf32>
    %cst_51 = arith.constant 9.99999974E-6 : f32
    %116 = vector.broadcast %cst_51 : f32 to vector<128x1xf32>
    %117 = arith.addf %113, %116 : vector<128x1xf32>
    %118 = math.rsqrt %117 : vector<128x1xf32>
    %119 = vector.broadcast %118 : vector<128x1xf32> to vector<128x128xf32>
    %120 = arith.mulf %115, %119 : vector<128x128xf32>
    %121 = vector.broadcast %4 : vector<1x128xf32> to vector<128x128xf32>
    %122 = arith.mulf %120, %121 : vector<128x128xf32>
    %123 = vector.broadcast %5 : vector<1x128xf32> to vector<128x128xf32>
    %124 = arith.addf %122, %123 : vector<128x128xf32>
    %c0_52 = arith.constant 0 : index
    %c0_53 = arith.constant 0 : index
    %125 = vector.load %arg6[%c0_52, %c0_53] : memref<128x256xf32, #tpu.memory_space<vmem>>, vector<128x256xf32>
    %cst_54 = arith.constant dense<0.000000e+00> : vector<128x256xf32>
    %126 = tpu.matmul %124, %125, %cst_54 {dimension_numbers = #tpu.dot_dimension_numbers<[1], [0], [0], [1], [0, 0, 1, 1], [], []>} : vector<128x128xf32>, vector<128x256xf32>, vector<128x256xf32> -> vector<128x256xf32>
    %127 = vector.broadcast %13 : vector<1x256xf32> to vector<128x256xf32>
    %128 = arith.addf %126, %127 : vector<128x256xf32>
    %cst_55 = arith.constant 0.000000e+00 : f32
    %129 = vector.broadcast %cst_55 : f32 to vector<128x256xf32>
    %130 = arith.maximumf %128, %129 : vector<128x256xf32>
    %c0_56 = arith.constant 0 : index
    %c0_57 = arith.constant 0 : index
    %131 = vector.load %arg7[%c0_56, %c0_57] : memref<256x128xf32, #tpu.memory_space<vmem>>, vector<256x128xf32>
    %cst_58 = arith.constant dense<0.000000e+00> : vector<128x128xf32>
    %132 = tpu.matmul %130, %131, %cst_58 {dimension_numbers = #tpu.dot_dimension_numbers<[1], [0], [0], [1], [0, 0, 1, 1], [], []>} : vector<128x256xf32>, vector<256x128xf32>, vector<128x128xf32> -> vector<128x128xf32>
    %133 = vector.broadcast %12 : vector<1x128xf32> to vector<128x128xf32>
    %134 = arith.addf %132, %133 : vector<128x128xf32>
    %135 = arith.addf %124, %134 : vector<128x128xf32>
    %cst_59 = arith.constant dense<0.000000e+00> : vector<128xf32>
    %136 = vector.multi_reduction <add>, %135, %cst_59 [1] : vector<128x128xf32> to vector<128xf32>
    %137 = vector.shape_cast %136 : vector<128xf32> to vector<128x1xf32>
    %cst_60 = arith.constant 1.280000e+02 : f32
    %138 = vector.broadcast %cst_60 : f32 to vector<128x1xf32>
    %139 = arith.divf %137, %138 : vector<128x1xf32>
    %140 = vector.broadcast %139 : vector<128x1xf32> to vector<128x128xf32>
    %141 = arith.subf %135, %140 : vector<128x128xf32>
    %142 = arith.mulf %141, %141 : vector<128x128xf32>
    %cst_61 = arith.constant dense<0.000000e+00> : vector<128xf32>
    %143 = vector.multi_reduction <add>, %142, %cst_61 [1] : vector<128x128xf32> to vector<128xf32>
    %144 = vector.shape_cast %143 : vector<128xf32> to vector<128x1xf32>
    %cst_62 = arith.constant 1.280000e+02 : f32
    %145 = vector.broadcast %cst_62 : f32 to vector<128x1xf32>
    %146 = arith.divf %144, %145 : vector<128x1xf32>
    %147 = vector.broadcast %139 : vector<128x1xf32> to vector<128x128xf32>
    %148 = arith.subf %135, %147 : vector<128x128xf32>
    %cst_63 = arith.constant 9.99999974E-6 : f32
    %149 = vector.broadcast %cst_63 : f32 to vector<128x1xf32>
    %150 = arith.addf %146, %149 : vector<128x1xf32>
    %151 = math.rsqrt %150 : vector<128x1xf32>
    %152 = vector.broadcast %151 : vector<128x1xf32> to vector<128x128xf32>
    %153 = arith.mulf %148, %152 : vector<128x128xf32>
    %154 = vector.broadcast %6 : vector<1x128xf32> to vector<128x128xf32>
    %155 = arith.mulf %153, %154 : vector<128x128xf32>
    %156 = vector.broadcast %7 : vector<1x128xf32> to vector<128x128xf32>
    %157 = arith.addf %155, %156 : vector<128x128xf32>
    %158 = vector.shape_cast %157 : vector<128x128xf32> to vector<8x16x128xf32>
    %c0_64 = arith.constant 0 : index
    %c0_65 = arith.constant 0 : index
    %c0_66 = arith.constant 0 : index
    %159 = vector.load %arg9[%c0_64, %c0_65, %c0_66] : memref<8x16x128xf32, #tpu.memory_space<vmem>>, vector<8x16x128xf32>
    tpu.vector_store %arg9[%c0_64, %c0_65, %c0_66], %158 {strides = array<i32>} : memref<8x16x128xf32, #tpu.memory_space<vmem>>, vector<8x16x128xf32>,
    return
  }
  func.func @transform_0(%arg0: i32) -> (i32, i32, i32) {
    %c0_i32 = arith.constant 0 : i32
    %c0_i32_0 = arith.constant 0 : i32
    %c0_i32_1 = arith.constant 0 : i32
    return %arg0, %c0_i32, %c0_i32_0 : i32, i32, i32
  }
  func.func @transform_1(%arg0: i32) -> (i32, i32, i32) {
    %c0_i32 = arith.constant 0 : i32
    %c0_i32_0 = arith.constant 0 : i32
    %c0_i32_1 = arith.constant 0 : i32
    return %arg0, %c0_i32, %c0_i32_0 : i32, i32, i32
  }
  func.func @transform_2(%arg0: i32) -> (i32, i32) {
    %c0_i32 = arith.constant 0 : i32
    %c0_i32_0 = arith.constant 0 : i32
    %c0_i32_1 = arith.constant 0 : i32
    return %c0_i32, %c0_i32_0 : i32, i32
  }
  func.func @transform_3(%arg0: i32) -> (i32, i32) {
    %c0_i32 = arith.constant 0 : i32
    %c0_i32_0 = arith.constant 0 : i32
    %c0_i32_1 = arith.constant 0 : i32
    return %c0_i32, %c0_i32_0 : i32, i32
  }
  func.func @transform_4(%arg0: i32) -> (i32, i32) {
    %c0_i32 = arith.constant 0 : i32
    %c0_i32_0 = arith.constant 0 : i32
    %c0_i32_1 = arith.constant 0 : i32
    return %c0_i32, %c0_i32_0 : i32, i32
  }
  func.func @transform_5(%arg0: i32) -> (i32, i32) {
    %c0_i32 = arith.constant 0 : i32
    %c0_i32_0 = arith.constant 0 : i32
    %c0_i32_1 = arith.constant 0 : i32
    return %c0_i32, %c0_i32_0 : i32, i32
  }
  func.func @transform_6(%arg0: i32) -> (i32, i32) {
    %c0_i32 = arith.constant 0 : i32
    %c0_i32_0 = arith.constant 0 : i32
    %c0_i32_1 = arith.constant 0 : i32
    return %c0_i32, %c0_i32_0 : i32, i32
  }
  func.func @transform_7(%arg0: i32) -> (i32, i32) {
    %c0_i32 = arith.constant 0 : i32
    %c0_i32_0 = arith.constant 0 : i32
    %c0_i32_1 = arith.constant 0 : i32
    return %c0_i32, %c0_i32_0 : i32, i32
  }
  func.func @transform_8(%arg0: i32) -> (i32, i32, i32) {
    %c0_i32 = arith.constant 0 : i32
    %c0_i32_0 = arith.constant 0 : i32
    %c0_i32_1 = arith.constant 0 : i32
    return %arg0, %c0_i32, %c0_i32_0 : i32, i32, i32
  }
}

module attributes {stable_mosaic.version = 11 : i64} {
  func.func @_emo_decoder_kernel(%arg0: i32, %arg1: memref<8x16x128xf32, #tpu.memory_space<vmem>>, %arg2: memref<8x16x128xf32, #tpu.memory_space<vmem>>, %arg3: memref<128x128xf32, #tpu.memory_space<vmem>>, %arg4: memref<128x256xf32, #tpu.memory_space<vmem>>, %arg5: memref<128x128xf32, #tpu.memory_space<vmem>>, %arg6: memref<128x256xf32, #tpu.memory_space<vmem>>, %arg7: memref<256x128xf32, #tpu.memory_space<vmem>>, %arg8: memref<10x256xf32, #tpu.memory_space<vmem>>, %arg9: memref<8x16x128xf32, #tpu.memory_space<vmem>>, %arg10: memref<128x128xf32, #tpu.memory_space<vmem>>) attributes {dimension_semantics = [#tpu.dimension_semantics<parallel>], iteration_bounds = array<i64: 1>, scalar_prefetch = 0 : i64, scratch_operands = 1 : i64, tpu.core_type = #tpu.core_type<tc>, window_params = [{transform_indices = @transform_0, window_bounds = array<i64: 8, 16, 128>}, {transform_indices = @transform_1, window_bounds = array<i64: 8, 16, 128>}, {pipeline_mode = #tpu.pipeline_mode<synchronous>, transform_indices = @transform_2, window_bounds = array<i64: 128, 128>}, {pipeline_mode = #tpu.pipeline_mode<synchronous>, transform_indices = @transform_3, window_bounds = array<i64: 128, 256>}, {pipeline_mode = #tpu.pipeline_mode<synchronous>, transform_indices = @transform_4, window_bounds = array<i64: 128, 128>}, {pipeline_mode = #tpu.pipeline_mode<synchronous>, transform_indices = @transform_5, window_bounds = array<i64: 128, 256>}, {pipeline_mode = #tpu.pipeline_mode<synchronous>, transform_indices = @transform_6, window_bounds = array<i64: 256, 128>}, {pipeline_mode = #tpu.pipeline_mode<synchronous>, transform_indices = @transform_7, window_bounds = array<i64: 10, 256>}, {transform_indices = @transform_8, window_bounds = array<i64: 8, 16, 128>}]} {
    %c0 = arith.constant 0 : index
    %c0_0 = arith.constant 0 : index
    %c0_1 = arith.constant 0 : index
    %0 = vector.load %arg1[%c0, %c0_0, %c0_1] : memref<8x16x128xf32, #tpu.memory_space<vmem>>, vector<8x16x128xf32>
    %1 = vector.shape_cast %0 : vector<8x16x128xf32> to vector<128x128xf32>
    %c0_2 = arith.constant 0 : index
    %c0_3 = arith.constant 0 : index
    %c0_4 = arith.constant 0 : index
    %2 = vector.load %arg2[%c0_2, %c0_3, %c0_4] : memref<8x16x128xf32, #tpu.memory_space<vmem>>, vector<8x16x128xf32>
    %3 = vector.shape_cast %2 : vector<8x16x128xf32> to vector<128x128xf32>
    %c0_5 = arith.constant 0 : index
    %c0_6 = arith.constant 0 : index
    %4 = vector.load %arg8[%c0_5, %c0_6] : memref<10x256xf32, #tpu.memory_space<vmem>>, vector<1x128xf32>
    %c1 = arith.constant 1 : index
    %c0_7 = arith.constant 0 : index
    %5 = vector.load %arg8[%c1, %c0_7] : memref<10x256xf32, #tpu.memory_space<vmem>>, vector<1x128xf32>
    %c2 = arith.constant 2 : index
    %c0_8 = arith.constant 0 : index
    %6 = vector.load %arg8[%c2, %c0_8] : memref<10x256xf32, #tpu.memory_space<vmem>>, vector<1x128xf32>
    %c3 = arith.constant 3 : index
    %c0_9 = arith.constant 0 : index
    %7 = vector.load %arg8[%c3, %c0_9] : memref<10x256xf32, #tpu.memory_space<vmem>>, vector<1x128xf32>
    %c4 = arith.constant 4 : index
    %c0_10 = arith.constant 0 : index
    %8 = vector.load %arg8[%c4, %c0_10] : memref<10x256xf32, #tpu.memory_space<vmem>>, vector<1x128xf32>
    %c5 = arith.constant 5 : index
    %c0_11 = arith.constant 0 : index
    %9 = vector.load %arg8[%c5, %c0_11] : memref<10x256xf32, #tpu.memory_space<vmem>>, vector<1x128xf32>
    %c6 = arith.constant 6 : index
    %c0_12 = arith.constant 0 : index
    %10 = vector.load %arg8[%c6, %c0_12] : memref<10x256xf32, #tpu.memory_space<vmem>>, vector<1x128xf32>
    %c7 = arith.constant 7 : index
    %c0_13 = arith.constant 0 : index
    %11 = vector.load %arg8[%c7, %c0_13] : memref<10x256xf32, #tpu.memory_space<vmem>>, vector<1x128xf32>
    %c8 = arith.constant 8 : index
    %c0_14 = arith.constant 0 : index
    %12 = vector.load %arg8[%c8, %c0_14] : memref<10x256xf32, #tpu.memory_space<vmem>>, vector<1x128xf32>
    %c9 = arith.constant 9 : index
    %c0_15 = arith.constant 0 : index
    %13 = vector.load %arg8[%c9, %c0_15] : memref<10x256xf32, #tpu.memory_space<vmem>>, vector<1x256xf32>
    %c0_16 = arith.constant 0 : index
    %c0_17 = arith.constant 0 : index
    %14 = vector.load %arg3[%c0_16, %c0_17] : memref<128x128xf32, #tpu.memory_space<vmem>>, vector<128x128xf32>
    %cst = arith.constant dense<0.000000e+00> : vector<128x128xf32>
    %15 = tpu.matmul %1, %14, %cst {dimension_numbers = #tpu.dot_dimension_numbers<[1], [0], [0], [1], [0, 0, 1, 1], [], []>} : vector<128x128xf32>, vector<128x128xf32>, vector<128x128xf32> -> vector<128x128xf32>
    %16 = vector.broadcast %8 : vector<1x128xf32> to vector<128x128xf32>
    %17 = arith.addf %15, %16 : vector<128x128xf32>
    %c0_18 = arith.constant 0 : index
    %c0_19 = arith.constant 0 : index
    %18 = vector.load %arg4[%c0_18, %c0_19] : memref<128x256xf32, #tpu.memory_space<vmem>>, vector<128x256xf32>
    %cst_20 = arith.constant dense<0.000000e+00> : vector<128x256xf32>
    %19 = tpu.matmul %3, %18, %cst_20 {dimension_numbers = #tpu.dot_dimension_numbers<[1], [0], [0], [1], [0, 0, 1, 1], [], []>} : vector<128x128xf32>, vector<128x256xf32>, vector<128x256xf32> -> vector<128x256xf32>
    %20 = vector.extract_strided_slice %19 {offsets = [0, 0], sizes = [128, 128], strides = [1, 1]} : vector<128x256xf32> to vector<128x128xf32>
    %21 = vector.broadcast %9 : vector<1x128xf32> to vector<128x128xf32>
    %22 = arith.addf %20, %21 : vector<128x128xf32>
    %23 = vector.extract_strided_slice %19 {offsets = [0, 128], sizes = [128, 128], strides = [1, 1]} : vector<128x256xf32> to vector<128x128xf32>
    %24 = vector.broadcast %10 : vector<1x128xf32> to vector<128x128xf32>
    %25 = arith.addf %23, %24 : vector<128x128xf32>
    %26 = vector.shape_cast %17 : vector<128x128xf32> to vector<8x16x128xf32>
    %27 = vector.shape_cast %22 : vector<128x128xf32> to vector<8x16x128xf32>
    %28 = vector.shape_cast %25 : vector<128x128xf32> to vector<8x16x128xf32>
    %29 = vector.extract_strided_slice %26 {offsets = [0, 0, 0], sizes = [8, 16, 32], strides = [1, 1, 1]} : vector<8x16x128xf32> to vector<8x16x32xf32>
    %30 = vector.extract_strided_slice %27 {offsets = [0, 0, 0], sizes = [8, 16, 32], strides = [1, 1, 1]} : vector<8x16x128xf32> to vector<8x16x32xf32>
    %31 = vector.extract_strided_slice %28 {offsets = [0, 0, 0], sizes = [8, 16, 32], strides = [1, 1, 1]} : vector<8x16x128xf32> to vector<8x16x32xf32>
    "tpu.trace_start"() <{level = 10 : i32, message = "btd,bsd->bts"}> : () -> ()
    %cst_21 = arith.constant dense<0.000000e+00> : vector<8x16x16xf32>
    %32 = tpu.matmul %29, %30, %cst_21 {dimension_numbers = #tpu.dot_dimension_numbers<[2], [2], [1], [1], [0, 0, 0, 1, 1, 1], [0], [0]>} : vector<8x16x32xf32>, vector<8x16x32xf32>, vector<8x16x16xf32> -> vector<8x16x16xf32>
    "tpu.trace_stop"() : () -> ()
    %cst_22 = arith.constant dense<0xFF800000> : vector<8x16xf32>
    %33 = vector.multi_reduction <maximumf>, %32, %cst_22 [2] : vector<8x16x16xf32> to vector<8x16xf32>
    %34 = vector.shape_cast %33 : vector<8x16xf32> to vector<8x16x1xf32>
    %35 = vector.broadcast %34 : vector<8x16x1xf32> to vector<8x16x16xf32>
    %36 = arith.subf %32, %35 : vector<8x16x16xf32>
    %37 = math.exp %36 : vector<8x16x16xf32>
    %cst_23 = arith.constant dense<0.000000e+00> : vector<8x16xf32>
    %38 = vector.multi_reduction <add>, %37, %cst_23 [2] : vector<8x16x16xf32> to vector<8x16xf32>
    %39 = vector.shape_cast %38 : vector<8x16xf32> to vector<8x16x1xf32>
    %40 = tpu.reciprocal %39 {approx = true} : vector<8x16x1xf32> -> vector<8x16x1xf32>
    %41 = vector.broadcast %40 : vector<8x16x1xf32> to vector<8x16x16xf32>
    %42 = arith.mulf %37, %41 : vector<8x16x16xf32>
    "tpu.trace_start"() <{level = 10 : i32, message = "bts,bsd->btd"}> : () -> ()
    %cst_24 = arith.constant dense<0.000000e+00> : vector<8x16x32xf32>
    %43 = tpu.matmul %42, %31, %cst_24 {dimension_numbers = #tpu.dot_dimension_numbers<[2], [1], [1], [2], [0, 0, 0, 1, 1, 2], [0], [0]>} : vector<8x16x16xf32>, vector<8x16x32xf32>, vector<8x16x32xf32> -> vector<8x16x32xf32>
    "tpu.trace_stop"() : () -> ()
    %44 = vector.shape_cast %43 : vector<8x16x32xf32> to vector<128x32xf32>
    %c0_25 = arith.constant 0 : index
    %c0_26 = arith.constant 0 : index
    %45 = vector.load %arg10[%c0_25, %c0_26] : memref<128x128xf32, #tpu.memory_space<vmem>>, vector<128x32xf32>
    tpu.vector_store %arg10[%c0_25, %c0_26], %44 {strides = array<i32>} : memref<128x128xf32, #tpu.memory_space<vmem>>, vector<128x32xf32>,
    %46 = vector.extract_strided_slice %26 {offsets = [0, 0, 32], sizes = [8, 16, 32], strides = [1, 1, 1]} : vector<8x16x128xf32> to vector<8x16x32xf32>
    %47 = vector.extract_strided_slice %27 {offsets = [0, 0, 32], sizes = [8, 16, 32], strides = [1, 1, 1]} : vector<8x16x128xf32> to vector<8x16x32xf32>
    %48 = vector.extract_strided_slice %28 {offsets = [0, 0, 32], sizes = [8, 16, 32], strides = [1, 1, 1]} : vector<8x16x128xf32> to vector<8x16x32xf32>
    "tpu.trace_start"() <{level = 10 : i32, message = "btd,bsd->bts"}> : () -> ()
    %cst_27 = arith.constant dense<0.000000e+00> : vector<8x16x16xf32>
    %49 = tpu.matmul %46, %47, %cst_27 {dimension_numbers = #tpu.dot_dimension_numbers<[2], [2], [1], [1], [0, 0, 0, 1, 1, 1], [0], [0]>} : vector<8x16x32xf32>, vector<8x16x32xf32>, vector<8x16x16xf32> -> vector<8x16x16xf32>
    "tpu.trace_stop"() : () -> ()
    %cst_28 = arith.constant dense<0xFF800000> : vector<8x16xf32>
    %50 = vector.multi_reduction <maximumf>, %49, %cst_28 [2] : vector<8x16x16xf32> to vector<8x16xf32>
    %51 = vector.shape_cast %50 : vector<8x16xf32> to vector<8x16x1xf32>
    %52 = vector.broadcast %51 : vector<8x16x1xf32> to vector<8x16x16xf32>
    %53 = arith.subf %49, %52 : vector<8x16x16xf32>
    %54 = math.exp %53 : vector<8x16x16xf32>
    %cst_29 = arith.constant dense<0.000000e+00> : vector<8x16xf32>
    %55 = vector.multi_reduction <add>, %54, %cst_29 [2] : vector<8x16x16xf32> to vector<8x16xf32>
    %56 = vector.shape_cast %55 : vector<8x16xf32> to vector<8x16x1xf32>
    %57 = tpu.reciprocal %56 {approx = true} : vector<8x16x1xf32> -> vector<8x16x1xf32>
    %58 = vector.broadcast %57 : vector<8x16x1xf32> to vector<8x16x16xf32>
    %59 = arith.mulf %54, %58 : vector<8x16x16xf32>
    "tpu.trace_start"() <{level = 10 : i32, message = "bts,bsd->btd"}> : () -> ()
    %cst_30 = arith.constant dense<0.000000e+00> : vector<8x16x32xf32>
    %60 = tpu.matmul %59, %48, %cst_30 {dimension_numbers = #tpu.dot_dimension_numbers<[2], [1], [1], [2], [0, 0, 0, 1, 1, 2], [0], [0]>} : vector<8x16x16xf32>, vector<8x16x32xf32>, vector<8x16x32xf32> -> vector<8x16x32xf32>
    "tpu.trace_stop"() : () -> ()
    %61 = vector.shape_cast %60 : vector<8x16x32xf32> to vector<128x32xf32>
    %c0_31 = arith.constant 0 : index
    %c32 = arith.constant 32 : index
    %62 = vector.load %arg10[%c0_31, %c32] : memref<128x128xf32, #tpu.memory_space<vmem>>, vector<128x32xf32>
    tpu.vector_store %arg10[%c0_31, %c32], %61 {strides = array<i32>} : memref<128x128xf32, #tpu.memory_space<vmem>>, vector<128x32xf32>,
    %63 = vector.extract_strided_slice %26 {offsets = [0, 0, 64], sizes = [8, 16, 32], strides = [1, 1, 1]} : vector<8x16x128xf32> to vector<8x16x32xf32>
    %64 = vector.extract_strided_slice %27 {offsets = [0, 0, 64], sizes = [8, 16, 32], strides = [1, 1, 1]} : vector<8x16x128xf32> to vector<8x16x32xf32>
    %65 = vector.extract_strided_slice %28 {offsets = [0, 0, 64], sizes = [8, 16, 32], strides = [1, 1, 1]} : vector<8x16x128xf32> to vector<8x16x32xf32>
    "tpu.trace_start"() <{level = 10 : i32, message = "btd,bsd->bts"}> : () -> ()
    %cst_32 = arith.constant dense<0.000000e+00> : vector<8x16x16xf32>
    %66 = tpu.matmul %63, %64, %cst_32 {dimension_numbers = #tpu.dot_dimension_numbers<[2], [2], [1], [1], [0, 0, 0, 1, 1, 1], [0], [0]>} : vector<8x16x32xf32>, vector<8x16x32xf32>, vector<8x16x16xf32> -> vector<8x16x16xf32>
    "tpu.trace_stop"() : () -> ()
    %cst_33 = arith.constant dense<0xFF800000> : vector<8x16xf32>
    %67 = vector.multi_reduction <maximumf>, %66, %cst_33 [2] : vector<8x16x16xf32> to vector<8x16xf32>
    %68 = vector.shape_cast %67 : vector<8x16xf32> to vector<8x16x1xf32>
    %69 = vector.broadcast %68 : vector<8x16x1xf32> to vector<8x16x16xf32>
    %70 = arith.subf %66, %69 : vector<8x16x16xf32>
    %71 = math.exp %70 : vector<8x16x16xf32>
    %cst_34 = arith.constant dense<0.000000e+00> : vector<8x16xf32>
    %72 = vector.multi_reduction <add>, %71, %cst_34 [2] : vector<8x16x16xf32> to vector<8x16xf32>
    %73 = vector.shape_cast %72 : vector<8x16xf32> to vector<8x16x1xf32>
    %74 = tpu.reciprocal %73 {approx = true} : vector<8x16x1xf32> -> vector<8x16x1xf32>
    %75 = vector.broadcast %74 : vector<8x16x1xf32> to vector<8x16x16xf32>
    %76 = arith.mulf %71, %75 : vector<8x16x16xf32>
    "tpu.trace_start"() <{level = 10 : i32, message = "bts,bsd->btd"}> : () -> ()
    %cst_35 = arith.constant dense<0.000000e+00> : vector<8x16x32xf32>
    %77 = tpu.matmul %76, %65, %cst_35 {dimension_numbers = #tpu.dot_dimension_numbers<[2], [1], [1], [2], [0, 0, 0, 1, 1, 2], [0], [0]>} : vector<8x16x16xf32>, vector<8x16x32xf32>, vector<8x16x32xf32> -> vector<8x16x32xf32>
    "tpu.trace_stop"() : () -> ()
    %78 = vector.shape_cast %77 : vector<8x16x32xf32> to vector<128x32xf32>
    %c0_36 = arith.constant 0 : index
    %c64 = arith.constant 64 : index
    %79 = vector.load %arg10[%c0_36, %c64] : memref<128x128xf32, #tpu.memory_space<vmem>>, vector<128x32xf32>
    tpu.vector_store %arg10[%c0_36, %c64], %78 {strides = array<i32>} : memref<128x128xf32, #tpu.memory_space<vmem>>, vector<128x32xf32>,
    %80 = vector.extract_strided_slice %26 {offsets = [0, 0, 96], sizes = [8, 16, 32], strides = [1, 1, 1]} : vector<8x16x128xf32> to vector<8x16x32xf32>
    %81 = vector.extract_strided_slice %27 {offsets = [0, 0, 96], sizes = [8, 16, 32], strides = [1, 1, 1]} : vector<8x16x128xf32> to vector<8x16x32xf32>
    %82 = vector.extract_strided_slice %28 {offsets = [0, 0, 96], sizes = [8, 16, 32], strides = [1, 1, 1]} : vector<8x16x128xf32> to vector<8x16x32xf32>
    "tpu.trace_start"() <{level = 10 : i32, message = "btd,bsd->bts"}> : () -> ()
    %cst_37 = arith.constant dense<0.000000e+00> : vector<8x16x16xf32>
    %83 = tpu.matmul %80, %81, %cst_37 {dimension_numbers = #tpu.dot_dimension_numbers<[2], [2], [1], [1], [0, 0, 0, 1, 1, 1], [0], [0]>} : vector<8x16x32xf32>, vector<8x16x32xf32>, vector<8x16x16xf32> -> vector<8x16x16xf32>
    "tpu.trace_stop"() : () -> ()
    %cst_38 = arith.constant dense<0xFF800000> : vector<8x16xf32>
    %84 = vector.multi_reduction <maximumf>, %83, %cst_38 [2] : vector<8x16x16xf32> to vector<8x16xf32>
    %85 = vector.shape_cast %84 : vector<8x16xf32> to vector<8x16x1xf32>
    %86 = vector.broadcast %85 : vector<8x16x1xf32> to vector<8x16x16xf32>
    %87 = arith.subf %83, %86 : vector<8x16x16xf32>
    %88 = math.exp %87 : vector<8x16x16xf32>
    %cst_39 = arith.constant dense<0.000000e+00> : vector<8x16xf32>
    %89 = vector.multi_reduction <add>, %88, %cst_39 [2] : vector<8x16x16xf32> to vector<8x16xf32>
    %90 = vector.shape_cast %89 : vector<8x16xf32> to vector<8x16x1xf32>
    %91 = tpu.reciprocal %90 {approx = true} : vector<8x16x1xf32> -> vector<8x16x1xf32>
    %92 = vector.broadcast %91 : vector<8x16x1xf32> to vector<8x16x16xf32>
    %93 = arith.mulf %88, %92 : vector<8x16x16xf32>
    "tpu.trace_start"() <{level = 10 : i32, message = "bts,bsd->btd"}> : () -> ()
    %cst_40 = arith.constant dense<0.000000e+00> : vector<8x16x32xf32>
    %94 = tpu.matmul %93, %82, %cst_40 {dimension_numbers = #tpu.dot_dimension_numbers<[2], [1], [1], [2], [0, 0, 0, 1, 1, 2], [0], [0]>} : vector<8x16x16xf32>, vector<8x16x32xf32>, vector<8x16x32xf32> -> vector<8x16x32xf32>
    "tpu.trace_stop"() : () -> ()
    %95 = vector.shape_cast %94 : vector<8x16x32xf32> to vector<128x32xf32>
    %c0_41 = arith.constant 0 : index
    %c96 = arith.constant 96 : index
    %96 = vector.load %arg10[%c0_41, %c96] : memref<128x128xf32, #tpu.memory_space<vmem>>, vector<128x32xf32>
    tpu.vector_store %arg10[%c0_41, %c96], %95 {strides = array<i32>} : memref<128x128xf32, #tpu.memory_space<vmem>>, vector<128x32xf32>,
    %c0_42 = arith.constant 0 : index
    %c0_43 = arith.constant 0 : index
    %97 = vector.load %arg10[%c0_42, %c0_43] : memref<128x128xf32, #tpu.memory_space<vmem>>, vector<128x128xf32>
    %c0_44 = arith.constant 0 : index
    %c0_45 = arith.constant 0 : index
    %98 = vector.load %arg5[%c0_44, %c0_45] : memref<128x128xf32, #tpu.memory_space<vmem>>, vector<128x128xf32>
    %cst_46 = arith.constant dense<0.000000e+00> : vector<128x128xf32>
    %99 = tpu.matmul %97, %98, %cst_46 {dimension_numbers = #tpu.dot_dimension_numbers<[1], [0], [0], [1], [0, 0, 1, 1], [], []>} : vector<128x128xf32>, vector<128x128xf32>, vector<128x128xf32> -> vector<128x128xf32>
    %100 = vector.broadcast %11 : vector<1x128xf32> to vector<128x128xf32>
    %101 = arith.addf %99, %100 : vector<128x128xf32>
    %102 = arith.addf %1, %101 : vector<128x128xf32>
    %cst_47 = arith.constant dense<0.000000e+00> : vector<128xf32>
    %103 = vector.multi_reduction <add>, %102, %cst_47 [1] : vector<128x128xf32> to vector<128xf32>
    %104 = vector.shape_cast %103 : vector<128xf32> to vector<128x1xf32>
    %cst_48 = arith.constant 1.280000e+02 : f32
    %105 = vector.broadcast %cst_48 : f32 to vector<128x1xf32>
    %106 = arith.divf %104, %105 : vector<128x1xf32>
    %107 = vector.broadcast %106 : vector<128x1xf32> to vector<128x128xf32>
    %108 = arith.subf %102, %107 : vector<128x128xf32>
    %109 = arith.mulf %108, %108 : vector<128x128xf32>
    %cst_49 = arith.constant dense<0.000000e+00> : vector<128xf32>
    %110 = vector.multi_reduction <add>, %109, %cst_49 [1] : vector<128x128xf32> to vector<128xf32>
    %111 = vector.shape_cast %110 : vector<128xf32> to vector<128x1xf32>
    %cst_50 = arith.constant 1.280000e+02 : f32
    %112 = vector.broadcast %cst_50 : f32 to vector<128x1xf32>
    %113 = arith.divf %111, %112 : vector<128x1xf32>
    %114 = vector.broadcast %106 : vector<128x1xf32> to vector<128x128xf32>
    %115 = arith.subf %102, %114 : vector<128x128xf32>
    %cst_51 = arith.constant 9.99999974E-6 : f32
    %116 = vector.broadcast %cst_51 : f32 to vector<128x1xf32>
    %117 = arith.addf %113, %116 : vector<128x1xf32>
    %118 = math.rsqrt %117 : vector<128x1xf32>
    %119 = vector.broadcast %118 : vector<128x1xf32> to vector<128x128xf32>
    %120 = arith.mulf %115, %119 : vector<128x128xf32>
    %121 = vector.broadcast %4 : vector<1x128xf32> to vector<128x128xf32>
    %122 = arith.mulf %120, %121 : vector<128x128xf32>
    %123 = vector.broadcast %5 : vector<1x128xf32> to vector<128x128xf32>
    %124 = arith.addf %122, %123 : vector<128x128xf32>
    %c0_52 = arith.constant 0 : index
    %c0_53 = arith.constant 0 : index
    %125 = vector.load %arg6[%c0_52, %c0_53] : memref<128x256xf32, #tpu.memory_space<vmem>>, vector<128x256xf32>
    %cst_54 = arith.constant dense<0.000000e+00> : vector<128x256xf32>
    %126 = tpu.matmul %124, %125, %cst_54 {dimension_numbers = #tpu.dot_dimension_numbers<[1], [0], [0], [1], [0, 0, 1, 1], [], []>} : vector<128x128xf32>, vector<128x256xf32>, vector<128x256xf32> -> vector<128x256xf32>
    %127 = vector.broadcast %13 : vector<1x256xf32> to vector<128x256xf32>
    %128 = arith.addf %126, %127 : vector<128x256xf32>
    %cst_55 = arith.constant 0.000000e+00 : f32
    %129 = vector.broadcast %cst_55 : f32 to vector<128x256xf32>
    %130 = arith.maximumf %128, %129 : vector<128x256xf32>
    %c0_56 = arith.constant 0 : index
    %c0_57 = arith.constant 0 : index
    %131 = vector.load %arg7[%c0_56, %c0_57] : memref<256x128xf32, #tpu.memory_space<vmem>>, vector<256x128xf32>
    %cst_58 = arith.constant dense<0.000000e+00> : vector<128x128xf32>
    %132 = tpu.matmul %130, %131, %cst_58 {dimension_numbers = #tpu.dot_dimension_numbers<[1], [0], [0], [1], [0, 0, 1, 1], [], []>} : vector<128x256xf32>, vector<256x128xf32>, vector<128x128xf32> -> vector<128x128xf32>
    %133 = vector.broadcast %12 : vector<1x128xf32> to vector<128x128xf32>
    %134 = arith.addf %132, %133 : vector<128x128xf32>
    %135 = arith.addf %124, %134 : vector<128x128xf32>
    %cst_59 = arith.constant dense<0.000000e+00> : vector<128xf32>
    %136 = vector.multi_reduction <add>, %135, %cst_59 [1] : vector<128x128xf32> to vector<128xf32>
    %137 = vector.shape_cast %136 : vector<128xf32> to vector<128x1xf32>
    %cst_60 = arith.constant 1.280000e+02 : f32
    %138 = vector.broadcast %cst_60 : f32 to vector<128x1xf32>
    %139 = arith.divf %137, %138 : vector<128x1xf32>
    %140 = vector.broadcast %139 : vector<128x1xf32> to vector<128x128xf32>
    %141 = arith.subf %135, %140 : vector<128x128xf32>
    %142 = arith.mulf %141, %141 : vector<128x128xf32>
    %cst_61 = arith.constant dense<0.000000e+00> : vector<128xf32>
    %143 = vector.multi_reduction <add>, %142, %cst_61 [1] : vector<128x128xf32> to vector<128xf32>
    %144 = vector.shape_cast %143 : vector<128xf32> to vector<128x1xf32>
    %cst_62 = arith.constant 1.280000e+02 : f32
    %145 = vector.broadcast %cst_62 : f32 to vector<128x1xf32>
    %146 = arith.divf %144, %145 : vector<128x1xf32>
    %147 = vector.broadcast %139 : vector<128x1xf32> to vector<128x128xf32>
    %148 = arith.subf %135, %147 : vector<128x128xf32>
    %cst_63 = arith.constant 9.99999974E-6 : f32
    %149 = vector.broadcast %cst_63 : f32 to vector<128x1xf32>
    %150 = arith.addf %146, %149 : vector<128x1xf32>
    %151 = math.rsqrt %150 : vector<128x1xf32>
    %152 = vector.broadcast %151 : vector<128x1xf32> to vector<128x128xf32>
    %153 = arith.mulf %148, %152 : vector<128x128xf32>
    %154 = vector.broadcast %6 : vector<1x128xf32> to vector<128x128xf32>
    %155 = arith.mulf %153, %154 : vector<128x128xf32>
    %156 = vector.broadcast %7 : vector<1x128xf32> to vector<128x128xf32>
    %157 = arith.addf %155, %156 : vector<128x128xf32>
    %158 = vector.shape_cast %157 : vector<128x128xf32> to vector<8x16x128xf32>
    %c0_64 = arith.constant 0 : index
    %c0_65 = arith.constant 0 : index
    %c0_66 = arith.constant 0 : index
    %159 = vector.load %arg9[%c0_64, %c0_65, %c0_66] : memref<8x16x128xf32, #tpu.memory_space<vmem>>, vector<8x16x128xf32>
    tpu.vector_store %arg9[%c0_64, %c0_65, %c0_66], %158 {strides = array<i32>} : memref<8x16x128xf32, #tpu.memory_space<vmem>>, vector<8x16x128xf32>,
    return
  }
  func.func @transform_0(%arg0: i32) -> (i32, i32, i32) {
    %c0_i32 = arith.constant 0 : i32
    %c0_i32_0 = arith.constant 0 : i32
    %c0_i32_1 = arith.constant 0 : i32
    return %arg0, %c0_i32, %c0_i32_0 : i32, i32, i32
  }
  func.func @transform_1(%arg0: i32) -> (i32, i32, i32) {
    %c0_i32 = arith.constant 0 : i32
    %c0_i32_0 = arith.constant 0 : i32
    %c0_i32_1 = arith.constant 0 : i32
    return %arg0, %c0_i32, %c0_i32_0 : i32, i32, i32
  }
  func.func @transform_2(%arg0: i32) -> (i32, i32) {
    %c0_i32 = arith.constant 0 : i32
    %c0_i32_0 = arith.constant 0 : i32
    %c0_i32_1 = arith.constant 0 : i32
    return %c0_i32, %c0_i32_0 : i32, i32
  }
  func.func @transform_3(%arg0: i32) -> (i32, i32) {
    %c0_i32 = arith.constant 0 : i32
    %c0_i32_0 = arith.constant 0 : i32
    %c0_i32_1 = arith.constant 0 : i32
    return %c0_i32, %c0_i32_0 : i32, i32
  }
  func.func @transform_4(%arg0: i32) -> (i32, i32) {
    %c0_i32 = arith.constant 0 : i32
    %c0_i32_0 = arith.constant 0 : i32
    %c0_i32_1 = arith.constant 0 : i32
    return %c0_i32, %c0_i32_0 : i32, i32
  }
  func.func @transform_5(%arg0: i32) -> (i32, i32) {
    %c0_i32 = arith.constant 0 : i32
    %c0_i32_0 = arith.constant 0 : i32
    %c0_i32_1 = arith.constant 0 : i32
    return %c0_i32, %c0_i32_0 : i32, i32
  }
  func.func @transform_6(%arg0: i32) -> (i32, i32) {
    %c0_i32 = arith.constant 0 : i32
    %c0_i32_0 = arith.constant 0 : i32
    %c0_i32_1 = arith.constant 0 : i32
    return %c0_i32, %c0_i32_0 : i32, i32
  }
  func.func @transform_7(%arg0: i32) -> (i32, i32) {
    %c0_i32 = arith.constant 0 : i32
    %c0_i32_0 = arith.constant 0 : i32
    %c0_i32_1 = arith.constant 0 : i32
    return %c0_i32, %c0_i32_0 : i32, i32
  }
  func.func @transform_8(%arg0: i32) -> (i32, i32, i32) {
    %c0_i32 = arith.constant 0 : i32
    %c0_i32_0 = arith.constant 0 : i32
    %c0_i32_1 = arith.constant 0 : i32
    return %arg0, %c0_i32, %c0_i32_0 : i32, i32, i32
  }
}

</mosaic_0001>

<llo_original>
// kernel: tpu_custom_call.1
$region0: #{tpu_custom_call.1}
  #allocation0 [shape = 'u32[]', space=smem, size = 0x4, offset = 0x4, fixed_abs, tag = 'smem constant byte address 0x4 - core index']
  #allocation1 [shape = 'u32[72,128]{1,0:T(1,128)}', space=vmem, size = 0x9000, scoped, tag = 'internal scratch']
  #allocation2 [shape = 'f32[128,128]{1,0:T(8,128)}', space=vmem, size = 0x10000, scoped, tag = 'scratch operand']
  %s0 = inlined_call_operand.hbm [shape: f32[8,16,128], index: 0, kind: input, shape index: {}]
  %s1 = inlined_call_operand.hbm [shape: f32[8,16,128], index: 1, kind: input, shape index: {}]
  %s2 = inlined_call_operand.hbm [shape: f32[128,128], index: 2, kind: input, shape index: {}]
  %s3 = inlined_call_operand.hbm [shape: f32[128,256], index: 3, kind: input, shape index: {}]
  %s4 = inlined_call_operand.hbm [shape: f32[128,128], index: 4, kind: input, shape index: {}]
  %s5 = inlined_call_operand.hbm [shape: f32[128,256], index: 5, kind: input, shape index: {}]
  %s6 = inlined_call_operand.hbm [shape: f32[256,128], index: 6, kind: input, shape index: {}]
  %s7 = inlined_call_operand.hbm [shape: f32[10,256], index: 7, kind: input, shape index: {}]
  %s8 = inlined_call_operand.hbm [shape: f32[8,16,128], index: 8, kind: output, shape index: {}]
  %s9 = sld [smem:[#allocation0]]
  $region74: #{tpu_custom_call.1} parent=0
    _
  %s11 = ssub.s32 1, %s9
  %s12 = scalar_select 0, %s11, %s9
  $region1: #{tpu_custom_call.1} parent=0
    #allocation3 [shape = 'u8[65536]{0}', space=vmem, size = 0x10000, scoped, tag = 'input window, operand 0, single buffered']
    #allocation4 [shape = 's32[1]{0}', space=sflag, size = 0x4, scoped, tag = 'scoped memory for tpu_custom_call.1']
    #allocation5 [shape = 's32[1]{0}', space=sflag, size = 0x4, scoped, tag = 'scoped memory for tpu_custom_call.1']
    #allocation6 [shape = 'u8[65536]{0}', space=vmem, size = 0x10000, scoped, tag = 'input window, operand 1, single buffered']
    #allocation7 [shape = 's32[1]{0}', space=sflag, size = 0x4, scoped, tag = 'scoped memory for tpu_custom_call.1']
    #allocation8 [shape = 'u8[65536]{0}', space=vmem, size = 0x10000, scoped, tag = 'input window, operand 2, single buffered']
    #allocation9 [shape = 'u8[131072]{0}', space=vmem, size = 0x20000, scoped, tag = 'input window, operand 3, single buffered']
    #allocation10 [shape = 's32[1]{0}', space=sflag, size = 0x4, scoped, tag = 'scoped memory for tpu_custom_call.1']
    #allocation11 [shape = 'u8[65536]{0}', space=vmem, size = 0x10000, scoped, tag = 'input window, operand 4, single buffered']
    #allocation12 [shape = 'u8[131072]{0}', space=vmem, size = 0x20000, scoped, tag = 'input window, operand 5, single buffered']
    #allocation13 [shape = 's32[1]{0}', space=sflag, size = 0x4, scoped, tag = 'scoped memory for tpu_custom_call.1']
    #allocation14 [shape = 'u8[131072]{0}', space=vmem, size = 0x20000, scoped, tag = 'input window, operand 6, single buffered']
    #allocation15 [shape = 'u8[16384]{0}', space=vmem, size = 0x4000, scoped, tag = 'input window, operand 7, single buffered']
    #allocation16 [shape = 's32[1]{0}', space=sflag, size = 0x4, scoped, tag = 'scoped memory for tpu_custom_call.1']
    #allocation17 [shape = 'u8[65536]{0}', space=vmem, size = 0x10000, scoped, tag = 'output window, operand 0, single buffered']
    %13 = vsyncpa [#allocation4], 0
    %14 = vsyncpa [#allocation7], 0
    %15 = vsyncpa [#allocation10], 0
    %16 = vsyncpa [#allocation13], 0
    %17 = vsyncpa [#allocation16], 0
    %18 = vsyncpa [#allocation5], 0
    // Predicated region
    $region2: #{tpu_custom_call.1} parent=1 // pred_check
      _
    $region3: #{tpu_custom_call.1} parent=1 // pred_check_branch
      %20 = sbr.rel (0) target = $region5
    $region4: #{tpu_custom_call.1} parent=1 // pred_region
      %22 = vsyncadd [#allocation4], 0
      %s23 = sshll.u32 %s0, 4
      %s24 = int_to_ptr.hbm [resolvable:$true] %s23
      %s25 = sshll.u32 [#allocation3], 4
      %s26 = int_to_ptr.vmem [resolvable:$true] %s25
      %31 = dma.hbm_to_vmem [thread:$0]  %s24, 2048, %s26, [#allocation4], 128, 128, 8
    $region5: #{tpu_custom_call.1} parent=1 // pred_fallthru
      _
    // Predicated region
    $region6: #{tpu_custom_call.1} parent=1 // pred_check
      _
    $region7: #{tpu_custom_call.1} parent=1 // pred_check_branch
      %33 = sbr.rel (0) target = $region9
    $region8: #{tpu_custom_call.1} parent=1 // pred_region
      %35 = vsyncadd [#allocation7], 0
      %s36 = sshll.u32 %s1, 4
      %s37 = int_to_ptr.hbm [resolvable:$true] %s36
      %s38 = sshll.u32 [#allocation6], 4
      %s39 = int_to_ptr.vmem [resolvable:$true] %s38
      %44 = dma.hbm_to_vmem [thread:$0]  %s37, 2048, %s39, [#allocation7], 128, 128, 8
    $region9: #{tpu_custom_call.1} parent=1 // pred_fallthru
      _
    // Predicated region
    $region10: #{tpu_custom_call.1} parent=1 // pred_check
      _
    $region11: #{tpu_custom_call.1} parent=1 // pred_check_branch
      %46 = sbr.rel (0) target = $region13
    $region12: #{tpu_custom_call.1} parent=1 // pred_region
      %48 = vsyncadd [#allocation7], 0
      %s49 = sshll.u32 %s2, 4
      %s50 = int_to_ptr.hbm [resolvable:$true] %s49
      %s51 = sshll.u32 [#allocation8], 4
      %s52 = int_to_ptr.vmem [resolvable:$true] %s51
      %57 = dma.hbm_to_vmem [thread:$0]  %s50, 2048, %s52, [#allocation7], 128, 128, 8
    $region13: #{tpu_custom_call.1} parent=1 // pred_fallthru
      _
    // Predicated region
    $region14: #{tpu_custom_call.1} parent=1 // pred_check
      _
    $region15: #{tpu_custom_call.1} parent=1 // pred_check_branch
      %59 = sbr.rel (0) target = $region17
    $region16: #{tpu_custom_call.1} parent=1 // pred_region
      %61 = vsyncadd [#allocation10], 0
      %s62 = sshll.u32 %s3, 4
      %s63 = int_to_ptr.hbm [resolvable:$true] %s62
      %s64 = sshll.u32 [#allocation9], 4
      %s65 = int_to_ptr.vmem [resolvable:$true] %s64
      %70 = dma.hbm_to_vmem [thread:$0]  %s63, 4096, %s65, [#allocation10], 256, 256, 16
    $region17: #{tpu_custom_call.1} parent=1 // pred_fallthru
      _
    // Predicated region
    $region18: #{tpu_custom_call.1} parent=1 // pred_check
      _
    $region19: #{tpu_custom_call.1} parent=1 // pred_check_branch
      %72 = sbr.rel (0) target = $region21
    $region20: #{tpu_custom_call.1} parent=1 // pred_region
      %74 = vsyncadd [#allocation10], 0
      %s75 = sshll.u32 %s4, 4
      %s76 = int_to_ptr.hbm [resolvable:$true] %s75
      %s77 = sshll.u32 [#allocation11], 4
      %s78 = int_to_ptr.vmem [resolvable:$true] %s77
      %83 = dma.hbm_to_vmem [thread:$0]  %s76, 2048, %s78, [#allocation10], 128, 128, 8
    $region21: #{tpu_custom_call.1} parent=1 // pred_fallthru
      _
    // Predicated region
    $region22: #{tpu_custom_call.1} parent=1 // pred_check
      _
    $region23: #{tpu_custom_call.1} parent=1 // pred_check_branch
      %85 = sbr.rel (0) target = $region25
    $region24: #{tpu_custom_call.1} parent=1 // pred_region
      %87 = vsyncadd [#allocation13], 0
      %s88 = sshll.u32 %s5, 4
      %s89 = int_to_ptr.hbm [resolvable:$true] %s88
      %s90 = sshll.u32 [#allocation12], 4
      %s91 = int_to_ptr.vmem [resolvable:$true] %s90
      %96 = dma.hbm_to_vmem [thread:$0]  %s89, 4096, %s91, [#allocation13], 256, 256, 16
    $region25: #{tpu_custom_call.1} parent=1 // pred_fallthru
      _
    // Predicated region
    $region26: #{tpu_custom_call.1} parent=1 // pred_check
      _
    $region27: #{tpu_custom_call.1} parent=1 // pred_check_branch
      %98 = sbr.rel (0) target = $region29
    $region28: #{tpu_custom_call.1} parent=1 // pred_region
      %100 = vsyncadd [#allocation13], 0
      %s101 = sshll.u32 %s6, 4
      %s102 = int_to_ptr.hbm [resolvable:$true] %s101
      %s103 = sshll.u32 [#allocation14], 4
      %s104 = int_to_ptr.vmem [resolvable:$true] %s103
      %109 = dma.hbm_to_vmem [thread:$0]  %s102, 4096, %s104, [#allocation13], 128, 128, 8
    $region29: #{tpu_custom_call.1} parent=1 // pred_fallthru
      _
    // Predicated region
    $region30: #{tpu_custom_call.1} parent=1 // pred_check
      _
    $region31: #{tpu_custom_call.1} parent=1 // pred_check_branch
      %111 = sbr.rel (0) target = $region33
    $region32: #{tpu_custom_call.1} parent=1 // pred_region
      %113 = vsyncadd [#allocation16], 0
      %s114 = sshll.u32 %s7, 4
      %s115 = int_to_ptr.hbm [resolvable:$true] %s114
      %s116 = sshll.u32 [#allocation15], 4
      %s117 = int_to_ptr.vmem [resolvable:$true] %s116
      %122 = dma.hbm_to_vmem [thread:$0]  %s115, 512, %s117, [#allocation16], 256, 256, 16
    $region33: #{tpu_custom_call.1} parent=1 // pred_fallthru
      _
    // Predicated region
    $region34: #{tpu_custom_call.1} parent=1 // pred_check
      _
    $region35: #{tpu_custom_call.1} parent=1 // pred_check_branch
      %124 = sbr.rel (0) target = $region37
    $region36: #{tpu_custom_call.1} parent=1 // pred_region
      %126 = dma.done [#allocation4], 2048
    $region37: #{tpu_custom_call.1} parent=1 // pred_fallthru
      _
    // Predicated region
    $region38: #{tpu_custom_call.1} parent=1 // pred_check
      _
    $region39: #{tpu_custom_call.1} parent=1 // pred_check_branch
      %128 = sbr.rel (0) target = $region41
    $region40: #{tpu_custom_call.1} parent=1 // pred_region
      %130 = dma.done [#allocation7], 2048
    $region41: #{tpu_custom_call.1} parent=1 // pred_fallthru
      _
    // Predicated region
    $region42: #{tpu_custom_call.1} parent=1 // pred_check
      _
    $region43: #{tpu_custom_call.1} parent=1 // pred_check_branch
      %132 = sbr.rel (0) target = $region45
    $region44: #{tpu_custom_call.1} parent=1 // pred_region
      %134 = dma.done [#allocation7], 2048
    $region45: #{tpu_custom_call.1} parent=1 // pred_fallthru
      _
    // Predicated region
    $region46: #{tpu_custom_call.1} parent=1 // pred_check
      _
    $region47: #{tpu_custom_call.1} parent=1 // pred_check_branch
      %136 = sbr.rel (0) target = $region49
    $region48: #{tpu_custom_call.1} parent=1 // pred_region
      %138 = dma.done [#allocation10], 4096
    $region49: #{tpu_custom_call.1} parent=1 // pred_fallthru
      _
    // Predicated region
    $region50: #{tpu_custom_call.1} parent=1 // pred_check
      _
    $region51: #{tpu_custom_call.1} parent=1 // pred_check_branch
      %140 = sbr.rel (0) target = $region53
    $region52: #{tpu_custom_call.1} parent=1 // pred_region
      %142 = dma.done [#allocation10], 2048
    $region53: #{tpu_custom_call.1} parent=1 // pred_fallthru
      _
    // Predicated region
    $region54: #{tpu_custom_call.1} parent=1 // pred_check
      _
    $region55: #{tpu_custom_call.1} parent=1 // pred_check_branch
      %144 = sbr.rel (0) target = $region57
    $region56: #{tpu_custom_call.1} parent=1 // pred_region
      %146 = dma.done [#allocation13], 4096
    $region57: #{tpu_custom_call.1} parent=1 // pred_fallthru
      _
    // Predicated region
    $region58: #{tpu_custom_call.1} parent=1 // pred_check
      _
    $region59: #{tpu_custom_call.1} parent=1 // pred_check_branch
      %148 = sbr.rel (0) target = $region61
    $region60: #{tpu_custom_call.1} parent=1 // pred_region
      %150 = dma.done [#allocation13], 4096
    $region61: #{tpu_custom_call.1} parent=1 // pred_fallthru
      _
    // Predicated region
    $region62: #{tpu_custom_call.1} parent=1 // pred_check
      _
    $region63: #{tpu_custom_call.1} parent=1 // pred_check_branch
      %152 = sbr.rel (0) target = $region65
    $region64: #{tpu_custom_call.1} parent=1 // pred_region
      %154 = dma.done [#allocation16], 512
    $region65: #{tpu_custom_call.1} parent=1 // pred_fallthru
      _
    %v155 = vld [vmem:[#allocation3] sm:$0xff]
    %v156 = vld [vmem:[#allocation3 + $0x8] sm:$0xff]
    %v157 = vld [vmem:[#allocation3 + $0x10] sm:$0xff]
    %v158 = vld [vmem:[#allocation3 + $0x18] sm:$0xff]
    %v159 = vld [vmem:[#allocation3 + $0x20] sm:$0xff]
    %v160 = vld [vmem:[#allocation3 + $0x28] sm:$0xff]
    %v161 = vld [vmem:[#allocation3 + $0x30] sm:$0xff]
    %v162 = vld [vmem:[#allocation3 + $0x38] sm:$0xff]
    %v163 = vld [vmem:[#allocation3 + $0x40] sm:$0xff]
    %v164 = vld [vmem:[#allocation3 + $0x48] sm:$0xff]
    %v165 = vld [vmem:[#allocation3 + $0x50] sm:$0xff]
    %v166 = vld [vmem:[#allocation3 + $0x58] sm:$0xff]
    %v167 = vld [vmem:[#allocation3 + $0x60] sm:$0xff]
    %v168 = vld [vmem:[#allocation3 + $0x68] sm:$0xff]
    %v169 = vld [vmem:[#allocation3 + $0x70] sm:$0xff]
    %v170 = vld [vmem:[#allocation3 + $0x78] sm:$0xff]
    %v171 = vld [vmem:[#allocation6] sm:$0xff]
    %v172 = vld [vmem:[#allocation6 + $0x8] sm:$0xff]
    %v173 = vld [vmem:[#allocation6 + $0x10] sm:$0xff]
    %v174 = vld [vmem:[#allocation6 + $0x18] sm:$0xff]
    %v175 = vld [vmem:[#allocation6 + $0x20] sm:$0xff]
    %v176 = vld [vmem:[#allocation6 + $0x28] sm:$0xff]
    %v177 = vld [vmem:[#allocation6 + $0x30] sm:$0xff]
    %v178 = vld [vmem:[#allocation6 + $0x38] sm:$0xff]
    %v179 = vld [vmem:[#allocation6 + $0x40] sm:$0xff]
    %v180 = vld [vmem:[#allocation6 + $0x48] sm:$0xff]
    %v181 = vld [vmem:[#allocation6 + $0x50] sm:$0xff]
    %v182 = vld [vmem:[#allocation6 + $0x58] sm:$0xff]
    %v183 = vld [vmem:[#allocation6 + $0x60] sm:$0xff]
    %v184 = vld [vmem:[#allocation6 + $0x68] sm:$0xff]
    %v185 = vld [vmem:[#allocation6 + $0x70] sm:$0xff]
    %v186 = vld [vmem:[#allocation6 + $0x78] sm:$0xff]
    %v187 = vld [vmem:[#allocation15] ss:$0 sm:$0xff]
    %v188 = vld [vmem:[#allocation15 + $0x1] ss:$0 sm:$0xff]
    %v189 = vld [vmem:[#allocation15 + $0x2] ss:$0 sm:$0xff]
    %v190 = vld [vmem:[#allocation15 + $0x3] ss:$0 sm:$0xff]
    %v191 = vld [vmem:[#allocation15 + $0x4] ss:$0 sm:$0xff]
    %v192 = vld [vmem:[#allocation15 + $0x5] ss:$0 sm:$0xff]
    %v193 = vld [vmem:[#allocation15 + $0x6] ss:$0 sm:$0xff]
    %v194 = vld [vmem:[#allocation15 + $0x7] ss:$0 sm:$0xff]
    %v195 = vld [vmem:[#allocation15 + $0x10] ss:$0 sm:$0xff]
    %s196 = scalar_lea.vmem [#allocation15], 17
    %v197 = vld [vmem:[%s196] ss:$8 sm:$0x3]
    %v198 = vld [vmem:[#allocation8] sm:$0xff]
    %v199 = vld [vmem:[#allocation8 + $0x8] sm:$0xff]
    %v200 = vld [vmem:[#allocation8 + $0x10] sm:$0xff]
    %v201 = vld [vmem:[#allocation8 + $0x18] sm:$0xff]
    %v202 = vld [vmem:[#allocation8 + $0x20] sm:$0xff]
    %v203 = vld [vmem:[#allocation8 + $0x28] sm:$0xff]
    %v204 = vld [vmem:[#allocation8 + $0x30] sm:$0xff]
    %v205 = vld [vmem:[#allocation8 + $0x38] sm:$0xff]
    %v206 = vld [vmem:[#allocation8 + $0x40] sm:$0xff]
    %v207 = vld [vmem:[#allocation8 + $0x48] sm:$0xff]
    %v208 = vld [vmem:[#allocation8 + $0x50] sm:$0xff]
    %v209 = vld [vmem:[#allocation8 + $0x58] sm:$0xff]
    %v210 = vld [vmem:[#allocation8 + $0x60] sm:$0xff]
    %v211 = vld [vmem:[#allocation8 + $0x68] sm:$0xff]
    %v212 = vld [vmem:[#allocation8 + $0x70] sm:$0xff]
    %v213 = vld [vmem:[#allocation8 + $0x78] sm:$0xff]
    %214 = vmatpush.msra.mxu0 %v213
    %215 = vmatpush.msra.mxu0 %v212
    %216 = vmatpush.msra.mxu0 %v211
    %217 = vmatpush.msra.mxu0 %v210
    %218 = vmatpush.msra.mxu0 %v209
    %219 = vmatpush.msra.mxu0 %v208
    %220 = vmatpush.msra.mxu0 %v207
    %221 = vmatpush.msra.mxu0 %v206
    %222 = vmatpush.msra.mxu0 %v205
    %223 = vmatpush.msra.mxu0 %v204
    %224 = vmatpush.msra.mxu0 %v203
    %225 = vmatpush.msra.mxu0 %v202
    %226 = vmatpush.msra.mxu0 %v201
    %227 = vmatpush.msra.mxu0 %v200
    %228 = vmatpush.msra.mxu0 %v199
    %229 = vmatpush.msra.mxu0 %v198
    %230 = vmatmul.f32.gmra.mxu0 %v155
    %v231 = vpop.f32.mrf.mxu0
    %v232 = vadd.f32 %v191, %v231
    %233 = vmatmul.f32.gmra.mxu0 %v156
    %v234 = vpop.f32.mrf.mxu0
    %v235 = vadd.f32 %v191, %v234
    %236 = vmatmul.f32.gmra.mxu0 %v157
    %v237 = vpop.f32.mrf.mxu0
    %v238 = vadd.f32 %v191, %v237
    %239 = vmatmul.f32.gmra.mxu0 %v158
    %v240 = vpop.f32.mrf.mxu0
    %v241 = vadd.f32 %v191, %v240
    %242 = vmatmul.f32.gmra.mxu0 %v159
    %v243 = vpop.f32.mrf.mxu0
    %v244 = vadd.f32 %v191, %v243
    %245 = vmatmul.f32.gmra.mxu0 %v160
    %v246 = vpop.f32.mrf.mxu0
    %v247 = vadd.f32 %v191, %v246
    %248 = vmatmul.f32.gmra.mxu0 %v161
    %v249 = vpop.f32.mrf.mxu0
    %v250 = vadd.f32 %v191, %v249
    %251 = vmatmul.f32.gmra.mxu0 %v162
    %v252 = vpop.f32.mrf.mxu0
    %v253 = vadd.f32 %v191, %v252
    %254 = vmatmul.f32.gmra.mxu0 %v163
    %v255 = vpop.f32.mrf.mxu0
    %v256 = vadd.f32 %v191, %v255
    %257 = vmatmul.f32.gmra.mxu0 %v164
    %v258 = vpop.f32.mrf.mxu0
    %v259 = vadd.f32 %v191, %v258
    %260 = vmatmul.f32.gmra.mxu0 %v165
    %v261 = vpop.f32.mrf.mxu0
    %v262 = vadd.f32 %v191, %v261
    %263 = vmatmul.f32.gmra.mxu0 %v166
    %v264 = vpop.f32.mrf.mxu0
    %v265 = vadd.f32 %v191, %v264
    %266 = vmatmul.f32.gmra.mxu0 %v167
    %v267 = vpop.f32.mrf.mxu0
    %v268 = vadd.f32 %v191, %v267
    %269 = vmatmul.f32.gmra.mxu0 %v168
    %v270 = vpop.f32.mrf.mxu0
    %v271 = vadd.f32 %v191, %v270
    %272 = vmatmul.f32.gmra.mxu0 %v169
    %v273 = vpop.f32.mrf.mxu0
    %v274 = vadd.f32 %v191, %v273
    %275 = vmatmul.f32.gmra.mxu0 %v170
    %v276 = vpop.f32.mrf.mxu0
    %v277 = vadd.f32 %v191, %v276
    %278 = vdwg.mxu0
    %v279 = vld [vmem:[#allocation9] sm:$0xff]
    %v280 = vld [vmem:[#allocation9 + $0x8] sm:$0xff]
    %v281 = vld [vmem:[#allocation9 + $0x10] sm:$0xff]
    %v282 = vld [vmem:[#allocation9 + $0x18] sm:$0xff]
    %v283 = vld [vmem:[#allocation9 + $0x20] sm:$0xff]
    %v284 = vld [vmem:[#allocation9 + $0x28] sm:$0xff]
    %v285 = vld [vmem:[#allocation9 + $0x30] sm:$0xff]
    %v286 = vld [vmem:[#allocation9 + $0x38] sm:$0xff]
    %v287 = vld [vmem:[#allocation9 + $0x40] sm:$0xff]
    %v288 = vld [vmem:[#allocation9 + $0x48] sm:$0xff]
    %v289 = vld [vmem:[#allocation9 + $0x50] sm:$0xff]
    %v290 = vld [vmem:[#allocation9 + $0x58] sm:$0xff]
    %v291 = vld [vmem:[#allocation9 + $0x60] sm:$0xff]
    %v292 = vld [vmem:[#allocation9 + $0x68] sm:$0xff]
    %v293 = vld [vmem:[#allocation9 + $0x70] sm:$0xff]
    %v294 = vld [vmem:[#allocation9 + $0x78] sm:$0xff]
    %v295 = vld [vmem:[#allocation9 + $0x80] sm:$0xff]
    %v296 = vld [vmem:[#allocation9 + $0x88] sm:$0xff]
    %v297 = vld [vmem:[#allocation9 + $0x90] sm:$0xff]
    %v298 = vld [vmem:[#allocation9 + $0x98] sm:$0xff]
    %v299 = vld [vmem:[#allocation9 + $0xa0] sm:$0xff]
    %v300 = vld [vmem:[#allocation9 + $0xa8] sm:$0xff]
    %v301 = vld [vmem:[#allocation9 + $0xb0] sm:$0xff]
    %v302 = vld [vmem:[#allocation9 + $0xb8] sm:$0xff]
    %v303 = vld [vmem:[#allocation9 + $0xc0] sm:$0xff]
    %v304 = vld [vmem:[#allocation9 + $0xc8] sm:$0xff]
    %v305 = vld [vmem:[#allocation9 + $0xd0] sm:$0xff]
    %v306 = vld [vmem:[#allocation9 + $0xd8] sm:$0xff]
    %v307 = vld [vmem:[#allocation9 + $0xe0] sm:$0xff]
    %v308 = vld [vmem:[#allocation9 + $0xe8] sm:$0xff]
    %v309 = vld [vmem:[#allocation9 + $0xf0] sm:$0xff]
    %v310 = vld [vmem:[#allocation9 + $0xf8] sm:$0xff]
    %311 = vmatpush.msra.mxu0 %v309
    %312 = vmatpush.msra.mxu0 %v307
    %313 = vmatpush.msra.mxu0 %v305
    %314 = vmatpush.msra.mxu0 %v303
    %315 = vmatpush.msra.mxu0 %v301
    %316 = vmatpush.msra.mxu0 %v299
    %317 = vmatpush.msra.mxu0 %v297
    %318 = vmatpush.msra.mxu0 %v295
    %319 = vmatpush.msra.mxu0 %v293
    %320 = vmatpush.msra.mxu0 %v291
    %321 = vmatpush.msra.mxu0 %v289
    %322 = vmatpush.msra.mxu0 %v287
    %323 = vmatpush.msra.mxu0 %v285
    %324 = vmatpush.msra.mxu0 %v283
    %325 = vmatpush.msra.mxu0 %v281
    %326 = vmatpush.msra.mxu0 %v279
    %327 = vmatmul.f32.gmra.mxu0 %v171
    %v328 = vpop.f32.mrf.mxu0
    %v329 = vadd.f32 0.0, %v328
    %330 = vmatmul.f32.gmra.mxu0 %v172
    %v331 = vpop.f32.mrf.mxu0
    %v332 = vadd.f32 0.0, %v331
    %333 = vmatmul.f32.gmra.mxu0 %v173
    %v334 = vpop.f32.mrf.mxu0
    %v335 = vadd.f32 0.0, %v334
    %336 = vmatmul.f32.gmra.mxu0 %v174
    %v337 = vpop.f32.mrf.mxu0
    %v338 = vadd.f32 0.0, %v337
    %339 = vmatmul.f32.gmra.mxu0 %v175
    %v340 = vpop.f32.mrf.mxu0
    %v341 = vadd.f32 0.0, %v340
    %342 = vmatmul.f32.gmra.mxu0 %v176
    %v343 = vpop.f32.mrf.mxu0
    %v344 = vadd.f32 0.0, %v343
    %345 = vmatmul.f32.gmra.mxu0 %v177
    %v346 = vpop.f32.mrf.mxu0
    %v347 = vadd.f32 0.0, %v346
    %348 = vmatmul.f32.gmra.mxu0 %v178
    %v349 = vpop.f32.mrf.mxu0
    %v350 = vadd.f32 0.0, %v349
    %351 = vmatmul.f32.gmra.mxu0 %v179
    %v352 = vpop.f32.mrf.mxu0
    %v353 = vadd.f32 0.0, %v352
    %354 = vmatmul.f32.gmra.mxu0 %v180
    %v355 = vpop.f32.mrf.mxu0
    %v356 = vadd.f32 0.0, %v355
    %357 = vmatmul.f32.gmra.mxu0 %v181
    %v358 = vpop.f32.mrf.mxu0
    %v359 = vadd.f32 0.0, %v358
    %360 = vmatmul.f32.gmra.mxu0 %v182
    %v361 = vpop.f32.mrf.mxu0
    %v362 = vadd.f32 0.0, %v361
    %363 = vmatmul.f32.gmra.mxu0 %v183
    %v364 = vpop.f32.mrf.mxu0
    %v365 = vadd.f32 0.0, %v364
    %366 = vmatmul.f32.gmra.mxu0 %v184
    %v367 = vpop.f32.mrf.mxu0
    %v368 = vadd.f32 0.0, %v367
    %369 = vmatmul.f32.gmra.mxu0 %v185
    %v370 = vpop.f32.mrf.mxu0
    %v371 = vadd.f32 0.0, %v370
    %372 = vmatmul.f32.gmra.mxu0 %v186
    %v373 = vpop.f32.mrf.mxu0
    %v374 = vadd.f32 0.0, %v373
    %375 = vdwg.mxu0
    %376 = vmatpush.msra.mxu0 %v310
    %377 = vmatpush.msra.mxu0 %v308
    %378 = vmatpush.msra.mxu0 %v306
    %379 = vmatpush.msra.mxu0 %v304
    %380 = vmatpush.msra.mxu0 %v302
    %381 = vmatpush.msra.mxu0 %v300
    %382 = vmatpush.msra.mxu0 %v298
    %383 = vmatpush.msra.mxu0 %v296
    %384 = vmatpush.msra.mxu0 %v294
    %385 = vmatpush.msra.mxu0 %v292
    %386 = vmatpush.msra.mxu0 %v290
    %387 = vmatpush.msra.mxu0 %v288
    %388 = vmatpush.msra.mxu0 %v286
    %389 = vmatpush.msra.mxu0 %v284
    %390 = vmatpush.msra.mxu0 %v282
    %391 = vmatpush.msra.mxu0 %v280
    %392 = vmatmul.f32.gmra.mxu0 %v171
    %v393 = vpop.f32.mrf.mxu0
    %v394 = vadd.f32 0.0, %v393
    %395 = vmatmul.f32.gmra.mxu0 %v172
    %v396 = vpop.f32.mrf.mxu0
    %v397 = vadd.f32 0.0, %v396
    %398 = vmatmul.f32.gmra.mxu0 %v173
    %v399 = vpop.f32.mrf.mxu0
    %v400 = vadd.f32 0.0, %v399
    %401 = vmatmul.f32.gmra.mxu0 %v174
    %v402 = vpop.f32.mrf.mxu0
    %v403 = vadd.f32 0.0, %v402
    %404 = vmatmul.f32.gmra.mxu0 %v175
    %v405 = vpop.f32.mrf.mxu0
    %v406 = vadd.f32 0.0, %v405
    %407 = vmatmul.f32.gmra.mxu0 %v176
    %v408 = vpop.f32.mrf.mxu0
    %v409 = vadd.f32 0.0, %v408
    %410 = vmatmul.f32.gmra.mxu0 %v177
    %v411 = vpop.f32.mrf.mxu0
    %v412 = vadd.f32 0.0, %v411
    %413 = vmatmul.f32.gmra.mxu0 %v178
    %v414 = vpop.f32.mrf.mxu0
    %v415 = vadd.f32 0.0, %v414
    %416 = vmatmul.f32.gmra.mxu0 %v179
    %v417 = vpop.f32.mrf.mxu0
    %v418 = vadd.f32 0.0, %v417
    %419 = vmatmul.f32.gmra.mxu0 %v180
    %v420 = vpop.f32.mrf.mxu0
    %v421 = vadd.f32 0.0, %v420
    %422 = vmatmul.f32.gmra.mxu0 %v181
    %v423 = vpop.f32.mrf.mxu0
    %v424 = vadd.f32 0.0, %v423
    %425 = vmatmul.f32.gmra.mxu0 %v182
    %v426 = vpop.f32.mrf.mxu0
    %v427 = vadd.f32 0.0, %v426
    %428 = vmatmul.f32.gmra.mxu0 %v183
    %v429 = vpop.f32.mrf.mxu0
    %v430 = vadd.f32 0.0, %v429
    %431 = vmatmul.f32.gmra.mxu0 %v184
    %v432 = vpop.f32.mrf.mxu0
    %v433 = vadd.f32 0.0, %v432
    %434 = vmatmul.f32.gmra.mxu0 %v185
    %v435 = vpop.f32.mrf.mxu0
    %v436 = vadd.f32 0.0, %v435
    %437 = vmatmul.f32.gmra.mxu0 %v186
    %v438 = vpop.f32.mrf.mxu0
    %v439 = vadd.f32 0.0, %v438
    %440 = vdwg.mxu0
    %v441 = vadd.f32 %v329, %v192
    %v442 = vadd.f32 %v332, %v192
    %v443 = vadd.f32 %v335, %v192
    %v444 = vadd.f32 %v338, %v192
    %v445 = vadd.f32 %v341, %v192
    %v446 = vadd.f32 %v344, %v192
    %v447 = vadd.f32 %v347, %v192
    %v448 = vadd.f32 %v350, %v192
    %v449 = vadd.f32 %v353, %v192
    %v450 = vadd.f32 %v356, %v192
    %v451 = vadd.f32 %v359, %v192
    %v452 = vadd.f32 %v362, %v192
    %v453 = vadd.f32 %v365, %v192
    %v454 = vadd.f32 %v368, %v192
    %v455 = vadd.f32 %v371, %v192
    %v456 = vadd.f32 %v374, %v192
    %v457 = vadd.f32 %v394, %v193
    %v458 = vadd.f32 %v397, %v193
    %v459 = vadd.f32 %v400, %v193
    %v460 = vadd.f32 %v403, %v193
    %v461 = vadd.f32 %v406, %v193
    %v462 = vadd.f32 %v409, %v193
    %v463 = vadd.f32 %v412, %v193
    %v464 = vadd.f32 %v415, %v193
    %v465 = vadd.f32 %v418, %v193
    %v466 = vadd.f32 %v421, %v193
    %v467 = vadd.f32 %v424, %v193
    %v468 = vadd.f32 %v427, %v193
    %v469 = vadd.f32 %v430, %v193
    %v470 = vadd.f32 %v433, %v193
    %v471 = vadd.f32 %v436, %v193
    %v472 = vadd.f32 %v439, %v193
    %vm473 = vcmask 261120
    %v475 = vsel %vm473, %v232, 0
    %v478 = vsel %vm473, %v235, 0
    %v481 = vsel %vm473, %v441, 0
    %v484 = vsel %vm473, %v442, 0
    %486 = vmatpush.xpose.msra.mxu0 0.0
    %487 = vmatpush.xpose.msra.mxu0 0.0
    %488 = vmatpush.xpose.msra.mxu0 0.0
    %489 = vmatpush.xpose.msra.mxu0 0.0
    %490 = vmatpush.xpose.msra.mxu0 0.0
    %491 = vmatpush.xpose.msra.mxu0 0.0
    %492 = vmatpush.xpose.msra.mxu0 0.0
    %493 = vmatpush.xpose.msra.mxu0 0.0
    %494 = vmatpush.xpose.msra.mxu0 0.0
    %495 = vmatpush.xpose.msra.mxu0 0.0
    %496 = vmatpush.xpose.msra.mxu0 0.0
    %497 = vmatpush.xpose.msra.mxu0 0.0
    %498 = vmatpush.xpose.msra.mxu0 0.0
    %499 = vmatpush.xpose.msra.mxu0 0.0
    %500 = vmatpush.xpose.msra.mxu0 %v484
    %501 = vmatpush.xpose.msra.mxu0 %v481
    %502 = vmatmul.f32.gmra.mxu0 %v475
    %v503 = vpop.f32.mrf.mxu0
    %v504 = vadd.f32 0.0, %v503
    %505 = vmatmul.f32.gmra.mxu0 %v478
    %v506 = vpop.f32.mrf.mxu0
    %v507 = vadd.f32 0.0, %v506
    %508 = vdwg.mxu0
    %v510 = vsel %vm473, %v238, 0
    %v513 = vsel %vm473, %v241, 0
    %v516 = vsel %vm473, %v443, 0
    %v519 = vsel %vm473, %v444, 0
    %521 = vmatpush.xpose.msra.mxu0 0.0
    %522 = vmatpush.xpose.msra.mxu0 0.0
    %523 = vmatpush.xpose.msra.mxu0 0.0
    %524 = vmatpush.xpose.msra.mxu0 0.0
    %525 = vmatpush.xpose.msra.mxu0 0.0
    %526 = vmatpush.xpose.msra.mxu0 0.0
    %527 = vmatpush.xpose.msra.mxu0 0.0
    %528 = vmatpush.xpose.msra.mxu0 0.0
    %529 = vmatpush.xpose.msra.mxu0 0.0
    %530 = vmatpush.xpose.msra.mxu0 0.0
    %531 = vmatpush.xpose.msra.mxu0 0.0
    %532 = vmatpush.xpose.msra.mxu0 0.0
    %533 = vmatpush.xpose.msra.mxu0 0.0
    %534 = vmatpush.xpose.msra.mxu0 0.0
    %535 = vmatpush.xpose.msra.mxu0 %v519
    %536 = vmatpush.xpose.msra.mxu0 %v516
    %537 = vmatmul.f32.gmra.mxu0 %v510
    %v538 = vpop.f32.mrf.mxu0
    %v539 = vadd.f32 0.0, %v538
    %540 = vmatmul.f32.gmra.mxu0 %v513
    %v541 = vpop.f32.mrf.mxu0
    %v542 = vadd.f32 0.0, %v541
    %543 = vdwg.mxu0
    %v545 = vsel %vm473, %v244, 0
    %v548 = vsel %vm473, %v247, 0
    %v551 = vsel %vm473, %v445, 0
    %v554 = vsel %vm473, %v446, 0
    %556 = vmatpush.xpose.msra.mxu0 0.0
    %557 = vmatpush.xpose.msra.mxu0 0.0
    %558 = vmatpush.xpose.msra.mxu0 0.0
    %559 = vmatpush.xpose.msra.mxu0 0.0
    %560 = vmatpush.xpose.msra.mxu0 0.0
    %561 = vmatpush.xpose.msra.mxu0 0.0
    %562 = vmatpush.xpose.msra.mxu0 0.0
    %563 = vmatpush.xpose.msra.mxu0 0.0
    %564 = vmatpush.xpose.msra.mxu0 0.0
    %565 = vmatpush.xpose.msra.mxu0 0.0
    %566 = vmatpush.xpose.msra.mxu0 0.0
    %567 = vmatpush.xpose.msra.mxu0 0.0
    %568 = vmatpush.xpose.msra.mxu0 0.0
    %569 = vmatpush.xpose.msra.mxu0 0.0
    %570 = vmatpush.xpose.msra.mxu0 %v554
    %571 = vmatpush.xpose.msra.mxu0 %v551
    %572 = vmatmul.f32.gmra.mxu0 %v545
    %v573 = vpop.f32.mrf.mxu0
    %v574 = vadd.f32 0.0, %v573
    %575 = vmatmul.f32.gmra.mxu0 %v548
    %v576 = vpop.f32.mrf.mxu0
    %v577 = vadd.f32 0.0, %v576
    %578 = vdwg.mxu0
    %v580 = vsel %vm473, %v250, 0
    %v583 = vsel %vm473, %v253, 0
    %v586 = vsel %vm473, %v447, 0
    %v589 = vsel %vm473, %v448, 0
    %591 = vmatpush.xpose.msra.mxu0 0.0
    %592 = vmatpush.xpose.msra.mxu0 0.0
    %593 = vmatpush.xpose.msra.mxu0 0.0
    %594 = vmatpush.xpose.msra.mxu0 0.0
    %595 = vmatpush.xpose.msra.mxu0 0.0
    %596 = vmatpush.xpose.msra.mxu0 0.0
    %597 = vmatpush.xpose.msra.mxu0 0.0
    %598 = vmatpush.xpose.msra.mxu0 0.0
    %599 = vmatpush.xpose.msra.mxu0 0.0
    %600 = vmatpush.xpose.msra.mxu0 0.0
    %601 = vmatpush.xpose.msra.mxu0 0.0
    %602 = vmatpush.xpose.msra.mxu0 0.0
    %603 = vmatpush.xpose.msra.mxu0 0.0
    %604 = vmatpush.xpose.msra.mxu0 0.0
    %605 = vmatpush.xpose.msra.mxu0 %v589
    %606 = vmatpush.xpose.msra.mxu0 %v586
    %607 = vmatmul.f32.gmra.mxu0 %v580
    %v608 = vpop.f32.mrf.mxu0
    %v609 = vadd.f32 0.0, %v608
    %610 = vmatmul.f32.gmra.mxu0 %v583
    %v611 = vpop.f32.mrf.mxu0
    %v612 = vadd.f32 0.0, %v611
    %613 = vdwg.mxu0
    %v615 = vsel %vm473, %v256, 0
    %v618 = vsel %vm473, %v259, 0
    %v621 = vsel %vm473, %v449, 0
    %v624 = vsel %vm473, %v450, 0
    %626 = vmatpush.xpose.msra.mxu0 0.0
    %627 = vmatpush.xpose.msra.mxu0 0.0
    %628 = vmatpush.xpose.msra.mxu0 0.0
    %629 = vmatpush.xpose.msra.mxu0 0.0
    %630 = vmatpush.xpose.msra.mxu0 0.0
    %631 = vmatpush.xpose.msra.mxu0 0.0
    %632 = vmatpush.xpose.msra.mxu0 0.0
    %633 = vmatpush.xpose.msra.mxu0 0.0
    %634 = vmatpush.xpose.msra.mxu0 0.0
    %635 = vmatpush.xpose.msra.mxu0 0.0
    %636 = vmatpush.xpose.msra.mxu0 0.0
    %637 = vmatpush.xpose.msra.mxu0 0.0
    %638 = vmatpush.xpose.msra.mxu0 0.0
    %639 = vmatpush.xpose.msra.mxu0 0.0
    %640 = vmatpush.xpose.msra.mxu0 %v624
    %641 = vmatpush.xpose.msra.mxu0 %v621
    %642 = vmatmul.f32.gmra.mxu0 %v615
    %v643 = vpop.f32.mrf.mxu0
    %v644 = vadd.f32 0.0, %v643
    %645 = vmatmul.f32.gmra.mxu0 %v618
    %v646 = vpop.f32.mrf.mxu0
    %v647 = vadd.f32 0.0, %v646
    %648 = vdwg.mxu0
    %v650 = vsel %vm473, %v262, 0
    %v653 = vsel %vm473, %v265, 0
    %v656 = vsel %vm473, %v451, 0
    %v659 = vsel %vm473, %v452, 0
    %661 = vmatpush.xpose.msra.mxu0 0.0
    %662 = vmatpush.xpose.msra.mxu0 0.0
    %663 = vmatpush.xpose.msra.mxu0 0.0
    %664 = vmatpush.xpose.msra.mxu0 0.0
    %665 = vmatpush.xpose.msra.mxu0 0.0
    %666 = vmatpush.xpose.msra.mxu0 0.0
    %667 = vmatpush.xpose.msra.mxu0 0.0
    %668 = vmatpush.xpose.msra.mxu0 0.0
    %669 = vmatpush.xpose.msra.mxu0 0.0
    %670 = vmatpush.xpose.msra.mxu0 0.0
    %671 = vmatpush.xpose.msra.mxu0 0.0
    %672 = vmatpush.xpose.msra.mxu0 0.0
    %673 = vmatpush.xpose.msra.mxu0 0.0
    %674 = vmatpush.xpose.msra.mxu0 0.0
    %675 = vmatpush.xpose.msra.mxu0 %v659
    %676 = vmatpush.xpose.msra.mxu0 %v656
    %677 = vmatmul.f32.gmra.mxu0 %v650
    %v678 = vpop.f32.mrf.mxu0
    %v679 = vadd.f32 0.0, %v678
    %680 = vmatmul.f32.gmra.mxu0 %v653
    %v681 = vpop.f32.mrf.mxu0
    %v682 = vadd.f32 0.0, %v681
    %683 = vdwg.mxu0
    %v685 = vsel %vm473, %v268, 0
    %v688 = vsel %vm473, %v271, 0
    %v691 = vsel %vm473, %v453, 0
    %v694 = vsel %vm473, %v454, 0
    %696 = vmatpush.xpose.msra.mxu0 0.0
    %697 = vmatpush.xpose.msra.mxu0 0.0
    %698 = vmatpush.xpose.msra.mxu0 0.0
    %699 = vmatpush.xpose.msra.mxu0 0.0
    %700 = vmatpush.xpose.msra.mxu0 0.0
    %701 = vmatpush.xpose.msra.mxu0 0.0
    %702 = vmatpush.xpose.msra.mxu0 0.0
    %703 = vmatpush.xpose.msra.mxu0 0.0
    %704 = vmatpush.xpose.msra.mxu0 0.0
    %705 = vmatpush.xpose.msra.mxu0 0.0
    %706 = vmatpush.xpose.msra.mxu0 0.0
    %707 = vmatpush.xpose.msra.mxu0 0.0
    %708 = vmatpush.xpose.msra.mxu0 0.0
    %709 = vmatpush.xpose.msra.mxu0 0.0
    %710 = vmatpush.xpose.msra.mxu0 %v694
    %711 = vmatpush.xpose.msra.mxu0 %v691
    %712 = vmatmul.f32.gmra.mxu0 %v685
    %v713 = vpop.f32.mrf.mxu0
    %v714 = vadd.f32 0.0, %v713
    %715 = vmatmul.f32.gmra.mxu0 %v688
    %v716 = vpop.f32.mrf.mxu0
    %v717 = vadd.f32 0.0, %v716
    %718 = vdwg.mxu0
    %v720 = vsel %vm473, %v274, 0
    %v723 = vsel %vm473, %v277, 0
    %v726 = vsel %vm473, %v455, 0
    %v729 = vsel %vm473, %v456, 0
    %731 = vmatpush.xpose.msra.mxu0 0.0
    %732 = vmatpush.xpose.msra.mxu0 0.0
    %733 = vmatpush.xpose.msra.mxu0 0.0
    %734 = vmatpush.xpose.msra.mxu0 0.0
    %735 = vmatpush.xpose.msra.mxu0 0.0
    %736 = vmatpush.xpose.msra.mxu0 0.0
    %737 = vmatpush.xpose.msra.mxu0 0.0
    %738 = vmatpush.xpose.msra.mxu0 0.0
    %739 = vmatpush.xpose.msra.mxu0 0.0
    %740 = vmatpush.xpose.msra.mxu0 0.0
    %741 = vmatpush.xpose.msra.mxu0 0.0
    %742 = vmatpush.xpose.msra.mxu0 0.0
    %743 = vmatpush.xpose.msra.mxu0 0.0
    %744 = vmatpush.xpose.msra.mxu0 0.0
    %745 = vmatpush.xpose.msra.mxu0 %v729
    %746 = vmatpush.xpose.msra.mxu0 %v726
    %747 = vmatmul.f32.gmra.mxu0 %v720
    %v748 = vpop.f32.mrf.mxu0
    %v749 = vadd.f32 0.0, %v748
    %750 = vmatmul.f32.gmra.mxu0 %v723
    %v751 = vpop.f32.mrf.mxu0
    %v752 = vadd.f32 0.0, %v751
    %753 = vdwg.mxu0
    %vm754 = vcmask 130048
    %v755 = vsel %vm754, %v504, -inf
    %756 = vmax.xlane.f32.xlu0 %v755
    %v757 = vpop.xlane.xlu0 %756
    %v758 = vsel %vm754, %v507, -inf
    %759 = vmax.xlane.f32.xlu0 %v758
    %v760 = vpop.xlane.xlu0 %759
    %v761 = vsel %vm754, %v539, -inf
    %762 = vmax.xlane.f32.xlu0 %v761
    %v763 = vpop.xlane.xlu0 %762
    %v764 = vsel %vm754, %v542, -inf
    %765 = vmax.xlane.f32.xlu0 %v764
    %v766 = vpop.xlane.xlu0 %765
    %v767 = vsel %vm754, %v574, -inf
    %768 = vmax.xlane.f32.xlu0 %v767
    %v769 = vpop.xlane.xlu0 %768
    %v770 = vsel %vm754, %v577, -inf
    %771 = vmax.xlane.f32.xlu0 %v770
    %v772 = vpop.xlane.xlu0 %771
    %v773 = vsel %vm754, %v609, -inf
    %774 = vmax.xlane.f32.xlu0 %v773
    %v775 = vpop.xlane.xlu0 %774
    %v776 = vsel %vm754, %v612, -inf
    %777 = vmax.xlane.f32.xlu0 %v776
    %v778 = vpop.xlane.xlu0 %777
    %v779 = vsel %vm754, %v644, -inf
    %780 = vmax.xlane.f32.xlu0 %v779
    %v781 = vpop.xlane.xlu0 %780
    %v782 = vsel %vm754, %v647, -inf
    %783 = vmax.xlane.f32.xlu0 %v782
    %v784 = vpop.xlane.xlu0 %783
    %v785 = vsel %vm754, %v679, -inf
    %786 = vmax.xlane.f32.xlu0 %v785
    %v787 = vpop.xlane.xlu0 %786
    %v788 = vsel %vm754, %v682, -inf
    %789 = vmax.xlane.f32.xlu0 %v788
    %v790 = vpop.xlane.xlu0 %789
    %v791 = vsel %vm754, %v714, -inf
    %792 = vmax.xlane.f32.xlu0 %v791
    %v793 = vpop.xlane.xlu0 %792
    %v794 = vsel %vm754, %v717, -inf
    %795 = vmax.xlane.f32.xlu0 %v794
    %v796 = vpop.xlane.xlu0 %795
    %v797 = vsel %vm754, %v749, -inf
    %798 = vmax.xlane.f32.xlu0 %v797
    %v799 = vpop.xlane.xlu0 %798
    %v800 = vsel %vm754, %v752, -inf
    %801 = vmax.xlane.f32.xlu0 %v800
    %v802 = vpop.xlane.xlu0 %801
    %v803 = vsub.f32 %v504, %v757
    %v804 = vsub.f32 %v507, %v760
    %v805 = vsub.f32 %v539, %v763
    %v806 = vsub.f32 %v542, %v766
    %v807 = vsub.f32 %v574, %v769
    %v808 = vsub.f32 %v577, %v772
    %v809 = vsub.f32 %v609, %v775
    %v810 = vsub.f32 %v612, %v778
    %v811 = vsub.f32 %v644, %v781
    %v812 = vsub.f32 %v647, %v784
    %v813 = vsub.f32 %v679, %v787
    %v814 = vsub.f32 %v682, %v790
    %v815 = vsub.f32 %v714, %v793
    %v816 = vsub.f32 %v717, %v796
    %v817 = vsub.f32 %v749, %v799
    %v818 = vsub.f32 %v752, %v802
    %v819 = vmul.f32 %v803, 1.442695
    %v820 = vpow.pop %v819
    %v821 = vmul.f32 %v804, 1.442695
    %v822 = vpow.pop %v821
    %v823 = vmul.f32 %v805, 1.442695
    %v824 = vpow.pop %v823
    %v825 = vmul.f32 %v806, 1.442695
    %v826 = vpow.pop %v825
    %v827 = vmul.f32 %v807, 1.442695
    %v828 = vpow.pop %v827
    %v829 = vmul.f32 %v808, 1.442695
    %v830 = vpow.pop %v829
    %v831 = vmul.f32 %v809, 1.442695
    %v832 = vpow.pop %v831
    %v833 = vmul.f32 %v810, 1.442695
    %v834 = vpow.pop %v833
    %v835 = vmul.f32 %v811, 1.442695
    %v836 = vpow.pop %v835
    %v837 = vmul.f32 %v812, 1.442695
    %v838 = vpow.pop %v837
    %v839 = vmul.f32 %v813, 1.442695
    %v840 = vpow.pop %v839
    %v841 = vmul.f32 %v814, 1.442695
    %v842 = vpow.pop %v841
    %v843 = vmul.f32 %v815, 1.442695
    %v844 = vpow.pop %v843
    %v845 = vmul.f32 %v816, 1.442695
    %v846 = vpow.pop %v845
    %v847 = vmul.f32 %v817, 1.442695
    %v848 = vpow.pop %v847
    %v849 = vmul.f32 %v818, 1.442695
    %v850 = vpow.pop %v849
    %v851 = vsel %vm754, %v820, 0.0
    %852 = vadd.xlane.f32.xlu0 %v851
    %v853 = vpop.xlane.xlu0 %852
    %v854 = vsel %vm754, %v822, 0.0
    %855 = vadd.xlane.f32.xlu0 %v854
    %v856 = vpop.xlane.xlu0 %855
    %v857 = vsel %vm754, %v824, 0.0
    %858 = vadd.xlane.f32.xlu0 %v857
    %v859 = vpop.xlane.xlu0 %858
    %v860 = vsel %vm754, %v826, 0.0
    %861 = vadd.xlane.f32.xlu0 %v860
    %v862 = vpop.xlane.xlu0 %861
    %v863 = vsel %vm754, %v828, 0.0
    %864 = vadd.xlane.f32.xlu0 %v863
    %v865 = vpop.xlane.xlu0 %864
    %v866 = vsel %vm754, %v830, 0.0
    %867 = vadd.xlane.f32.xlu0 %v866
    %v868 = vpop.xlane.xlu0 %867
    %v869 = vsel %vm754, %v832, 0.0
    %870 = vadd.xlane.f32.xlu0 %v869
    %v871 = vpop.xlane.xlu0 %870
    %v872 = vsel %vm754, %v834, 0.0
    %873 = vadd.xlane.f32.xlu0 %v872
    %v874 = vpop.xlane.xlu0 %873
    %v875 = vsel %vm754, %v836, 0.0
    %876 = vadd.xlane.f32.xlu0 %v875
    %v877 = vpop.xlane.xlu0 %876
    %v878 = vsel %vm754, %v838, 0.0
    %879 = vadd.xlane.f32.xlu0 %v878
    %v880 = vpop.xlane.xlu0 %879
    %v881 = vsel %vm754, %v840, 0.0
    %882 = vadd.xlane.f32.xlu0 %v881
    %v883 = vpop.xlane.xlu0 %882
    %v884 = vsel %vm754, %v842, 0.0
    %885 = vadd.xlane.f32.xlu0 %v884
    %v886 = vpop.xlane.xlu0 %885
    %v887 = vsel %vm754, %v844, 0.0
    %888 = vadd.xlane.f32.xlu0 %v887
    %v889 = vpop.xlane.xlu0 %888
    %v890 = vsel %vm754, %v846, 0.0
    %891 = vadd.xlane.f32.xlu0 %v890
    %v892 = vpop.xlane.xlu0 %891
    %v893 = vsel %vm754, %v848, 0.0
    %894 = vadd.xlane.f32.xlu0 %v893
    %v895 = vpop.xlane.xlu0 %894
    %v896 = vsel %vm754, %v850, 0.0
    %897 = vadd.xlane.f32.xlu0 %v896
    %v898 = vpop.xlane.xlu0 %897
    %v899 = vrcp.pop %v853
    %v900 = vrcp.pop %v856
    %v901 = vrcp.pop %v859
    %v902 = vrcp.pop %v862
    %v903 = vrcp.pop %v865
    %v904 = vrcp.pop %v868
    %v905 = vrcp.pop %v871
    %v906 = vrcp.pop %v874
    %v907 = vrcp.pop %v877
    %v908 = vrcp.pop %v880
    %v909 = vrcp.pop %v883
    %v910 = vrcp.pop %v886
    %v911 = vrcp.pop %v889
    %v912 = vrcp.pop %v892
    %v913 = vrcp.pop %v895
    %v914 = vrcp.pop %v898
    %v915 = vmul.f32 %v820, %v899
    %v916 = vmul.f32 %v822, %v900
    %v917 = vmul.f32 %v824, %v901
    %v918 = vmul.f32 %v826, %v902
    %v919 = vmul.f32 %v828, %v903
    %v920 = vmul.f32 %v830, %v904
    %v921 = vmul.f32 %v832, %v905
    %v922 = vmul.f32 %v834, %v906
    %v923 = vmul.f32 %v836, %v907
    %v924 = vmul.f32 %v838, %v908
    %v925 = vmul.f32 %v840, %v909
    %v926 = vmul.f32 %v842, %v910
    %v927 = vmul.f32 %v844, %v911
    %v928 = vmul.f32 %v846, %v912
    %v929 = vmul.f32 %v848, %v913
    %v930 = vmul.f32 %v850, %v914
    %v932 = vsel %vm754, %v915, 0
    %v935 = vsel %vm754, %v916, 0
    %937 = vmatpush.msra.mxu0 0.0
    %938 = vmatpush.msra.mxu0 0.0
    %939 = vmatpush.msra.mxu0 0.0
    %940 = vmatpush.msra.mxu0 0.0
    %941 = vmatpush.msra.mxu0 0.0
    %942 = vmatpush.msra.mxu0 0.0
    %943 = vmatpush.msra.mxu0 0.0
    %944 = vmatpush.msra.mxu0 0.0
    %945 = vmatpush.msra.mxu0 0.0
    %946 = vmatpush.msra.mxu0 0.0
    %947 = vmatpush.msra.mxu0 0.0
    %948 = vmatpush.msra.mxu0 0.0
    %949 = vmatpush.msra.mxu0 0.0
    %950 = vmatpush.msra.mxu0 0.0
    %951 = vmatpush.msra.mxu0 %v458
    %952 = vmatpush.msra.mxu0 %v457
    %953 = vmatmul.f32.gmra.mxu0 %v932
    %v954 = vpop.f32.mrf.mxu0
    %v955 = vadd.f32 0.0, %v954
    %956 = vmatmul.f32.gmra.mxu0 %v935
    %v957 = vpop.f32.mrf.mxu0
    %v958 = vadd.f32 0.0, %v957
    %959 = vdwg.mxu0
    %v961 = vsel %vm754, %v917, 0
    %v964 = vsel %vm754, %v918, 0
    %966 = vmatpush.msra.mxu0 0.0
    %967 = vmatpush.msra.mxu0 0.0
    %968 = vmatpush.msra.mxu0 0.0
    %969 = vmatpush.msra.mxu0 0.0
    %970 = vmatpush.msra.mxu0 0.0
    %971 = vmatpush.msra.mxu0 0.0
    %972 = vmatpush.msra.mxu0 0.0
    %973 = vmatpush.msra.mxu0 0.0
    %974 = vmatpush.msra.mxu0 0.0
    %975 = vmatpush.msra.mxu0 0.0
    %976 = vmatpush.msra.mxu0 0.0
    %977 = vmatpush.msra.mxu0 0.0
    %978 = vmatpush.msra.mxu0 0.0
    %979 = vmatpush.msra.mxu0 0.0
    %980 = vmatpush.msra.mxu0 %v460
    %981 = vmatpush.msra.mxu0 %v459
    %982 = vmatmul.f32.gmra.mxu0 %v961
    %v983 = vpop.f32.mrf.mxu0
    %v984 = vadd.f32 0.0, %v983
    %985 = vmatmul.f32.gmra.mxu0 %v964
    %v986 = vpop.f32.mrf.mxu0
    %v987 = vadd.f32 0.0, %v986
    %988 = vdwg.mxu0
    %v990 = vsel %vm754, %v919, 0
    %v993 = vsel %vm754, %v920, 0
    %995 = vmatpush.msra.mxu0 0.0
    %996 = vmatpush.msra.mxu0 0.0
    %997 = vmatpush.msra.mxu0 0.0
    %998 = vmatpush.msra.mxu0 0.0
    %999 = vmatpush.msra.mxu0 0.0
    %1000 = vmatpush.msra.mxu0 0.0
    %1001 = vmatpush.msra.mxu0 0.0
    %1002 = vmatpush.msra.mxu0 0.0
    %1003 = vmatpush.msra.mxu0 0.0
    %1004 = vmatpush.msra.mxu0 0.0
    %1005 = vmatpush.msra.mxu0 0.0
    %1006 = vmatpush.msra.mxu0 0.0
    %1007 = vmatpush.msra.mxu0 0.0
    %1008 = vmatpush.msra.mxu0 0.0
    %1009 = vmatpush.msra.mxu0 %v462
    %1010 = vmatpush.msra.mxu0 %v461
    %1011 = vmatmul.f32.gmra.mxu0 %v990
    %v1012 = vpop.f32.mrf.mxu0
    %v1013 = vadd.f32 0.0, %v1012
    %1014 = vmatmul.f32.gmra.mxu0 %v993
    %v1015 = vpop.f32.mrf.mxu0
    %v1016 = vadd.f32 0.0, %v1015
    %1017 = vdwg.mxu0
    %v1019 = vsel %vm754, %v921, 0
    %v1022 = vsel %vm754, %v922, 0
    %1024 = vmatpush.msra.mxu0 0.0
    %1025 = vmatpush.msra.mxu0 0.0
    %1026 = vmatpush.msra.mxu0 0.0
    %1027 = vmatpush.msra.mxu0 0.0
    %1028 = vmatpush.msra.mxu0 0.0
    %1029 = vmatpush.msra.mxu0 0.0
    %1030 = vmatpush.msra.mxu0 0.0
    %1031 = vmatpush.msra.mxu0 0.0
    %1032 = vmatpush.msra.mxu0 0.0
    %1033 = vmatpush.msra.mxu0 0.0
    %1034 = vmatpush.msra.mxu0 0.0
    %1035 = vmatpush.msra.mxu0 0.0
    %1036 = vmatpush.msra.mxu0 0.0
    %1037 = vmatpush.msra.mxu0 0.0
    %1038 = vmatpush.msra.mxu0 %v464
    %1039 = vmatpush.msra.mxu0 %v463
    %1040 = vmatmul.f32.gmra.mxu0 %v1019
    %v1041 = vpop.f32.mrf.mxu0
    %v1042 = vadd.f32 0.0, %v1041
    %1043 = vmatmul.f32.gmra.mxu0 %v1022
    %v1044 = vpop.f32.mrf.mxu0
    %v1045 = vadd.f32 0.0, %v1044
    %1046 = vdwg.mxu0
    %v1048 = vsel %vm754, %v923, 0
    %v1051 = vsel %vm754, %v924, 0
    %1053 = vmatpush.msra.mxu0 0.0
    %1054 = vmatpush.msra.mxu0 0.0
    %1055 = vmatpush.msra.mxu0 0.0
    %1056 = vmatpush.msra.mxu0 0.0
    %1057 = vmatpush.msra.mxu0 0.0
    %1058 = vmatpush.msra.mxu0 0.0
    %1059 = vmatpush.msra.mxu0 0.0
    %1060 = vmatpush.msra.mxu0 0.0
    %1061 = vmatpush.msra.mxu0 0.0
    %1062 = vmatpush.msra.mxu0 0.0
    %1063 = vmatpush.msra.mxu0 0.0
    %1064 = vmatpush.msra.mxu0 0.0
    %1065 = vmatpush.msra.mxu0 0.0
    %1066 = vmatpush.msra.mxu0 0.0
    %1067 = vmatpush.msra.mxu0 %v466
    %1068 = vmatpush.msra.mxu0 %v465
    %1069 = vmatmul.f32.gmra.mxu0 %v1048
    %v1070 = vpop.f32.mrf.mxu0
    %v1071 = vadd.f32 0.0, %v1070
    %1072 = vmatmul.f32.gmra.mxu0 %v1051
    %v1073 = vpop.f32.mrf.mxu0
    %v1074 = vadd.f32 0.0, %v1073
    %1075 = vdwg.mxu0
    %v1077 = vsel %vm754, %v925, 0
    %v1080 = vsel %vm754, %v926, 0
    %1082 = vmatpush.msra.mxu0 0.0
    %1083 = vmatpush.msra.mxu0 0.0
    %1084 = vmatpush.msra.mxu0 0.0
    %1085 = vmatpush.msra.mxu0 0.0
    %1086 = vmatpush.msra.mxu0 0.0
    %1087 = vmatpush.msra.mxu0 0.0
    %1088 = vmatpush.msra.mxu0 0.0
    %1089 = vmatpush.msra.mxu0 0.0
    %1090 = vmatpush.msra.mxu0 0.0
    %1091 = vmatpush.msra.mxu0 0.0
    %1092 = vmatpush.msra.mxu0 0.0
    %1093 = vmatpush.msra.mxu0 0.0
    %1094 = vmatpush.msra.mxu0 0.0
    %1095 = vmatpush.msra.mxu0 0.0
    %1096 = vmatpush.msra.mxu0 %v468
    %1097 = vmatpush.msra.mxu0 %v467
    %1098 = vmatmul.f32.gmra.mxu0 %v1077
    %v1099 = vpop.f32.mrf.mxu0
    %v1100 = vadd.f32 0.0, %v1099
    %1101 = vmatmul.f32.gmra.mxu0 %v1080
    %v1102 = vpop.f32.mrf.mxu0
    %v1103 = vadd.f32 0.0, %v1102
    %1104 = vdwg.mxu0
    %v1106 = vsel %vm754, %v927, 0
    %v1109 = vsel %vm754, %v928, 0
    %1111 = vmatpush.msra.mxu0 0.0
    %1112 = vmatpush.msra.mxu0 0.0
    %1113 = vmatpush.msra.mxu0 0.0
    %1114 = vmatpush.msra.mxu0 0.0
    %1115 = vmatpush.msra.mxu0 0.0
    %1116 = vmatpush.msra.mxu0 0.0
    %1117 = vmatpush.msra.mxu0 0.0
    %1118 = vmatpush.msra.mxu0 0.0
    %1119 = vmatpush.msra.mxu0 0.0
    %1120 = vmatpush.msra.mxu0 0.0
    %1121 = vmatpush.msra.mxu0 0.0
    %1122 = vmatpush.msra.mxu0 0.0
    %1123 = vmatpush.msra.mxu0 0.0
    %1124 = vmatpush.msra.mxu0 0.0
    %1125 = vmatpush.msra.mxu0 %v470
    %1126 = vmatpush.msra.mxu0 %v469
    %1127 = vmatmul.f32.gmra.mxu0 %v1106
    %v1128 = vpop.f32.mrf.mxu0
    %v1129 = vadd.f32 0.0, %v1128
    %1130 = vmatmul.f32.gmra.mxu0 %v1109
    %v1131 = vpop.f32.mrf.mxu0
    %v1132 = vadd.f32 0.0, %v1131
    %1133 = vdwg.mxu0
    %v1135 = vsel %vm754, %v929, 0
    %v1138 = vsel %vm754, %v930, 0
    %1140 = vmatpush.msra.mxu0 0.0
    %1141 = vmatpush.msra.mxu0 0.0
    %1142 = vmatpush.msra.mxu0 0.0
    %1143 = vmatpush.msra.mxu0 0.0
    %1144 = vmatpush.msra.mxu0 0.0
    %1145 = vmatpush.msra.mxu0 0.0
    %1146 = vmatpush.msra.mxu0 0.0
    %1147 = vmatpush.msra.mxu0 0.0
    %1148 = vmatpush.msra.mxu0 0.0
    %1149 = vmatpush.msra.mxu0 0.0
    %1150 = vmatpush.msra.mxu0 0.0
    %1151 = vmatpush.msra.mxu0 0.0
    %1152 = vmatpush.msra.mxu0 0.0
    %1153 = vmatpush.msra.mxu0 0.0
    %1154 = vmatpush.msra.mxu0 %v472
    %1155 = vmatpush.msra.mxu0 %v471
    %1156 = vmatmul.f32.gmra.mxu0 %v1135
    %v1157 = vpop.f32.mrf.mxu0
    %v1158 = vadd.f32 0.0, %v1157
    %1159 = vmatmul.f32.gmra.mxu0 %v1138
    %v1160 = vpop.f32.mrf.mxu0
    %v1161 = vadd.f32 0.0, %v1160
    %1162 = vdwg.mxu0
    %1163 = vst.msk [vmem:[#allocation2] sm:$0xff] %vm473, %v955
    %1164 = vst.msk [vmem:[#allocation2 + $0x8] sm:$0xff] %vm473, %v958
    %1165 = vst.msk [vmem:[#allocation2 + $0x10] sm:$0xff] %vm473, %v984
    %1166 = vst.msk [vmem:[#allocation2 + $0x18] sm:$0xff] %vm473, %v987
    %1167 = vst.msk [vmem:[#allocation2 + $0x20] sm:$0xff] %vm473, %v1013
    %1168 = vst.msk [vmem:[#allocation2 + $0x28] sm:$0xff] %vm473, %v1016
    %1169 = vst.msk [vmem:[#allocation2 + $0x30] sm:$0xff] %vm473, %v1042
    %1170 = vst.msk [vmem:[#allocation2 + $0x38] sm:$0xff] %vm473, %v1045
    %1171 = vst.msk [vmem:[#allocation2 + $0x40] sm:$0xff] %vm473, %v1071
    %1172 = vst.msk [vmem:[#allocation2 + $0x48] sm:$0xff] %vm473, %v1074
    %1173 = vst.msk [vmem:[#allocation2 + $0x50] sm:$0xff] %vm473, %v1100
    %1174 = vst.msk [vmem:[#allocation2 + $0x58] sm:$0xff] %vm473, %v1103
    %1175 = vst.msk [vmem:[#allocation2 + $0x60] sm:$0xff] %vm473, %v1129
    %1176 = vst.msk [vmem:[#allocation2 + $0x68] sm:$0xff] %vm473, %v1132
    %1177 = vst.msk [vmem:[#allocation2 + $0x70] sm:$0xff] %vm473, %v1158
    %1178 = vst.msk [vmem:[#allocation2 + $0x78] sm:$0xff] %vm473, %v1161
    %1179 = vrot.lane.b32.xlu0 %v232, 96
    %v1180 = vpop.permute.xlu0 %1179
    %1181 = vrot.lane.b32.xlu0 %v235, 96
    %v1182 = vpop.permute.xlu0 %1181
    %1183 = vrot.lane.b32.xlu0 %v441, 96
    %v1184 = vpop.permute.xlu0 %1183
    %1185 = vrot.lane.b32.xlu0 %v442, 96
    %v1186 = vpop.permute.xlu0 %1185
    %v1187 = vsel %vm473, %v1180, 0
    %v1189 = vsel %vm473, %v1182, 0
    %v1191 = vsel %vm473, %v1184, 0
    %v1193 = vsel %vm473, %v1186, 0
    %1195 = vmatpush.xpose.msra.mxu0 0.0
    %1196 = vmatpush.xpose.msra.mxu0 0.0
    %1197 = vmatpush.xpose.msra.mxu0 0.0
    %1198 = vmatpush.xpose.msra.mxu0 0.0
    %1199 = vmatpush.xpose.msra.mxu0 0.0
    %1200 = vmatpush.xpose.msra.mxu0 0.0
    %1201 = vmatpush.xpose.msra.mxu0 0.0
    %1202 = vmatpush.xpose.msra.mxu0 0.0
    %1203 = vmatpush.xpose.msra.mxu0 0.0
    %1204 = vmatpush.xpose.msra.mxu0 0.0
    %1205 = vmatpush.xpose.msra.mxu0 0.0
    %1206 = vmatpush.xpose.msra.mxu0 0.0
    %1207 = vmatpush.xpose.msra.mxu0 0.0
    %1208 = vmatpush.xpose.msra.mxu0 0.0
    %1209 = vmatpush.xpose.msra.mxu0 %v1193
    %1210 = vmatpush.xpose.msra.mxu0 %v1191
    %1211 = vmatmul.f32.gmra.mxu0 %v1187
    %v1212 = vpop.f32.mrf.mxu0
    %v1213 = vadd.f32 0.0, %v1212
    %1214 = vmatmul.f32.gmra.mxu0 %v1189
    %v1215 = vpop.f32.mrf.mxu0
    %v1216 = vadd.f32 0.0, %v1215
    %1217 = vdwg.mxu0
    %1218 = vrot.lane.b32.xlu0 %v238, 96
    %v1219 = vpop.permute.xlu0 %1218
    %1220 = vrot.lane.b32.xlu0 %v241, 96
    %v1221 = vpop.permute.xlu0 %1220
    %1222 = vrot.lane.b32.xlu0 %v443, 96
    %v1223 = vpop.permute.xlu0 %1222
    %1224 = vrot.lane.b32.xlu0 %v444, 96
    %v1225 = vpop.permute.xlu0 %1224
    %v1226 = vsel %vm473, %v1219, 0
    %v1228 = vsel %vm473, %v1221, 0
    %v1230 = vsel %vm473, %v1223, 0
    %v1232 = vsel %vm473, %v1225, 0
    %1234 = vmatpush.xpose.msra.mxu0 0.0
    %1235 = vmatpush.xpose.msra.mxu0 0.0
    %1236 = vmatpush.xpose.msra.mxu0 0.0
    %1237 = vmatpush.xpose.msra.mxu0 0.0
    %1238 = vmatpush.xpose.msra.mxu0 0.0
    %1239 = vmatpush.xpose.msra.mxu0 0.0
    %1240 = vmatpush.xpose.msra.mxu0 0.0
    %1241 = vmatpush.xpose.msra.mxu0 0.0
    %1242 = vmatpush.xpose.msra.mxu0 0.0
    %1243 = vmatpush.xpose.msra.mxu0 0.0
    %1244 = vmatpush.xpose.msra.mxu0 0.0
    %1245 = vmatpush.xpose.msra.mxu0 0.0
    %1246 = vmatpush.xpose.msra.mxu0 0.0
    %1247 = vmatpush.xpose.msra.mxu0 0.0
    %1248 = vmatpush.xpose.msra.mxu0 %v1232
    %1249 = vmatpush.xpose.msra.mxu0 %v1230
    %1250 = vmatmul.f32.gmra.mxu0 %v1226
    %v1251 = vpop.f32.mrf.mxu0
    %v1252 = vadd.f32 0.0, %v1251
    %1253 = vmatmul.f32.gmra.mxu0 %v1228
    %v1254 = vpop.f32.mrf.mxu0
    %v1255 = vadd.f32 0.0, %v1254
    %1256 = vdwg.mxu0
    %1257 = vrot.lane.b32.xlu0 %v244, 96
    %v1258 = vpop.permute.xlu0 %1257
    %1259 = vrot.lane.b32.xlu0 %v247, 96
    %v1260 = vpop.permute.xlu0 %1259
    %1261 = vrot.lane.b32.xlu0 %v445, 96
    %v1262 = vpop.permute.xlu0 %1261
    %1263 = vrot.lane.b32.xlu0 %v446, 96
    %v1264 = vpop.permute.xlu0 %1263
    %v1265 = vsel %vm473, %v1258, 0
    %v1267 = vsel %vm473, %v1260, 0
    %v1269 = vsel %vm473, %v1262, 0
    %v1271 = vsel %vm473, %v1264, 0
    %1273 = vmatpush.xpose.msra.mxu0 0.0
    %1274 = vmatpush.xpose.msra.mxu0 0.0
    %1275 = vmatpush.xpose.msra.mxu0 0.0
    %1276 = vmatpush.xpose.msra.mxu0 0.0
    %1277 = vmatpush.xpose.msra.mxu0 0.0
    %1278 = vmatpush.xpose.msra.mxu0 0.0
    %1279 = vmatpush.xpose.msra.mxu0 0.0
    %1280 = vmatpush.xpose.msra.mxu0 0.0
    %1281 = vmatpush.xpose.msra.mxu0 0.0
    %1282 = vmatpush.xpose.msra.mxu0 0.0
    %1283 = vmatpush.xpose.msra.mxu0 0.0
    %1284 = vmatpush.xpose.msra.mxu0 0.0
    %1285 = vmatpush.xpose.msra.mxu0 0.0
    %1286 = vmatpush.xpose.msra.mxu0 0.0
    %1287 = vmatpush.xpose.msra.mxu0 %v1271
    %1288 = vmatpush.xpose.msra.mxu0 %v1269
    %1289 = vmatmul.f32.gmra.mxu0 %v1265
    %v1290 = vpop.f32.mrf.mxu0
    %v1291 = vadd.f32 0.0, %v1290
    %1292 = vmatmul.f32.gmra.mxu0 %v1267
    %v1293 = vpop.f32.mrf.mxu0
    %v1294 = vadd.f32 0.0, %v1293
    %1295 = vdwg.mxu0
    %1296 = vrot.lane.b32.xlu0 %v250, 96
    %v1297 = vpop.permute.xlu0 %1296
    %1298 = vrot.lane.b32.xlu0 %v253, 96
    %v1299 = vpop.permute.xlu0 %1298
    %1300 = vrot.lane.b32.xlu0 %v447, 96
    %v1301 = vpop.permute.xlu0 %1300
    %1302 = vrot.lane.b32.xlu0 %v448, 96
    %v1303 = vpop.permute.xlu0 %1302
    %v1304 = vsel %vm473, %v1297, 0
    %v1306 = vsel %vm473, %v1299, 0
    %v1308 = vsel %vm473, %v1301, 0
    %v1310 = vsel %vm473, %v1303, 0
    %1312 = vmatpush.xpose.msra.mxu0 0.0
    %1313 = vmatpush.xpose.msra.mxu0 0.0
    %1314 = vmatpush.xpose.msra.mxu0 0.0
    %1315 = vmatpush.xpose.msra.mxu0 0.0
    %1316 = vmatpush.xpose.msra.mxu0 0.0
    %1317 = vmatpush.xpose.msra.mxu0 0.0
    %1318 = vmatpush.xpose.msra.mxu0 0.0
    %1319 = vmatpush.xpose.msra.mxu0 0.0
    %1320 = vmatpush.xpose.msra.mxu0 0.0
    %1321 = vmatpush.xpose.msra.mxu0 0.0
    %1322 = vmatpush.xpose.msra.mxu0 0.0
    %1323 = vmatpush.xpose.msra.mxu0 0.0
    %1324 = vmatpush.xpose.msra.mxu0 0.0
    %1325 = vmatpush.xpose.msra.mxu0 0.0
    %1326 = vmatpush.xpose.msra.mxu0 %v1310
    %1327 = vmatpush.xpose.msra.mxu0 %v1308
    %1328 = vmatmul.f32.gmra.mxu0 %v1304
    %v1329 = vpop.f32.mrf.mxu0
    %v1330 = vadd.f32 0.0, %v1329
    %1331 = vmatmul.f32.gmra.mxu0 %v1306
    %v1332 = vpop.f32.mrf.mxu0
    %v1333 = vadd.f32 0.0, %v1332
    %1334 = vdwg.mxu0
    %1335 = vrot.lane.b32.xlu0 %v256, 96
    %v1336 = vpop.permute.xlu0 %1335
    %1337 = vrot.lane.b32.xlu0 %v259, 96
    %v1338 = vpop.permute.xlu0 %1337
    %1339 = vrot.lane.b32.xlu0 %v449, 96
    %v1340 = vpop.permute.xlu0 %1339
    %1341 = vrot.lane.b32.xlu0 %v450, 96
    %v1342 = vpop.permute.xlu0 %1341
    %v1343 = vsel %vm473, %v1336, 0
    %v1345 = vsel %vm473, %v1338, 0
    %v1347 = vsel %vm473, %v1340, 0
    %v1349 = vsel %vm473, %v1342, 0
    %1351 = vmatpush.xpose.msra.mxu0 0.0
    %1352 = vmatpush.xpose.msra.mxu0 0.0
    %1353 = vmatpush.xpose.msra.mxu0 0.0
    %1354 = vmatpush.xpose.msra.mxu0 0.0
    %1355 = vmatpush.xpose.msra.mxu0 0.0
    %1356 = vmatpush.xpose.msra.mxu0 0.0
    %1357 = vmatpush.xpose.msra.mxu0 0.0
    %1358 = vmatpush.xpose.msra.mxu0 0.0
    %1359 = vmatpush.xpose.msra.mxu0 0.0
    %1360 = vmatpush.xpose.msra.mxu0 0.0
    %1361 = vmatpush.xpose.msra.mxu0 0.0
    %1362 = vmatpush.xpose.msra.mxu0 0.0
    %1363 = vmatpush.xpose.msra.mxu0 0.0
    %1364 = vmatpush.xpose.msra.mxu0 0.0
    %1365 = vmatpush.xpose.msra.mxu0 %v1349
    %1366 = vmatpush.xpose.msra.mxu0 %v1347
    %1367 = vmatmul.f32.gmra.mxu0 %v1343
    %v1368 = vpop.f32.mrf.mxu0
    %v1369 = vadd.f32 0.0, %v1368
    %1370 = vmatmul.f32.gmra.mxu0 %v1345
    %v1371 = vpop.f32.mrf.mxu0
    %v1372 = vadd.f32 0.0, %v1371
    %1373 = vdwg.mxu0
    %1374 = vrot.lane.b32.xlu0 %v262, 96
    %v1375 = vpop.permute.xlu0 %1374
    %1376 = vrot.lane.b32.xlu0 %v265, 96
    %v1377 = vpop.permute.xlu0 %1376
    %1378 = vrot.lane.b32.xlu0 %v451, 96
    %v1379 = vpop.permute.xlu0 %1378
    %1380 = vrot.lane.b32.xlu0 %v452, 96
    %v1381 = vpop.permute.xlu0 %1380
    %v1382 = vsel %vm473, %v1375, 0
    %v1384 = vsel %vm473, %v1377, 0
    %v1386 = vsel %vm473, %v1379, 0
    %v1388 = vsel %vm473, %v1381, 0
    %1390 = vmatpush.xpose.msra.mxu0 0.0
    %1391 = vmatpush.xpose.msra.mxu0 0.0
    %1392 = vmatpush.xpose.msra.mxu0 0.0
    %1393 = vmatpush.xpose.msra.mxu0 0.0
    %1394 = vmatpush.xpose.msra.mxu0 0.0
    %1395 = vmatpush.xpose.msra.mxu0 0.0
    %1396 = vmatpush.xpose.msra.mxu0 0.0
    %1397 = vmatpush.xpose.msra.mxu0 0.0
    %1398 = vmatpush.xpose.msra.mxu0 0.0
    %1399 = vmatpush.xpose.msra.mxu0 0.0
    %1400 = vmatpush.xpose.msra.mxu0 0.0
    %1401 = vmatpush.xpose.msra.mxu0 0.0
    %1402 = vmatpush.xpose.msra.mxu0 0.0
    %1403 = vmatpush.xpose.msra.mxu0 0.0
    %1404 = vmatpush.xpose.msra.mxu0 %v1388
    %1405 = vmatpush.xpose.msra.mxu0 %v1386
    %1406 = vmatmul.f32.gmra.mxu0 %v1382
    %v1407 = vpop.f32.mrf.mxu0
    %v1408 = vadd.f32 0.0, %v1407
    %1409 = vmatmul.f32.gmra.mxu0 %v1384
    %v1410 = vpop.f32.mrf.mxu0
    %v1411 = vadd.f32 0.0, %v1410
    %1412 = vdwg.mxu0
    %1413 = vrot.lane.b32.xlu0 %v268, 96
    %v1414 = vpop.permute.xlu0 %1413
    %1415 = vrot.lane.b32.xlu0 %v271, 96
    %v1416 = vpop.permute.xlu0 %1415
    %1417 = vrot.lane.b32.xlu0 %v453, 96
    %v1418 = vpop.permute.xlu0 %1417
    %1419 = vrot.lane.b32.xlu0 %v454, 96
    %v1420 = vpop.permute.xlu0 %1419
    %v1421 = vsel %vm473, %v1414, 0
    %v1423 = vsel %vm473, %v1416, 0
    %v1425 = vsel %vm473, %v1418, 0
    %v1427 = vsel %vm473, %v1420, 0
    %1429 = vmatpush.xpose.msra.mxu0 0.0
    %1430 = vmatpush.xpose.msra.mxu0 0.0
    %1431 = vmatpush.xpose.msra.mxu0 0.0
    %1432 = vmatpush.xpose.msra.mxu0 0.0
    %1433 = vmatpush.xpose.msra.mxu0 0.0
    %1434 = vmatpush.xpose.msra.mxu0 0.0
    %1435 = vmatpush.xpose.msra.mxu0 0.0
    %1436 = vmatpush.xpose.msra.mxu0 0.0
    %1437 = vmatpush.xpose.msra.mxu0 0.0
    %1438 = vmatpush.xpose.msra.mxu0 0.0
    %1439 = vmatpush.xpose.msra.mxu0 0.0
    %1440 = vmatpush.xpose.msra.mxu0 0.0
    %1441 = vmatpush.xpose.msra.mxu0 0.0
    %1442 = vmatpush.xpose.msra.mxu0 0.0
    %1443 = vmatpush.xpose.msra.mxu0 %v1427
    %1444 = vmatpush.xpose.msra.mxu0 %v1425
    %1445 = vmatmul.f32.gmra.mxu0 %v1421
    %v1446 = vpop.f32.mrf.mxu0
    %v1447 = vadd.f32 0.0, %v1446
    %1448 = vmatmul.f32.gmra.mxu0 %v1423
    %v1449 = vpop.f32.mrf.mxu0
    %v1450 = vadd.f32 0.0, %v1449
    %1451 = vdwg.mxu0
    %1452 = vrot.lane.b32.xlu0 %v274, 96
    %v1453 = vpop.permute.xlu0 %1452
    %1454 = vrot.lane.b32.xlu0 %v277, 96
    %v1455 = vpop.permute.xlu0 %1454
    %1456 = vrot.lane.b32.xlu0 %v455, 96
    %v1457 = vpop.permute.xlu0 %1456
    %1458 = vrot.lane.b32.xlu0 %v456, 96
    %v1459 = vpop.permute.xlu0 %1458
    %v1460 = vsel %vm473, %v1453, 0
    %v1462 = vsel %vm473, %v1455, 0
    %v1464 = vsel %vm473, %v1457, 0
    %v1466 = vsel %vm473, %v1459, 0
    %1468 = vmatpush.xpose.msra.mxu0 0.0
    %1469 = vmatpush.xpose.msra.mxu0 0.0
    %1470 = vmatpush.xpose.msra.mxu0 0.0
    %1471 = vmatpush.xpose.msra.mxu0 0.0
    %1472 = vmatpush.xpose.msra.mxu0 0.0
    %1473 = vmatpush.xpose.msra.mxu0 0.0
    %1474 = vmatpush.xpose.msra.mxu0 0.0
    %1475 = vmatpush.xpose.msra.mxu0 0.0
    %1476 = vmatpush.xpose.msra.mxu0 0.0
    %1477 = vmatpush.xpose.msra.mxu0 0.0
    %1478 = vmatpush.xpose.msra.mxu0 0.0
    %1479 = vmatpush.xpose.msra.mxu0 0.0
    %1480 = vmatpush.xpose.msra.mxu0 0.0
    %1481 = vmatpush.xpose.msra.mxu0 0.0
    %1482 = vmatpush.xpose.msra.mxu0 %v1466
    %1483 = vmatpush.xpose.msra.mxu0 %v1464
    %1484 = vmatmul.f32.gmra.mxu0 %v1460
    %v1485 = vpop.f32.mrf.mxu0
    %v1486 = vadd.f32 0.0, %v1485
    %1487 = vmatmul.f32.gmra.mxu0 %v1462
    %v1488 = vpop.f32.mrf.mxu0
    %v1489 = vadd.f32 0.0, %v1488
    %1490 = vdwg.mxu0
    %v1491 = vsel %vm754, %v1213, -inf
    %1492 = vmax.xlane.f32.xlu0 %v1491
    %v1493 = vpop.xlane.xlu0 %1492
    %v1494 = vsel %vm754, %v1216, -inf
    %1495 = vmax.xlane.f32.xlu0 %v1494
    %v1496 = vpop.xlane.xlu0 %1495
    %v1497 = vsel %vm754, %v1252, -inf
    %1498 = vmax.xlane.f32.xlu0 %v1497
    %v1499 = vpop.xlane.xlu0 %1498
    %v1500 = vsel %vm754, %v1255, -inf
    %1501 = vmax.xlane.f32.xlu0 %v1500
    %v1502 = vpop.xlane.xlu0 %1501
    %v1503 = vsel %vm754, %v1291, -inf
    %1504 = vmax.xlane.f32.xlu0 %v1503
    %v1505 = vpop.xlane.xlu0 %1504
    %v1506 = vsel %vm754, %v1294, -inf
    %1507 = vmax.xlane.f32.xlu0 %v1506
    %v1508 = vpop.xlane.xlu0 %1507
    %v1509 = vsel %vm754, %v1330, -inf
    %1510 = vmax.xlane.f32.xlu0 %v1509
    %v1511 = vpop.xlane.xlu0 %1510
    %v1512 = vsel %vm754, %v1333, -inf
    %1513 = vmax.xlane.f32.xlu0 %v1512
    %v1514 = vpop.xlane.xlu0 %1513
    %v1515 = vsel %vm754, %v1369, -inf
    %1516 = vmax.xlane.f32.xlu0 %v1515
    %v1517 = vpop.xlane.xlu0 %1516
    %v1518 = vsel %vm754, %v1372, -inf
    %1519 = vmax.xlane.f32.xlu0 %v1518
    %v1520 = vpop.xlane.xlu0 %1519
    %v1521 = vsel %vm754, %v1408, -inf
    %1522 = vmax.xlane.f32.xlu0 %v1521
    %v1523 = vpop.xlane.xlu0 %1522
    %v1524 = vsel %vm754, %v1411, -inf
    %1525 = vmax.xlane.f32.xlu0 %v1524
    %v1526 = vpop.xlane.xlu0 %1525
    %v1527 = vsel %vm754, %v1447, -inf
    %1528 = vmax.xlane.f32.xlu0 %v1527
    %v1529 = vpop.xlane.xlu0 %1528
    %v1530 = vsel %vm754, %v1450, -inf
    %1531 = vmax.xlane.f32.xlu0 %v1530
    %v1532 = vpop.xlane.xlu0 %1531
    %v1533 = vsel %vm754, %v1486, -inf
    %1534 = vmax.xlane.f32.xlu0 %v1533
    %v1535 = vpop.xlane.xlu0 %1534
    %v1536 = vsel %vm754, %v1489, -inf
    %1537 = vmax.xlane.f32.xlu0 %v1536
    %v1538 = vpop.xlane.xlu0 %1537
    %v1539 = vsub.f32 %v1213, %v1493
    %v1540 = vsub.f32 %v1216, %v1496
    %v1541 = vsub.f32 %v1252, %v1499
    %v1542 = vsub.f32 %v1255, %v1502
    %v1543 = vsub.f32 %v1291, %v1505
    %v1544 = vsub.f32 %v1294, %v1508
    %v1545 = vsub.f32 %v1330, %v1511
    %v1546 = vsub.f32 %v1333, %v1514
    %v1547 = vsub.f32 %v1369, %v1517
    %v1548 = vsub.f32 %v1372, %v1520
    %v1549 = vsub.f32 %v1408, %v1523
    %v1550 = vsub.f32 %v1411, %v1526
    %v1551 = vsub.f32 %v1447, %v1529
    %v1552 = vsub.f32 %v1450, %v1532
    %v1553 = vsub.f32 %v1486, %v1535
    %v1554 = vsub.f32 %v1489, %v1538
    %v1555 = vmul.f32 %v1539, 1.442695
    %v1556 = vpow.pop %v1555
    %v1557 = vmul.f32 %v1540, 1.442695
    %v1558 = vpow.pop %v1557
    %v1559 = vmul.f32 %v1541, 1.442695
    %v1560 = vpow.pop %v1559
    %v1561 = vmul.f32 %v1542, 1.442695
    %v1562 = vpow.pop %v1561
    %v1563 = vmul.f32 %v1543, 1.442695
    %v1564 = vpow.pop %v1563
    %v1565 = vmul.f32 %v1544, 1.442695
    %v1566 = vpow.pop %v1565
    %v1567 = vmul.f32 %v1545, 1.442695
    %v1568 = vpow.pop %v1567
    %v1569 = vmul.f32 %v1546, 1.442695
    %v1570 = vpow.pop %v1569
    %v1571 = vmul.f32 %v1547, 1.442695
    %v1572 = vpow.pop %v1571
    %v1573 = vmul.f32 %v1548, 1.442695
    %v1574 = vpow.pop %v1573
    %v1575 = vmul.f32 %v1549, 1.442695
    %v1576 = vpow.pop %v1575
    %v1577 = vmul.f32 %v1550, 1.442695
    %v1578 = vpow.pop %v1577
    %v1579 = vmul.f32 %v1551, 1.442695
    %v1580 = vpow.pop %v1579
    %v1581 = vmul.f32 %v1552, 1.442695
    %v1582 = vpow.pop %v1581
    %v1583 = vmul.f32 %v1553, 1.442695
    %v1584 = vpow.pop %v1583
    %v1585 = vmul.f32 %v1554, 1.442695
    %v1586 = vpow.pop %v1585
    %v1587 = vsel %vm754, %v1556, 0.0
    %1588 = vadd.xlane.f32.xlu0 %v1587
    %v1589 = vpop.xlane.xlu0 %1588
    %v1590 = vsel %vm754, %v1558, 0.0
    %1591 = vadd.xlane.f32.xlu0 %v1590
    %v1592 = vpop.xlane.xlu0 %1591
    %v1593 = vsel %vm754, %v1560, 0.0
    %1594 = vadd.xlane.f32.xlu0 %v1593
    %v1595 = vpop.xlane.xlu0 %1594
    %v1596 = vsel %vm754, %v1562, 0.0
    %1597 = vadd.xlane.f32.xlu0 %v1596
    %v1598 = vpop.xlane.xlu0 %1597
    %v1599 = vsel %vm754, %v1564, 0.0
    %1600 = vadd.xlane.f32.xlu0 %v1599
    %v1601 = vpop.xlane.xlu0 %1600
    %v1602 = vsel %vm754, %v1566, 0.0
    %1603 = vadd.xlane.f32.xlu0 %v1602
    %v1604 = vpop.xlane.xlu0 %1603
    %v1605 = vsel %vm754, %v1568, 0.0
    %1606 = vadd.xlane.f32.xlu0 %v1605
    %v1607 = vpop.xlane.xlu0 %1606
    %v1608 = vsel %vm754, %v1570, 0.0
    %1609 = vadd.xlane.f32.xlu0 %v1608
    %v1610 = vpop.xlane.xlu0 %1609
    %v1611 = vsel %vm754, %v1572, 0.0
    %1612 = vadd.xlane.f32.xlu0 %v1611
    %v1613 = vpop.xlane.xlu0 %1612
    %v1614 = vsel %vm754, %v1574, 0.0
    %1615 = vadd.xlane.f32.xlu0 %v1614
    %v1616 = vpop.xlane.xlu0 %1615
    %v1617 = vsel %vm754, %v1576, 0.0
    %1618 = vadd.xlane.f32.xlu0 %v1617
    %v1619 = vpop.xlane.xlu0 %1618
    %v1620 = vsel %vm754, %v1578, 0.0
    %1621 = vadd.xlane.f32.xlu0 %v1620
    %v1622 = vpop.xlane.xlu0 %1621
    %v1623 = vsel %vm754, %v1580, 0.0
    %1624 = vadd.xlane.f32.xlu0 %v1623
    %v1625 = vpop.xlane.xlu0 %1624
    %v1626 = vsel %vm754, %v1582, 0.0
    %1627 = vadd.xlane.f32.xlu0 %v1626
    %v1628 = vpop.xlane.xlu0 %1627
    %v1629 = vsel %vm754, %v1584, 0.0
    %1630 = vadd.xlane.f32.xlu0 %v1629
    %v1631 = vpop.xlane.xlu0 %1630
    %v1632 = vsel %vm754, %v1586, 0.0
    %1633 = vadd.xlane.f32.xlu0 %v1632
    %v1634 = vpop.xlane.xlu0 %1633
    %v1635 = vrcp.pop %v1589
    %v1636 = vrcp.pop %v1592
    %v1637 = vrcp.pop %v1595
    %v1638 = vrcp.pop %v1598
    %v1639 = vrcp.pop %v1601
    %v1640 = vrcp.pop %v1604
    %v1641 = vrcp.pop %v1607
    %v1642 = vrcp.pop %v1610
    %v1643 = vrcp.pop %v1613
    %v1644 = vrcp.pop %v1616
    %v1645 = vrcp.pop %v1619
    %v1646 = vrcp.pop %v1622
    %v1647 = vrcp.pop %v1625
    %v1648 = vrcp.pop %v1628
    %v1649 = vrcp.pop %v1631
    %v1650 = vrcp.pop %v1634
    %v1651 = vmul.f32 %v1556, %v1635
    %v1652 = vmul.f32 %v1558, %v1636
    %v1653 = vmul.f32 %v1560, %v1637
    %v1654 = vmul.f32 %v1562, %v1638
    %v1655 = vmul.f32 %v1564, %v1639
    %v1656 = vmul.f32 %v1566, %v1640
    %v1657 = vmul.f32 %v1568, %v1641
    %v1658 = vmul.f32 %v1570, %v1642
    %v1659 = vmul.f32 %v1572, %v1643
    %v1660 = vmul.f32 %v1574, %v1644
    %v1661 = vmul.f32 %v1576, %v1645
    %v1662 = vmul.f32 %v1578, %v1646
    %v1663 = vmul.f32 %v1580, %v1647
    %v1664 = vmul.f32 %v1582, %v1648
    %v1665 = vmul.f32 %v1584, %v1649
    %v1666 = vmul.f32 %v1586, %v1650
    %1669 = vrot.lane.b32.xlu0 %v457, 96
    %v1670 = vpop.permute.xlu0 %1669
    %1671 = vrot.lane.b32.xlu0 %v458, 96
    %v1672 = vpop.permute.xlu0 %1671
    %v1676 = vsel %vm754, %v1651, 0
    %v1679 = vsel %vm754, %v1652, 0
    %1681 = vmatpush.msra.mxu0 0.0
    %1682 = vmatpush.msra.mxu0 0.0
    %1683 = vmatpush.msra.mxu0 0.0
    %1684 = vmatpush.msra.mxu0 0.0
    %1685 = vmatpush.msra.mxu0 0.0
    %1686 = vmatpush.msra.mxu0 0.0
    %1687 = vmatpush.msra.mxu0 0.0
    %1688 = vmatpush.msra.mxu0 0.0
    %1689 = vmatpush.msra.mxu0 0.0
    %1690 = vmatpush.msra.mxu0 0.0
    %1691 = vmatpush.msra.mxu0 0.0
    %1692 = vmatpush.msra.mxu0 0.0
    %1693 = vmatpush.msra.mxu0 0.0
    %1694 = vmatpush.msra.mxu0 0.0
    %1695 = vmatpush.msra.mxu0 %v1672
    %1696 = vmatpush.msra.mxu0 %v1670
    %1697 = vmatmul.f32.gmra.mxu0 %v1676
    %v1698 = vpop.f32.mrf.mxu0
    %v1699 = vadd.f32 0.0, %v1698
    %1700 = vmatmul.f32.gmra.mxu0 %v1679
    %v1701 = vpop.f32.mrf.mxu0
    %v1702 = vadd.f32 0.0, %v1701
    %1703 = vdwg.mxu0
    %1706 = vrot.lane.b32.xlu0 %v459, 96
    %v1707 = vpop.permute.xlu0 %1706
    %1708 = vrot.lane.b32.xlu0 %v460, 96
    %v1709 = vpop.permute.xlu0 %1708
    %v1713 = vsel %vm754, %v1653, 0
    %v1716 = vsel %vm754, %v1654, 0
    %1718 = vmatpush.msra.mxu0 0.0
    %1719 = vmatpush.msra.mxu0 0.0
    %1720 = vmatpush.msra.mxu0 0.0
    %1721 = vmatpush.msra.mxu0 0.0
    %1722 = vmatpush.msra.mxu0 0.0
    %1723 = vmatpush.msra.mxu0 0.0
    %1724 = vmatpush.msra.mxu0 0.0
    %1725 = vmatpush.msra.mxu0 0.0
    %1726 = vmatpush.msra.mxu0 0.0
    %1727 = vmatpush.msra.mxu0 0.0
    %1728 = vmatpush.msra.mxu0 0.0
    %1729 = vmatpush.msra.mxu0 0.0
    %1730 = vmatpush.msra.mxu0 0.0
    %1731 = vmatpush.msra.mxu0 0.0
    %1732 = vmatpush.msra.mxu0 %v1709
    %1733 = vmatpush.msra.mxu0 %v1707
    %1734 = vmatmul.f32.gmra.mxu0 %v1713
    %v1735 = vpop.f32.mrf.mxu0
    %v1736 = vadd.f32 0.0, %v1735
    %1737 = vmatmul.f32.gmra.mxu0 %v1716
    %v1738 = vpop.f32.mrf.mxu0
    %v1739 = vadd.f32 0.0, %v1738
    %1740 = vdwg.mxu0
    %1743 = vrot.lane.b32.xlu0 %v461, 96
    %v1744 = vpop.permute.xlu0 %1743
    %1745 = vrot.lane.b32.xlu0 %v462, 96
    %v1746 = vpop.permute.xlu0 %1745
    %v1750 = vsel %vm754, %v1655, 0
    %v1753 = vsel %vm754, %v1656, 0
    %1755 = vmatpush.msra.mxu0 0.0
    %1756 = vmatpush.msra.mxu0 0.0
    %1757 = vmatpush.msra.mxu0 0.0
    %1758 = vmatpush.msra.mxu0 0.0
    %1759 = vmatpush.msra.mxu0 0.0
    %1760 = vmatpush.msra.mxu0 0.0
    %1761 = vmatpush.msra.mxu0 0.0
    %1762 = vmatpush.msra.mxu0 0.0
    %1763 = vmatpush.msra.mxu0 0.0
    %1764 = vmatpush.msra.mxu0 0.0
    %1765 = vmatpush.msra.mxu0 0.0
    %1766 = vmatpush.msra.mxu0 0.0
    %1767 = vmatpush.msra.mxu0 0.0
    %1768 = vmatpush.msra.mxu0 0.0
    %1769 = vmatpush.msra.mxu0 %v1746
    %1770 = vmatpush.msra.mxu0 %v1744
    %1771 = vmatmul.f32.gmra.mxu0 %v1750
    %v1772 = vpop.f32.mrf.mxu0
    %v1773 = vadd.f32 0.0, %v1772
    %1774 = vmatmul.f32.gmra.mxu0 %v1753
    %v1775 = vpop.f32.mrf.mxu0
    %v1776 = vadd.f32 0.0, %v1775
    %1777 = vdwg.mxu0
    %1780 = vrot.lane.b32.xlu0 %v463, 96
    %v1781 = vpop.permute.xlu0 %1780
    %1782 = vrot.lane.b32.xlu0 %v464, 96
    %v1783 = vpop.permute.xlu0 %1782
    %v1787 = vsel %vm754, %v1657, 0
    %v1790 = vsel %vm754, %v1658, 0
    %1792 = vmatpush.msra.mxu0 0.0
    %1793 = vmatpush.msra.mxu0 0.0
    %1794 = vmatpush.msra.mxu0 0.0
    %1795 = vmatpush.msra.mxu0 0.0
    %1796 = vmatpush.msra.mxu0 0.0
    %1797 = vmatpush.msra.mxu0 0.0
    %1798 = vmatpush.msra.mxu0 0.0
    %1799 = vmatpush.msra.mxu0 0.0
    %1800 = vmatpush.msra.mxu0 0.0
    %1801 = vmatpush.msra.mxu0 0.0
    %1802 = vmatpush.msra.mxu0 0.0
    %1803 = vmatpush.msra.mxu0 0.0
    %1804 = vmatpush.msra.mxu0 0.0
    %1805 = vmatpush.msra.mxu0 0.0
    %1806 = vmatpush.msra.mxu0 %v1783
    %1807 = vmatpush.msra.mxu0 %v1781
    %1808 = vmatmul.f32.gmra.mxu0 %v1787
    %v1809 = vpop.f32.mrf.mxu0
    %v1810 = vadd.f32 0.0, %v1809
    %1811 = vmatmul.f32.gmra.mxu0 %v1790
    %v1812 = vpop.f32.mrf.mxu0
    %v1813 = vadd.f32 0.0, %v1812
    %1814 = vdwg.mxu0
    %1817 = vrot.lane.b32.xlu0 %v465, 96
    %v1818 = vpop.permute.xlu0 %1817
    %1819 = vrot.lane.b32.xlu0 %v466, 96
    %v1820 = vpop.permute.xlu0 %1819
    %v1824 = vsel %vm754, %v1659, 0
    %v1827 = vsel %vm754, %v1660, 0
    %1829 = vmatpush.msra.mxu0 0.0
    %1830 = vmatpush.msra.mxu0 0.0
    %1831 = vmatpush.msra.mxu0 0.0
    %1832 = vmatpush.msra.mxu0 0.0
    %1833 = vmatpush.msra.mxu0 0.0
    %1834 = vmatpush.msra.mxu0 0.0
    %1835 = vmatpush.msra.mxu0 0.0
    %1836 = vmatpush.msra.mxu0 0.0
    %1837 = vmatpush.msra.mxu0 0.0
    %1838 = vmatpush.msra.mxu0 0.0
    %1839 = vmatpush.msra.mxu0 0.0
    %1840 = vmatpush.msra.mxu0 0.0
    %1841 = vmatpush.msra.mxu0 0.0
    %1842 = vmatpush.msra.mxu0 0.0
    %1843 = vmatpush.msra.mxu0 %v1820
    %1844 = vmatpush.msra.mxu0 %v1818
    %1845 = vmatmul.f32.gmra.mxu0 %v1824
    %v1846 = vpop.f32.mrf.mxu0
    %v1847 = vadd.f32 0.0, %v1846
    %1848 = vmatmul.f32.gmra.mxu0 %v1827
    %v1849 = vpop.f32.mrf.mxu0
    %v1850 = vadd.f32 0.0, %v1849
    %1851 = vdwg.mxu0
    %1854 = vrot.lane.b32.xlu0 %v467, 96
    %v1855 = vpop.permute.xlu0 %1854
    %1856 = vrot.lane.b32.xlu0 %v468, 96
    %v1857 = vpop.permute.xlu0 %1856
    %v1861 = vsel %vm754, %v1661, 0
    %v1864 = vsel %vm754, %v1662, 0
    %1866 = vmatpush.msra.mxu0 0.0
    %1867 = vmatpush.msra.mxu0 0.0
    %1868 = vmatpush.msra.mxu0 0.0
    %1869 = vmatpush.msra.mxu0 0.0
    %1870 = vmatpush.msra.mxu0 0.0
    %1871 = vmatpush.msra.mxu0 0.0
    %1872 = vmatpush.msra.mxu0 0.0
    %1873 = vmatpush.msra.mxu0 0.0
    %1874 = vmatpush.msra.mxu0 0.0
    %1875 = vmatpush.msra.mxu0 0.0
    %1876 = vmatpush.msra.mxu0 0.0
    %1877 = vmatpush.msra.mxu0 0.0
    %1878 = vmatpush.msra.mxu0 0.0
    %1879 = vmatpush.msra.mxu0 0.0
    %1880 = vmatpush.msra.mxu0 %v1857
    %1881 = vmatpush.msra.mxu0 %v1855
    %1882 = vmatmul.f32.gmra.mxu0 %v1861
    %v1883 = vpop.f32.mrf.mxu0
    %v1884 = vadd.f32 0.0, %v1883
    %1885 = vmatmul.f32.gmra.mxu0 %v1864
    %v1886 = vpop.f32.mrf.mxu0
    %v1887 = vadd.f32 0.0, %v1886
    %1888 = vdwg.mxu0
    %1891 = vrot.lane.b32.xlu0 %v469, 96
    %v1892 = vpop.permute.xlu0 %1891
    %1893 = vrot.lane.b32.xlu0 %v470, 96
    %v1894 = vpop.permute.xlu0 %1893
    %v1898 = vsel %vm754, %v1663, 0
    %v1901 = vsel %vm754, %v1664, 0
    %1903 = vmatpush.msra.mxu0 0.0
    %1904 = vmatpush.msra.mxu0 0.0
    %1905 = vmatpush.msra.mxu0 0.0
    %1906 = vmatpush.msra.mxu0 0.0
    %1907 = vmatpush.msra.mxu0 0.0
    %1908 = vmatpush.msra.mxu0 0.0
    %1909 = vmatpush.msra.mxu0 0.0
    %1910 = vmatpush.msra.mxu0 0.0
    %1911 = vmatpush.msra.mxu0 0.0
    %1912 = vmatpush.msra.mxu0 0.0
    %1913 = vmatpush.msra.mxu0 0.0
    %1914 = vmatpush.msra.mxu0 0.0
    %1915 = vmatpush.msra.mxu0 0.0
    %1916 = vmatpush.msra.mxu0 0.0
    %1917 = vmatpush.msra.mxu0 %v1894
    %1918 = vmatpush.msra.mxu0 %v1892
    %1919 = vmatmul.f32.gmra.mxu0 %v1898
    %v1920 = vpop.f32.mrf.mxu0
    %v1921 = vadd.f32 0.0, %v1920
    %1922 = vmatmul.f32.gmra.mxu0 %v1901
    %v1923 = vpop.f32.mrf.mxu0
    %v1924 = vadd.f32 0.0, %v1923
    %1925 = vdwg.mxu0
    %1928 = vrot.lane.b32.xlu0 %v471, 96
    %v1929 = vpop.permute.xlu0 %1928
    %1930 = vrot.lane.b32.xlu0 %v472, 96
    %v1931 = vpop.permute.xlu0 %1930
    %v1935 = vsel %vm754, %v1665, 0
    %v1938 = vsel %vm754, %v1666, 0
    %1940 = vmatpush.msra.mxu0 0.0
    %1941 = vmatpush.msra.mxu0 0.0
    %1942 = vmatpush.msra.mxu0 0.0
    %1943 = vmatpush.msra.mxu0 0.0
    %1944 = vmatpush.msra.mxu0 0.0
    %1945 = vmatpush.msra.mxu0 0.0
    %1946 = vmatpush.msra.mxu0 0.0
    %1947 = vmatpush.msra.mxu0 0.0
    %1948 = vmatpush.msra.mxu0 0.0
    %1949 = vmatpush.msra.mxu0 0.0
    %1950 = vmatpush.msra.mxu0 0.0
    %1951 = vmatpush.msra.mxu0 0.0
    %1952 = vmatpush.msra.mxu0 0.0
    %1953 = vmatpush.msra.mxu0 0.0
    %1954 = vmatpush.msra.mxu0 %v1931
    %1955 = vmatpush.msra.mxu0 %v1929
    %1956 = vmatmul.f32.gmra.mxu0 %v1935
    %v1957 = vpop.f32.mrf.mxu0
    %v1958 = vadd.f32 0.0, %v1957
    %1959 = vmatmul.f32.gmra.mxu0 %v1938
    %v1960 = vpop.f32.mrf.mxu0
    %v1961 = vadd.f32 0.0, %v1960
    %1962 = vdwg.mxu0
    %1979 = vrot.lane.b32.xlu0 %v1699, 32
    %v1980 = vpop.permute.xlu0 %1979
    %1981 = vrot.lane.b32.xlu0 %v1702, 32
    %v1982 = vpop.permute.xlu0 %1981
    %1983 = vrot.lane.b32.xlu0 %v1736, 32
    %v1984 = vpop.permute.xlu0 %1983
    %1985 = vrot.lane.b32.xlu0 %v1739, 32
    %v1986 = vpop.permute.xlu0 %1985
    %1987 = vrot.lane.b32.xlu0 %v1773, 32
    %v1988 = vpop.permute.xlu0 %1987
    %1989 = vrot.lane.b32.xlu0 %v1776, 32
    %v1990 = vpop.permute.xlu0 %1989
    %1991 = vrot.lane.b32.xlu0 %v1810, 32
    %v1992 = vpop.permute.xlu0 %1991
    %1993 = vrot.lane.b32.xlu0 %v1813, 32
    %v1994 = vpop.permute.xlu0 %1993
    %1995 = vrot.lane.b32.xlu0 %v1847, 32
    %v1996 = vpop.permute.xlu0 %1995
    %1997 = vrot.lane.b32.xlu0 %v1850, 32
    %v1998 = vpop.permute.xlu0 %1997
    %1999 = vrot.lane.b32.xlu0 %v1884, 32
    %v2000 = vpop.permute.xlu0 %1999
    %2001 = vrot.lane.b32.xlu0 %v1887, 32
    %v2002 = vpop.permute.xlu0 %2001
    %2003 = vrot.lane.b32.xlu0 %v1921, 32
    %v2004 = vpop.permute.xlu0 %2003
    %2005 = vrot.lane.b32.xlu0 %v1924, 32
    %v2006 = vpop.permute.xlu0 %2005
    %2007 = vrot.lane.b32.xlu0 %v1958, 32
    %v2008 = vpop.permute.xlu0 %2007
    %2009 = vrot.lane.b32.xlu0 %v1961, 32
    %v2010 = vpop.permute.xlu0 %2009
    %vm2027 = vcmask 523520
    %2028 = vst.msk [vmem:[#allocation2] sm:$0xff] %vm2027, %v1980
    %2029 = vst.msk [vmem:[#allocation2 + $0x8] sm:$0xff] %vm2027, %v1982
    %2030 = vst.msk [vmem:[#allocation2 + $0x10] sm:$0xff] %vm2027, %v1984
    %2031 = vst.msk [vmem:[#allocation2 + $0x18] sm:$0xff] %vm2027, %v1986
    %2032 = vst.msk [vmem:[#allocation2 + $0x20] sm:$0xff] %vm2027, %v1988
    %2033 = vst.msk [vmem:[#allocation2 + $0x28] sm:$0xff] %vm2027, %v1990
    %2034 = vst.msk [vmem:[#allocation2 + $0x30] sm:$0xff] %vm2027, %v1992
    %2035 = vst.msk [vmem:[#allocation2 + $0x38] sm:$0xff] %vm2027, %v1994
    %2036 = vst.msk [vmem:[#allocation2 + $0x40] sm:$0xff] %vm2027, %v1996
    %2037 = vst.msk [vmem:[#allocation2 + $0x48] sm:$0xff] %vm2027, %v1998
    %2038 = vst.msk [vmem:[#allocation2 + $0x50] sm:$0xff] %vm2027, %v2000
    %2039 = vst.msk [vmem:[#allocation2 + $0x58] sm:$0xff] %vm2027, %v2002
    %2040 = vst.msk [vmem:[#allocation2 + $0x60] sm:$0xff] %vm2027, %v2004
    %2041 = vst.msk [vmem:[#allocation2 + $0x68] sm:$0xff] %vm2027, %v2006
    %2042 = vst.msk [vmem:[#allocation2 + $0x70] sm:$0xff] %vm2027, %v2008
    %2043 = vst.msk [vmem:[#allocation2 + $0x78] sm:$0xff] %vm2027, %v2010
    %2044 = vrot.lane.b32.xlu0 %v232, 64
    %v2045 = vpop.permute.xlu0 %2044
    %2046 = vrot.lane.b32.xlu0 %v235, 64
    %v2047 = vpop.permute.xlu0 %2046
    %2048 = vrot.lane.b32.xlu0 %v441, 64
    %v2049 = vpop.permute.xlu0 %2048
    %2050 = vrot.lane.b32.xlu0 %v442, 64
    %v2051 = vpop.permute.xlu0 %2050
    %v2052 = vsel %vm473, %v2045, 0
    %v2054 = vsel %vm473, %v2047, 0
    %v2056 = vsel %vm473, %v2049, 0
    %v2058 = vsel %vm473, %v2051, 0
    %2060 = vmatpush.xpose.msra.mxu0 0.0
    %2061 = vmatpush.xpose.msra.mxu0 0.0
    %2062 = vmatpush.xpose.msra.mxu0 0.0
    %2063 = vmatpush.xpose.msra.mxu0 0.0
    %2064 = vmatpush.xpose.msra.mxu0 0.0
    %2065 = vmatpush.xpose.msra.mxu0 0.0
    %2066 = vmatpush.xpose.msra.mxu0 0.0
    %2067 = vmatpush.xpose.msra.mxu0 0.0
    %2068 = vmatpush.xpose.msra.mxu0 0.0
    %2069 = vmatpush.xpose.msra.mxu0 0.0
    %2070 = vmatpush.xpose.msra.mxu0 0.0
    %2071 = vmatpush.xpose.msra.mxu0 0.0
    %2072 = vmatpush.xpose.msra.mxu0 0.0
    %2073 = vmatpush.xpose.msra.mxu0 0.0
    %2074 = vmatpush.xpose.msra.mxu0 %v2058
    %2075 = vmatpush.xpose.msra.mxu0 %v2056
    %2076 = vmatmul.f32.gmra.mxu0 %v2052
    %v2077 = vpop.f32.mrf.mxu0
    %v2078 = vadd.f32 0.0, %v2077
    %2079 = vmatmul.f32.gmra.mxu0 %v2054
    %v2080 = vpop.f32.mrf.mxu0
    %v2081 = vadd.f32 0.0, %v2080
    %2082 = vdwg.mxu0
    %2083 = vrot.lane.b32.xlu0 %v238, 64
    %v2084 = vpop.permute.xlu0 %2083
    %2085 = vrot.lane.b32.xlu0 %v241, 64
    %v2086 = vpop.permute.xlu0 %2085
    %2087 = vrot.lane.b32.xlu0 %v443, 64
    %v2088 = vpop.permute.xlu0 %2087
    %2089 = vrot.lane.b32.xlu0 %v444, 64
    %v2090 = vpop.permute.xlu0 %2089
    %v2091 = vsel %vm473, %v2084, 0
    %v2093 = vsel %vm473, %v2086, 0
    %v2095 = vsel %vm473, %v2088, 0
    %v2097 = vsel %vm473, %v2090, 0
    %2099 = vmatpush.xpose.msra.mxu0 0.0
    %2100 = vmatpush.xpose.msra.mxu0 0.0
    %2101 = vmatpush.xpose.msra.mxu0 0.0
    %2102 = vmatpush.xpose.msra.mxu0 0.0
    %2103 = vmatpush.xpose.msra.mxu0 0.0
    %2104 = vmatpush.xpose.msra.mxu0 0.0
    %2105 = vmatpush.xpose.msra.mxu0 0.0
    %2106 = vmatpush.xpose.msra.mxu0 0.0
    %2107 = vmatpush.xpose.msra.mxu0 0.0
    %2108 = vmatpush.xpose.msra.mxu0 0.0
    %2109 = vmatpush.xpose.msra.mxu0 0.0
    %2110 = vmatpush.xpose.msra.mxu0 0.0
    %2111 = vmatpush.xpose.msra.mxu0 0.0
    %2112 = vmatpush.xpose.msra.mxu0 0.0
    %2113 = vmatpush.xpose.msra.mxu0 %v2097
    %2114 = vmatpush.xpose.msra.mxu0 %v2095
    %2115 = vmatmul.f32.gmra.mxu0 %v2091
    %v2116 = vpop.f32.mrf.mxu0
    %v2117 = vadd.f32 0.0, %v2116
    %2118 = vmatmul.f32.gmra.mxu0 %v2093
    %v2119 = vpop.f32.mrf.mxu0
    %v2120 = vadd.f32 0.0, %v2119
    %2121 = vdwg.mxu0
    %2122 = vrot.lane.b32.xlu0 %v244, 64
    %v2123 = vpop.permute.xlu0 %2122
    %2124 = vrot.lane.b32.xlu0 %v247, 64
    %v2125 = vpop.permute.xlu0 %2124
    %2126 = vrot.lane.b32.xlu0 %v445, 64
    %v2127 = vpop.permute.xlu0 %2126
    %2128 = vrot.lane.b32.xlu0 %v446, 64
    %v2129 = vpop.permute.xlu0 %2128
    %v2130 = vsel %vm473, %v2123, 0
    %v2132 = vsel %vm473, %v2125, 0
    %v2134 = vsel %vm473, %v2127, 0
    %v2136 = vsel %vm473, %v2129, 0
    %2138 = vmatpush.xpose.msra.mxu0 0.0
    %2139 = vmatpush.xpose.msra.mxu0 0.0
    %2140 = vmatpush.xpose.msra.mxu0 0.0
    %2141 = vmatpush.xpose.msra.mxu0 0.0
    %2142 = vmatpush.xpose.msra.mxu0 0.0
    %2143 = vmatpush.xpose.msra.mxu0 0.0
    %2144 = vmatpush.xpose.msra.mxu0 0.0
    %2145 = vmatpush.xpose.msra.mxu0 0.0
    %2146 = vmatpush.xpose.msra.mxu0 0.0
    %2147 = vmatpush.xpose.msra.mxu0 0.0
    %2148 = vmatpush.xpose.msra.mxu0 0.0
    %2149 = vmatpush.xpose.msra.mxu0 0.0
    %2150 = vmatpush.xpose.msra.mxu0 0.0
    %2151 = vmatpush.xpose.msra.mxu0 0.0
    %2152 = vmatpush.xpose.msra.mxu0 %v2136
    %2153 = vmatpush.xpose.msra.mxu0 %v2134
    %2154 = vmatmul.f32.gmra.mxu0 %v2130
    %v2155 = vpop.f32.mrf.mxu0
    %v2156 = vadd.f32 0.0, %v2155
    %2157 = vmatmul.f32.gmra.mxu0 %v2132
    %v2158 = vpop.f32.mrf.mxu0
    %v2159 = vadd.f32 0.0, %v2158
    %2160 = vdwg.mxu0
    %2161 = vrot.lane.b32.xlu0 %v250, 64
    %v2162 = vpop.permute.xlu0 %2161
    %2163 = vrot.lane.b32.xlu0 %v253, 64
    %v2164 = vpop.permute.xlu0 %2163
    %2165 = vrot.lane.b32.xlu0 %v447, 64
    %v2166 = vpop.permute.xlu0 %2165
    %2167 = vrot.lane.b32.xlu0 %v448, 64
    %v2168 = vpop.permute.xlu0 %2167
    %v2169 = vsel %vm473, %v2162, 0
    %v2171 = vsel %vm473, %v2164, 0
    %v2173 = vsel %vm473, %v2166, 0
    %v2175 = vsel %vm473, %v2168, 0
    %2177 = vmatpush.xpose.msra.mxu0 0.0
    %2178 = vmatpush.xpose.msra.mxu0 0.0
    %2179 = vmatpush.xpose.msra.mxu0 0.0
    %2180 = vmatpush.xpose.msra.mxu0 0.0
    %2181 = vmatpush.xpose.msra.mxu0 0.0
    %2182 = vmatpush.xpose.msra.mxu0 0.0
    %2183 = vmatpush.xpose.msra.mxu0 0.0
    %2184 = vmatpush.xpose.msra.mxu0 0.0
    %2185 = vmatpush.xpose.msra.mxu0 0.0
    %2186 = vmatpush.xpose.msra.mxu0 0.0
    %2187 = vmatpush.xpose.msra.mxu0 0.0
    %2188 = vmatpush.xpose.msra.mxu0 0.0
    %2189 = vmatpush.xpose.msra.mxu0 0.0
    %2190 = vmatpush.xpose.msra.mxu0 0.0
    %2191 = vmatpush.xpose.msra.mxu0 %v2175
    %2192 = vmatpush.xpose.msra.mxu0 %v2173
    %2193 = vmatmul.f32.gmra.mxu0 %v2169
    %v2194 = vpop.f32.mrf.mxu0
    %v2195 = vadd.f32 0.0, %v2194
    %2196 = vmatmul.f32.gmra.mxu0 %v2171
    %v2197 = vpop.f32.mrf.mxu0
    %v2198 = vadd.f32 0.0, %v2197
    %2199 = vdwg.mxu0
    %2200 = vrot.lane.b32.xlu0 %v256, 64
    %v2201 = vpop.permute.xlu0 %2200
    %2202 = vrot.lane.b32.xlu0 %v259, 64
    %v2203 = vpop.permute.xlu0 %2202
    %2204 = vrot.lane.b32.xlu0 %v449, 64
    %v2205 = vpop.permute.xlu0 %2204
    %2206 = vrot.lane.b32.xlu0 %v450, 64
    %v2207 = vpop.permute.xlu0 %2206
    %v2208 = vsel %vm473, %v2201, 0
    %v2210 = vsel %vm473, %v2203, 0
    %v2212 = vsel %vm473, %v2205, 0
    %v2214 = vsel %vm473, %v2207, 0
    %2216 = vmatpush.xpose.msra.mxu0 0.0
    %2217 = vmatpush.xpose.msra.mxu0 0.0
    %2218 = vmatpush.xpose.msra.mxu0 0.0
    %2219 = vmatpush.xpose.msra.mxu0 0.0
    %2220 = vmatpush.xpose.msra.mxu0 0.0
    %2221 = vmatpush.xpose.msra.mxu0 0.0
    %2222 = vmatpush.xpose.msra.mxu0 0.0
    %2223 = vmatpush.xpose.msra.mxu0 0.0
    %2224 = vmatpush.xpose.msra.mxu0 0.0
    %2225 = vmatpush.xpose.msra.mxu0 0.0
    %2226 = vmatpush.xpose.msra.mxu0 0.0
    %2227 = vmatpush.xpose.msra.mxu0 0.0
    %2228 = vmatpush.xpose.msra.mxu0 0.0
    %2229 = vmatpush.xpose.msra.mxu0 0.0
    %2230 = vmatpush.xpose.msra.mxu0 %v2214
    %2231 = vmatpush.xpose.msra.mxu0 %v2212
    %2232 = vmatmul.f32.gmra.mxu0 %v2208
    %v2233 = vpop.f32.mrf.mxu0
    %v2234 = vadd.f32 0.0, %v2233
    %2235 = vmatmul.f32.gmra.mxu0 %v2210
    %v2236 = vpop.f32.mrf.mxu0
    %v2237 = vadd.f32 0.0, %v2236
    %2238 = vdwg.mxu0
    %2239 = vrot.lane.b32.xlu0 %v262, 64
    %v2240 = vpop.permute.xlu0 %2239
    %2241 = vrot.lane.b32.xlu0 %v265, 64
    %v2242 = vpop.permute.xlu0 %2241
    %2243 = vrot.lane.b32.xlu0 %v451, 64
    %v2244 = vpop.permute.xlu0 %2243
    %2245 = vrot.lane.b32.xlu0 %v452, 64
    %v2246 = vpop.permute.xlu0 %2245
    %v2247 = vsel %vm473, %v2240, 0
    %v2249 = vsel %vm473, %v2242, 0
    %v2251 = vsel %vm473, %v2244, 0
    %v2253 = vsel %vm473, %v2246, 0
    %2255 = vmatpush.xpose.msra.mxu0 0.0
    %2256 = vmatpush.xpose.msra.mxu0 0.0
    %2257 = vmatpush.xpose.msra.mxu0 0.0
    %2258 = vmatpush.xpose.msra.mxu0 0.0
    %2259 = vmatpush.xpose.msra.mxu0 0.0
    %2260 = vmatpush.xpose.msra.mxu0 0.0
    %2261 = vmatpush.xpose.msra.mxu0 0.0
    %2262 = vmatpush.xpose.msra.mxu0 0.0
    %2263 = vmatpush.xpose.msra.mxu0 0.0
    %2264 = vmatpush.xpose.msra.mxu0 0.0
    %2265 = vmatpush.xpose.msra.mxu0 0.0
    %2266 = vmatpush.xpose.msra.mxu0 0.0
    %2267 = vmatpush.xpose.msra.mxu0 0.0
    %2268 = vmatpush.xpose.msra.mxu0 0.0
    %2269 = vmatpush.xpose.msra.mxu0 %v2253
    %2270 = vmatpush.xpose.msra.mxu0 %v2251
    %2271 = vmatmul.f32.gmra.mxu0 %v2247
    %v2272 = vpop.f32.mrf.mxu0
    %v2273 = vadd.f32 0.0, %v2272
    %2274 = vmatmul.f32.gmra.mxu0 %v2249
    %v2275 = vpop.f32.mrf.mxu0
    %v2276 = vadd.f32 0.0, %v2275
    %2277 = vdwg.mxu0
    %2278 = vrot.lane.b32.xlu0 %v268, 64
    %v2279 = vpop.permute.xlu0 %2278
    %2280 = vrot.lane.b32.xlu0 %v271, 64
    %v2281 = vpop.permute.xlu0 %2280
    %2282 = vrot.lane.b32.xlu0 %v453, 64
    %v2283 = vpop.permute.xlu0 %2282
    %2284 = vrot.lane.b32.xlu0 %v454, 64
    %v2285 = vpop.permute.xlu0 %2284
    %v2286 = vsel %vm473, %v2279, 0
    %v2288 = vsel %vm473, %v2281, 0
    %v2290 = vsel %vm473, %v2283, 0
    %v2292 = vsel %vm473, %v2285, 0
    %2294 = vmatpush.xpose.msra.mxu0 0.0
    %2295 = vmatpush.xpose.msra.mxu0 0.0
    %2296 = vmatpush.xpose.msra.mxu0 0.0
    %2297 = vmatpush.xpose.msra.mxu0 0.0
    %2298 = vmatpush.xpose.msra.mxu0 0.0
    %2299 = vmatpush.xpose.msra.mxu0 0.0
    %2300 = vmatpush.xpose.msra.mxu0 0.0
    %2301 = vmatpush.xpose.msra.mxu0 0.0
    %2302 = vmatpush.xpose.msra.mxu0 0.0
    %2303 = vmatpush.xpose.msra.mxu0 0.0
    %2304 = vmatpush.xpose.msra.mxu0 0.0
    %2305 = vmatpush.xpose.msra.mxu0 0.0
    %2306 = vmatpush.xpose.msra.mxu0 0.0
    %2307 = vmatpush.xpose.msra.mxu0 0.0
    %2308 = vmatpush.xpose.msra.mxu0 %v2292
    %2309 = vmatpush.xpose.msra.mxu0 %v2290
    %2310 = vmatmul.f32.gmra.mxu0 %v2286
    %v2311 = vpop.f32.mrf.mxu0
    %v2312 = vadd.f32 0.0, %v2311
    %2313 = vmatmul.f32.gmra.mxu0 %v2288
    %v2314 = vpop.f32.mrf.mxu0
    %v2315 = vadd.f32 0.0, %v2314
    %2316 = vdwg.mxu0
    %2317 = vrot.lane.b32.xlu0 %v274, 64
    %v2318 = vpop.permute.xlu0 %2317
    %2319 = vrot.lane.b32.xlu0 %v277, 64
    %v2320 = vpop.permute.xlu0 %2319
    %2321 = vrot.lane.b32.xlu0 %v455, 64
    %v2322 = vpop.permute.xlu0 %2321
    %2323 = vrot.lane.b32.xlu0 %v456, 64
    %v2324 = vpop.permute.xlu0 %2323
    %v2325 = vsel %vm473, %v2318, 0
    %v2327 = vsel %vm473, %v2320, 0
    %v2329 = vsel %vm473, %v2322, 0
    %v2331 = vsel %vm473, %v2324, 0
    %2333 = vmatpush.xpose.msra.mxu0 0.0
    %2334 = vmatpush.xpose.msra.mxu0 0.0
    %2335 = vmatpush.xpose.msra.mxu0 0.0
    %2336 = vmatpush.xpose.msra.mxu0 0.0
    %2337 = vmatpush.xpose.msra.mxu0 0.0
    %2338 = vmatpush.xpose.msra.mxu0 0.0
    %2339 = vmatpush.xpose.msra.mxu0 0.0
    %2340 = vmatpush.xpose.msra.mxu0 0.0
    %2341 = vmatpush.xpose.msra.mxu0 0.0
    %2342 = vmatpush.xpose.msra.mxu0 0.0
    %2343 = vmatpush.xpose.msra.mxu0 0.0
    %2344 = vmatpush.xpose.msra.mxu0 0.0
    %2345 = vmatpush.xpose.msra.mxu0 0.0
    %2346 = vmatpush.xpose.msra.mxu0 0.0
    %2347 = vmatpush.xpose.msra.mxu0 %v2331
    %2348 = vmatpush.xpose.msra.mxu0 %v2329
    %2349 = vmatmul.f32.gmra.mxu0 %v2325
    %v2350 = vpop.f32.mrf.mxu0
    %v2351 = vadd.f32 0.0, %v2350
    %2352 = vmatmul.f32.gmra.mxu0 %v2327
    %v2353 = vpop.f32.mrf.mxu0
    %v2354 = vadd.f32 0.0, %v2353
    %2355 = vdwg.mxu0
    %v2356 = vsel %vm754, %v2078, -inf
    %2357 = vmax.xlane.f32.xlu0 %v2356
    %v2358 = vpop.xlane.xlu0 %2357
    %v2359 = vsel %vm754, %v2081, -inf
    %2360 = vmax.xlane.f32.xlu0 %v2359
    %v2361 = vpop.xlane.xlu0 %2360
    %v2362 = vsel %vm754, %v2117, -inf
    %2363 = vmax.xlane.f32.xlu0 %v2362
    %v2364 = vpop.xlane.xlu0 %2363
    %v2365 = vsel %vm754, %v2120, -inf
    %2366 = vmax.xlane.f32.xlu0 %v2365
    %v2367 = vpop.xlane.xlu0 %2366
    %v2368 = vsel %vm754, %v2156, -inf
    %2369 = vmax.xlane.f32.xlu0 %v2368
    %v2370 = vpop.xlane.xlu0 %2369
    %v2371 = vsel %vm754, %v2159, -inf
    %2372 = vmax.xlane.f32.xlu0 %v2371
    %v2373 = vpop.xlane.xlu0 %2372
    %v2374 = vsel %vm754, %v2195, -inf
    %2375 = vmax.xlane.f32.xlu0 %v2374
    %v2376 = vpop.xlane.xlu0 %2375
    %v2377 = vsel %vm754, %v2198, -inf
    %2378 = vmax.xlane.f32.xlu0 %v2377
    %v2379 = vpop.xlane.xlu0 %2378
    %v2380 = vsel %vm754, %v2234, -inf
    %2381 = vmax.xlane.f32.xlu0 %v2380
    %v2382 = vpop.xlane.xlu0 %2381
    %v2383 = vsel %vm754, %v2237, -inf
    %2384 = vmax.xlane.f32.xlu0 %v2383
    %v2385 = vpop.xlane.xlu0 %2384
    %v2386 = vsel %vm754, %v2273, -inf
    %2387 = vmax.xlane.f32.xlu0 %v2386
    %v2388 = vpop.xlane.xlu0 %2387
    %v2389 = vsel %vm754, %v2276, -inf
    %2390 = vmax.xlane.f32.xlu0 %v2389
    %v2391 = vpop.xlane.xlu0 %2390
    %v2392 = vsel %vm754, %v2312, -inf
    %2393 = vmax.xlane.f32.xlu0 %v2392
    %v2394 = vpop.xlane.xlu0 %2393
    %v2395 = vsel %vm754, %v2315, -inf
    %2396 = vmax.xlane.f32.xlu0 %v2395
    %v2397 = vpop.xlane.xlu0 %2396
    %v2398 = vsel %vm754, %v2351, -inf
    %2399 = vmax.xlane.f32.xlu0 %v2398
    %v2400 = vpop.xlane.xlu0 %2399
    %v2401 = vsel %vm754, %v2354, -inf
    %2402 = vmax.xlane.f32.xlu0 %v2401
    %v2403 = vpop.xlane.xlu0 %2402
    %v2404 = vsub.f32 %v2078, %v2358
    %v2405 = vsub.f32 %v2081, %v2361
    %v2406 = vsub.f32 %v2117, %v2364
    %v2407 = vsub.f32 %v2120, %v2367
    %v2408 = vsub.f32 %v2156, %v2370
    %v2409 = vsub.f32 %v2159, %v2373
    %v2410 = vsub.f32 %v2195, %v2376
    %v2411 = vsub.f32 %v2198, %v2379
    %v2412 = vsub.f32 %v2234, %v2382
    %v2413 = vsub.f32 %v2237, %v2385
    %v2414 = vsub.f32 %v2273, %v2388
    %v2415 = vsub.f32 %v2276, %v2391
    %v2416 = vsub.f32 %v2312, %v2394
    %v2417 = vsub.f32 %v2315, %v2397
    %v2418 = vsub.f32 %v2351, %v2400
    %v2419 = vsub.f32 %v2354, %v2403
    %v2420 = vmul.f32 %v2404, 1.442695
    %v2421 = vpow.pop %v2420
    %v2422 = vmul.f32 %v2405, 1.442695
    %v2423 = vpow.pop %v2422
    %v2424 = vmul.f32 %v2406, 1.442695
    %v2425 = vpow.pop %v2424
    %v2426 = vmul.f32 %v2407, 1.442695
    %v2427 = vpow.pop %v2426
    %v2428 = vmul.f32 %v2408, 1.442695
    %v2429 = vpow.pop %v2428
    %v2430 = vmul.f32 %v2409, 1.442695
    %v2431 = vpow.pop %v2430
    %v2432 = vmul.f32 %v2410, 1.442695
    %v2433 = vpow.pop %v2432
    %v2434 = vmul.f32 %v2411, 1.442695
    %v2435 = vpow.pop %v2434
    %v2436 = vmul.f32 %v2412, 1.442695
    %v2437 = vpow.pop %v2436
    %v2438 = vmul.f32 %v2413, 1.442695
    %v2439 = vpow.pop %v2438
    %v2440 = vmul.f32 %v2414, 1.442695
    %v2441 = vpow.pop %v2440
    %v2442 = vmul.f32 %v2415, 1.442695
    %v2443 = vpow.pop %v2442
    %v2444 = vmul.f32 %v2416, 1.442695
    %v2445 = vpow.pop %v2444
    %v2446 = vmul.f32 %v2417, 1.442695
    %v2447 = vpow.pop %v2446
    %v2448 = vmul.f32 %v2418, 1.442695
    %v2449 = vpow.pop %v2448
    %v2450 = vmul.f32 %v2419, 1.442695
    %v2451 = vpow.pop %v2450
    %v2452 = vsel %vm754, %v2421, 0.0
    %2453 = vadd.xlane.f32.xlu0 %v2452
    %v2454 = vpop.xlane.xlu0 %2453
    %v2455 = vsel %vm754, %v2423, 0.0
    %2456 = vadd.xlane.f32.xlu0 %v2455
    %v2457 = vpop.xlane.xlu0 %2456
    %v2458 = vsel %vm754, %v2425, 0.0
    %2459 = vadd.xlane.f32.xlu0 %v2458
    %v2460 = vpop.xlane.xlu0 %2459
    %v2461 = vsel %vm754, %v2427, 0.0
    %2462 = vadd.xlane.f32.xlu0 %v2461
    %v2463 = vpop.xlane.xlu0 %2462
    %v2464 = vsel %vm754, %v2429, 0.0
    %2465 = vadd.xlane.f32.xlu0 %v2464
    %v2466 = vpop.xlane.xlu0 %2465
    %v2467 = vsel %vm754, %v2431, 0.0
    %2468 = vadd.xlane.f32.xlu0 %v2467
    %v2469 = vpop.xlane.xlu0 %2468
    %v2470 = vsel %vm754, %v2433, 0.0
    %2471 = vadd.xlane.f32.xlu0 %v2470
    %v2472 = vpop.xlane.xlu0 %2471
    %v2473 = vsel %vm754, %v2435, 0.0
    %2474 = vadd.xlane.f32.xlu0 %v2473
    %v2475 = vpop.xlane.xlu0 %2474
    %v2476 = vsel %vm754, %v2437, 0.0
    %2477 = vadd.xlane.f32.xlu0 %v2476
    %v2478 = vpop.xlane.xlu0 %2477
    %v2479 = vsel %vm754, %v2439, 0.0
    %2480 = vadd.xlane.f32.xlu0 %v2479
    %v2481 = vpop.xlane.xlu0 %2480
    %v2482 = vsel %vm754, %v2441, 0.0
    %2483 = vadd.xlane.f32.xlu0 %v2482
    %v2484 = vpop.xlane.xlu0 %2483
    %v2485 = vsel %vm754, %v2443, 0.0
    %2486 = vadd.xlane.f32.xlu0 %v2485
    %v2487 = vpop.xlane.xlu0 %2486
    %v2488 = vsel %vm754, %v2445, 0.0
    %2489 = vadd.xlane.f32.xlu0 %v2488
    %v2490 = vpop.xlane.xlu0 %2489
    %v2491 = vsel %vm754, %v2447, 0.0
    %2492 = vadd.xlane.f32.xlu0 %v2491
    %v2493 = vpop.xlane.xlu0 %2492
    %v2494 = vsel %vm754, %v2449, 0.0
    %2495 = vadd.xlane.f32.xlu0 %v2494
    %v2496 = vpop.xlane.xlu0 %2495
    %v2497 = vsel %vm754, %v2451, 0.0
    %2498 = vadd.xlane.f32.xlu0 %v2497
    %v2499 = vpop.xlane.xlu0 %2498
    %v2500 = vrcp.pop %v2454
    %v2501 = vrcp.pop %v2457
    %v2502 = vrcp.pop %v2460
    %v2503 = vrcp.pop %v2463
    %v2504 = vrcp.pop %v2466
    %v2505 = vrcp.pop %v2469
    %v2506 = vrcp.pop %v2472
    %v2507 = vrcp.pop %v2475
    %v2508 = vrcp.pop %v2478
    %v2509 = vrcp.pop %v2481
    %v2510 = vrcp.pop %v2484
    %v2511 = vrcp.pop %v2487
    %v2512 = vrcp.pop %v2490
    %v2513 = vrcp.pop %v2493
    %v2514 = vrcp.pop %v2496
    %v2515 = vrcp.pop %v2499
    %v2516 = vmul.f32 %v2421, %v2500
    %v2517 = vmul.f32 %v2423, %v2501
    %v2518 = vmul.f32 %v2425, %v2502
    %v2519 = vmul.f32 %v2427, %v2503
    %v2520 = vmul.f32 %v2429, %v2504
    %v2521 = vmul.f32 %v2431, %v2505
    %v2522 = vmul.f32 %v2433, %v2506
    %v2523 = vmul.f32 %v2435, %v2507
    %v2524 = vmul.f32 %v2437, %v2508
    %v2525 = vmul.f32 %v2439, %v2509
    %v2526 = vmul.f32 %v2441, %v2510
    %v2527 = vmul.f32 %v2443, %v2511
    %v2528 = vmul.f32 %v2445, %v2512
    %v2529 = vmul.f32 %v2447, %v2513
    %v2530 = vmul.f32 %v2449, %v2514
    %v2531 = vmul.f32 %v2451, %v2515
    %2532 = vrot.lane.b32.xlu0 %v457, 64
    %v2533 = vpop.permute.xlu0 %2532
    %2534 = vrot.lane.b32.xlu0 %v458, 64
    %v2535 = vpop.permute.xlu0 %2534
    %v2539 = vsel %vm754, %v2516, 0
    %v2542 = vsel %vm754, %v2517, 0
    %2544 = vmatpush.msra.mxu0 0.0
    %2545 = vmatpush.msra.mxu0 0.0
    %2546 = vmatpush.msra.mxu0 0.0
    %2547 = vmatpush.msra.mxu0 0.0
    %2548 = vmatpush.msra.mxu0 0.0
    %2549 = vmatpush.msra.mxu0 0.0
    %2550 = vmatpush.msra.mxu0 0.0
    %2551 = vmatpush.msra.mxu0 0.0
    %2552 = vmatpush.msra.mxu0 0.0
    %2553 = vmatpush.msra.mxu0 0.0
    %2554 = vmatpush.msra.mxu0 0.0
    %2555 = vmatpush.msra.mxu0 0.0
    %2556 = vmatpush.msra.mxu0 0.0
    %2557 = vmatpush.msra.mxu0 0.0
    %2558 = vmatpush.msra.mxu0 %v2535
    %2559 = vmatpush.msra.mxu0 %v2533
    %2560 = vmatmul.f32.gmra.mxu0 %v2539
    %v2561 = vpop.f32.mrf.mxu0
    %v2562 = vadd.f32 0.0, %v2561
    %2563 = vmatmul.f32.gmra.mxu0 %v2542
    %v2564 = vpop.f32.mrf.mxu0
    %v2565 = vadd.f32 0.0, %v2564
    %2566 = vdwg.mxu0
    %2567 = vrot.lane.b32.xlu0 %v459, 64
    %v2568 = vpop.permute.xlu0 %2567
    %2569 = vrot.lane.b32.xlu0 %v460, 64
    %v2570 = vpop.permute.xlu0 %2569
    %v2574 = vsel %vm754, %v2518, 0
    %v2577 = vsel %vm754, %v2519, 0
    %2579 = vmatpush.msra.mxu0 0.0
    %2580 = vmatpush.msra.mxu0 0.0
    %2581 = vmatpush.msra.mxu0 0.0
    %2582 = vmatpush.msra.mxu0 0.0
    %2583 = vmatpush.msra.mxu0 0.0
    %2584 = vmatpush.msra.mxu0 0.0
    %2585 = vmatpush.msra.mxu0 0.0
    %2586 = vmatpush.msra.mxu0 0.0
    %2587 = vmatpush.msra.mxu0 0.0
    %2588 = vmatpush.msra.mxu0 0.0
    %2589 = vmatpush.msra.mxu0 0.0
    %2590 = vmatpush.msra.mxu0 0.0
    %2591 = vmatpush.msra.mxu0 0.0
    %2592 = vmatpush.msra.mxu0 0.0
    %2593 = vmatpush.msra.mxu0 %v2570
    %2594 = vmatpush.msra.mxu0 %v2568
    %2595 = vmatmul.f32.gmra.mxu0 %v2574
    %v2596 = vpop.f32.mrf.mxu0
    %v2597 = vadd.f32 0.0, %v2596
    %2598 = vmatmul.f32.gmra.mxu0 %v2577
    %v2599 = vpop.f32.mrf.mxu0
    %v2600 = vadd.f32 0.0, %v2599
    %2601 = vdwg.mxu0
    %2602 = vrot.lane.b32.xlu0 %v461, 64
    %v2603 = vpop.permute.xlu0 %2602
    %2604 = vrot.lane.b32.xlu0 %v462, 64
    %v2605 = vpop.permute.xlu0 %2604
    %v2609 = vsel %vm754, %v2520, 0
    %v2612 = vsel %vm754, %v2521, 0
    %2614 = vmatpush.msra.mxu0 0.0
    %2615 = vmatpush.msra.mxu0 0.0
    %2616 = vmatpush.msra.mxu0 0.0
    %2617 = vmatpush.msra.mxu0 0.0
    %2618 = vmatpush.msra.mxu0 0.0
    %2619 = vmatpush.msra.mxu0 0.0
    %2620 = vmatpush.msra.mxu0 0.0
    %2621 = vmatpush.msra.mxu0 0.0
    %2622 = vmatpush.msra.mxu0 0.0
    %2623 = vmatpush.msra.mxu0 0.0
    %2624 = vmatpush.msra.mxu0 0.0
    %2625 = vmatpush.msra.mxu0 0.0
    %2626 = vmatpush.msra.mxu0 0.0
    %2627 = vmatpush.msra.mxu0 0.0
    %2628 = vmatpush.msra.mxu0 %v2605
    %2629 = vmatpush.msra.mxu0 %v2603
    %2630 = vmatmul.f32.gmra.mxu0 %v2609
    %v2631 = vpop.f32.mrf.mxu0
    %v2632 = vadd.f32 0.0, %v2631
    %2633 = vmatmul.f32.gmra.mxu0 %v2612
    %v2634 = vpop.f32.mrf.mxu0
    %v2635 = vadd.f32 0.0, %v2634
    %2636 = vdwg.mxu0
    %2637 = vrot.lane.b32.xlu0 %v463, 64
    %v2638 = vpop.permute.xlu0 %2637
    %2639 = vrot.lane.b32.xlu0 %v464, 64
    %v2640 = vpop.permute.xlu0 %2639
    %v2644 = vsel %vm754, %v2522, 0
    %v2647 = vsel %vm754, %v2523, 0
    %2649 = vmatpush.msra.mxu0 0.0
    %2650 = vmatpush.msra.mxu0 0.0
    %2651 = vmatpush.msra.mxu0 0.0
    %2652 = vmatpush.msra.mxu0 0.0
    %2653 = vmatpush.msra.mxu0 0.0
    %2654 = vmatpush.msra.mxu0 0.0
    %2655 = vmatpush.msra.mxu0 0.0
    %2656 = vmatpush.msra.mxu0 0.0
    %2657 = vmatpush.msra.mxu0 0.0
    %2658 = vmatpush.msra.mxu0 0.0
    %2659 = vmatpush.msra.mxu0 0.0
    %2660 = vmatpush.msra.mxu0 0.0
    %2661 = vmatpush.msra.mxu0 0.0
    %2662 = vmatpush.msra.mxu0 0.0
    %2663 = vmatpush.msra.mxu0 %v2640
    %2664 = vmatpush.msra.mxu0 %v2638
    %2665 = vmatmul.f32.gmra.mxu0 %v2644
    %v2666 = vpop.f32.mrf.mxu0
    %v2667 = vadd.f32 0.0, %v2666
    %2668 = vmatmul.f32.gmra.mxu0 %v2647
    %v2669 = vpop.f32.mrf.mxu0
    %v2670 = vadd.f32 0.0, %v2669
    %2671 = vdwg.mxu0
    %2672 = vrot.lane.b32.xlu0 %v465, 64
    %v2673 = vpop.permute.xlu0 %2672
    %2674 = vrot.lane.b32.xlu0 %v466, 64
    %v2675 = vpop.permute.xlu0 %2674
    %v2679 = vsel %vm754, %v2524, 0
    %v2682 = vsel %vm754, %v2525, 0
    %2684 = vmatpush.msra.mxu0 0.0
    %2685 = vmatpush.msra.mxu0 0.0
    %2686 = vmatpush.msra.mxu0 0.0
    %2687 = vmatpush.msra.mxu0 0.0
    %2688 = vmatpush.msra.mxu0 0.0
    %2689 = vmatpush.msra.mxu0 0.0
    %2690 = vmatpush.msra.mxu0 0.0
    %2691 = vmatpush.msra.mxu0 0.0
    %2692 = vmatpush.msra.mxu0 0.0
    %2693 = vmatpush.msra.mxu0 0.0
    %2694 = vmatpush.msra.mxu0 0.0
    %2695 = vmatpush.msra.mxu0 0.0
    %2696 = vmatpush.msra.mxu0 0.0
    %2697 = vmatpush.msra.mxu0 0.0
    %2698 = vmatpush.msra.mxu0 %v2675
    %2699 = vmatpush.msra.mxu0 %v2673
    %2700 = vmatmul.f32.gmra.mxu0 %v2679
    %v2701 = vpop.f32.mrf.mxu0
    %v2702 = vadd.f32 0.0, %v2701
    %2703 = vmatmul.f32.gmra.mxu0 %v2682
    %v2704 = vpop.f32.mrf.mxu0
    %v2705 = vadd.f32 0.0, %v2704
    %2706 = vdwg.mxu0
    %2707 = vrot.lane.b32.xlu0 %v467, 64
    %v2708 = vpop.permute.xlu0 %2707
    %2709 = vrot.lane.b32.xlu0 %v468, 64
    %v2710 = vpop.permute.xlu0 %2709
    %v2714 = vsel %vm754, %v2526, 0
    %v2717 = vsel %vm754, %v2527, 0
    %2719 = vmatpush.msra.mxu0 0.0
    %2720 = vmatpush.msra.mxu0 0.0
    %2721 = vmatpush.msra.mxu0 0.0
    %2722 = vmatpush.msra.mxu0 0.0
    %2723 = vmatpush.msra.mxu0 0.0
    %2724 = vmatpush.msra.mxu0 0.0
    %2725 = vmatpush.msra.mxu0 0.0
    %2726 = vmatpush.msra.mxu0 0.0
    %2727 = vmatpush.msra.mxu0 0.0
    %2728 = vmatpush.msra.mxu0 0.0
    %2729 = vmatpush.msra.mxu0 0.0
    %2730 = vmatpush.msra.mxu0 0.0
    %2731 = vmatpush.msra.mxu0 0.0
    %2732 = vmatpush.msra.mxu0 0.0
    %2733 = vmatpush.msra.mxu0 %v2710
    %2734 = vmatpush.msra.mxu0 %v2708
    %2735 = vmatmul.f32.gmra.mxu0 %v2714
    %v2736 = vpop.f32.mrf.mxu0
    %v2737 = vadd.f32 0.0, %v2736
    %2738 = vmatmul.f32.gmra.mxu0 %v2717
    %v2739 = vpop.f32.mrf.mxu0
    %v2740 = vadd.f32 0.0, %v2739
    %2741 = vdwg.mxu0
    %2742 = vrot.lane.b32.xlu0 %v469, 64
    %v2743 = vpop.permute.xlu0 %2742
    %2744 = vrot.lane.b32.xlu0 %v470, 64
    %v2745 = vpop.permute.xlu0 %2744
    %v2749 = vsel %vm754, %v2528, 0
    %v2752 = vsel %vm754, %v2529, 0
    %2754 = vmatpush.msra.mxu0 0.0
    %2755 = vmatpush.msra.mxu0 0.0
    %2756 = vmatpush.msra.mxu0 0.0
    %2757 = vmatpush.msra.mxu0 0.0
    %2758 = vmatpush.msra.mxu0 0.0
    %2759 = vmatpush.msra.mxu0 0.0
    %2760 = vmatpush.msra.mxu0 0.0
    %2761 = vmatpush.msra.mxu0 0.0
    %2762 = vmatpush.msra.mxu0 0.0
    %2763 = vmatpush.msra.mxu0 0.0
    %2764 = vmatpush.msra.mxu0 0.0
    %2765 = vmatpush.msra.mxu0 0.0
    %2766 = vmatpush.msra.mxu0 0.0
    %2767 = vmatpush.msra.mxu0 0.0
    %2768 = vmatpush.msra.mxu0 %v2745
    %2769 = vmatpush.msra.mxu0 %v2743
    %2770 = vmatmul.f32.gmra.mxu0 %v2749
    %v2771 = vpop.f32.mrf.mxu0
    %v2772 = vadd.f32 0.0, %v2771
    %2773 = vmatmul.f32.gmra.mxu0 %v2752
    %v2774 = vpop.f32.mrf.mxu0
    %v2775 = vadd.f32 0.0, %v2774
    %2776 = vdwg.mxu0
    %2777 = vrot.lane.b32.xlu0 %v471, 64
    %v2778 = vpop.permute.xlu0 %2777
    %2779 = vrot.lane.b32.xlu0 %v472, 64
    %v2780 = vpop.permute.xlu0 %2779
    %v2784 = vsel %vm754, %v2530, 0
    %v2787 = vsel %vm754, %v2531, 0
    %2789 = vmatpush.msra.mxu0 0.0
    %2790 = vmatpush.msra.mxu0 0.0
    %2791 = vmatpush.msra.mxu0 0.0
    %2792 = vmatpush.msra.mxu0 0.0
    %2793 = vmatpush.msra.mxu0 0.0
    %2794 = vmatpush.msra.mxu0 0.0
    %2795 = vmatpush.msra.mxu0 0.0
    %2796 = vmatpush.msra.mxu0 0.0
    %2797 = vmatpush.msra.mxu0 0.0
    %2798 = vmatpush.msra.mxu0 0.0
    %2799 = vmatpush.msra.mxu0 0.0
    %2800 = vmatpush.msra.mxu0 0.0
    %2801 = vmatpush.msra.mxu0 0.0
    %2802 = vmatpush.msra.mxu0 0.0
    %2803 = vmatpush.msra.mxu0 %v2780
    %2804 = vmatpush.msra.mxu0 %v2778
    %2805 = vmatmul.f32.gmra.mxu0 %v2784
    %v2806 = vpop.f32.mrf.mxu0
    %v2807 = vadd.f32 0.0, %v2806
    %2808 = vmatmul.f32.gmra.mxu0 %v2787
    %v2809 = vpop.f32.mrf.mxu0
    %v2810 = vadd.f32 0.0, %v2809
    %2811 = vdwg.mxu0
    %2828 = vrot.lane.b32.xlu0 %v2562, 64
    %v2829 = vpop.permute.xlu0 %2828
    %2830 = vrot.lane.b32.xlu0 %v2565, 64
    %v2831 = vpop.permute.xlu0 %2830
    %2832 = vrot.lane.b32.xlu0 %v2597, 64
    %v2833 = vpop.permute.xlu0 %2832
    %2834 = vrot.lane.b32.xlu0 %v2600, 64
    %v2835 = vpop.permute.xlu0 %2834
    %2836 = vrot.lane.b32.xlu0 %v2632, 64
    %v2837 = vpop.permute.xlu0 %2836
    %2838 = vrot.lane.b32.xlu0 %v2635, 64
    %v2839 = vpop.permute.xlu0 %2838
    %2840 = vrot.lane.b32.xlu0 %v2667, 64
    %v2841 = vpop.permute.xlu0 %2840
    %2842 = vrot.lane.b32.xlu0 %v2670, 64
    %v2843 = vpop.permute.xlu0 %2842
    %2844 = vrot.lane.b32.xlu0 %v2702, 64
    %v2845 = vpop.permute.xlu0 %2844
    %2846 = vrot.lane.b32.xlu0 %v2705, 64
    %v2847 = vpop.permute.xlu0 %2846
    %2848 = vrot.lane.b32.xlu0 %v2737, 64
    %v2849 = vpop.permute.xlu0 %2848
    %2850 = vrot.lane.b32.xlu0 %v2740, 64
    %v2851 = vpop.permute.xlu0 %2850
    %2852 = vrot.lane.b32.xlu0 %v2772, 64
    %v2853 = vpop.permute.xlu0 %2852
    %2854 = vrot.lane.b32.xlu0 %v2775, 64
    %v2855 = vpop.permute.xlu0 %2854
    %2856 = vrot.lane.b32.xlu0 %v2807, 64
    %v2857 = vpop.permute.xlu0 %2856
    %2858 = vrot.lane.b32.xlu0 %v2810, 64
    %v2859 = vpop.permute.xlu0 %2858
    %vm2876 = vcmask 785920
    %2877 = vst.msk [vmem:[#allocation2] sm:$0xff] %vm2876, %v2829
    %2878 = vst.msk [vmem:[#allocation2 + $0x8] sm:$0xff] %vm2876, %v2831
    %2879 = vst.msk [vmem:[#allocation2 + $0x10] sm:$0xff] %vm2876, %v2833
    %2880 = vst.msk [vmem:[#allocation2 + $0x18] sm:$0xff] %vm2876, %v2835
    %2881 = vst.msk [vmem:[#allocation2 + $0x20] sm:$0xff] %vm2876, %v2837
    %2882 = vst.msk [vmem:[#allocation2 + $0x28] sm:$0xff] %vm2876, %v2839
    %2883 = vst.msk [vmem:[#allocation2 + $0x30] sm:$0xff] %vm2876, %v2841
    %2884 = vst.msk [vmem:[#allocation2 + $0x38] sm:$0xff] %vm2876, %v2843
    %2885 = vst.msk [vmem:[#allocation2 + $0x40] sm:$0xff] %vm2876, %v2845
    %2886 = vst.msk [vmem:[#allocation2 + $0x48] sm:$0xff] %vm2876, %v2847
    %2887 = vst.msk [vmem:[#allocation2 + $0x50] sm:$0xff] %vm2876, %v2849
    %2888 = vst.msk [vmem:[#allocation2 + $0x58] sm:$0xff] %vm2876, %v2851
    %2889 = vst.msk [vmem:[#allocation2 + $0x60] sm:$0xff] %vm2876, %v2853
    %2890 = vst.msk [vmem:[#allocation2 + $0x68] sm:$0xff] %vm2876, %v2855
    %2891 = vst.msk [vmem:[#allocation2 + $0x70] sm:$0xff] %vm2876, %v2857
    %2892 = vst.msk [vmem:[#allocation2 + $0x78] sm:$0xff] %vm2876, %v2859
    %2893 = vrot.lane.b32.xlu0 %v232, 32
    %v2894 = vpop.permute.xlu0 %2893
    %2895 = vrot.lane.b32.xlu0 %v235, 32
    %v2896 = vpop.permute.xlu0 %2895
    %2897 = vrot.lane.b32.xlu0 %v441, 32
    %v2898 = vpop.permute.xlu0 %2897
    %2899 = vrot.lane.b32.xlu0 %v442, 32
    %v2900 = vpop.permute.xlu0 %2899
    %v2901 = vsel %vm473, %v2894, 0
    %v2903 = vsel %vm473, %v2896, 0
    %v2905 = vsel %vm473, %v2898, 0
    %v2907 = vsel %vm473, %v2900, 0
    %2909 = vmatpush.xpose.msra.mxu0 0.0
    %2910 = vmatpush.xpose.msra.mxu0 0.0
    %2911 = vmatpush.xpose.msra.mxu0 0.0
    %2912 = vmatpush.xpose.msra.mxu0 0.0
    %2913 = vmatpush.xpose.msra.mxu0 0.0
    %2914 = vmatpush.xpose.msra.mxu0 0.0
    %2915 = vmatpush.xpose.msra.mxu0 0.0
    %2916 = vmatpush.xpose.msra.mxu0 0.0
    %2917 = vmatpush.xpose.msra.mxu0 0.0
    %2918 = vmatpush.xpose.msra.mxu0 0.0
    %2919 = vmatpush.xpose.msra.mxu0 0.0
    %2920 = vmatpush.xpose.msra.mxu0 0.0
    %2921 = vmatpush.xpose.msra.mxu0 0.0
    %2922 = vmatpush.xpose.msra.mxu0 0.0
    %2923 = vmatpush.xpose.msra.mxu0 %v2907
    %2924 = vmatpush.xpose.msra.mxu0 %v2905
    %2925 = vmatmul.f32.gmra.mxu0 %v2901
    %v2926 = vpop.f32.mrf.mxu0
    %v2927 = vadd.f32 0.0, %v2926
    %2928 = vmatmul.f32.gmra.mxu0 %v2903
    %v2929 = vpop.f32.mrf.mxu0
    %v2930 = vadd.f32 0.0, %v2929
    %2931 = vdwg.mxu0
    %2932 = vrot.lane.b32.xlu0 %v238, 32
    %v2933 = vpop.permute.xlu0 %2932
    %2934 = vrot.lane.b32.xlu0 %v241, 32
    %v2935 = vpop.permute.xlu0 %2934
    %2936 = vrot.lane.b32.xlu0 %v443, 32
    %v2937 = vpop.permute.xlu0 %2936
    %2938 = vrot.lane.b32.xlu0 %v444, 32
    %v2939 = vpop.permute.xlu0 %2938
    %v2940 = vsel %vm473, %v2933, 0
    %v2942 = vsel %vm473, %v2935, 0
    %v2944 = vsel %vm473, %v2937, 0
    %v2946 = vsel %vm473, %v2939, 0
    %2948 = vmatpush.xpose.msra.mxu0 0.0
    %2949 = vmatpush.xpose.msra.mxu0 0.0
    %2950 = vmatpush.xpose.msra.mxu0 0.0
    %2951 = vmatpush.xpose.msra.mxu0 0.0
    %2952 = vmatpush.xpose.msra.mxu0 0.0
    %2953 = vmatpush.xpose.msra.mxu0 0.0
    %2954 = vmatpush.xpose.msra.mxu0 0.0
    %2955 = vmatpush.xpose.msra.mxu0 0.0
    %2956 = vmatpush.xpose.msra.mxu0 0.0
    %2957 = vmatpush.xpose.msra.mxu0 0.0
    %2958 = vmatpush.xpose.msra.mxu0 0.0
    %2959 = vmatpush.xpose.msra.mxu0 0.0
    %2960 = vmatpush.xpose.msra.mxu0 0.0
    %2961 = vmatpush.xpose.msra.mxu0 0.0
    %2962 = vmatpush.xpose.msra.mxu0 %v2946
    %2963 = vmatpush.xpose.msra.mxu0 %v2944
    %2964 = vmatmul.f32.gmra.mxu0 %v2940
    %v2965 = vpop.f32.mrf.mxu0
    %v2966 = vadd.f32 0.0, %v2965
    %2967 = vmatmul.f32.gmra.mxu0 %v2942
    %v2968 = vpop.f32.mrf.mxu0
    %v2969 = vadd.f32 0.0, %v2968
    %2970 = vdwg.mxu0
    %2971 = vrot.lane.b32.xlu0 %v244, 32
    %v2972 = vpop.permute.xlu0 %2971
    %2973 = vrot.lane.b32.xlu0 %v247, 32
    %v2974 = vpop.permute.xlu0 %2973
    %2975 = vrot.lane.b32.xlu0 %v445, 32
    %v2976 = vpop.permute.xlu0 %2975
    %2977 = vrot.lane.b32.xlu0 %v446, 32
    %v2978 = vpop.permute.xlu0 %2977
    %v2979 = vsel %vm473, %v2972, 0
    %v2981 = vsel %vm473, %v2974, 0
    %v2983 = vsel %vm473, %v2976, 0
    %v2985 = vsel %vm473, %v2978, 0
    %2987 = vmatpush.xpose.msra.mxu0 0.0
    %2988 = vmatpush.xpose.msra.mxu0 0.0
    %2989 = vmatpush.xpose.msra.mxu0 0.0
    %2990 = vmatpush.xpose.msra.mxu0 0.0
    %2991 = vmatpush.xpose.msra.mxu0 0.0
    %2992 = vmatpush.xpose.msra.mxu0 0.0
    %2993 = vmatpush.xpose.msra.mxu0 0.0
    %2994 = vmatpush.xpose.msra.mxu0 0.0
    %2995 = vmatpush.xpose.msra.mxu0 0.0
    %2996 = vmatpush.xpose.msra.mxu0 0.0
    %2997 = vmatpush.xpose.msra.mxu0 0.0
    %2998 = vmatpush.xpose.msra.mxu0 0.0
    %2999 = vmatpush.xpose.msra.mxu0 0.0
    %3000 = vmatpush.xpose.msra.mxu0 0.0
    %3001 = vmatpush.xpose.msra.mxu0 %v2985
    %3002 = vmatpush.xpose.msra.mxu0 %v2983
    %3003 = vmatmul.f32.gmra.mxu0 %v2979
    %v3004 = vpop.f32.mrf.mxu0
    %v3005 = vadd.f32 0.0, %v3004
    %3006 = vmatmul.f32.gmra.mxu0 %v2981
    %v3007 = vpop.f32.mrf.mxu0
    %v3008 = vadd.f32 0.0, %v3007
    %3009 = vdwg.mxu0
    %3010 = vrot.lane.b32.xlu0 %v250, 32
    %v3011 = vpop.permute.xlu0 %3010
    %3012 = vrot.lane.b32.xlu0 %v253, 32
    %v3013 = vpop.permute.xlu0 %3012
    %3014 = vrot.lane.b32.xlu0 %v447, 32
    %v3015 = vpop.permute.xlu0 %3014
    %3016 = vrot.lane.b32.xlu0 %v448, 32
    %v3017 = vpop.permute.xlu0 %3016
    %v3018 = vsel %vm473, %v3011, 0
    %v3020 = vsel %vm473, %v3013, 0
    %v3022 = vsel %vm473, %v3015, 0
    %v3024 = vsel %vm473, %v3017, 0
    %3026 = vmatpush.xpose.msra.mxu0 0.0
    %3027 = vmatpush.xpose.msra.mxu0 0.0
    %3028 = vmatpush.xpose.msra.mxu0 0.0
    %3029 = vmatpush.xpose.msra.mxu0 0.0
    %3030 = vmatpush.xpose.msra.mxu0 0.0
    %3031 = vmatpush.xpose.msra.mxu0 0.0
    %3032 = vmatpush.xpose.msra.mxu0 0.0
    %3033 = vmatpush.xpose.msra.mxu0 0.0
    %3034 = vmatpush.xpose.msra.mxu0 0.0
    %3035 = vmatpush.xpose.msra.mxu0 0.0
    %3036 = vmatpush.xpose.msra.mxu0 0.0
    %3037 = vmatpush.xpose.msra.mxu0 0.0
    %3038 = vmatpush.xpose.msra.mxu0 0.0
    %3039 = vmatpush.xpose.msra.mxu0 0.0
    %3040 = vmatpush.xpose.msra.mxu0 %v3024
    %3041 = vmatpush.xpose.msra.mxu0 %v3022
    %3042 = vmatmul.f32.gmra.mxu0 %v3018
    %v3043 = vpop.f32.mrf.mxu0
    %v3044 = vadd.f32 0.0, %v3043
    %3045 = vmatmul.f32.gmra.mxu0 %v3020
    %v3046 = vpop.f32.mrf.mxu0
    %v3047 = vadd.f32 0.0, %v3046
    %3048 = vdwg.mxu0
    %3049 = vrot.lane.b32.xlu0 %v256, 32
    %v3050 = vpop.permute.xlu0 %3049
    %3051 = vrot.lane.b32.xlu0 %v259, 32
    %v3052 = vpop.permute.xlu0 %3051
    %3053 = vrot.lane.b32.xlu0 %v449, 32
    %v3054 = vpop.permute.xlu0 %3053
    %3055 = vrot.lane.b32.xlu0 %v450, 32
    %v3056 = vpop.permute.xlu0 %3055
    %v3057 = vsel %vm473, %v3050, 0
    %v3059 = vsel %vm473, %v3052, 0
    %v3061 = vsel %vm473, %v3054, 0
    %v3063 = vsel %vm473, %v3056, 0
    %3065 = vmatpush.xpose.msra.mxu0 0.0
    %3066 = vmatpush.xpose.msra.mxu0 0.0
    %3067 = vmatpush.xpose.msra.mxu0 0.0
    %3068 = vmatpush.xpose.msra.mxu0 0.0
    %3069 = vmatpush.xpose.msra.mxu0 0.0
    %3070 = vmatpush.xpose.msra.mxu0 0.0
    %3071 = vmatpush.xpose.msra.mxu0 0.0
    %3072 = vmatpush.xpose.msra.mxu0 0.0
    %3073 = vmatpush.xpose.msra.mxu0 0.0
    %3074 = vmatpush.xpose.msra.mxu0 0.0
    %3075 = vmatpush.xpose.msra.mxu0 0.0
    %3076 = vmatpush.xpose.msra.mxu0 0.0
    %3077 = vmatpush.xpose.msra.mxu0 0.0
    %3078 = vmatpush.xpose.msra.mxu0 0.0
    %3079 = vmatpush.xpose.msra.mxu0 %v3063
    %3080 = vmatpush.xpose.msra.mxu0 %v3061
    %3081 = vmatmul.f32.gmra.mxu0 %v3057
    %v3082 = vpop.f32.mrf.mxu0
    %v3083 = vadd.f32 0.0, %v3082
    %3084 = vmatmul.f32.gmra.mxu0 %v3059
    %v3085 = vpop.f32.mrf.mxu0
    %v3086 = vadd.f32 0.0, %v3085
    %3087 = vdwg.mxu0
    %3088 = vrot.lane.b32.xlu0 %v262, 32
    %v3089 = vpop.permute.xlu0 %3088
    %3090 = vrot.lane.b32.xlu0 %v265, 32
    %v3091 = vpop.permute.xlu0 %3090
    %3092 = vrot.lane.b32.xlu0 %v451, 32
    %v3093 = vpop.permute.xlu0 %3092
    %3094 = vrot.lane.b32.xlu0 %v452, 32
    %v3095 = vpop.permute.xlu0 %3094
    %v3096 = vsel %vm473, %v3089, 0
    %v3098 = vsel %vm473, %v3091, 0
    %v3100 = vsel %vm473, %v3093, 0
    %v3102 = vsel %vm473, %v3095, 0
    %3104 = vmatpush.xpose.msra.mxu0 0.0
    %3105 = vmatpush.xpose.msra.mxu0 0.0
    %3106 = vmatpush.xpose.msra.mxu0 0.0
    %3107 = vmatpush.xpose.msra.mxu0 0.0
    %3108 = vmatpush.xpose.msra.mxu0 0.0
    %3109 = vmatpush.xpose.msra.mxu0 0.0
    %3110 = vmatpush.xpose.msra.mxu0 0.0
    %3111 = vmatpush.xpose.msra.mxu0 0.0
    %3112 = vmatpush.xpose.msra.mxu0 0.0
    %3113 = vmatpush.xpose.msra.mxu0 0.0
    %3114 = vmatpush.xpose.msra.mxu0 0.0
    %3115 = vmatpush.xpose.msra.mxu0 0.0
    %3116 = vmatpush.xpose.msra.mxu0 0.0
    %3117 = vmatpush.xpose.msra.mxu0 0.0
    %3118 = vmatpush.xpose.msra.mxu0 %v3102
    %3119 = vmatpush.xpose.msra.mxu0 %v3100
    %3120 = vmatmul.f32.gmra.mxu0 %v3096
    %v3121 = vpop.f32.mrf.mxu0
    %v3122 = vadd.f32 0.0, %v3121
    %3123 = vmatmul.f32.gmra.mxu0 %v3098
    %v3124 = vpop.f32.mrf.mxu0
    %v3125 = vadd.f32 0.0, %v3124
    %3126 = vdwg.mxu0
    %3127 = vrot.lane.b32.xlu0 %v268, 32
    %v3128 = vpop.permute.xlu0 %3127
    %3129 = vrot.lane.b32.xlu0 %v271, 32
    %v3130 = vpop.permute.xlu0 %3129
    %3131 = vrot.lane.b32.xlu0 %v453, 32
    %v3132 = vpop.permute.xlu0 %3131
    %3133 = vrot.lane.b32.xlu0 %v454, 32
    %v3134 = vpop.permute.xlu0 %3133
    %v3135 = vsel %vm473, %v3128, 0
    %v3137 = vsel %vm473, %v3130, 0
    %v3139 = vsel %vm473, %v3132, 0
    %v3141 = vsel %vm473, %v3134, 0
    %3143 = vmatpush.xpose.msra.mxu0 0.0
    %3144 = vmatpush.xpose.msra.mxu0 0.0
    %3145 = vmatpush.xpose.msra.mxu0 0.0
    %3146 = vmatpush.xpose.msra.mxu0 0.0
    %3147 = vmatpush.xpose.msra.mxu0 0.0
    %3148 = vmatpush.xpose.msra.mxu0 0.0
    %3149 = vmatpush.xpose.msra.mxu0 0.0
    %3150 = vmatpush.xpose.msra.mxu0 0.0
    %3151 = vmatpush.xpose.msra.mxu0 0.0
    %3152 = vmatpush.xpose.msra.mxu0 0.0
    %3153 = vmatpush.xpose.msra.mxu0 0.0
    %3154 = vmatpush.xpose.msra.mxu0 0.0
    %3155 = vmatpush.xpose.msra.mxu0 0.0
    %3156 = vmatpush.xpose.msra.mxu0 0.0
    %3157 = vmatpush.xpose.msra.mxu0 %v3141
    %3158 = vmatpush.xpose.msra.mxu0 %v3139
    %3159 = vmatmul.f32.gmra.mxu0 %v3135
    %v3160 = vpop.f32.mrf.mxu0
    %v3161 = vadd.f32 0.0, %v3160
    %3162 = vmatmul.f32.gmra.mxu0 %v3137
    %v3163 = vpop.f32.mrf.mxu0
    %v3164 = vadd.f32 0.0, %v3163
    %3165 = vdwg.mxu0
    %3166 = vrot.lane.b32.xlu0 %v274, 32
    %v3167 = vpop.permute.xlu0 %3166
    %3168 = vrot.lane.b32.xlu0 %v277, 32
    %v3169 = vpop.permute.xlu0 %3168
    %3170 = vrot.lane.b32.xlu0 %v455, 32
    %v3171 = vpop.permute.xlu0 %3170
    %3172 = vrot.lane.b32.xlu0 %v456, 32
    %v3173 = vpop.permute.xlu0 %3172
    %v3174 = vsel %vm473, %v3167, 0
    %v3176 = vsel %vm473, %v3169, 0
    %v3178 = vsel %vm473, %v3171, 0
    %v3180 = vsel %vm473, %v3173, 0
    %3182 = vmatpush.xpose.msra.mxu0 0.0
    %3183 = vmatpush.xpose.msra.mxu0 0.0
    %3184 = vmatpush.xpose.msra.mxu0 0.0
    %3185 = vmatpush.xpose.msra.mxu0 0.0
    %3186 = vmatpush.xpose.msra.mxu0 0.0
    %3187 = vmatpush.xpose.msra.mxu0 0.0
    %3188 = vmatpush.xpose.msra.mxu0 0.0
    %3189 = vmatpush.xpose.msra.mxu0 0.0
    %3190 = vmatpush.xpose.msra.mxu0 0.0
    %3191 = vmatpush.xpose.msra.mxu0 0.0
    %3192 = vmatpush.xpose.msra.mxu0 0.0
    %3193 = vmatpush.xpose.msra.mxu0 0.0
    %3194 = vmatpush.xpose.msra.mxu0 0.0
    %3195 = vmatpush.xpose.msra.mxu0 0.0
    %3196 = vmatpush.xpose.msra.mxu0 %v3180
    %3197 = vmatpush.xpose.msra.mxu0 %v3178
    %3198 = vmatmul.f32.gmra.mxu0 %v3174
    %v3199 = vpop.f32.mrf.mxu0
    %v3200 = vadd.f32 0.0, %v3199
    %3201 = vmatmul.f32.gmra.mxu0 %v3176
    %v3202 = vpop.f32.mrf.mxu0
    %v3203 = vadd.f32 0.0, %v3202
    %3204 = vdwg.mxu0
    %v3205 = vsel %vm754, %v2927, -inf
    %3206 = vmax.xlane.f32.xlu0 %v3205
    %v3207 = vpop.xlane.xlu0 %3206
    %v3208 = vsel %vm754, %v2930, -inf
    %3209 = vmax.xlane.f32.xlu0 %v3208
    %v3210 = vpop.xlane.xlu0 %3209
    %v3211 = vsel %vm754, %v2966, -inf
    %3212 = vmax.xlane.f32.xlu0 %v3211
    %v3213 = vpop.xlane.xlu0 %3212
    %v3214 = vsel %vm754, %v2969, -inf
    %3215 = vmax.xlane.f32.xlu0 %v3214
    %v3216 = vpop.xlane.xlu0 %3215
    %v3217 = vsel %vm754, %v3005, -inf
    %3218 = vmax.xlane.f32.xlu0 %v3217
    %v3219 = vpop.xlane.xlu0 %3218
    %v3220 = vsel %vm754, %v3008, -inf
    %3221 = vmax.xlane.f32.xlu0 %v3220
    %v3222 = vpop.xlane.xlu0 %3221
    %v3223 = vsel %vm754, %v3044, -inf
    %3224 = vmax.xlane.f32.xlu0 %v3223
    %v3225 = vpop.xlane.xlu0 %3224
    %v3226 = vsel %vm754, %v3047, -inf
    %3227 = vmax.xlane.f32.xlu0 %v3226
    %v3228 = vpop.xlane.xlu0 %3227
    %v3229 = vsel %vm754, %v3083, -inf
    %3230 = vmax.xlane.f32.xlu0 %v3229
    %v3231 = vpop.xlane.xlu0 %3230
    %v3232 = vsel %vm754, %v3086, -inf
    %3233 = vmax.xlane.f32.xlu0 %v3232
    %v3234 = vpop.xlane.xlu0 %3233
    %v3235 = vsel %vm754, %v3122, -inf
    %3236 = vmax.xlane.f32.xlu0 %v3235
    %v3237 = vpop.xlane.xlu0 %3236
    %v3238 = vsel %vm754, %v3125, -inf
    %3239 = vmax.xlane.f32.xlu0 %v3238
    %v3240 = vpop.xlane.xlu0 %3239
    %v3241 = vsel %vm754, %v3161, -inf
    %3242 = vmax.xlane.f32.xlu0 %v3241
    %v3243 = vpop.xlane.xlu0 %3242
    %v3244 = vsel %vm754, %v3164, -inf
    %3245 = vmax.xlane.f32.xlu0 %v3244
    %v3246 = vpop.xlane.xlu0 %3245
    %v3247 = vsel %vm754, %v3200, -inf
    %3248 = vmax.xlane.f32.xlu0 %v3247
    %v3249 = vpop.xlane.xlu0 %3248
    %v3250 = vsel %vm754, %v3203, -inf
    %3251 = vmax.xlane.f32.xlu0 %v3250
    %v3252 = vpop.xlane.xlu0 %3251
    %v3253 = vsub.f32 %v2927, %v3207
    %v3254 = vsub.f32 %v2930, %v3210
    %v3255 = vsub.f32 %v2966, %v3213
    %v3256 = vsub.f32 %v2969, %v3216
    %v3257 = vsub.f32 %v3005, %v3219
    %v3258 = vsub.f32 %v3008, %v3222
    %v3259 = vsub.f32 %v3044, %v3225
    %v3260 = vsub.f32 %v3047, %v3228
    %v3261 = vsub.f32 %v3083, %v3231
    %v3262 = vsub.f32 %v3086, %v3234
    %v3263 = vsub.f32 %v3122, %v3237
    %v3264 = vsub.f32 %v3125, %v3240
    %v3265 = vsub.f32 %v3161, %v3243
    %v3266 = vsub.f32 %v3164, %v3246
    %v3267 = vsub.f32 %v3200, %v3249
    %v3268 = vsub.f32 %v3203, %v3252
    %v3269 = vmul.f32 %v3253, 1.442695
    %v3270 = vpow.pop %v3269
    %v3271 = vmul.f32 %v3254, 1.442695
    %v3272 = vpow.pop %v3271
    %v3273 = vmul.f32 %v3255, 1.442695
    %v3274 = vpow.pop %v3273
    %v3275 = vmul.f32 %v3256, 1.442695
    %v3276 = vpow.pop %v3275
    %v3277 = vmul.f32 %v3257, 1.442695
    %v3278 = vpow.pop %v3277
    %v3279 = vmul.f32 %v3258, 1.442695
    %v3280 = vpow.pop %v3279
    %v3281 = vmul.f32 %v3259, 1.442695
    %v3282 = vpow.pop %v3281
    %v3283 = vmul.f32 %v3260, 1.442695
    %v3284 = vpow.pop %v3283
    %v3285 = vmul.f32 %v3261, 1.442695
    %v3286 = vpow.pop %v3285
    %v3287 = vmul.f32 %v3262, 1.442695
    %v3288 = vpow.pop %v3287
    %v3289 = vmul.f32 %v3263, 1.442695
    %v3290 = vpow.pop %v3289
    %v3291 = vmul.f32 %v3264, 1.442695
    %v3292 = vpow.pop %v3291
    %v3293 = vmul.f32 %v3265, 1.442695
    %v3294 = vpow.pop %v3293
    %v3295 = vmul.f32 %v3266, 1.442695
    %v3296 = vpow.pop %v3295
    %v3297 = vmul.f32 %v3267, 1.442695
    %v3298 = vpow.pop %v3297
    %v3299 = vmul.f32 %v3268, 1.442695
    %v3300 = vpow.pop %v3299
    %v3301 = vsel %vm754, %v3270, 0.0
    %3302 = vadd.xlane.f32.xlu0 %v3301
    %v3303 = vpop.xlane.xlu0 %3302
    %v3304 = vsel %vm754, %v3272, 0.0
    %3305 = vadd.xlane.f32.xlu0 %v3304
    %v3306 = vpop.xlane.xlu0 %3305
    %v3307 = vsel %vm754, %v3274, 0.0
    %3308 = vadd.xlane.f32.xlu0 %v3307
    %v3309 = vpop.xlane.xlu0 %3308
    %v3310 = vsel %vm754, %v3276, 0.0
    %3311 = vadd.xlane.f32.xlu0 %v3310
    %v3312 = vpop.xlane.xlu0 %3311
    %v3313 = vsel %vm754, %v3278, 0.0
    %3314 = vadd.xlane.f32.xlu0 %v3313
    %v3315 = vpop.xlane.xlu0 %3314
    %v3316 = vsel %vm754, %v3280, 0.0
    %3317 = vadd.xlane.f32.xlu0 %v3316
    %v3318 = vpop.xlane.xlu0 %3317
    %v3319 = vsel %vm754, %v3282, 0.0
    %3320 = vadd.xlane.f32.xlu0 %v3319
    %v3321 = vpop.xlane.xlu0 %3320
    %v3322 = vsel %vm754, %v3284, 0.0
    %3323 = vadd.xlane.f32.xlu0 %v3322
    %v3324 = vpop.xlane.xlu0 %3323
    %v3325 = vsel %vm754, %v3286, 0.0
    %3326 = vadd.xlane.f32.xlu0 %v3325
    %v3327 = vpop.xlane.xlu0 %3326
    %v3328 = vsel %vm754, %v3288, 0.0
    %3329 = vadd.xlane.f32.xlu0 %v3328
    %v3330 = vpop.xlane.xlu0 %3329
    %v3331 = vsel %vm754, %v3290, 0.0
    %3332 = vadd.xlane.f32.xlu0 %v3331
    %v3333 = vpop.xlane.xlu0 %3332
    %v3334 = vsel %vm754, %v3292, 0.0
    %3335 = vadd.xlane.f32.xlu0 %v3334
    %v3336 = vpop.xlane.xlu0 %3335
    %v3337 = vsel %vm754, %v3294, 0.0
    %3338 = vadd.xlane.f32.xlu0 %v3337
    %v3339 = vpop.xlane.xlu0 %3338
    %v3340 = vsel %vm754, %v3296, 0.0
    %3341 = vadd.xlane.f32.xlu0 %v3340
    %v3342 = vpop.xlane.xlu0 %3341
    %v3343 = vsel %vm754, %v3298, 0.0
    %3344 = vadd.xlane.f32.xlu0 %v3343
    %v3345 = vpop.xlane.xlu0 %3344
    %v3346 = vsel %vm754, %v3300, 0.0
    %3347 = vadd.xlane.f32.xlu0 %v3346
    %v3348 = vpop.xlane.xlu0 %3347
    %v3349 = vrcp.pop %v3303
    %v3350 = vrcp.pop %v3306
    %v3351 = vrcp.pop %v3309
    %v3352 = vrcp.pop %v3312
    %v3353 = vrcp.pop %v3315
    %v3354 = vrcp.pop %v3318
    %v3355 = vrcp.pop %v3321
    %v3356 = vrcp.pop %v3324
    %v3357 = vrcp.pop %v3327
    %v3358 = vrcp.pop %v3330
    %v3359 = vrcp.pop %v3333
    %v3360 = vrcp.pop %v3336
    %v3361 = vrcp.pop %v3339
    %v3362 = vrcp.pop %v3342
    %v3363 = vrcp.pop %v3345
    %v3364 = vrcp.pop %v3348
    %v3365 = vmul.f32 %v3270, %v3349
    %v3366 = vmul.f32 %v3272, %v3350
    %v3367 = vmul.f32 %v3274, %v3351
    %v3368 = vmul.f32 %v3276, %v3352
    %v3369 = vmul.f32 %v3278, %v3353
    %v3370 = vmul.f32 %v3280, %v3354
    %v3371 = vmul.f32 %v3282, %v3355
    %v3372 = vmul.f32 %v3284, %v3356
    %v3373 = vmul.f32 %v3286, %v3357
    %v3374 = vmul.f32 %v3288, %v3358
    %v3375 = vmul.f32 %v3290, %v3359
    %v3376 = vmul.f32 %v3292, %v3360
    %v3377 = vmul.f32 %v3294, %v3361
    %v3378 = vmul.f32 %v3296, %v3362
    %v3379 = vmul.f32 %v3298, %v3363
    %v3380 = vmul.f32 %v3300, %v3364
    %3381 = vrot.lane.b32.xlu0 %v457, 32
    %v3382 = vpop.permute.xlu0 %3381
    %3383 = vrot.lane.b32.xlu0 %v458, 32
    %v3384 = vpop.permute.xlu0 %3383
    %v3388 = vsel %vm754, %v3365, 0
    %v3391 = vsel %vm754, %v3366, 0
    %3393 = vmatpush.msra.mxu0 0.0
    %3394 = vmatpush.msra.mxu0 0.0
    %3395 = vmatpush.msra.mxu0 0.0
    %3396 = vmatpush.msra.mxu0 0.0
    %3397 = vmatpush.msra.mxu0 0.0
    %3398 = vmatpush.msra.mxu0 0.0
    %3399 = vmatpush.msra.mxu0 0.0
    %3400 = vmatpush.msra.mxu0 0.0
    %3401 = vmatpush.msra.mxu0 0.0
    %3402 = vmatpush.msra.mxu0 0.0
    %3403 = vmatpush.msra.mxu0 0.0
    %3404 = vmatpush.msra.mxu0 0.0
    %3405 = vmatpush.msra.mxu0 0.0
    %3406 = vmatpush.msra.mxu0 0.0
    %3407 = vmatpush.msra.mxu0 %v3384
    %3408 = vmatpush.msra.mxu0 %v3382
    %3409 = vmatmul.f32.gmra.mxu0 %v3388
    %v3410 = vpop.f32.mrf.mxu0
    %v3411 = vadd.f32 0.0, %v3410
    %3412 = vmatmul.f32.gmra.mxu0 %v3391
    %v3413 = vpop.f32.mrf.mxu0
    %v3414 = vadd.f32 0.0, %v3413
    %3415 = vdwg.mxu0
    %3416 = vrot.lane.b32.xlu0 %v459, 32
    %v3417 = vpop.permute.xlu0 %3416
    %3418 = vrot.lane.b32.xlu0 %v460, 32
    %v3419 = vpop.permute.xlu0 %3418
    %v3423 = vsel %vm754, %v3367, 0
    %v3426 = vsel %vm754, %v3368, 0
    %3428 = vmatpush.msra.mxu0 0.0
    %3429 = vmatpush.msra.mxu0 0.0
    %3430 = vmatpush.msra.mxu0 0.0
    %3431 = vmatpush.msra.mxu0 0.0
    %3432 = vmatpush.msra.mxu0 0.0
    %3433 = vmatpush.msra.mxu0 0.0
    %3434 = vmatpush.msra.mxu0 0.0
    %3435 = vmatpush.msra.mxu0 0.0
    %3436 = vmatpush.msra.mxu0 0.0
    %3437 = vmatpush.msra.mxu0 0.0
    %3438 = vmatpush.msra.mxu0 0.0
    %3439 = vmatpush.msra.mxu0 0.0
    %3440 = vmatpush.msra.mxu0 0.0
    %3441 = vmatpush.msra.mxu0 0.0
    %3442 = vmatpush.msra.mxu0 %v3419
    %3443 = vmatpush.msra.mxu0 %v3417
    %3444 = vmatmul.f32.gmra.mxu0 %v3423
    %v3445 = vpop.f32.mrf.mxu0
    %v3446 = vadd.f32 0.0, %v3445
    %3447 = vmatmul.f32.gmra.mxu0 %v3426
    %v3448 = vpop.f32.mrf.mxu0
    %v3449 = vadd.f32 0.0, %v3448
    %3450 = vdwg.mxu0
    %3451 = vrot.lane.b32.xlu0 %v461, 32
    %v3452 = vpop.permute.xlu0 %3451
    %3453 = vrot.lane.b32.xlu0 %v462, 32
    %v3454 = vpop.permute.xlu0 %3453
    %v3458 = vsel %vm754, %v3369, 0
    %v3461 = vsel %vm754, %v3370, 0
    %3463 = vmatpush.msra.mxu0 0.0
    %3464 = vmatpush.msra.mxu0 0.0
    %3465 = vmatpush.msra.mxu0 0.0
    %3466 = vmatpush.msra.mxu0 0.0
    %3467 = vmatpush.msra.mxu0 0.0
    %3468 = vmatpush.msra.mxu0 0.0
    %3469 = vmatpush.msra.mxu0 0.0
    %3470 = vmatpush.msra.mxu0 0.0
    %3471 = vmatpush.msra.mxu0 0.0
    %3472 = vmatpush.msra.mxu0 0.0
    %3473 = vmatpush.msra.mxu0 0.0
    %3474 = vmatpush.msra.mxu0 0.0
    %3475 = vmatpush.msra.mxu0 0.0
    %3476 = vmatpush.msra.mxu0 0.0
    %3477 = vmatpush.msra.mxu0 %v3454
    %3478 = vmatpush.msra.mxu0 %v3452
    %3479 = vmatmul.f32.gmra.mxu0 %v3458
    %v3480 = vpop.f32.mrf.mxu0
    %v3481 = vadd.f32 0.0, %v3480
    %3482 = vmatmul.f32.gmra.mxu0 %v3461
    %v3483 = vpop.f32.mrf.mxu0
    %v3484 = vadd.f32 0.0, %v3483
    %3485 = vdwg.mxu0
    %3486 = vrot.lane.b32.xlu0 %v463, 32
    %v3487 = vpop.permute.xlu0 %3486
    %3488 = vrot.lane.b32.xlu0 %v464, 32
    %v3489 = vpop.permute.xlu0 %3488
    %v3493 = vsel %vm754, %v3371, 0
    %v3496 = vsel %vm754, %v3372, 0
    %3498 = vmatpush.msra.mxu0 0.0
    %3499 = vmatpush.msra.mxu0 0.0
    %3500 = vmatpush.msra.mxu0 0.0
    %3501 = vmatpush.msra.mxu0 0.0
    %3502 = vmatpush.msra.mxu0 0.0
    %3503 = vmatpush.msra.mxu0 0.0
    %3504 = vmatpush.msra.mxu0 0.0
    %3505 = vmatpush.msra.mxu0 0.0
    %3506 = vmatpush.msra.mxu0 0.0
    %3507 = vmatpush.msra.mxu0 0.0
    %3508 = vmatpush.msra.mxu0 0.0
    %3509 = vmatpush.msra.mxu0 0.0
    %3510 = vmatpush.msra.mxu0 0.0
    %3511 = vmatpush.msra.mxu0 0.0
    %3512 = vmatpush.msra.mxu0 %v3489
    %3513 = vmatpush.msra.mxu0 %v3487
    %3514 = vmatmul.f32.gmra.mxu0 %v3493
    %v3515 = vpop.f32.mrf.mxu0
    %v3516 = vadd.f32 0.0, %v3515
    %3517 = vmatmul.f32.gmra.mxu0 %v3496
    %v3518 = vpop.f32.mrf.mxu0
    %v3519 = vadd.f32 0.0, %v3518
    %3520 = vdwg.mxu0
    %3521 = vrot.lane.b32.xlu0 %v465, 32
    %v3522 = vpop.permute.xlu0 %3521
    %3523 = vrot.lane.b32.xlu0 %v466, 32
    %v3524 = vpop.permute.xlu0 %3523
    %v3528 = vsel %vm754, %v3373, 0
    %v3531 = vsel %vm754, %v3374, 0
    %3533 = vmatpush.msra.mxu0 0.0
    %3534 = vmatpush.msra.mxu0 0.0
    %3535 = vmatpush.msra.mxu0 0.0
    %3536 = vmatpush.msra.mxu0 0.0
    %3537 = vmatpush.msra.mxu0 0.0
    %3538 = vmatpush.msra.mxu0 0.0
    %3539 = vmatpush.msra.mxu0 0.0
    %3540 = vmatpush.msra.mxu0 0.0
    %3541 = vmatpush.msra.mxu0 0.0
    %3542 = vmatpush.msra.mxu0 0.0
    %3543 = vmatpush.msra.mxu0 0.0
    %3544 = vmatpush.msra.mxu0 0.0
    %3545 = vmatpush.msra.mxu0 0.0
    %3546 = vmatpush.msra.mxu0 0.0
    %3547 = vmatpush.msra.mxu0 %v3524
    %3548 = vmatpush.msra.mxu0 %v3522
    %3549 = vmatmul.f32.gmra.mxu0 %v3528
    %v3550 = vpop.f32.mrf.mxu0
    %v3551 = vadd.f32 0.0, %v3550
    %3552 = vmatmul.f32.gmra.mxu0 %v3531
    %v3553 = vpop.f32.mrf.mxu0
    %v3554 = vadd.f32 0.0, %v3553
    %3555 = vdwg.mxu0
    %3556 = vrot.lane.b32.xlu0 %v467, 32
    %v3557 = vpop.permute.xlu0 %3556
    %3558 = vrot.lane.b32.xlu0 %v468, 32
    %v3559 = vpop.permute.xlu0 %3558
    %v3563 = vsel %vm754, %v3375, 0
    %v3566 = vsel %vm754, %v3376, 0
    %3568 = vmatpush.msra.mxu0 0.0
    %3569 = vmatpush.msra.mxu0 0.0
    %3570 = vmatpush.msra.mxu0 0.0
    %3571 = vmatpush.msra.mxu0 0.0
    %3572 = vmatpush.msra.mxu0 0.0
    %3573 = vmatpush.msra.mxu0 0.0
    %3574 = vmatpush.msra.mxu0 0.0
    %3575 = vmatpush.msra.mxu0 0.0
    %3576 = vmatpush.msra.mxu0 0.0
    %3577 = vmatpush.msra.mxu0 0.0
    %3578 = vmatpush.msra.mxu0 0.0
    %3579 = vmatpush.msra.mxu0 0.0
    %3580 = vmatpush.msra.mxu0 0.0
    %3581 = vmatpush.msra.mxu0 0.0
    %3582 = vmatpush.msra.mxu0 %v3559
    %3583 = vmatpush.msra.mxu0 %v3557
    %3584 = vmatmul.f32.gmra.mxu0 %v3563
    %v3585 = vpop.f32.mrf.mxu0
    %v3586 = vadd.f32 0.0, %v3585
    %3587 = vmatmul.f32.gmra.mxu0 %v3566
    %v3588 = vpop.f32.mrf.mxu0
    %v3589 = vadd.f32 0.0, %v3588
    %3590 = vdwg.mxu0
    %3591 = vrot.lane.b32.xlu0 %v469, 32
    %v3592 = vpop.permute.xlu0 %3591
    %3593 = vrot.lane.b32.xlu0 %v470, 32
    %v3594 = vpop.permute.xlu0 %3593
    %v3598 = vsel %vm754, %v3377, 0
    %v3601 = vsel %vm754, %v3378, 0
    %3603 = vmatpush.msra.mxu0 0.0
    %3604 = vmatpush.msra.mxu0 0.0
    %3605 = vmatpush.msra.mxu0 0.0
    %3606 = vmatpush.msra.mxu0 0.0
    %3607 = vmatpush.msra.mxu0 0.0
    %3608 = vmatpush.msra.mxu0 0.0
    %3609 = vmatpush.msra.mxu0 0.0
    %3610 = vmatpush.msra.mxu0 0.0
    %3611 = vmatpush.msra.mxu0 0.0
    %3612 = vmatpush.msra.mxu0 0.0
    %3613 = vmatpush.msra.mxu0 0.0
    %3614 = vmatpush.msra.mxu0 0.0
    %3615 = vmatpush.msra.mxu0 0.0
    %3616 = vmatpush.msra.mxu0 0.0
    %3617 = vmatpush.msra.mxu0 %v3594
    %3618 = vmatpush.msra.mxu0 %v3592
    %3619 = vmatmul.f32.gmra.mxu0 %v3598
    %v3620 = vpop.f32.mrf.mxu0
    %v3621 = vadd.f32 0.0, %v3620
    %3622 = vmatmul.f32.gmra.mxu0 %v3601
    %v3623 = vpop.f32.mrf.mxu0
    %v3624 = vadd.f32 0.0, %v3623
    %3625 = vdwg.mxu0
    %3626 = vrot.lane.b32.xlu0 %v471, 32
    %v3627 = vpop.permute.xlu0 %3626
    %3628 = vrot.lane.b32.xlu0 %v472, 32
    %v3629 = vpop.permute.xlu0 %3628
    %v3633 = vsel %vm754, %v3379, 0
    %v3636 = vsel %vm754, %v3380, 0
    %3638 = vmatpush.msra.mxu0 0.0
    %3639 = vmatpush.msra.mxu0 0.0
    %3640 = vmatpush.msra.mxu0 0.0
    %3641 = vmatpush.msra.mxu0 0.0
    %3642 = vmatpush.msra.mxu0 0.0
    %3643 = vmatpush.msra.mxu0 0.0
    %3644 = vmatpush.msra.mxu0 0.0
    %3645 = vmatpush.msra.mxu0 0.0
    %3646 = vmatpush.msra.mxu0 0.0
    %3647 = vmatpush.msra.mxu0 0.0
    %3648 = vmatpush.msra.mxu0 0.0
    %3649 = vmatpush.msra.mxu0 0.0
    %3650 = vmatpush.msra.mxu0 0.0
    %3651 = vmatpush.msra.mxu0 0.0
    %3652 = vmatpush.msra.mxu0 %v3629
    %3653 = vmatpush.msra.mxu0 %v3627
    %3654 = vmatmul.f32.gmra.mxu0 %v3633
    %v3655 = vpop.f32.mrf.mxu0
    %v3656 = vadd.f32 0.0, %v3655
    %3657 = vmatmul.f32.gmra.mxu0 %v3636
    %v3658 = vpop.f32.mrf.mxu0
    %v3659 = vadd.f32 0.0, %v3658
    %3660 = vdwg.mxu0
    %3677 = vrot.lane.b32.xlu0 %v3411, 96
    %v3678 = vpop.permute.xlu0 %3677
    %3679 = vrot.lane.b32.xlu0 %v3414, 96
    %v3680 = vpop.permute.xlu0 %3679
    %3681 = vrot.lane.b32.xlu0 %v3446, 96
    %v3682 = vpop.permute.xlu0 %3681
    %3683 = vrot.lane.b32.xlu0 %v3449, 96
    %v3684 = vpop.permute.xlu0 %3683
    %3685 = vrot.lane.b32.xlu0 %v3481, 96
    %v3686 = vpop.permute.xlu0 %3685
    %3687 = vrot.lane.b32.xlu0 %v3484, 96
    %v3688 = vpop.permute.xlu0 %3687
    %3689 = vrot.lane.b32.xlu0 %v3516, 96
    %v3690 = vpop.permute.xlu0 %3689
    %3691 = vrot.lane.b32.xlu0 %v3519, 96
    %v3692 = vpop.permute.xlu0 %3691
    %3693 = vrot.lane.b32.xlu0 %v3551, 96
    %v3694 = vpop.permute.xlu0 %3693
    %3695 = vrot.lane.b32.xlu0 %v3554, 96
    %v3696 = vpop.permute.xlu0 %3695
    %3697 = vrot.lane.b32.xlu0 %v3586, 96
    %v3698 = vpop.permute.xlu0 %3697
    %3699 = vrot.lane.b32.xlu0 %v3589, 96
    %v3700 = vpop.permute.xlu0 %3699
    %3701 = vrot.lane.b32.xlu0 %v3621, 96
    %v3702 = vpop.permute.xlu0 %3701
    %3703 = vrot.lane.b32.xlu0 %v3624, 96
    %v3704 = vpop.permute.xlu0 %3703
    %3705 = vrot.lane.b32.xlu0 %v3656, 96
    %v3706 = vpop.permute.xlu0 %3705
    %3707 = vrot.lane.b32.xlu0 %v3659, 96
    %v3708 = vpop.permute.xlu0 %3707
    %vm3725 = vcmask 1048320
    %3726 = vst.msk [vmem:[#allocation2] sm:$0xff] %vm3725, %v3678
    %3727 = vst.msk [vmem:[#allocation2 + $0x8] sm:$0xff] %vm3725, %v3680
    %3728 = vst.msk [vmem:[#allocation2 + $0x10] sm:$0xff] %vm3725, %v3682
    %3729 = vst.msk [vmem:[#allocation2 + $0x18] sm:$0xff] %vm3725, %v3684
    %3730 = vst.msk [vmem:[#allocation2 + $0x20] sm:$0xff] %vm3725, %v3686
    %3731 = vst.msk [vmem:[#allocation2 + $0x28] sm:$0xff] %vm3725, %v3688
    %3732 = vst.msk [vmem:[#allocation2 + $0x30] sm:$0xff] %vm3725, %v3690
    %3733 = vst.msk [vmem:[#allocation2 + $0x38] sm:$0xff] %vm3725, %v3692
    %3734 = vst.msk [vmem:[#allocation2 + $0x40] sm:$0xff] %vm3725, %v3694
    %3735 = vst.msk [vmem:[#allocation2 + $0x48] sm:$0xff] %vm3725, %v3696
    %3736 = vst.msk [vmem:[#allocation2 + $0x50] sm:$0xff] %vm3725, %v3698
    %3737 = vst.msk [vmem:[#allocation2 + $0x58] sm:$0xff] %vm3725, %v3700
    %3738 = vst.msk [vmem:[#allocation2 + $0x60] sm:$0xff] %vm3725, %v3702
    %3739 = vst.msk [vmem:[#allocation2 + $0x68] sm:$0xff] %vm3725, %v3704
    %3740 = vst.msk [vmem:[#allocation2 + $0x70] sm:$0xff] %vm3725, %v3706
    %3741 = vst.msk [vmem:[#allocation2 + $0x78] sm:$0xff] %vm3725, %v3708
    %v3742 = vld [vmem:[#allocation2] sm:$0xff]
    %v3743 = vld [vmem:[#allocation2 + $0x8] sm:$0xff]
    %v3744 = vld [vmem:[#allocation2 + $0x10] sm:$0xff]
    %v3745 = vld [vmem:[#allocation2 + $0x18] sm:$0xff]
    %v3746 = vld [vmem:[#allocation2 + $0x20] sm:$0xff]
    %v3747 = vld [vmem:[#allocation2 + $0x28] sm:$0xff]
    %v3748 = vld [vmem:[#allocation2 + $0x30] sm:$0xff]
    %v3749 = vld [vmem:[#allocation2 + $0x38] sm:$0xff]
    %v3750 = vld [vmem:[#allocation2 + $0x40] sm:$0xff]
    %v3751 = vld [vmem:[#allocation2 + $0x48] sm:$0xff]
    %v3752 = vld [vmem:[#allocation2 + $0x50] sm:$0xff]
    %v3753 = vld [vmem:[#allocation2 + $0x58] sm:$0xff]
    %v3754 = vld [vmem:[#allocation2 + $0x60] sm:$0xff]
    %v3755 = vld [vmem:[#allocation2 + $0x68] sm:$0xff]
    %v3756 = vld [vmem:[#allocation2 + $0x70] sm:$0xff]
    %v3757 = vld [vmem:[#allocation2 + $0x78] sm:$0xff]
    %v3758 = vld [vmem:[#allocation11] sm:$0xff]
    %v3759 = vld [vmem:[#allocation11 + $0x8] sm:$0xff]
    %v3760 = vld [vmem:[#allocation11 + $0x10] sm:$0xff]
    %v3761 = vld [vmem:[#allocation11 + $0x18] sm:$0xff]
    %v3762 = vld [vmem:[#allocation11 + $0x20] sm:$0xff]
    %v3763 = vld [vmem:[#allocation11 + $0x28] sm:$0xff]
    %v3764 = vld [vmem:[#allocation11 + $0x30] sm:$0xff]
    %v3765 = vld [vmem:[#allocation11 + $0x38] sm:$0xff]
    %v3766 = vld [vmem:[#allocation11 + $0x40] sm:$0xff]
    %v3767 = vld [vmem:[#allocation11 + $0x48] sm:$0xff]
    %v3768 = vld [vmem:[#allocation11 + $0x50] sm:$0xff]
    %v3769 = vld [vmem:[#allocation11 + $0x58] sm:$0xff]
    %v3770 = vld [vmem:[#allocation11 + $0x60] sm:$0xff]
    %v3771 = vld [vmem:[#allocation11 + $0x68] sm:$0xff]
    %v3772 = vld [vmem:[#allocation11 + $0x70] sm:$0xff]
    %v3773 = vld [vmem:[#allocation11 + $0x78] sm:$0xff]
    %3774 = vmatpush.msra.mxu0 %v3773
    %3775 = vmatpush.msra.mxu0 %v3772
    %3776 = vmatpush.msra.mxu0 %v3771
    %3777 = vmatpush.msra.mxu0 %v3770
    %3778 = vmatpush.msra.mxu0 %v3769
    %3779 = vmatpush.msra.mxu0 %v3768
    %3780 = vmatpush.msra.mxu0 %v3767
    %3781 = vmatpush.msra.mxu0 %v3766
    %3782 = vmatpush.msra.mxu0 %v3765
    %3783 = vmatpush.msra.mxu0 %v3764
    %3784 = vmatpush.msra.mxu0 %v3763
    %3785 = vmatpush.msra.mxu0 %v3762
    %3786 = vmatpush.msra.mxu0 %v3761
    %3787 = vmatpush.msra.mxu0 %v3760
    %3788 = vmatpush.msra.mxu0 %v3759
    %3789 = vmatpush.msra.mxu0 %v3758
    %3790 = vmatmul.f32.gmra.mxu0 %v3742
    %v3791 = vpop.f32.mrf.mxu0
    %v3792 = vadd.f32 %v194, %v3791
    %3793 = vmatmul.f32.gmra.mxu0 %v3743
    %v3794 = vpop.f32.mrf.mxu0
    %v3795 = vadd.f32 %v194, %v3794
    %3796 = vmatmul.f32.gmra.mxu0 %v3744
    %v3797 = vpop.f32.mrf.mxu0
    %v3798 = vadd.f32 %v194, %v3797
    %3799 = vmatmul.f32.gmra.mxu0 %v3745
    %v3800 = vpop.f32.mrf.mxu0
    %v3801 = vadd.f32 %v194, %v3800
    %3802 = vmatmul.f32.gmra.mxu0 %v3746
    %v3803 = vpop.f32.mrf.mxu0
    %v3804 = vadd.f32 %v194, %v3803
    %3805 = vmatmul.f32.gmra.mxu0 %v3747
    %v3806 = vpop.f32.mrf.mxu0
    %v3807 = vadd.f32 %v194, %v3806
    %3808 = vmatmul.f32.gmra.mxu0 %v3748
    %v3809 = vpop.f32.mrf.mxu0
    %v3810 = vadd.f32 %v194, %v3809
    %3811 = vmatmul.f32.gmra.mxu0 %v3749
    %v3812 = vpop.f32.mrf.mxu0
    %v3813 = vadd.f32 %v194, %v3812
    %3814 = vmatmul.f32.gmra.mxu0 %v3750
    %v3815 = vpop.f32.mrf.mxu0
    %v3816 = vadd.f32 %v194, %v3815
    %3817 = vmatmul.f32.gmra.mxu0 %v3751
    %v3818 = vpop.f32.mrf.mxu0
    %v3819 = vadd.f32 %v194, %v3818
    %3820 = vmatmul.f32.gmra.mxu0 %v3752
    %v3821 = vpop.f32.mrf.mxu0
    %v3822 = vadd.f32 %v194, %v3821
    %3823 = vmatmul.f32.gmra.mxu0 %v3753
    %v3824 = vpop.f32.mrf.mxu0
    %v3825 = vadd.f32 %v194, %v3824
    %3826 = vmatmul.f32.gmra.mxu0 %v3754
    %v3827 = vpop.f32.mrf.mxu0
    %v3828 = vadd.f32 %v194, %v3827
    %3829 = vmatmul.f32.gmra.mxu0 %v3755
    %v3830 = vpop.f32.mrf.mxu0
    %v3831 = vadd.f32 %v194, %v3830
    %3832 = vmatmul.f32.gmra.mxu0 %v3756
    %v3833 = vpop.f32.mrf.mxu0
    %v3834 = vadd.f32 %v194, %v3833
    %3835 = vmatmul.f32.gmra.mxu0 %v3757
    %v3836 = vpop.f32.mrf.mxu0
    %v3837 = vadd.f32 %v194, %v3836
    %3838 = vdwg.mxu0
    %v3839 = vadd.f32 %v155, %v3792
    %v3840 = vadd.f32 %v156, %v3795
    %v3841 = vadd.f32 %v157, %v3798
    %v3842 = vadd.f32 %v158, %v3801
    %v3843 = vadd.f32 %v159, %v3804
    %v3844 = vadd.f32 %v160, %v3807
    %v3845 = vadd.f32 %v161, %v3810
    %v3846 = vadd.f32 %v162, %v3813
    %v3847 = vadd.f32 %v163, %v3816
    %v3848 = vadd.f32 %v164, %v3819
    %v3849 = vadd.f32 %v165, %v3822
    %v3850 = vadd.f32 %v166, %v3825
    %v3851 = vadd.f32 %v167, %v3828
    %v3852 = vadd.f32 %v168, %v3831
    %v3853 = vadd.f32 %v169, %v3834
    %v3854 = vadd.f32 %v170, %v3837
    %3855 = vadd.xlane.f32.xlu0 %v3839
    %v3856 = vpop.xlane.xlu0 %3855
    %3857 = vadd.xlane.f32.xlu0 %v3840
    %v3858 = vpop.xlane.xlu0 %3857
    %3859 = vadd.xlane.f32.xlu0 %v3841
    %v3860 = vpop.xlane.xlu0 %3859
    %3861 = vadd.xlane.f32.xlu0 %v3842
    %v3862 = vpop.xlane.xlu0 %3861
    %3863 = vadd.xlane.f32.xlu0 %v3843
    %v3864 = vpop.xlane.xlu0 %3863
    %3865 = vadd.xlane.f32.xlu0 %v3844
    %v3866 = vpop.xlane.xlu0 %3865
    %3867 = vadd.xlane.f32.xlu0 %v3845
    %v3868 = vpop.xlane.xlu0 %3867
    %3869 = vadd.xlane.f32.xlu0 %v3846
    %v3870 = vpop.xlane.xlu0 %3869
    %3871 = vadd.xlane.f32.xlu0 %v3847
    %v3872 = vpop.xlane.xlu0 %3871
    %3873 = vadd.xlane.f32.xlu0 %v3848
    %v3874 = vpop.xlane.xlu0 %3873
    %3875 = vadd.xlane.f32.xlu0 %v3849
    %v3876 = vpop.xlane.xlu0 %3875
    %3877 = vadd.xlane.f32.xlu0 %v3850
    %v3878 = vpop.xlane.xlu0 %3877
    %3879 = vadd.xlane.f32.xlu0 %v3851
    %v3880 = vpop.xlane.xlu0 %3879
    %3881 = vadd.xlane.f32.xlu0 %v3852
    %v3882 = vpop.xlane.xlu0 %3881
    %3883 = vadd.xlane.f32.xlu0 %v3853
    %v3884 = vpop.xlane.xlu0 %3883
    %3885 = vadd.xlane.f32.xlu0 %v3854
    %v3886 = vpop.xlane.xlu0 %3885
    %v3887 = vrcp.pop 128.0
    %v3888 = vmul.f32 128.0, %v3887
    %v3889 = vsub.f32 1.0, %v3888
    %v3890 = vmul.f32 %v3887, %v3889
    %v3891 = vadd.f32 %v3887, %v3890
    %vm3892 = vweird.f32 %v3887
    %v3893 = vsel %vm3892, %v3887, %v3891
    %v3894 = vmul.f32 %v3856, %v3893
    %v3895 = vmul.f32 %v3858, %v3893
    %v3896 = vmul.f32 %v3860, %v3893
    %v3897 = vmul.f32 %v3862, %v3893
    %v3898 = vmul.f32 %v3864, %v3893
    %v3899 = vmul.f32 %v3866, %v3893
    %v3900 = vmul.f32 %v3868, %v3893
    %v3901 = vmul.f32 %v3870, %v3893
    %v3902 = vmul.f32 %v3872, %v3893
    %v3903 = vmul.f32 %v3874, %v3893
    %v3904 = vmul.f32 %v3876, %v3893
    %v3905 = vmul.f32 %v3878, %v3893
    %v3906 = vmul.f32 %v3880, %v3893
    %v3907 = vmul.f32 %v3882, %v3893
    %v3908 = vmul.f32 %v3884, %v3893
    %v3909 = vmul.f32 %v3886, %v3893
    %v3910 = vsub.f32 %v3839, %v3894
    %v3911 = vsub.f32 %v3840, %v3895
    %v3912 = vsub.f32 %v3841, %v3896
    %v3913 = vsub.f32 %v3842, %v3897
    %v3914 = vsub.f32 %v3843, %v3898
    %v3915 = vsub.f32 %v3844, %v3899
    %v3916 = vsub.f32 %v3845, %v3900
    %v3917 = vsub.f32 %v3846, %v3901
    %v3918 = vsub.f32 %v3847, %v3902
    %v3919 = vsub.f32 %v3848, %v3903
    %v3920 = vsub.f32 %v3849, %v3904
    %v3921 = vsub.f32 %v3850, %v3905
    %v3922 = vsub.f32 %v3851, %v3906
    %v3923 = vsub.f32 %v3852, %v3907
    %v3924 = vsub.f32 %v3853, %v3908
    %v3925 = vsub.f32 %v3854, %v3909
    %v3926 = vmul.f32 %v3910, %v3910
    %v3927 = vmul.f32 %v3911, %v3911
    %v3928 = vmul.f32 %v3912, %v3912
    %v3929 = vmul.f32 %v3913, %v3913
    %v3930 = vmul.f32 %v3914, %v3914
    %v3931 = vmul.f32 %v3915, %v3915
    %v3932 = vmul.f32 %v3916, %v3916
    %v3933 = vmul.f32 %v3917, %v3917
    %v3934 = vmul.f32 %v3918, %v3918
    %v3935 = vmul.f32 %v3919, %v3919
    %v3936 = vmul.f32 %v3920, %v3920
    %v3937 = vmul.f32 %v3921, %v3921
    %v3938 = vmul.f32 %v3922, %v3922
    %v3939 = vmul.f32 %v3923, %v3923
    %v3940 = vmul.f32 %v3924, %v3924
    %v3941 = vmul.f32 %v3925, %v3925
    %3942 = vadd.xlane.f32.xlu0 %v3926
    %v3943 = vpop.xlane.xlu0 %3942
    %3944 = vadd.xlane.f32.xlu0 %v3927
    %v3945 = vpop.xlane.xlu0 %3944
    %3946 = vadd.xlane.f32.xlu0 %v3928
    %v3947 = vpop.xlane.xlu0 %3946
    %3948 = vadd.xlane.f32.xlu0 %v3929
    %v3949 = vpop.xlane.xlu0 %3948
    %3950 = vadd.xlane.f32.xlu0 %v3930
    %v3951 = vpop.xlane.xlu0 %3950
    %3952 = vadd.xlane.f32.xlu0 %v3931
    %v3953 = vpop.xlane.xlu0 %3952
    %3954 = vadd.xlane.f32.xlu0 %v3932
    %v3955 = vpop.xlane.xlu0 %3954
    %3956 = vadd.xlane.f32.xlu0 %v3933
    %v3957 = vpop.xlane.xlu0 %3956
    %3958 = vadd.xlane.f32.xlu0 %v3934
    %v3959 = vpop.xlane.xlu0 %3958
    %3960 = vadd.xlane.f32.xlu0 %v3935
    %v3961 = vpop.xlane.xlu0 %3960
    %3962 = vadd.xlane.f32.xlu0 %v3936
    %v3963 = vpop.xlane.xlu0 %3962
    %3964 = vadd.xlane.f32.xlu0 %v3937
    %v3965 = vpop.xlane.xlu0 %3964
    %3966 = vadd.xlane.f32.xlu0 %v3938
    %v3967 = vpop.xlane.xlu0 %3966
    %3968 = vadd.xlane.f32.xlu0 %v3939
    %v3969 = vpop.xlane.xlu0 %3968
    %3970 = vadd.xlane.f32.xlu0 %v3940
    %v3971 = vpop.xlane.xlu0 %3970
    %3972 = vadd.xlane.f32.xlu0 %v3941
    %v3973 = vpop.xlane.xlu0 %3972
    %v3974 = vmul.f32 %v3943, %v3893
    %v3975 = vmul.f32 %v3945, %v3893
    %v3976 = vmul.f32 %v3947, %v3893
    %v3977 = vmul.f32 %v3949, %v3893
    %v3978 = vmul.f32 %v3951, %v3893
    %v3979 = vmul.f32 %v3953, %v3893
    %v3980 = vmul.f32 %v3955, %v3893
    %v3981 = vmul.f32 %v3957, %v3893
    %v3982 = vmul.f32 %v3959, %v3893
    %v3983 = vmul.f32 %v3961, %v3893
    %v3984 = vmul.f32 %v3963, %v3893
    %v3985 = vmul.f32 %v3965, %v3893
    %v3986 = vmul.f32 %v3967, %v3893
    %v3987 = vmul.f32 %v3969, %v3893
    %v3988 = vmul.f32 %v3971, %v3893
    %v3989 = vmul.f32 %v3973, %v3893
    %v3990 = vadd.f32 %v3974, 1e-05
    %v3991 = vadd.f32 %v3975, 1e-05
    %v3992 = vadd.f32 %v3976, 1e-05
    %v3993 = vadd.f32 %v3977, 1e-05
    %v3994 = vadd.f32 %v3978, 1e-05
    %v3995 = vadd.f32 %v3979, 1e-05
    %v3996 = vadd.f32 %v3980, 1e-05
    %v3997 = vadd.f32 %v3981, 1e-05
    %v3998 = vadd.f32 %v3982, 1e-05
    %v3999 = vadd.f32 %v3983, 1e-05
    %v4000 = vadd.f32 %v3984, 1e-05
    %v4001 = vadd.f32 %v3985, 1e-05
    %v4002 = vadd.f32 %v3986, 1e-05
    %v4003 = vadd.f32 %v3987, 1e-05
    %v4004 = vadd.f32 %v3988, 1e-05
    %v4005 = vadd.f32 %v3989, 1e-05
    %v4006 = vrsqrt.pop %v3990
    %v4007 = vmul.f32 %v4006, %v3990
    %v4008 = vmul.f32 %v4007, %v4006
    %v4009 = vmul.f32 0.5, %v4008
    %v4010 = vsub.f32 1.5, %v4009
    %v4011 = vmul.f32 %v4006, %v4010
    %vm4012 = vweird.f32 %v3990
    %vm4013 = vweird.f32 %v4006
    %vm4014 = vmor %vm4012, %vm4013
    %v4015 = vsel %vm4014, %v4006, %v4011
    %v4016 = vrsqrt.pop %v3991
    %v4017 = vmul.f32 %v4016, %v3991
    %v4018 = vmul.f32 %v4017, %v4016
    %v4019 = vmul.f32 0.5, %v4018
    %v4020 = vsub.f32 1.5, %v4019
    %v4021 = vmul.f32 %v4016, %v4020
    %vm4022 = vweird.f32 %v3991
    %vm4023 = vweird.f32 %v4016
    %vm4024 = vmor %vm4022, %vm4023
    %v4025 = vsel %vm4024, %v4016, %v4021
    %v4026 = vrsqrt.pop %v3992
    %v4027 = vmul.f32 %v4026, %v3992
    %v4028 = vmul.f32 %v4027, %v4026
    %v4029 = vmul.f32 0.5, %v4028
    %v4030 = vsub.f32 1.5, %v4029
    %v4031 = vmul.f32 %v4026, %v4030
    %vm4032 = vweird.f32 %v3992
    %vm4033 = vweird.f32 %v4026
    %vm4034 = vmor %vm4032, %vm4033
    %v4035 = vsel %vm4034, %v4026, %v4031
    %v4036 = vrsqrt.pop %v3993
    %v4037 = vmul.f32 %v4036, %v3993
    %v4038 = vmul.f32 %v4037, %v4036
    %v4039 = vmul.f32 0.5, %v4038
    %v4040 = vsub.f32 1.5, %v4039
    %v4041 = vmul.f32 %v4036, %v4040
    %vm4042 = vweird.f32 %v3993
    %vm4043 = vweird.f32 %v4036
    %vm4044 = vmor %vm4042, %vm4043
    %v4045 = vsel %vm4044, %v4036, %v4041
    %v4046 = vrsqrt.pop %v3994
    %v4047 = vmul.f32 %v4046, %v3994
    %v4048 = vmul.f32 %v4047, %v4046
    %v4049 = vmul.f32 0.5, %v4048
    %v4050 = vsub.f32 1.5, %v4049
    %v4051 = vmul.f32 %v4046, %v4050
    %vm4052 = vweird.f32 %v3994
    %vm4053 = vweird.f32 %v4046
    %vm4054 = vmor %vm4052, %vm4053
    %v4055 = vsel %vm4054, %v4046, %v4051
    %v4056 = vrsqrt.pop %v3995
    %v4057 = vmul.f32 %v4056, %v3995
    %v4058 = vmul.f32 %v4057, %v4056
    %v4059 = vmul.f32 0.5, %v4058
    %v4060 = vsub.f32 1.5, %v4059
    %v4061 = vmul.f32 %v4056, %v4060
    %vm4062 = vweird.f32 %v3995
    %vm4063 = vweird.f32 %v4056
    %vm4064 = vmor %vm4062, %vm4063
    %v4065 = vsel %vm4064, %v4056, %v4061
    %v4066 = vrsqrt.pop %v3996
    %v4067 = vmul.f32 %v4066, %v3996
    %v4068 = vmul.f32 %v4067, %v4066
    %v4069 = vmul.f32 0.5, %v4068
    %v4070 = vsub.f32 1.5, %v4069
    %v4071 = vmul.f32 %v4066, %v4070
    %vm4072 = vweird.f32 %v3996
    %vm4073 = vweird.f32 %v4066
    %vm4074 = vmor %vm4072, %vm4073
    %v4075 = vsel %vm4074, %v4066, %v4071
    %v4076 = vrsqrt.pop %v3997
    %v4077 = vmul.f32 %v4076, %v3997
    %v4078 = vmul.f32 %v4077, %v4076
    %v4079 = vmul.f32 0.5, %v4078
    %v4080 = vsub.f32 1.5, %v4079
    %v4081 = vmul.f32 %v4076, %v4080
    %vm4082 = vweird.f32 %v3997
    %vm4083 = vweird.f32 %v4076
    %vm4084 = vmor %vm4082, %vm4083
    %v4085 = vsel %vm4084, %v4076, %v4081
    %v4086 = vrsqrt.pop %v3998
    %v4087 = vmul.f32 %v4086, %v3998
    %v4088 = vmul.f32 %v4087, %v4086
    %v4089 = vmul.f32 0.5, %v4088
    %v4090 = vsub.f32 1.5, %v4089
    %v4091 = vmul.f32 %v4086, %v4090
    %vm4092 = vweird.f32 %v3998
    %vm4093 = vweird.f32 %v4086
    %vm4094 = vmor %vm4092, %vm4093
    %v4095 = vsel %vm4094, %v4086, %v4091
    %v4096 = vrsqrt.pop %v3999
    %v4097 = vmul.f32 %v4096, %v3999
    %v4098 = vmul.f32 %v4097, %v4096
    %v4099 = vmul.f32 0.5, %v4098
    %v4100 = vsub.f32 1.5, %v4099
    %v4101 = vmul.f32 %v4096, %v4100
    %vm4102 = vweird.f32 %v3999
    %vm4103 = vweird.f32 %v4096
    %vm4104 = vmor %vm4102, %vm4103
    %v4105 = vsel %vm4104, %v4096, %v4101
    %v4106 = vrsqrt.pop %v4000
    %v4107 = vmul.f32 %v4106, %v4000
    %v4108 = vmul.f32 %v4107, %v4106
    %v4109 = vmul.f32 0.5, %v4108
    %v4110 = vsub.f32 1.5, %v4109
    %v4111 = vmul.f32 %v4106, %v4110
    %vm4112 = vweird.f32 %v4000
    %vm4113 = vweird.f32 %v4106
    %vm4114 = vmor %vm4112, %vm4113
    %v4115 = vsel %vm4114, %v4106, %v4111
    %v4116 = vrsqrt.pop %v4001
    %v4117 = vmul.f32 %v4116, %v4001
    %v4118 = vmul.f32 %v4117, %v4116
    %v4119 = vmul.f32 0.5, %v4118
    %v4120 = vsub.f32 1.5, %v4119
    %v4121 = vmul.f32 %v4116, %v4120
    %vm4122 = vweird.f32 %v4001
    %vm4123 = vweird.f32 %v4116
    %vm4124 = vmor %vm4122, %vm4123
    %v4125 = vsel %vm4124, %v4116, %v4121
    %v4126 = vrsqrt.pop %v4002
    %v4127 = vmul.f32 %v4126, %v4002
    %v4128 = vmul.f32 %v4127, %v4126
    %v4129 = vmul.f32 0.5, %v4128
    %v4130 = vsub.f32 1.5, %v4129
    %v4131 = vmul.f32 %v4126, %v4130
    %vm4132 = vweird.f32 %v4002
    %vm4133 = vweird.f32 %v4126
    %vm4134 = vmor %vm4132, %vm4133
    %v4135 = vsel %vm4134, %v4126, %v4131
    %v4136 = vrsqrt.pop %v4003
    %v4137 = vmul.f32 %v4136, %v4003
    %v4138 = vmul.f32 %v4137, %v4136
    %v4139 = vmul.f32 0.5, %v4138
    %v4140 = vsub.f32 1.5, %v4139
    %v4141 = vmul.f32 %v4136, %v4140
    %vm4142 = vweird.f32 %v4003
    %vm4143 = vweird.f32 %v4136
    %vm4144 = vmor %vm4142, %vm4143
    %v4145 = vsel %vm4144, %v4136, %v4141
    %v4146 = vrsqrt.pop %v4004
    %v4147 = vmul.f32 %v4146, %v4004
    %v4148 = vmul.f32 %v4147, %v4146
    %v4149 = vmul.f32 0.5, %v4148
    %v4150 = vsub.f32 1.5, %v4149
    %v4151 = vmul.f32 %v4146, %v4150
    %vm4152 = vweird.f32 %v4004
    %vm4153 = vweird.f32 %v4146
    %vm4154 = vmor %vm4152, %vm4153
    %v4155 = vsel %vm4154, %v4146, %v4151
    %v4156 = vrsqrt.pop %v4005
    %v4157 = vmul.f32 %v4156, %v4005
    %v4158 = vmul.f32 %v4157, %v4156
    %v4159 = vmul.f32 0.5, %v4158
    %v4160 = vsub.f32 1.5, %v4159
    %v4161 = vmul.f32 %v4156, %v4160
    %vm4162 = vweird.f32 %v4005
    %vm4163 = vweird.f32 %v4156
    %vm4164 = vmor %vm4162, %vm4163
    %v4165 = vsel %vm4164, %v4156, %v4161
    %v4166 = vmul.f32 %v3910, %v4015
    %v4167 = vmul.f32 %v3911, %v4025
    %v4168 = vmul.f32 %v3912, %v4035
    %v4169 = vmul.f32 %v3913, %v4045
    %v4170 = vmul.f32 %v3914, %v4055
    %v4171 = vmul.f32 %v3915, %v4065
    %v4172 = vmul.f32 %v3916, %v4075
    %v4173 = vmul.f32 %v3917, %v4085
    %v4174 = vmul.f32 %v3918, %v4095
    %v4175 = vmul.f32 %v3919, %v4105
    %v4176 = vmul.f32 %v3920, %v4115
    %v4177 = vmul.f32 %v3921, %v4125
    %v4178 = vmul.f32 %v3922, %v4135
    %v4179 = vmul.f32 %v3923, %v4145
    %v4180 = vmul.f32 %v3924, %v4155
    %v4181 = vmul.f32 %v3925, %v4165
    %v4182 = vmul.f32 %v4166, %v187
    %v4183 = vmul.f32 %v4167, %v187
    %v4184 = vmul.f32 %v4168, %v187
    %v4185 = vmul.f32 %v4169, %v187
    %v4186 = vmul.f32 %v4170, %v187
    %v4187 = vmul.f32 %v4171, %v187
    %v4188 = vmul.f32 %v4172, %v187
    %v4189 = vmul.f32 %v4173, %v187
    %v4190 = vmul.f32 %v4174, %v187
    %v4191 = vmul.f32 %v4175, %v187
    %v4192 = vmul.f32 %v4176, %v187
    %v4193 = vmul.f32 %v4177, %v187
    %v4194 = vmul.f32 %v4178, %v187
    %v4195 = vmul.f32 %v4179, %v187
    %v4196 = vmul.f32 %v4180, %v187
    %v4197 = vmul.f32 %v4181, %v187
    %v4198 = vadd.f32 %v4182, %v188
    %v4199 = vadd.f32 %v4183, %v188
    %v4200 = vadd.f32 %v4184, %v188
    %v4201 = vadd.f32 %v4185, %v188
    %v4202 = vadd.f32 %v4186, %v188
    %v4203 = vadd.f32 %v4187, %v188
    %v4204 = vadd.f32 %v4188, %v188
    %v4205 = vadd.f32 %v4189, %v188
    %v4206 = vadd.f32 %v4190, %v188
    %v4207 = vadd.f32 %v4191, %v188
    %v4208 = vadd.f32 %v4192, %v188
    %v4209 = vadd.f32 %v4193, %v188
    %v4210 = vadd.f32 %v4194, %v188
    %v4211 = vadd.f32 %v4195, %v188
    %v4212 = vadd.f32 %v4196, %v188
    %v4213 = vadd.f32 %v4197, %v188
    %v4214 = vld [vmem:[#allocation12] sm:$0xff]
    %v4215 = vld [vmem:[#allocation12 + $0x8] sm:$0xff]
    %v4216 = vld [vmem:[#allocation12 + $0x10] sm:$0xff]
    %v4217 = vld [vmem:[#allocation12 + $0x18] sm:$0xff]
    %v4218 = vld [vmem:[#allocation12 + $0x20] sm:$0xff]
    %v4219 = vld [vmem:[#allocation12 + $0x28] sm:$0xff]
    %v4220 = vld [vmem:[#allocation12 + $0x30] sm:$0xff]
    %v4221 = vld [vmem:[#allocation12 + $0x38] sm:$0xff]
    %v4222 = vld [vmem:[#allocation12 + $0x40] sm:$0xff]
    %v4223 = vld [vmem:[#allocation12 + $0x48] sm:$0xff]
    %v4224 = vld [vmem:[#allocation12 + $0x50] sm:$0xff]
    %v4225 = vld [vmem:[#allocation12 + $0x58] sm:$0xff]
    %v4226 = vld [vmem:[#allocation12 + $0x60] sm:$0xff]
    %v4227 = vld [vmem:[#allocation12 + $0x68] sm:$0xff]
    %v4228 = vld [vmem:[#allocation12 + $0x70] sm:$0xff]
    %v4229 = vld [vmem:[#allocation12 + $0x78] sm:$0xff]
    %v4230 = vld [vmem:[#allocation12 + $0x80] sm:$0xff]
    %v4231 = vld [vmem:[#allocation12 + $0x88] sm:$0xff]
    %v4232 = vld [vmem:[#allocation12 + $0x90] sm:$0xff]
    %v4233 = vld [vmem:[#allocation12 + $0x98] sm:$0xff]
    %v4234 = vld [vmem:[#allocation12 + $0xa0] sm:$0xff]
    %v4235 = vld [vmem:[#allocation12 + $0xa8] sm:$0xff]
    %v4236 = vld [vmem:[#allocation12 + $0xb0] sm:$0xff]
    %v4237 = vld [vmem:[#allocation12 + $0xb8] sm:$0xff]
    %v4238 = vld [vmem:[#allocation12 + $0xc0] sm:$0xff]
    %v4239 = vld [vmem:[#allocation12 + $0xc8] sm:$0xff]
    %v4240 = vld [vmem:[#allocation12 + $0xd0] sm:$0xff]
    %v4241 = vld [vmem:[#allocation12 + $0xd8] sm:$0xff]
    %v4242 = vld [vmem:[#allocation12 + $0xe0] sm:$0xff]
    %v4243 = vld [vmem:[#allocation12 + $0xe8] sm:$0xff]
    %v4244 = vld [vmem:[#allocation12 + $0xf0] sm:$0xff]
    %v4245 = vld [vmem:[#allocation12 + $0xf8] sm:$0xff]
    %v4247 = vperm.slane %v197, 0
    %v4248 = vperm.slane %v197, 1
    %4251 = vmatpush.msra.mxu0 %v4244
    %4252 = vmatpush.msra.mxu0 %v4242
    %4253 = vmatpush.msra.mxu0 %v4240
    %4254 = vmatpush.msra.mxu0 %v4238
    %4255 = vmatpush.msra.mxu0 %v4236
    %4256 = vmatpush.msra.mxu0 %v4234
    %4257 = vmatpush.msra.mxu0 %v4232
    %4258 = vmatpush.msra.mxu0 %v4230
    %4259 = vmatpush.msra.mxu0 %v4228
    %4260 = vmatpush.msra.mxu0 %v4226
    %4261 = vmatpush.msra.mxu0 %v4224
    %4262 = vmatpush.msra.mxu0 %v4222
    %4263 = vmatpush.msra.mxu0 %v4220
    %4264 = vmatpush.msra.mxu0 %v4218
    %4265 = vmatpush.msra.mxu0 %v4216
    %4266 = vmatpush.msra.mxu0 %v4214
    %4267 = vmatmul.f32.gmra.mxu0 %v4198
    %v4268 = vpop.f32.mrf.mxu0
    %v4269 = vadd.f32 %v4247, %v4268
    %4270 = vmatmul.f32.gmra.mxu0 %v4199
    %v4271 = vpop.f32.mrf.mxu0
    %v4272 = vadd.f32 %v4247, %v4271
    %4273 = vmatmul.f32.gmra.mxu0 %v4200
    %v4274 = vpop.f32.mrf.mxu0
    %v4275 = vadd.f32 %v4247, %v4274
    %4276 = vmatmul.f32.gmra.mxu0 %v4201
    %v4277 = vpop.f32.mrf.mxu0
    %v4278 = vadd.f32 %v4247, %v4277
    %4279 = vmatmul.f32.gmra.mxu0 %v4202
    %v4280 = vpop.f32.mrf.mxu0
    %v4281 = vadd.f32 %v4247, %v4280
    %4282 = vmatmul.f32.gmra.mxu0 %v4203
    %v4283 = vpop.f32.mrf.mxu0
    %v4284 = vadd.f32 %v4247, %v4283
    %4285 = vmatmul.f32.gmra.mxu0 %v4204
    %v4286 = vpop.f32.mrf.mxu0
    %v4287 = vadd.f32 %v4247, %v4286
    %4288 = vmatmul.f32.gmra.mxu0 %v4205
    %v4289 = vpop.f32.mrf.mxu0
    %v4290 = vadd.f32 %v4247, %v4289
    %4291 = vmatmul.f32.gmra.mxu0 %v4206
    %v4292 = vpop.f32.mrf.mxu0
    %v4293 = vadd.f32 %v4247, %v4292
    %4294 = vmatmul.f32.gmra.mxu0 %v4207
    %v4295 = vpop.f32.mrf.mxu0
    %v4296 = vadd.f32 %v4247, %v4295
    %4297 = vmatmul.f32.gmra.mxu0 %v4208
    %v4298 = vpop.f32.mrf.mxu0
    %v4299 = vadd.f32 %v4247, %v4298
    %4300 = vmatmul.f32.gmra.mxu0 %v4209
    %v4301 = vpop.f32.mrf.mxu0
    %v4302 = vadd.f32 %v4247, %v4301
    %4303 = vmatmul.f32.gmra.mxu0 %v4210
    %v4304 = vpop.f32.mrf.mxu0
    %v4305 = vadd.f32 %v4247, %v4304
    %4306 = vmatmul.f32.gmra.mxu0 %v4211
    %v4307 = vpop.f32.mrf.mxu0
    %v4308 = vadd.f32 %v4247, %v4307
    %4309 = vmatmul.f32.gmra.mxu0 %v4212
    %v4310 = vpop.f32.mrf.mxu0
    %v4311 = vadd.f32 %v4247, %v4310
    %4312 = vmatmul.f32.gmra.mxu0 %v4213
    %v4313 = vpop.f32.mrf.mxu0
    %v4314 = vadd.f32 %v4247, %v4313
    %4315 = vdwg.mxu0
    %4316 = vmatpush.msra.mxu0 %v4245
    %4317 = vmatpush.msra.mxu0 %v4243
    %4318 = vmatpush.msra.mxu0 %v4241
    %4319 = vmatpush.msra.mxu0 %v4239
    %4320 = vmatpush.msra.mxu0 %v4237
    %4321 = vmatpush.msra.mxu0 %v4235
    %4322 = vmatpush.msra.mxu0 %v4233
    %4323 = vmatpush.msra.mxu0 %v4231
    %4324 = vmatpush.msra.mxu0 %v4229
    %4325 = vmatpush.msra.mxu0 %v4227
    %4326 = vmatpush.msra.mxu0 %v4225
    %4327 = vmatpush.msra.mxu0 %v4223
    %4328 = vmatpush.msra.mxu0 %v4221
    %4329 = vmatpush.msra.mxu0 %v4219
    %4330 = vmatpush.msra.mxu0 %v4217
    %4331 = vmatpush.msra.mxu0 %v4215
    %4332 = vmatmul.f32.gmra.mxu0 %v4198
    %v4333 = vpop.f32.mrf.mxu0
    %v4334 = vadd.f32 %v4248, %v4333
    %4335 = vmatmul.f32.gmra.mxu0 %v4199
    %v4336 = vpop.f32.mrf.mxu0
    %v4337 = vadd.f32 %v4248, %v4336
    %4338 = vmatmul.f32.gmra.mxu0 %v4200
    %v4339 = vpop.f32.mrf.mxu0
    %v4340 = vadd.f32 %v4248, %v4339
    %4341 = vmatmul.f32.gmra.mxu0 %v4201
    %v4342 = vpop.f32.mrf.mxu0
    %v4343 = vadd.f32 %v4248, %v4342
    %4344 = vmatmul.f32.gmra.mxu0 %v4202
    %v4345 = vpop.f32.mrf.mxu0
    %v4346 = vadd.f32 %v4248, %v4345
    %4347 = vmatmul.f32.gmra.mxu0 %v4203
    %v4348 = vpop.f32.mrf.mxu0
    %v4349 = vadd.f32 %v4248, %v4348
    %4350 = vmatmul.f32.gmra.mxu0 %v4204
    %v4351 = vpop.f32.mrf.mxu0
    %v4352 = vadd.f32 %v4248, %v4351
    %4353 = vmatmul.f32.gmra.mxu0 %v4205
    %v4354 = vpop.f32.mrf.mxu0
    %v4355 = vadd.f32 %v4248, %v4354
    %4356 = vmatmul.f32.gmra.mxu0 %v4206
    %v4357 = vpop.f32.mrf.mxu0
    %v4358 = vadd.f32 %v4248, %v4357
    %4359 = vmatmul.f32.gmra.mxu0 %v4207
    %v4360 = vpop.f32.mrf.mxu0
    %v4361 = vadd.f32 %v4248, %v4360
    %4362 = vmatmul.f32.gmra.mxu0 %v4208
    %v4363 = vpop.f32.mrf.mxu0
    %v4364 = vadd.f32 %v4248, %v4363
    %4365 = vmatmul.f32.gmra.mxu0 %v4209
    %v4366 = vpop.f32.mrf.mxu0
    %v4367 = vadd.f32 %v4248, %v4366
    %4368 = vmatmul.f32.gmra.mxu0 %v4210
    %v4369 = vpop.f32.mrf.mxu0
    %v4370 = vadd.f32 %v4248, %v4369
    %4371 = vmatmul.f32.gmra.mxu0 %v4211
    %v4372 = vpop.f32.mrf.mxu0
    %v4373 = vadd.f32 %v4248, %v4372
    %4374 = vmatmul.f32.gmra.mxu0 %v4212
    %v4375 = vpop.f32.mrf.mxu0
    %v4376 = vadd.f32 %v4248, %v4375
    %4377 = vmatmul.f32.gmra.mxu0 %v4213
    %v4378 = vpop.f32.mrf.mxu0
    %v4379 = vadd.f32 %v4248, %v4378
    %4380 = vdwg.mxu0
    %v4381 = vmax.f32 %v4269, 0.0
    %v4382 = vmax.f32 %v4334, 0.0
    %v4383 = vmax.f32 %v4272, 0.0
    %v4384 = vmax.f32 %v4337, 0.0
    %v4385 = vmax.f32 %v4275, 0.0
    %v4386 = vmax.f32 %v4340, 0.0
    %v4387 = vmax.f32 %v4278, 0.0
    %v4388 = vmax.f32 %v4343, 0.0
    %v4389 = vmax.f32 %v4281, 0.0
    %v4390 = vmax.f32 %v4346, 0.0
    %v4391 = vmax.f32 %v4284, 0.0
    %v4392 = vmax.f32 %v4349, 0.0
    %v4393 = vmax.f32 %v4287, 0.0
    %v4394 = vmax.f32 %v4352, 0.0
    %v4395 = vmax.f32 %v4290, 0.0
    %v4396 = vmax.f32 %v4355, 0.0
    %v4397 = vmax.f32 %v4293, 0.0
    %v4398 = vmax.f32 %v4358, 0.0
    %v4399 = vmax.f32 %v4296, 0.0
    %v4400 = vmax.f32 %v4361, 0.0
    %v4401 = vmax.f32 %v4299, 0.0
    %v4402 = vmax.f32 %v4364, 0.0
    %v4403 = vmax.f32 %v4302, 0.0
    %v4404 = vmax.f32 %v4367, 0.0
    %v4405 = vmax.f32 %v4305, 0.0
    %v4406 = vmax.f32 %v4370, 0.0
    %v4407 = vmax.f32 %v4308, 0.0
    %v4408 = vmax.f32 %v4373, 0.0
    %v4409 = vmax.f32 %v4311, 0.0
    %v4410 = vmax.f32 %v4376, 0.0
    %v4411 = vmax.f32 %v4314, 0.0
    %v4412 = vmax.f32 %v4379, 0.0
    %v4413 = vld [vmem:[#allocation14] sm:$0xff]
    %v4414 = vld [vmem:[#allocation14 + $0x8] sm:$0xff]
    %v4415 = vld [vmem:[#allocation14 + $0x10] sm:$0xff]
    %v4416 = vld [vmem:[#allocation14 + $0x18] sm:$0xff]
    %v4417 = vld [vmem:[#allocation14 + $0x20] sm:$0xff]
    %v4418 = vld [vmem:[#allocation14 + $0x28] sm:$0xff]
    %v4419 = vld [vmem:[#allocation14 + $0x30] sm:$0xff]
    %v4420 = vld [vmem:[#allocation14 + $0x38] sm:$0xff]
    %v4421 = vld [vmem:[#allocation14 + $0x40] sm:$0xff]
    %v4422 = vld [vmem:[#allocation14 + $0x48] sm:$0xff]
    %v4423 = vld [vmem:[#allocation14 + $0x50] sm:$0xff]
    %v4424 = vld [vmem:[#allocation14 + $0x58] sm:$0xff]
    %v4425 = vld [vmem:[#allocation14 + $0x60] sm:$0xff]
    %v4426 = vld [vmem:[#allocation14 + $0x68] sm:$0xff]
    %v4427 = vld [vmem:[#allocation14 + $0x70] sm:$0xff]
    %v4428 = vld [vmem:[#allocation14 + $0x78] sm:$0xff]
    %v4429 = vld [vmem:[#allocation14 + $0x80] sm:$0xff]
    %v4430 = vld [vmem:[#allocation14 + $0x88] sm:$0xff]
    %v4431 = vld [vmem:[#allocation14 + $0x90] sm:$0xff]
    %v4432 = vld [vmem:[#allocation14 + $0x98] sm:$0xff]
    %v4433 = vld [vmem:[#allocation14 + $0xa0] sm:$0xff]
    %v4434 = vld [vmem:[#allocation14 + $0xa8] sm:$0xff]
    %v4435 = vld [vmem:[#allocation14 + $0xb0] sm:$0xff]
    %v4436 = vld [vmem:[#allocation14 + $0xb8] sm:$0xff]
    %v4437 = vld [vmem:[#allocation14 + $0xc0] sm:$0xff]
    %v4438 = vld [vmem:[#allocation14 + $0xc8] sm:$0xff]
    %v4439 = vld [vmem:[#allocation14 + $0xd0] sm:$0xff]
    %v4440 = vld [vmem:[#allocation14 + $0xd8] sm:$0xff]
    %v4441 = vld [vmem:[#allocation14 + $0xe0] sm:$0xff]
    %v4442 = vld [vmem:[#allocation14 + $0xe8] sm:$0xff]
    %v4443 = vld [vmem:[#allocation14 + $0xf0] sm:$0xff]
    %v4444 = vld [vmem:[#allocation14 + $0xf8] sm:$0xff]
    %4445 = vmatpush.msra.mxu0 %v4428
    %4446 = vmatpush.msra.mxu0 %v4427
    %4447 = vmatpush.msra.mxu0 %v4426
    %4448 = vmatpush.msra.mxu0 %v4425
    %4449 = vmatpush.msra.mxu0 %v4424
    %4450 = vmatpush.msra.mxu0 %v4423
    %4451 = vmatpush.msra.mxu0 %v4422
    %4452 = vmatpush.msra.mxu0 %v4421
    %4453 = vmatpush.msra.mxu0 %v4420
    %4454 = vmatpush.msra.mxu0 %v4419
    %4455 = vmatpush.msra.mxu0 %v4418
    %4456 = vmatpush.msra.mxu0 %v4417
    %4457 = vmatpush.msra.mxu0 %v4416
    %4458 = vmatpush.msra.mxu0 %v4415
    %4459 = vmatpush.msra.mxu0 %v4414
    %4460 = vmatpush.msra.mxu0 %v4413
    %4461 = vmatmul.f32.gmra.mxu0 %v4381
    %v4462 = vpop.f32.mrf.mxu0
    %v4463 = vadd.f32 %v195, %v4462
    %4464 = vmatmul.f32.gmra.mxu0 %v4383
    %v4465 = vpop.f32.mrf.mxu0
    %v4466 = vadd.f32 %v195, %v4465
    %4467 = vmatmul.f32.gmra.mxu0 %v4385
    %v4468 = vpop.f32.mrf.mxu0
    %v4469 = vadd.f32 %v195, %v4468
    %4470 = vmatmul.f32.gmra.mxu0 %v4387
    %v4471 = vpop.f32.mrf.mxu0
    %v4472 = vadd.f32 %v195, %v4471
    %4473 = vmatmul.f32.gmra.mxu0 %v4389
    %v4474 = vpop.f32.mrf.mxu0
    %v4475 = vadd.f32 %v195, %v4474
    %4476 = vmatmul.f32.gmra.mxu0 %v4391
    %v4477 = vpop.f32.mrf.mxu0
    %v4478 = vadd.f32 %v195, %v4477
    %4479 = vmatmul.f32.gmra.mxu0 %v4393
    %v4480 = vpop.f32.mrf.mxu0
    %v4481 = vadd.f32 %v195, %v4480
    %4482 = vmatmul.f32.gmra.mxu0 %v4395
    %v4483 = vpop.f32.mrf.mxu0
    %v4484 = vadd.f32 %v195, %v4483
    %4485 = vmatmul.f32.gmra.mxu0 %v4397
    %v4486 = vpop.f32.mrf.mxu0
    %v4487 = vadd.f32 %v195, %v4486
    %4488 = vmatmul.f32.gmra.mxu0 %v4399
    %v4489 = vpop.f32.mrf.mxu0
    %v4490 = vadd.f32 %v195, %v4489
    %4491 = vmatmul.f32.gmra.mxu0 %v4401
    %v4492 = vpop.f32.mrf.mxu0
    %v4493 = vadd.f32 %v195, %v4492
    %4494 = vmatmul.f32.gmra.mxu0 %v4403
    %v4495 = vpop.f32.mrf.mxu0
    %v4496 = vadd.f32 %v195, %v4495
    %4497 = vmatmul.f32.gmra.mxu0 %v4405
    %v4498 = vpop.f32.mrf.mxu0
    %v4499 = vadd.f32 %v195, %v4498
    %4500 = vmatmul.f32.gmra.mxu0 %v4407
    %v4501 = vpop.f32.mrf.mxu0
    %v4502 = vadd.f32 %v195, %v4501
    %4503 = vmatmul.f32.gmra.mxu0 %v4409
    %v4504 = vpop.f32.mrf.mxu0
    %v4505 = vadd.f32 %v195, %v4504
    %4506 = vmatmul.f32.gmra.mxu0 %v4411
    %v4507 = vpop.f32.mrf.mxu0
    %v4508 = vadd.f32 %v195, %v4507
    %4509 = vdwg.mxu0
    %4510 = vmatpush.msra.mxu0 %v4444
    %4511 = vmatpush.msra.mxu0 %v4443
    %4512 = vmatpush.msra.mxu0 %v4442
    %4513 = vmatpush.msra.mxu0 %v4441
    %4514 = vmatpush.msra.mxu0 %v4440
    %4515 = vmatpush.msra.mxu0 %v4439
    %4516 = vmatpush.msra.mxu0 %v4438
    %4517 = vmatpush.msra.mxu0 %v4437
    %4518 = vmatpush.msra.mxu0 %v4436
    %4519 = vmatpush.msra.mxu0 %v4435
    %4520 = vmatpush.msra.mxu0 %v4434
    %4521 = vmatpush.msra.mxu0 %v4433
    %4522 = vmatpush.msra.mxu0 %v4432
    %4523 = vmatpush.msra.mxu0 %v4431
    %4524 = vmatpush.msra.mxu0 %v4430
    %4525 = vmatpush.msra.mxu0 %v4429
    %4526 = vmatmul.f32.gmra.mxu0 %v4382
    %v4527 = vpop.f32.mrf.mxu0
    %v4528 = vadd.f32 %v4463, %v4527
    %4529 = vmatmul.f32.gmra.mxu0 %v4384
    %v4530 = vpop.f32.mrf.mxu0
    %v4531 = vadd.f32 %v4466, %v4530
    %4532 = vmatmul.f32.gmra.mxu0 %v4386
    %v4533 = vpop.f32.mrf.mxu0
    %v4534 = vadd.f32 %v4469, %v4533
    %4535 = vmatmul.f32.gmra.mxu0 %v4388
    %v4536 = vpop.f32.mrf.mxu0
    %v4537 = vadd.f32 %v4472, %v4536
    %4538 = vmatmul.f32.gmra.mxu0 %v4390
    %v4539 = vpop.f32.mrf.mxu0
    %v4540 = vadd.f32 %v4475, %v4539
    %4541 = vmatmul.f32.gmra.mxu0 %v4392
    %v4542 = vpop.f32.mrf.mxu0
    %v4543 = vadd.f32 %v4478, %v4542
    %4544 = vmatmul.f32.gmra.mxu0 %v4394
    %v4545 = vpop.f32.mrf.mxu0
    %v4546 = vadd.f32 %v4481, %v4545
    %4547 = vmatmul.f32.gmra.mxu0 %v4396
    %v4548 = vpop.f32.mrf.mxu0
    %v4549 = vadd.f32 %v4484, %v4548
    %4550 = vmatmul.f32.gmra.mxu0 %v4398
    %v4551 = vpop.f32.mrf.mxu0
    %v4552 = vadd.f32 %v4487, %v4551
    %4553 = vmatmul.f32.gmra.mxu0 %v4400
    %v4554 = vpop.f32.mrf.mxu0
    %v4555 = vadd.f32 %v4490, %v4554
    %4556 = vmatmul.f32.gmra.mxu0 %v4402
    %v4557 = vpop.f32.mrf.mxu0
    %v4558 = vadd.f32 %v4493, %v4557
    %4559 = vmatmul.f32.gmra.mxu0 %v4404
    %v4560 = vpop.f32.mrf.mxu0
    %v4561 = vadd.f32 %v4496, %v4560
    %4562 = vmatmul.f32.gmra.mxu0 %v4406
    %v4563 = vpop.f32.mrf.mxu0
    %v4564 = vadd.f32 %v4499, %v4563
    %4565 = vmatmul.f32.gmra.mxu0 %v4408
    %v4566 = vpop.f32.mrf.mxu0
    %v4567 = vadd.f32 %v4502, %v4566
    %4568 = vmatmul.f32.gmra.mxu0 %v4410
    %v4569 = vpop.f32.mrf.mxu0
    %v4570 = vadd.f32 %v4505, %v4569
    %4571 = vmatmul.f32.gmra.mxu0 %v4412
    %v4572 = vpop.f32.mrf.mxu0
    %v4573 = vadd.f32 %v4508, %v4572
    %4574 = vdwg.mxu0
    %v4575 = vadd.f32 %v4198, %v4528
    %v4576 = vadd.f32 %v4199, %v4531
    %v4577 = vadd.f32 %v4200, %v4534
    %v4578 = vadd.f32 %v4201, %v4537
    %v4579 = vadd.f32 %v4202, %v4540
    %v4580 = vadd.f32 %v4203, %v4543
    %v4581 = vadd.f32 %v4204, %v4546
    %v4582 = vadd.f32 %v4205, %v4549
    %v4583 = vadd.f32 %v4206, %v4552
    %v4584 = vadd.f32 %v4207, %v4555
    %v4585 = vadd.f32 %v4208, %v4558
    %v4586 = vadd.f32 %v4209, %v4561
    %v4587 = vadd.f32 %v4210, %v4564
    %v4588 = vadd.f32 %v4211, %v4567
    %v4589 = vadd.f32 %v4212, %v4570
    %v4590 = vadd.f32 %v4213, %v4573
    %4591 = vadd.xlane.f32.xlu0 %v4575
    %v4592 = vpop.xlane.xlu0 %4591
    %4593 = vadd.xlane.f32.xlu0 %v4576
    %v4594 = vpop.xlane.xlu0 %4593
    %4595 = vadd.xlane.f32.xlu0 %v4577
    %v4596 = vpop.xlane.xlu0 %4595
    %4597 = vadd.xlane.f32.xlu0 %v4578
    %v4598 = vpop.xlane.xlu0 %4597
    %4599 = vadd.xlane.f32.xlu0 %v4579
    %v4600 = vpop.xlane.xlu0 %4599
    %4601 = vadd.xlane.f32.xlu0 %v4580
    %v4602 = vpop.xlane.xlu0 %4601
    %4603 = vadd.xlane.f32.xlu0 %v4581
    %v4604 = vpop.xlane.xlu0 %4603
    %4605 = vadd.xlane.f32.xlu0 %v4582
    %v4606 = vpop.xlane.xlu0 %4605
    %4607 = vadd.xlane.f32.xlu0 %v4583
    %v4608 = vpop.xlane.xlu0 %4607
    %4609 = vadd.xlane.f32.xlu0 %v4584
    %v4610 = vpop.xlane.xlu0 %4609
    %4611 = vadd.xlane.f32.xlu0 %v4585
    %v4612 = vpop.xlane.xlu0 %4611
    %4613 = vadd.xlane.f32.xlu0 %v4586
    %v4614 = vpop.xlane.xlu0 %4613
    %4615 = vadd.xlane.f32.xlu0 %v4587
    %v4616 = vpop.xlane.xlu0 %4615
    %4617 = vadd.xlane.f32.xlu0 %v4588
    %v4618 = vpop.xlane.xlu0 %4617
    %4619 = vadd.xlane.f32.xlu0 %v4589
    %v4620 = vpop.xlane.xlu0 %4619
    %4621 = vadd.xlane.f32.xlu0 %v4590
    %v4622 = vpop.xlane.xlu0 %4621
    %v4623 = vmul.f32 %v4592, %v3893
    %v4624 = vmul.f32 %v4594, %v3893
    %v4625 = vmul.f32 %v4596, %v3893
    %v4626 = vmul.f32 %v4598, %v3893
    %v4627 = vmul.f32 %v4600, %v3893
    %v4628 = vmul.f32 %v4602, %v3893
    %v4629 = vmul.f32 %v4604, %v3893
    %v4630 = vmul.f32 %v4606, %v3893
    %v4631 = vmul.f32 %v4608, %v3893
    %v4632 = vmul.f32 %v4610, %v3893
    %v4633 = vmul.f32 %v4612, %v3893
    %v4634 = vmul.f32 %v4614, %v3893
    %v4635 = vmul.f32 %v4616, %v3893
    %v4636 = vmul.f32 %v4618, %v3893
    %v4637 = vmul.f32 %v4620, %v3893
    %v4638 = vmul.f32 %v4622, %v3893
    %v4639 = vsub.f32 %v4575, %v4623
    %v4640 = vsub.f32 %v4576, %v4624
    %v4641 = vsub.f32 %v4577, %v4625
    %v4642 = vsub.f32 %v4578, %v4626
    %v4643 = vsub.f32 %v4579, %v4627
    %v4644 = vsub.f32 %v4580, %v4628
    %v4645 = vsub.f32 %v4581, %v4629
    %v4646 = vsub.f32 %v4582, %v4630
    %v4647 = vsub.f32 %v4583, %v4631
    %v4648 = vsub.f32 %v4584, %v4632
    %v4649 = vsub.f32 %v4585, %v4633
    %v4650 = vsub.f32 %v4586, %v4634
    %v4651 = vsub.f32 %v4587, %v4635
    %v4652 = vsub.f32 %v4588, %v4636
    %v4653 = vsub.f32 %v4589, %v4637
    %v4654 = vsub.f32 %v4590, %v4638
    %v4655 = vmul.f32 %v4639, %v4639
    %v4656 = vmul.f32 %v4640, %v4640
    %v4657 = vmul.f32 %v4641, %v4641
    %v4658 = vmul.f32 %v4642, %v4642
    %v4659 = vmul.f32 %v4643, %v4643
    %v4660 = vmul.f32 %v4644, %v4644
    %v4661 = vmul.f32 %v4645, %v4645
    %v4662 = vmul.f32 %v4646, %v4646
    %v4663 = vmul.f32 %v4647, %v4647
    %v4664 = vmul.f32 %v4648, %v4648
    %v4665 = vmul.f32 %v4649, %v4649
    %v4666 = vmul.f32 %v4650, %v4650
    %v4667 = vmul.f32 %v4651, %v4651
    %v4668 = vmul.f32 %v4652, %v4652
    %v4669 = vmul.f32 %v4653, %v4653
    %v4670 = vmul.f32 %v4654, %v4654
    %4671 = vadd.xlane.f32.xlu0 %v4655
    %v4672 = vpop.xlane.xlu0 %4671
    %4673 = vadd.xlane.f32.xlu0 %v4656
    %v4674 = vpop.xlane.xlu0 %4673
    %4675 = vadd.xlane.f32.xlu0 %v4657
    %v4676 = vpop.xlane.xlu0 %4675
    %4677 = vadd.xlane.f32.xlu0 %v4658
    %v4678 = vpop.xlane.xlu0 %4677
    %4679 = vadd.xlane.f32.xlu0 %v4659
    %v4680 = vpop.xlane.xlu0 %4679
    %4681 = vadd.xlane.f32.xlu0 %v4660
    %v4682 = vpop.xlane.xlu0 %4681
    %4683 = vadd.xlane.f32.xlu0 %v4661
    %v4684 = vpop.xlane.xlu0 %4683
    %4685 = vadd.xlane.f32.xlu0 %v4662
    %v4686 = vpop.xlane.xlu0 %4685
    %4687 = vadd.xlane.f32.xlu0 %v4663
    %v4688 = vpop.xlane.xlu0 %4687
    %4689 = vadd.xlane.f32.xlu0 %v4664
    %v4690 = vpop.xlane.xlu0 %4689
    %4691 = vadd.xlane.f32.xlu0 %v4665
    %v4692 = vpop.xlane.xlu0 %4691
    %4693 = vadd.xlane.f32.xlu0 %v4666
    %v4694 = vpop.xlane.xlu0 %4693
    %4695 = vadd.xlane.f32.xlu0 %v4667
    %v4696 = vpop.xlane.xlu0 %4695
    %4697 = vadd.xlane.f32.xlu0 %v4668
    %v4698 = vpop.xlane.xlu0 %4697
    %4699 = vadd.xlane.f32.xlu0 %v4669
    %v4700 = vpop.xlane.xlu0 %4699
    %4701 = vadd.xlane.f32.xlu0 %v4670
    %v4702 = vpop.xlane.xlu0 %4701
    %v4703 = vmul.f32 %v4672, %v3893
    %v4704 = vmul.f32 %v4674, %v3893
    %v4705 = vmul.f32 %v4676, %v3893
    %v4706 = vmul.f32 %v4678, %v3893
    %v4707 = vmul.f32 %v4680, %v3893
    %v4708 = vmul.f32 %v4682, %v3893
    %v4709 = vmul.f32 %v4684, %v3893
    %v4710 = vmul.f32 %v4686, %v3893
    %v4711 = vmul.f32 %v4688, %v3893
    %v4712 = vmul.f32 %v4690, %v3893
    %v4713 = vmul.f32 %v4692, %v3893
    %v4714 = vmul.f32 %v4694, %v3893
    %v4715 = vmul.f32 %v4696, %v3893
    %v4716 = vmul.f32 %v4698, %v3893
    %v4717 = vmul.f32 %v4700, %v3893
    %v4718 = vmul.f32 %v4702, %v3893
    %v4719 = vadd.f32 %v4703, 1e-05
    %v4720 = vadd.f32 %v4704, 1e-05
    %v4721 = vadd.f32 %v4705, 1e-05
    %v4722 = vadd.f32 %v4706, 1e-05
    %v4723 = vadd.f32 %v4707, 1e-05
    %v4724 = vadd.f32 %v4708, 1e-05
    %v4725 = vadd.f32 %v4709, 1e-05
    %v4726 = vadd.f32 %v4710, 1e-05
    %v4727 = vadd.f32 %v4711, 1e-05
    %v4728 = vadd.f32 %v4712, 1e-05
    %v4729 = vadd.f32 %v4713, 1e-05
    %v4730 = vadd.f32 %v4714, 1e-05
    %v4731 = vadd.f32 %v4715, 1e-05
    %v4732 = vadd.f32 %v4716, 1e-05
    %v4733 = vadd.f32 %v4717, 1e-05
    %v4734 = vadd.f32 %v4718, 1e-05
    %v4735 = vrsqrt.pop %v4719
    %v4736 = vmul.f32 %v4735, %v4719
    %v4737 = vmul.f32 %v4736, %v4735
    %v4738 = vmul.f32 0.5, %v4737
    %v4739 = vsub.f32 1.5, %v4738
    %v4740 = vmul.f32 %v4735, %v4739
    %vm4741 = vweird.f32 %v4719
    %vm4742 = vweird.f32 %v4735
    %vm4743 = vmor %vm4741, %vm4742
    %v4744 = vsel %vm4743, %v4735, %v4740
    %v4745 = vrsqrt.pop %v4720
    %v4746 = vmul.f32 %v4745, %v4720
    %v4747 = vmul.f32 %v4746, %v4745
    %v4748 = vmul.f32 0.5, %v4747
    %v4749 = vsub.f32 1.5, %v4748
    %v4750 = vmul.f32 %v4745, %v4749
    %vm4751 = vweird.f32 %v4720
    %vm4752 = vweird.f32 %v4745
    %vm4753 = vmor %vm4751, %vm4752
    %v4754 = vsel %vm4753, %v4745, %v4750
    %v4755 = vrsqrt.pop %v4721
    %v4756 = vmul.f32 %v4755, %v4721
    %v4757 = vmul.f32 %v4756, %v4755
    %v4758 = vmul.f32 0.5, %v4757
    %v4759 = vsub.f32 1.5, %v4758
    %v4760 = vmul.f32 %v4755, %v4759
    %vm4761 = vweird.f32 %v4721
    %vm4762 = vweird.f32 %v4755
    %vm4763 = vmor %vm4761, %vm4762
    %v4764 = vsel %vm4763, %v4755, %v4760
    %v4765 = vrsqrt.pop %v4722
    %v4766 = vmul.f32 %v4765, %v4722
    %v4767 = vmul.f32 %v4766, %v4765
    %v4768 = vmul.f32 0.5, %v4767
    %v4769 = vsub.f32 1.5, %v4768
    %v4770 = vmul.f32 %v4765, %v4769
    %vm4771 = vweird.f32 %v4722
    %vm4772 = vweird.f32 %v4765
    %vm4773 = vmor %vm4771, %vm4772
    %v4774 = vsel %vm4773, %v4765, %v4770
    %v4775 = vrsqrt.pop %v4723
    %v4776 = vmul.f32 %v4775, %v4723
    %v4777 = vmul.f32 %v4776, %v4775
    %v4778 = vmul.f32 0.5, %v4777
    %v4779 = vsub.f32 1.5, %v4778
    %v4780 = vmul.f32 %v4775, %v4779
    %vm4781 = vweird.f32 %v4723
    %vm4782 = vweird.f32 %v4775
    %vm4783 = vmor %vm4781, %vm4782
    %v4784 = vsel %vm4783, %v4775, %v4780
    %v4785 = vrsqrt.pop %v4724
    %v4786 = vmul.f32 %v4785, %v4724
    %v4787 = vmul.f32 %v4786, %v4785
    %v4788 = vmul.f32 0.5, %v4787
    %v4789 = vsub.f32 1.5, %v4788
    %v4790 = vmul.f32 %v4785, %v4789
    %vm4791 = vweird.f32 %v4724
    %vm4792 = vweird.f32 %v4785
    %vm4793 = vmor %vm4791, %vm4792
    %v4794 = vsel %vm4793, %v4785, %v4790
    %v4795 = vrsqrt.pop %v4725
    %v4796 = vmul.f32 %v4795, %v4725
    %v4797 = vmul.f32 %v4796, %v4795
    %v4798 = vmul.f32 0.5, %v4797
    %v4799 = vsub.f32 1.5, %v4798
    %v4800 = vmul.f32 %v4795, %v4799
    %vm4801 = vweird.f32 %v4725
    %vm4802 = vweird.f32 %v4795
    %vm4803 = vmor %vm4801, %vm4802
    %v4804 = vsel %vm4803, %v4795, %v4800
    %v4805 = vrsqrt.pop %v4726
    %v4806 = vmul.f32 %v4805, %v4726
    %v4807 = vmul.f32 %v4806, %v4805
    %v4808 = vmul.f32 0.5, %v4807
    %v4809 = vsub.f32 1.5, %v4808
    %v4810 = vmul.f32 %v4805, %v4809
    %vm4811 = vweird.f32 %v4726
    %vm4812 = vweird.f32 %v4805
    %vm4813 = vmor %vm4811, %vm4812
    %v4814 = vsel %vm4813, %v4805, %v4810
    %v4815 = vrsqrt.pop %v4727
    %v4816 = vmul.f32 %v4815, %v4727
    %v4817 = vmul.f32 %v4816, %v4815
    %v4818 = vmul.f32 0.5, %v4817
    %v4819 = vsub.f32 1.5, %v4818
    %v4820 = vmul.f32 %v4815, %v4819
    %vm4821 = vweird.f32 %v4727
    %vm4822 = vweird.f32 %v4815
    %vm4823 = vmor %vm4821, %vm4822
    %v4824 = vsel %vm4823, %v4815, %v4820
    %v4825 = vrsqrt.pop %v4728
    %v4826 = vmul.f32 %v4825, %v4728
    %v4827 = vmul.f32 %v4826, %v4825
    %v4828 = vmul.f32 0.5, %v4827
    %v4829 = vsub.f32 1.5, %v4828
    %v4830 = vmul.f32 %v4825, %v4829
    %vm4831 = vweird.f32 %v4728
    %vm4832 = vweird.f32 %v4825
    %vm4833 = vmor %vm4831, %vm4832
    %v4834 = vsel %vm4833, %v4825, %v4830
    %v4835 = vrsqrt.pop %v4729
    %v4836 = vmul.f32 %v4835, %v4729
    %v4837 = vmul.f32 %v4836, %v4835
    %v4838 = vmul.f32 0.5, %v4837
    %v4839 = vsub.f32 1.5, %v4838
    %v4840 = vmul.f32 %v4835, %v4839
    %vm4841 = vweird.f32 %v4729
    %vm4842 = vweird.f32 %v4835
    %vm4843 = vmor %vm4841, %vm4842
    %v4844 = vsel %vm4843, %v4835, %v4840
    %v4845 = vrsqrt.pop %v4730
    %v4846 = vmul.f32 %v4845, %v4730
    %v4847 = vmul.f32 %v4846, %v4845
    %v4848 = vmul.f32 0.5, %v4847
    %v4849 = vsub.f32 1.5, %v4848
    %v4850 = vmul.f32 %v4845, %v4849
    %vm4851 = vweird.f32 %v4730
    %vm4852 = vweird.f32 %v4845
    %vm4853 = vmor %vm4851, %vm4852
    %v4854 = vsel %vm4853, %v4845, %v4850
    %v4855 = vrsqrt.pop %v4731
    %v4856 = vmul.f32 %v4855, %v4731
    %v4857 = vmul.f32 %v4856, %v4855
    %v4858 = vmul.f32 0.5, %v4857
    %v4859 = vsub.f32 1.5, %v4858
    %v4860 = vmul.f32 %v4855, %v4859
    %vm4861 = vweird.f32 %v4731
    %vm4862 = vweird.f32 %v4855
    %vm4863 = vmor %vm4861, %vm4862
    %v4864 = vsel %vm4863, %v4855, %v4860
    %v4865 = vrsqrt.pop %v4732
    %v4866 = vmul.f32 %v4865, %v4732
    %v4867 = vmul.f32 %v4866, %v4865
    %v4868 = vmul.f32 0.5, %v4867
    %v4869 = vsub.f32 1.5, %v4868
    %v4870 = vmul.f32 %v4865, %v4869
    %vm4871 = vweird.f32 %v4732
    %vm4872 = vweird.f32 %v4865
    %vm4873 = vmor %vm4871, %vm4872
    %v4874 = vsel %vm4873, %v4865, %v4870
    %v4875 = vrsqrt.pop %v4733
    %v4876 = vmul.f32 %v4875, %v4733
    %v4877 = vmul.f32 %v4876, %v4875
    %v4878 = vmul.f32 0.5, %v4877
    %v4879 = vsub.f32 1.5, %v4878
    %v4880 = vmul.f32 %v4875, %v4879
    %vm4881 = vweird.f32 %v4733
    %vm4882 = vweird.f32 %v4875
    %vm4883 = vmor %vm4881, %vm4882
    %v4884 = vsel %vm4883, %v4875, %v4880
    %v4885 = vrsqrt.pop %v4734
    %v4886 = vmul.f32 %v4885, %v4734
    %v4887 = vmul.f32 %v4886, %v4885
    %v4888 = vmul.f32 0.5, %v4887
    %v4889 = vsub.f32 1.5, %v4888
    %v4890 = vmul.f32 %v4885, %v4889
    %vm4891 = vweird.f32 %v4734
    %vm4892 = vweird.f32 %v4885
    %vm4893 = vmor %vm4891, %vm4892
    %v4894 = vsel %vm4893, %v4885, %v4890
    %v4895 = vmul.f32 %v4639, %v4744
    %v4896 = vmul.f32 %v4640, %v4754
    %v4897 = vmul.f32 %v4641, %v4764
    %v4898 = vmul.f32 %v4642, %v4774
    %v4899 = vmul.f32 %v4643, %v4784
    %v4900 = vmul.f32 %v4644, %v4794
    %v4901 = vmul.f32 %v4645, %v4804
    %v4902 = vmul.f32 %v4646, %v4814
    %v4903 = vmul.f32 %v4647, %v4824
    %v4904 = vmul.f32 %v4648, %v4834
    %v4905 = vmul.f32 %v4649, %v4844
    %v4906 = vmul.f32 %v4650, %v4854
    %v4907 = vmul.f32 %v4651, %v4864
    %v4908 = vmul.f32 %v4652, %v4874
    %v4909 = vmul.f32 %v4653, %v4884
    %v4910 = vmul.f32 %v4654, %v4894
    %v4911 = vmul.f32 %v4895, %v189
    %v4912 = vmul.f32 %v4896, %v189
    %v4913 = vmul.f32 %v4897, %v189
    %v4914 = vmul.f32 %v4898, %v189
    %v4915 = vmul.f32 %v4899, %v189
    %v4916 = vmul.f32 %v4900, %v189
    %v4917 = vmul.f32 %v4901, %v189
    %v4918 = vmul.f32 %v4902, %v189
    %v4919 = vmul.f32 %v4903, %v189
    %v4920 = vmul.f32 %v4904, %v189
    %v4921 = vmul.f32 %v4905, %v189
    %v4922 = vmul.f32 %v4906, %v189
    %v4923 = vmul.f32 %v4907, %v189
    %v4924 = vmul.f32 %v4908, %v189
    %v4925 = vmul.f32 %v4909, %v189
    %v4926 = vmul.f32 %v4910, %v189
    %v4927 = vadd.f32 %v4911, %v190
    %v4928 = vadd.f32 %v4912, %v190
    %v4929 = vadd.f32 %v4913, %v190
    %v4930 = vadd.f32 %v4914, %v190
    %v4931 = vadd.f32 %v4915, %v190
    %v4932 = vadd.f32 %v4916, %v190
    %v4933 = vadd.f32 %v4917, %v190
    %v4934 = vadd.f32 %v4918, %v190
    %v4935 = vadd.f32 %v4919, %v190
    %v4936 = vadd.f32 %v4920, %v190
    %v4937 = vadd.f32 %v4921, %v190
    %v4938 = vadd.f32 %v4922, %v190
    %v4939 = vadd.f32 %v4923, %v190
    %v4940 = vadd.f32 %v4924, %v190
    %v4941 = vadd.f32 %v4925, %v190
    %v4942 = vadd.f32 %v4926, %v190
    %4943 = vst [vmem:[#allocation17] sm:$0xff] %v4927
    %4944 = vst [vmem:[#allocation17 + $0x8] sm:$0xff] %v4928
    %4945 = vst [vmem:[#allocation17 + $0x10] sm:$0xff] %v4929
    %4946 = vst [vmem:[#allocation17 + $0x18] sm:$0xff] %v4930
    %4947 = vst [vmem:[#allocation17 + $0x20] sm:$0xff] %v4931
    %4948 = vst [vmem:[#allocation17 + $0x28] sm:$0xff] %v4932
    %4949 = vst [vmem:[#allocation17 + $0x30] sm:$0xff] %v4933
    %4950 = vst [vmem:[#allocation17 + $0x38] sm:$0xff] %v4934
    %4951 = vst [vmem:[#allocation17 + $0x40] sm:$0xff] %v4935
    %4952 = vst [vmem:[#allocation17 + $0x48] sm:$0xff] %v4936
    %4953 = vst [vmem:[#allocation17 + $0x50] sm:$0xff] %v4937
    %4954 = vst [vmem:[#allocation17 + $0x58] sm:$0xff] %v4938
    %4955 = vst [vmem:[#allocation17 + $0x60] sm:$0xff] %v4939
    %4956 = vst [vmem:[#allocation17 + $0x68] sm:$0xff] %v4940
    %4957 = vst [vmem:[#allocation17 + $0x70] sm:$0xff] %v4941
    %4958 = vst [vmem:[#allocation17 + $0x78] sm:$0xff] %v4942
    // Predicated region
    $region66: #{tpu_custom_call.1} parent=1 // pred_check
      _
    $region67: #{tpu_custom_call.1} parent=1 // pred_check_branch
      %4960 = sbr.rel (0) target = $region69
    $region68: #{tpu_custom_call.1} parent=1 // pred_region
      %4962 = vsyncadd [#allocation5], 0
      %s4963 = sshll.u32 [#allocation17], 4
      %s4964 = int_to_ptr.vmem [resolvable:$true] %s4963
      %s4965 = sshll.u32 %s8, 4
      %s4966 = int_to_ptr.hbm [resolvable:$true] %s4965
      %4971 = dma.vmem_to_hbm [thread:$0]  %s4964, 2048, %s4966, [#allocation5], 128, 128, 8
    $region69: #{tpu_custom_call.1} parent=1 // pred_fallthru
      _
    // Predicated region
    $region70: #{tpu_custom_call.1} parent=1 // pred_check
      _
    $region71: #{tpu_custom_call.1} parent=1 // pred_check_branch
      %4973 = sbr.rel (0) target = $region73
    $region72: #{tpu_custom_call.1} parent=1 // pred_region
      %4975 = dma.done [#allocation5], 2048
    $region73: #{tpu_custom_call.1} parent=1 // pred_fallthru
      _
    %4976 = vsyncpa [#allocation4], 1
    %4977 = vsyncpa [#allocation7], 1
    %4978 = vsyncpa [#allocation10], 1
    %4979 = vsyncpa [#allocation13], 1
    %4980 = vsyncpa [#allocation16], 1
    %4981 = vsyncpa [#allocation5], 1

// kernel: tpu_custom_call.1
$region0: #{tpu_custom_call.1}
  #allocation0 [shape = 'u32[]', space=smem, size = 0x4, offset = 0x4, fixed_abs, tag = 'smem constant byte address 0x4 - core index']
  #allocation1 [shape = 'u32[72,128]{1,0:T(1,128)}', space=vmem, size = 0x9000, scoped, tag = 'internal scratch']
  #allocation2 [shape = 'f32[128,128]{1,0:T(8,128)}', space=vmem, size = 0x10000, scoped, tag = 'scratch operand']
  %s0 = inlined_call_operand.hbm [shape: f32[8,16,128], index: 0, kind: input, shape index: {}]
  %s1 = inlined_call_operand.hbm [shape: f32[8,16,128], index: 1, kind: input, shape index: {}]
  %s2 = inlined_call_operand.hbm [shape: f32[128,128], index: 2, kind: input, shape index: {}]
  %s3 = inlined_call_operand.hbm [shape: f32[128,256], index: 3, kind: input, shape index: {}]
  %s4 = inlined_call_operand.hbm [shape: f32[128,128], index: 4, kind: input, shape index: {}]
  %s5 = inlined_call_operand.hbm [shape: f32[128,256], index: 5, kind: input, shape index: {}]
  %s6 = inlined_call_operand.hbm [shape: f32[256,128], index: 6, kind: input, shape index: {}]
  %s7 = inlined_call_operand.hbm [shape: f32[10,256], index: 7, kind: input, shape index: {}]
  %s8 = inlined_call_operand.hbm [shape: f32[8,16,128], index: 8, kind: output, shape index: {}]
  %s9 = sld [smem:[#allocation0]]
  $region74: #{tpu_custom_call.1} parent=0
    _
  %s11 = ssub.s32 1, %s9
  %s12 = scalar_select 0, %s11, %s9
  $region1: #{tpu_custom_call.1} parent=0
    #allocation3 [shape = 'u8[65536]{0}', space=vmem, size = 0x10000, scoped, tag = 'input window, operand 0, single buffered']
    #allocation4 [shape = 's32[1]{0}', space=sflag, size = 0x4, scoped, tag = 'scoped memory for tpu_custom_call.1']
    #allocation5 [shape = 's32[1]{0}', space=sflag, size = 0x4, scoped, tag = 'scoped memory for tpu_custom_call.1']
    #allocation6 [shape = 'u8[65536]{0}', space=vmem, size = 0x10000, scoped, tag = 'input window, operand 1, single buffered']
    #allocation7 [shape = 's32[1]{0}', space=sflag, size = 0x4, scoped, tag = 'scoped memory for tpu_custom_call.1']
    #allocation8 [shape = 'u8[65536]{0}', space=vmem, size = 0x10000, scoped, tag = 'input window, operand 2, single buffered']
    #allocation9 [shape = 'u8[131072]{0}', space=vmem, size = 0x20000, scoped, tag = 'input window, operand 3, single buffered']
    #allocation10 [shape = 's32[1]{0}', space=sflag, size = 0x4, scoped, tag = 'scoped memory for tpu_custom_call.1']
    #allocation11 [shape = 'u8[65536]{0}', space=vmem, size = 0x10000, scoped, tag = 'input window, operand 4, single buffered']
    #allocation12 [shape = 'u8[131072]{0}', space=vmem, size = 0x20000, scoped, tag = 'input window, operand 5, single buffered']
    #allocation13 [shape = 's32[1]{0}', space=sflag, size = 0x4, scoped, tag = 'scoped memory for tpu_custom_call.1']
    #allocation14 [shape = 'u8[131072]{0}', space=vmem, size = 0x20000, scoped, tag = 'input window, operand 6, single buffered']
    #allocation15 [shape = 'u8[16384]{0}', space=vmem, size = 0x4000, scoped, tag = 'input window, operand 7, single buffered']
    #allocation16 [shape = 's32[1]{0}', space=sflag, size = 0x4, scoped, tag = 'scoped memory for tpu_custom_call.1']
    #allocation17 [shape = 'u8[65536]{0}', space=vmem, size = 0x10000, scoped, tag = 'output window, operand 0, single buffered']
    %13 = vsyncpa [#allocation4], 0
    %14 = vsyncpa [#allocation7], 0
    %15 = vsyncpa [#allocation10], 0
    %16 = vsyncpa [#allocation13], 0
    %17 = vsyncpa [#allocation16], 0
    %18 = vsyncpa [#allocation5], 0
    // Predicated region
    $region2: #{tpu_custom_call.1} parent=1 // pred_check
      _
    $region3: #{tpu_custom_call.1} parent=1 // pred_check_branch
      %20 = sbr.rel (0) target = $region5
    $region4: #{tpu_custom_call.1} parent=1 // pred_region
      %22 = vsyncadd [#allocation4], 0
      %s23 = sshll.u32 %s0, 4
      %s24 = int_to_ptr.hbm [resolvable:$true] %s23
      %s25 = sshll.u32 [#allocation3], 4
      %s26 = int_to_ptr.vmem [resolvable:$true] %s25
      %31 = dma.hbm_to_vmem [thread:$0]  %s24, 2048, %s26, [#allocation4], 128, 128, 8
    $region5: #{tpu_custom_call.1} parent=1 // pred_fallthru
      _
    // Predicated region
    $region6: #{tpu_custom_call.1} parent=1 // pred_check
      _
    $region7: #{tpu_custom_call.1} parent=1 // pred_check_branch
      %33 = sbr.rel (0) target = $region9
    $region8: #{tpu_custom_call.1} parent=1 // pred_region
      %35 = vsyncadd [#allocation7], 0
      %s36 = sshll.u32 %s1, 4
      %s37 = int_to_ptr.hbm [resolvable:$true] %s36
      %s38 = sshll.u32 [#allocation6], 4
      %s39 = int_to_ptr.vmem [resolvable:$true] %s38
      %44 = dma.hbm_to_vmem [thread:$0]  %s37, 2048, %s39, [#allocation7], 128, 128, 8
    $region9: #{tpu_custom_call.1} parent=1 // pred_fallthru
      _
    // Predicated region
    $region10: #{tpu_custom_call.1} parent=1 // pred_check
      _
    $region11: #{tpu_custom_call.1} parent=1 // pred_check_branch
      %46 = sbr.rel (0) target = $region13
    $region12: #{tpu_custom_call.1} parent=1 // pred_region
      %48 = vsyncadd [#allocation7], 0
      %s49 = sshll.u32 %s2, 4
      %s50 = int_to_ptr.hbm [resolvable:$true] %s49
      %s51 = sshll.u32 [#allocation8], 4
      %s52 = int_to_ptr.vmem [resolvable:$true] %s51
      %57 = dma.hbm_to_vmem [thread:$0]  %s50, 2048, %s52, [#allocation7], 128, 128, 8
    $region13: #{tpu_custom_call.1} parent=1 // pred_fallthru
      _
    // Predicated region
    $region14: #{tpu_custom_call.1} parent=1 // pred_check
      _
    $region15: #{tpu_custom_call.1} parent=1 // pred_check_branch
      %59 = sbr.rel (0) target = $region17
    $region16: #{tpu_custom_call.1} parent=1 // pred_region
      %61 = vsyncadd [#allocation10], 0
      %s62 = sshll.u32 %s3, 4
      %s63 = int_to_ptr.hbm [resolvable:$true] %s62
      %s64 = sshll.u32 [#allocation9], 4
      %s65 = int_to_ptr.vmem [resolvable:$true] %s64
      %70 = dma.hbm_to_vmem [thread:$0]  %s63, 4096, %s65, [#allocation10], 256, 256, 16
    $region17: #{tpu_custom_call.1} parent=1 // pred_fallthru
      _
    // Predicated region
    $region18: #{tpu_custom_call.1} parent=1 // pred_check
      _
    $region19: #{tpu_custom_call.1} parent=1 // pred_check_branch
      %72 = sbr.rel (0) target = $region21
    $region20: #{tpu_custom_call.1} parent=1 // pred_region
      %74 = vsyncadd [#allocation10], 0
      %s75 = sshll.u32 %s4, 4
      %s76 = int_to_ptr.hbm [resolvable:$true] %s75
      %s77 = sshll.u32 [#allocation11], 4
      %s78 = int_to_ptr.vmem [resolvable:$true] %s77
      %83 = dma.hbm_to_vmem [thread:$0]  %s76, 2048, %s78, [#allocation10], 128, 128, 8
    $region21: #{tpu_custom_call.1} parent=1 // pred_fallthru
      _
    // Predicated region
    $region22: #{tpu_custom_call.1} parent=1 // pred_check
      _
    $region23: #{tpu_custom_call.1} parent=1 // pred_check_branch
      %85 = sbr.rel (0) target = $region25
    $region24: #{tpu_custom_call.1} parent=1 // pred_region
      %87 = vsyncadd [#allocation13], 0
      %s88 = sshll.u32 %s5, 4
      %s89 = int_to_ptr.hbm [resolvable:$true] %s88
      %s90 = sshll.u32 [#allocation12], 4
      %s91 = int_to_ptr.vmem [resolvable:$true] %s90
      %96 = dma.hbm_to_vmem [thread:$0]  %s89, 4096, %s91, [#allocation13], 256, 256, 16
    $region25: #{tpu_custom_call.1} parent=1 // pred_fallthru
      _
    // Predicated region
    $region26: #{tpu_custom_call.1} parent=1 // pred_check
      _
    $region27: #{tpu_custom_call.1} parent=1 // pred_check_branch
      %98 = sbr.rel (0) target = $region29
    $region28: #{tpu_custom_call.1} parent=1 // pred_region
      %100 = vsyncadd [#allocation13], 0
      %s101 = sshll.u32 %s6, 4
      %s102 = int_to_ptr.hbm [resolvable:$true] %s101
      %s103 = sshll.u32 [#allocation14], 4
      %s104 = int_to_ptr.vmem [resolvable:$true] %s103
      %109 = dma.hbm_to_vmem [thread:$0]  %s102, 4096, %s104, [#allocation13], 128, 128, 8
    $region29: #{tpu_custom_call.1} parent=1 // pred_fallthru
      _
    // Predicated region
    $region30: #{tpu_custom_call.1} parent=1 // pred_check
      _
    $region31: #{tpu_custom_call.1} parent=1 // pred_check_branch
      %111 = sbr.rel (0) target = $region33
    $region32: #{tpu_custom_call.1} parent=1 // pred_region
      %113 = vsyncadd [#allocation16], 0
      %s114 = sshll.u32 %s7, 4
      %s115 = int_to_ptr.hbm [resolvable:$true] %s114
      %s116 = sshll.u32 [#allocation15], 4
      %s117 = int_to_ptr.vmem [resolvable:$true] %s116
      %122 = dma.hbm_to_vmem [thread:$0]  %s115, 512, %s117, [#allocation16], 256, 256, 16
    $region33: #{tpu_custom_call.1} parent=1 // pred_fallthru
      _
    // Predicated region
    $region34: #{tpu_custom_call.1} parent=1 // pred_check
      _
    $region35: #{tpu_custom_call.1} parent=1 // pred_check_branch
      %124 = sbr.rel (0) target = $region37
    $region36: #{tpu_custom_call.1} parent=1 // pred_region
      %126 = dma.done [#allocation4], 2048
    $region37: #{tpu_custom_call.1} parent=1 // pred_fallthru
      _
    // Predicated region
    $region38: #{tpu_custom_call.1} parent=1 // pred_check
      _
    $region39: #{tpu_custom_call.1} parent=1 // pred_check_branch
      %128 = sbr.rel (0) target = $region41
    $region40: #{tpu_custom_call.1} parent=1 // pred_region
      %130 = dma.done [#allocation7], 2048
    $region41: #{tpu_custom_call.1} parent=1 // pred_fallthru
      _
    // Predicated region
    $region42: #{tpu_custom_call.1} parent=1 // pred_check
      _
    $region43: #{tpu_custom_call.1} parent=1 // pred_check_branch
      %132 = sbr.rel (0) target = $region45
    $region44: #{tpu_custom_call.1} parent=1 // pred_region
      %134 = dma.done [#allocation7], 2048
    $region45: #{tpu_custom_call.1} parent=1 // pred_fallthru
      _
    // Predicated region
    $region46: #{tpu_custom_call.1} parent=1 // pred_check
      _
    $region47: #{tpu_custom_call.1} parent=1 // pred_check_branch
      %136 = sbr.rel (0) target = $region49
    $region48: #{tpu_custom_call.1} parent=1 // pred_region
      %138 = dma.done [#allocation10], 4096
    $region49: #{tpu_custom_call.1} parent=1 // pred_fallthru
      _
    // Predicated region
    $region50: #{tpu_custom_call.1} parent=1 // pred_check
      _
    $region51: #{tpu_custom_call.1} parent=1 // pred_check_branch
      %140 = sbr.rel (0) target = $region53
    $region52: #{tpu_custom_call.1} parent=1 // pred_region
      %142 = dma.done [#allocation10], 2048
    $region53: #{tpu_custom_call.1} parent=1 // pred_fallthru
      _
    // Predicated region
    $region54: #{tpu_custom_call.1} parent=1 // pred_check
      _
    $region55: #{tpu_custom_call.1} parent=1 // pred_check_branch
      %144 = sbr.rel (0) target = $region57
    $region56: #{tpu_custom_call.1} parent=1 // pred_region
      %146 = dma.done [#allocation13], 4096
    $region57: #{tpu_custom_call.1} parent=1 // pred_fallthru
      _
    // Predicated region
    $region58: #{tpu_custom_call.1} parent=1 // pred_check
      _
    $region59: #{tpu_custom_call.1} parent=1 // pred_check_branch
      %148 = sbr.rel (0) target = $region61
    $region60: #{tpu_custom_call.1} parent=1 // pred_region
      %150 = dma.done [#allocation13], 4096
    $region61: #{tpu_custom_call.1} parent=1 // pred_fallthru
      _
    // Predicated region
    $region62: #{tpu_custom_call.1} parent=1 // pred_check
      _
    $region63: #{tpu_custom_call.1} parent=1 // pred_check_branch
      %152 = sbr.rel (0) target = $region65
    $region64: #{tpu_custom_call.1} parent=1 // pred_region
      %154 = dma.done [#allocation16], 512
    $region65: #{tpu_custom_call.1} parent=1 // pred_fallthru
      _
    %v155 = vld [vmem:[#allocation3] sm:$0xff]
    %v156 = vld [vmem:[#allocation3 + $0x8] sm:$0xff]
    %v157 = vld [vmem:[#allocation3 + $0x10] sm:$0xff]
    %v158 = vld [vmem:[#allocation3 + $0x18] sm:$0xff]
    %v159 = vld [vmem:[#allocation3 + $0x20] sm:$0xff]
    %v160 = vld [vmem:[#allocation3 + $0x28] sm:$0xff]
    %v161 = vld [vmem:[#allocation3 + $0x30] sm:$0xff]
    %v162 = vld [vmem:[#allocation3 + $0x38] sm:$0xff]
    %v163 = vld [vmem:[#allocation3 + $0x40] sm:$0xff]
    %v164 = vld [vmem:[#allocation3 + $0x48] sm:$0xff]
    %v165 = vld [vmem:[#allocation3 + $0x50] sm:$0xff]
    %v166 = vld [vmem:[#allocation3 + $0x58] sm:$0xff]
    %v167 = vld [vmem:[#allocation3 + $0x60] sm:$0xff]
    %v168 = vld [vmem:[#allocation3 + $0x68] sm:$0xff]
    %v169 = vld [vmem:[#allocation3 + $0x70] sm:$0xff]
    %v170 = vld [vmem:[#allocation3 + $0x78] sm:$0xff]
    %v171 = vld [vmem:[#allocation6] sm:$0xff]
    %v172 = vld [vmem:[#allocation6 + $0x8] sm:$0xff]
    %v173 = vld [vmem:[#allocation6 + $0x10] sm:$0xff]
    %v174 = vld [vmem:[#allocation6 + $0x18] sm:$0xff]
    %v175 = vld [vmem:[#allocation6 + $0x20] sm:$0xff]
    %v176 = vld [vmem:[#allocation6 + $0x28] sm:$0xff]
    %v177 = vld [vmem:[#allocation6 + $0x30] sm:$0xff]
    %v178 = vld [vmem:[#allocation6 + $0x38] sm:$0xff]
    %v179 = vld [vmem:[#allocation6 + $0x40] sm:$0xff]
    %v180 = vld [vmem:[#allocation6 + $0x48] sm:$0xff]
    %v181 = vld [vmem:[#allocation6 + $0x50] sm:$0xff]
    %v182 = vld [vmem:[#allocation6 + $0x58] sm:$0xff]
    %v183 = vld [vmem:[#allocation6 + $0x60] sm:$0xff]
    %v184 = vld [vmem:[#allocation6 + $0x68] sm:$0xff]
    %v185 = vld [vmem:[#allocation6 + $0x70] sm:$0xff]
    %v186 = vld [vmem:[#allocation6 + $0x78] sm:$0xff]
    %v187 = vld [vmem:[#allocation15] ss:$0 sm:$0xff]
    %v188 = vld [vmem:[#allocation15 + $0x1] ss:$0 sm:$0xff]
    %v189 = vld [vmem:[#allocation15 + $0x2] ss:$0 sm:$0xff]
    %v190 = vld [vmem:[#allocation15 + $0x3] ss:$0 sm:$0xff]
    %v191 = vld [vmem:[#allocation15 + $0x4] ss:$0 sm:$0xff]
    %v192 = vld [vmem:[#allocation15 + $0x5] ss:$0 sm:$0xff]
    %v193 = vld [vmem:[#allocation15 + $0x6] ss:$0 sm:$0xff]
    %v194 = vld [vmem:[#allocation15 + $0x7] ss:$0 sm:$0xff]
    %v195 = vld [vmem:[#allocation15 + $0x10] ss:$0 sm:$0xff]
    %s196 = scalar_lea.vmem [#allocation15], 17
    %v197 = vld [vmem:[%s196] ss:$8 sm:$0x3]
    %v198 = vld [vmem:[#allocation8] sm:$0xff]
    %v199 = vld [vmem:[#allocation8 + $0x8] sm:$0xff]
    %v200 = vld [vmem:[#allocation8 + $0x10] sm:$0xff]
    %v201 = vld [vmem:[#allocation8 + $0x18] sm:$0xff]
    %v202 = vld [vmem:[#allocation8 + $0x20] sm:$0xff]
    %v203 = vld [vmem:[#allocation8 + $0x28] sm:$0xff]
    %v204 = vld [vmem:[#allocation8 + $0x30] sm:$0xff]
    %v205 = vld [vmem:[#allocation8 + $0x38] sm:$0xff]
    %v206 = vld [vmem:[#allocation8 + $0x40] sm:$0xff]
    %v207 = vld [vmem:[#allocation8 + $0x48] sm:$0xff]
    %v208 = vld [vmem:[#allocation8 + $0x50] sm:$0xff]
    %v209 = vld [vmem:[#allocation8 + $0x58] sm:$0xff]
    %v210 = vld [vmem:[#allocation8 + $0x60] sm:$0xff]
    %v211 = vld [vmem:[#allocation8 + $0x68] sm:$0xff]
    %v212 = vld [vmem:[#allocation8 + $0x70] sm:$0xff]
    %v213 = vld [vmem:[#allocation8 + $0x78] sm:$0xff]
    %214 = vmatpush.msra.mxu0 %v213
    %215 = vmatpush.msra.mxu0 %v212
    %216 = vmatpush.msra.mxu0 %v211
    %217 = vmatpush.msra.mxu0 %v210
    %218 = vmatpush.msra.mxu0 %v209
    %219 = vmatpush.msra.mxu0 %v208
    %220 = vmatpush.msra.mxu0 %v207
    %221 = vmatpush.msra.mxu0 %v206
    %222 = vmatpush.msra.mxu0 %v205
    %223 = vmatpush.msra.mxu0 %v204
    %224 = vmatpush.msra.mxu0 %v203
    %225 = vmatpush.msra.mxu0 %v202
    %226 = vmatpush.msra.mxu0 %v201
    %227 = vmatpush.msra.mxu0 %v200
    %228 = vmatpush.msra.mxu0 %v199
    %229 = vmatpush.msra.mxu0 %v198
    %230 = vmatmul.f32.gmra.mxu0 %v155
    %v231 = vpop.f32.mrf.mxu0
    %v232 = vadd.f32 %v191, %v231
    %233 = vmatmul.f32.gmra.mxu0 %v156
    %v234 = vpop.f32.mrf.mxu0
    %v235 = vadd.f32 %v191, %v234
    %236 = vmatmul.f32.gmra.mxu0 %v157
    %v237 = vpop.f32.mrf.mxu0
    %v238 = vadd.f32 %v191, %v237
    %239 = vmatmul.f32.gmra.mxu0 %v158
    %v240 = vpop.f32.mrf.mxu0
    %v241 = vadd.f32 %v191, %v240
    %242 = vmatmul.f32.gmra.mxu0 %v159
    %v243 = vpop.f32.mrf.mxu0
    %v244 = vadd.f32 %v191, %v243
    %245 = vmatmul.f32.gmra.mxu0 %v160
    %v246 = vpop.f32.mrf.mxu0
    %v247 = vadd.f32 %v191, %v246
    %248 = vmatmul.f32.gmra.mxu0 %v161
    %v249 = vpop.f32.mrf.mxu0
    %v250 = vadd.f32 %v191, %v249
    %251 = vmatmul.f32.gmra.mxu0 %v162
    %v252 = vpop.f32.mrf.mxu0
    %v253 = vadd.f32 %v191, %v252
    %254 = vmatmul.f32.gmra.mxu0 %v163
    %v255 = vpop.f32.mrf.mxu0
    %v256 = vadd.f32 %v191, %v255
    %257 = vmatmul.f32.gmra.mxu0 %v164
    %v258 = vpop.f32.mrf.mxu0
    %v259 = vadd.f32 %v191, %v258
    %260 = vmatmul.f32.gmra.mxu0 %v165
    %v261 = vpop.f32.mrf.mxu0
    %v262 = vadd.f32 %v191, %v261
    %263 = vmatmul.f32.gmra.mxu0 %v166
    %v264 = vpop.f32.mrf.mxu0
    %v265 = vadd.f32 %v191, %v264
    %266 = vmatmul.f32.gmra.mxu0 %v167
    %v267 = vpop.f32.mrf.mxu0
    %v268 = vadd.f32 %v191, %v267
    %269 = vmatmul.f32.gmra.mxu0 %v168
    %v270 = vpop.f32.mrf.mxu0
    %v271 = vadd.f32 %v191, %v270
    %272 = vmatmul.f32.gmra.mxu0 %v169
    %v273 = vpop.f32.mrf.mxu0
    %v274 = vadd.f32 %v191, %v273
    %275 = vmatmul.f32.gmra.mxu0 %v170
    %v276 = vpop.f32.mrf.mxu0
    %v277 = vadd.f32 %v191, %v276
    %278 = vdwg.mxu0
    %v279 = vld [vmem:[#allocation9] sm:$0xff]
    %v280 = vld [vmem:[#allocation9 + $0x8] sm:$0xff]
    %v281 = vld [vmem:[#allocation9 + $0x10] sm:$0xff]
    %v282 = vld [vmem:[#allocation9 + $0x18] sm:$0xff]
    %v283 = vld [vmem:[#allocation9 + $0x20] sm:$0xff]
    %v284 = vld [vmem:[#allocation9 + $0x28] sm:$0xff]
    %v285 = vld [vmem:[#allocation9 + $0x30] sm:$0xff]
    %v286 = vld [vmem:[#allocation9 + $0x38] sm:$0xff]
    %v287 = vld [vmem:[#allocation9 + $0x40] sm:$0xff]
    %v288 = vld [vmem:[#allocation9 + $0x48] sm:$0xff]
    %v289 = vld [vmem:[#allocation9 + $0x50] sm:$0xff]
    %v290 = vld [vmem:[#allocation9 + $0x58] sm:$0xff]
    %v291 = vld [vmem:[#allocation9 + $0x60] sm:$0xff]
    %v292 = vld [vmem:[#allocation9 + $0x68] sm:$0xff]
    %v293 = vld [vmem:[#allocation9 + $0x70] sm:$0xff]
    %v294 = vld [vmem:[#allocation9 + $0x78] sm:$0xff]
    %v295 = vld [vmem:[#allocation9 + $0x80] sm:$0xff]
    %v296 = vld [vmem:[#allocation9 + $0x88] sm:$0xff]
    %v297 = vld [vmem:[#allocation9 + $0x90] sm:$0xff]
    %v298 = vld [vmem:[#allocation9 + $0x98] sm:$0xff]
    %v299 = vld [vmem:[#allocation9 + $0xa0] sm:$0xff]
    %v300 = vld [vmem:[#allocation9 + $0xa8] sm:$0xff]
    %v301 = vld [vmem:[#allocation9 + $0xb0] sm:$0xff]
    %v302 = vld [vmem:[#allocation9 + $0xb8] sm:$0xff]
    %v303 = vld [vmem:[#allocation9 + $0xc0] sm:$0xff]
    %v304 = vld [vmem:[#allocation9 + $0xc8] sm:$0xff]
    %v305 = vld [vmem:[#allocation9 + $0xd0] sm:$0xff]
    %v306 = vld [vmem:[#allocation9 + $0xd8] sm:$0xff]
    %v307 = vld [vmem:[#allocation9 + $0xe0] sm:$0xff]
    %v308 = vld [vmem:[#allocation9 + $0xe8] sm:$0xff]
    %v309 = vld [vmem:[#allocation9 + $0xf0] sm:$0xff]
    %v310 = vld [vmem:[#allocation9 + $0xf8] sm:$0xff]
    %311 = vmatpush.msra.mxu0 %v309
    %312 = vmatpush.msra.mxu0 %v307
    %313 = vmatpush.msra.mxu0 %v305
    %314 = vmatpush.msra.mxu0 %v303
    %315 = vmatpush.msra.mxu0 %v301
    %316 = vmatpush.msra.mxu0 %v299
    %317 = vmatpush.msra.mxu0 %v297
    %318 = vmatpush.msra.mxu0 %v295
    %319 = vmatpush.msra.mxu0 %v293
    %320 = vmatpush.msra.mxu0 %v291
    %321 = vmatpush.msra.mxu0 %v289
    %322 = vmatpush.msra.mxu0 %v287
    %323 = vmatpush.msra.mxu0 %v285
    %324 = vmatpush.msra.mxu0 %v283
    %325 = vmatpush.msra.mxu0 %v281
    %326 = vmatpush.msra.mxu0 %v279
    %327 = vmatmul.f32.gmra.mxu0 %v171
    %v328 = vpop.f32.mrf.mxu0
    %v329 = vadd.f32 0.0, %v328
    %330 = vmatmul.f32.gmra.mxu0 %v172
    %v331 = vpop.f32.mrf.mxu0
    %v332 = vadd.f32 0.0, %v331
    %333 = vmatmul.f32.gmra.mxu0 %v173
    %v334 = vpop.f32.mrf.mxu0
    %v335 = vadd.f32 0.0, %v334
    %336 = vmatmul.f32.gmra.mxu0 %v174
    %v337 = vpop.f32.mrf.mxu0
    %v338 = vadd.f32 0.0, %v337
    %339 = vmatmul.f32.gmra.mxu0 %v175
    %v340 = vpop.f32.mrf.mxu0
    %v341 = vadd.f32 0.0, %v340
    %342 = vmatmul.f32.gmra.mxu0 %v176
    %v343 = vpop.f32.mrf.mxu0
    %v344 = vadd.f32 0.0, %v343
    %345 = vmatmul.f32.gmra.mxu0 %v177
    %v346 = vpop.f32.mrf.mxu0
    %v347 = vadd.f32 0.0, %v346
    %348 = vmatmul.f32.gmra.mxu0 %v178
    %v349 = vpop.f32.mrf.mxu0
    %v350 = vadd.f32 0.0, %v349
    %351 = vmatmul.f32.gmra.mxu0 %v179
    %v352 = vpop.f32.mrf.mxu0
    %v353 = vadd.f32 0.0, %v352
    %354 = vmatmul.f32.gmra.mxu0 %v180
    %v355 = vpop.f32.mrf.mxu0
    %v356 = vadd.f32 0.0, %v355
    %357 = vmatmul.f32.gmra.mxu0 %v181
    %v358 = vpop.f32.mrf.mxu0
    %v359 = vadd.f32 0.0, %v358
    %360 = vmatmul.f32.gmra.mxu0 %v182
    %v361 = vpop.f32.mrf.mxu0
    %v362 = vadd.f32 0.0, %v361
    %363 = vmatmul.f32.gmra.mxu0 %v183
    %v364 = vpop.f32.mrf.mxu0
    %v365 = vadd.f32 0.0, %v364
    %366 = vmatmul.f32.gmra.mxu0 %v184
    %v367 = vpop.f32.mrf.mxu0
    %v368 = vadd.f32 0.0, %v367
    %369 = vmatmul.f32.gmra.mxu0 %v185
    %v370 = vpop.f32.mrf.mxu0
    %v371 = vadd.f32 0.0, %v370
    %372 = vmatmul.f32.gmra.mxu0 %v186
    %v373 = vpop.f32.mrf.mxu0
    %v374 = vadd.f32 0.0, %v373
    %375 = vdwg.mxu0
    %376 = vmatpush.msra.mxu0 %v310
    %377 = vmatpush.msra.mxu0 %v308
    %378 = vmatpush.msra.mxu0 %v306
    %379 = vmatpush.msra.mxu0 %v304
    %380 = vmatpush.msra.mxu0 %v302
    %381 = vmatpush.msra.mxu0 %v300
    %382 = vmatpush.msra.mxu0 %v298
    %383 = vmatpush.msra.mxu0 %v296
    %384 = vmatpush.msra.mxu0 %v294
    %385 = vmatpush.msra.mxu0 %v292
    %386 = vmatpush.msra.mxu0 %v290
    %387 = vmatpush.msra.mxu0 %v288
    %388 = vmatpush.msra.mxu0 %v286
    %389 = vmatpush.msra.mxu0 %v284
    %390 = vmatpush.msra.mxu0 %v282
    %391 = vmatpush.msra.mxu0 %v280
    %392 = vmatmul.f32.gmra.mxu0 %v171
    %v393 = vpop.f32.mrf.mxu0
    %v394 = vadd.f32 0.0, %v393
    %395 = vmatmul.f32.gmra.mxu0 %v172
    %v396 = vpop.f32.mrf.mxu0
    %v397 = vadd.f32 0.0, %v396
    %398 = vmatmul.f32.gmra.mxu0 %v173
    %v399 = vpop.f32.mrf.mxu0
    %v400 = vadd.f32 0.0, %v399
    %401 = vmatmul.f32.gmra.mxu0 %v174
    %v402 = vpop.f32.mrf.mxu0
    %v403 = vadd.f32 0.0, %v402
    %404 = vmatmul.f32.gmra.mxu0 %v175
    %v405 = vpop.f32.mrf.mxu0
    %v406 = vadd.f32 0.0, %v405
    %407 = vmatmul.f32.gmra.mxu0 %v176
    %v408 = vpop.f32.mrf.mxu0
    %v409 = vadd.f32 0.0, %v408
    %410 = vmatmul.f32.gmra.mxu0 %v177
    %v411 = vpop.f32.mrf.mxu0
    %v412 = vadd.f32 0.0, %v411
    %413 = vmatmul.f32.gmra.mxu0 %v178
    %v414 = vpop.f32.mrf.mxu0
    %v415 = vadd.f32 0.0, %v414
    %416 = vmatmul.f32.gmra.mxu0 %v179
    %v417 = vpop.f32.mrf.mxu0
    %v418 = vadd.f32 0.0, %v417
    %419 = vmatmul.f32.gmra.mxu0 %v180
    %v420 = vpop.f32.mrf.mxu0
    %v421 = vadd.f32 0.0, %v420
    %422 = vmatmul.f32.gmra.mxu0 %v181
    %v423 = vpop.f32.mrf.mxu0
    %v424 = vadd.f32 0.0, %v423
    %425 = vmatmul.f32.gmra.mxu0 %v182
    %v426 = vpop.f32.mrf.mxu0
    %v427 = vadd.f32 0.0, %v426
    %428 = vmatmul.f32.gmra.mxu0 %v183
    %v429 = vpop.f32.mrf.mxu0
    %v430 = vadd.f32 0.0, %v429
    %431 = vmatmul.f32.gmra.mxu0 %v184
    %v432 = vpop.f32.mrf.mxu0
    %v433 = vadd.f32 0.0, %v432
    %434 = vmatmul.f32.gmra.mxu0 %v185
    %v435 = vpop.f32.mrf.mxu0
    %v436 = vadd.f32 0.0, %v435
    %437 = vmatmul.f32.gmra.mxu0 %v186
    %v438 = vpop.f32.mrf.mxu0
    %v439 = vadd.f32 0.0, %v438
    %440 = vdwg.mxu0
    %v441 = vadd.f32 %v329, %v192
    %v442 = vadd.f32 %v332, %v192
    %v443 = vadd.f32 %v335, %v192
    %v444 = vadd.f32 %v338, %v192
    %v445 = vadd.f32 %v341, %v192
    %v446 = vadd.f32 %v344, %v192
    %v447 = vadd.f32 %v347, %v192
    %v448 = vadd.f32 %v350, %v192
    %v449 = vadd.f32 %v353, %v192
    %v450 = vadd.f32 %v356, %v192
    %v451 = vadd.f32 %v359, %v192
    %v452 = vadd.f32 %v362, %v192
    %v453 = vadd.f32 %v365, %v192
    %v454 = vadd.f32 %v368, %v192
    %v455 = vadd.f32 %v371, %v192
    %v456 = vadd.f32 %v374, %v192
    %v457 = vadd.f32 %v394, %v193
    %v458 = vadd.f32 %v397, %v193
    %v459 = vadd.f32 %v400, %v193
    %v460 = vadd.f32 %v403, %v193
    %v461 = vadd.f32 %v406, %v193
    %v462 = vadd.f32 %v409, %v193
    %v463 = vadd.f32 %v412, %v193
    %v464 = vadd.f32 %v415, %v193
    %v465 = vadd.f32 %v418, %v193
    %v466 = vadd.f32 %v421, %v193
    %v467 = vadd.f32 %v424, %v193
    %v468 = vadd.f32 %v427, %v193
    %v469 = vadd.f32 %v430, %v193
    %v470 = vadd.f32 %v433, %v193
    %v471 = vadd.f32 %v436, %v193
    %v472 = vadd.f32 %v439, %v193
    %vm473 = vcmask 261120
    %v475 = vsel %vm473, %v232, 0
    %v478 = vsel %vm473, %v235, 0
    %v481 = vsel %vm473, %v441, 0
    %v484 = vsel %vm473, %v442, 0
    %486 = vmatpush.xpose.msra.mxu0 0.0
    %487 = vmatpush.xpose.msra.mxu0 0.0
    %488 = vmatpush.xpose.msra.mxu0 0.0
    %489 = vmatpush.xpose.msra.mxu0 0.0
    %490 = vmatpush.xpose.msra.mxu0 0.0
    %491 = vmatpush.xpose.msra.mxu0 0.0
    %492 = vmatpush.xpose.msra.mxu0 0.0
    %493 = vmatpush.xpose.msra.mxu0 0.0
    %494 = vmatpush.xpose.msra.mxu0 0.0
    %495 = vmatpush.xpose.msra.mxu0 0.0
    %496 = vmatpush.xpose.msra.mxu0 0.0
    %497 = vmatpush.xpose.msra.mxu0 0.0
    %498 = vmatpush.xpose.msra.mxu0 0.0
    %499 = vmatpush.xpose.msra.mxu0 0.0
    %500 = vmatpush.xpose.msra.mxu0 %v484
    %501 = vmatpush.xpose.msra.mxu0 %v481
    %502 = vmatmul.f32.gmra.mxu0 %v475
    %v503 = vpop.f32.mrf.mxu0
    %v504 = vadd.f32 0.0, %v503
    %505 = vmatmul.f32.gmra.mxu0 %v478
    %v506 = vpop.f32.mrf.mxu0
    %v507 = vadd.f32 0.0, %v506
    %508 = vdwg.mxu0
    %v510 = vsel %vm473, %v238, 0
    %v513 = vsel %vm473, %v241, 0
    %v516 = vsel %vm473, %v443, 0
    %v519 = vsel %vm473, %v444, 0
    %521 = vmatpush.xpose.msra.mxu0 0.0
    %522 = vmatpush.xpose.msra.mxu0 0.0
    %523 = vmatpush.xpose.msra.mxu0 0.0
    %524 = vmatpush.xpose.msra.mxu0 0.0
    %525 = vmatpush.xpose.msra.mxu0 0.0
    %526 = vmatpush.xpose.msra.mxu0 0.0
    %527 = vmatpush.xpose.msra.mxu0 0.0
    %528 = vmatpush.xpose.msra.mxu0 0.0
    %529 = vmatpush.xpose.msra.mxu0 0.0
    %530 = vmatpush.xpose.msra.mxu0 0.0
    %531 = vmatpush.xpose.msra.mxu0 0.0
    %532 = vmatpush.xpose.msra.mxu0 0.0
    %533 = vmatpush.xpose.msra.mxu0 0.0
    %534 = vmatpush.xpose.msra.mxu0 0.0
    %535 = vmatpush.xpose.msra.mxu0 %v519
    %536 = vmatpush.xpose.msra.mxu0 %v516
    %537 = vmatmul.f32.gmra.mxu0 %v510
    %v538 = vpop.f32.mrf.mxu0
    %v539 = vadd.f32 0.0, %v538
    %540 = vmatmul.f32.gmra.mxu0 %v513
    %v541 = vpop.f32.mrf.mxu0
    %v542 = vadd.f32 0.0, %v541
    %543 = vdwg.mxu0
    %v545 = vsel %vm473, %v244, 0
    %v548 = vsel %vm473, %v247, 0
    %v551 = vsel %vm473, %v445, 0
    %v554 = vsel %vm473, %v446, 0
    %556 = vmatpush.xpose.msra.mxu0 0.0
    %557 = vmatpush.xpose.msra.mxu0 0.0
    %558 = vmatpush.xpose.msra.mxu0 0.0
    %559 = vmatpush.xpose.msra.mxu0 0.0
    %560 = vmatpush.xpose.msra.mxu0 0.0
    %561 = vmatpush.xpose.msra.mxu0 0.0
    %562 = vmatpush.xpose.msra.mxu0 0.0
    %563 = vmatpush.xpose.msra.mxu0 0.0
    %564 = vmatpush.xpose.msra.mxu0 0.0
    %565 = vmatpush.xpose.msra.mxu0 0.0
    %566 = vmatpush.xpose.msra.mxu0 0.0
    %567 = vmatpush.xpose.msra.mxu0 0.0
    %568 = vmatpush.xpose.msra.mxu0 0.0
    %569 = vmatpush.xpose.msra.mxu0 0.0
    %570 = vmatpush.xpose.msra.mxu0 %v554
    %571 = vmatpush.xpose.msra.mxu0 %v551
    %572 = vmatmul.f32.gmra.mxu0 %v545
    %v573 = vpop.f32.mrf.mxu0
    %v574 = vadd.f32 0.0, %v573
    %575 = vmatmul.f32.gmra.mxu0 %v548
    %v576 = vpop.f32.mrf.mxu0
    %v577 = vadd.f32 0.0, %v576
    %578 = vdwg.mxu0
    %v580 = vsel %vm473, %v250, 0
    %v583 = vsel %vm473, %v253, 0
    %v586 = vsel %vm473, %v447, 0
    %v589 = vsel %vm473, %v448, 0
    %591 = vmatpush.xpose.msra.mxu0 0.0
    %592 = vmatpush.xpose.msra.mxu0 0.0
    %593 = vmatpush.xpose.msra.mxu0 0.0
    %594 = vmatpush.xpose.msra.mxu0 0.0
    %595 = vmatpush.xpose.msra.mxu0 0.0
    %596 = vmatpush.xpose.msra.mxu0 0.0
    %597 = vmatpush.xpose.msra.mxu0 0.0
    %598 = vmatpush.xpose.msra.mxu0 0.0
    %599 = vmatpush.xpose.msra.mxu0 0.0
    %600 = vmatpush.xpose.msra.mxu0 0.0
    %601 = vmatpush.xpose.msra.mxu0 0.0
    %602 = vmatpush.xpose.msra.mxu0 0.0
    %603 = vmatpush.xpose.msra.mxu0 0.0
    %604 = vmatpush.xpose.msra.mxu0 0.0
    %605 = vmatpush.xpose.msra.mxu0 %v589
    %606 = vmatpush.xpose.msra.mxu0 %v586
    %607 = vmatmul.f32.gmra.mxu0 %v580
    %v608 = vpop.f32.mrf.mxu0
    %v609 = vadd.f32 0.0, %v608
    %610 = vmatmul.f32.gmra.mxu0 %v583
    %v611 = vpop.f32.mrf.mxu0
    %v612 = vadd.f32 0.0, %v611
    %613 = vdwg.mxu0
    %v615 = vsel %vm473, %v256, 0
    %v618 = vsel %vm473, %v259, 0
    %v621 = vsel %vm473, %v449, 0
    %v624 = vsel %vm473, %v450, 0
    %626 = vmatpush.xpose.msra.mxu0 0.0
    %627 = vmatpush.xpose.msra.mxu0 0.0
    %628 = vmatpush.xpose.msra.mxu0 0.0
    %629 = vmatpush.xpose.msra.mxu0 0.0
    %630 = vmatpush.xpose.msra.mxu0 0.0
    %631 = vmatpush.xpose.msra.mxu0 0.0
    %632 = vmatpush.xpose.msra.mxu0 0.0
    %633 = vmatpush.xpose.msra.mxu0 0.0
    %634 = vmatpush.xpose.msra.mxu0 0.0
    %635 = vmatpush.xpose.msra.mxu0 0.0
    %636 = vmatpush.xpose.msra.mxu0 0.0
    %637 = vmatpush.xpose.msra.mxu0 0.0
    %638 = vmatpush.xpose.msra.mxu0 0.0
    %639 = vmatpush.xpose.msra.mxu0 0.0
    %640 = vmatpush.xpose.msra.mxu0 %v624
    %641 = vmatpush.xpose.msra.mxu0 %v621
    %642 = vmatmul.f32.gmra.mxu0 %v615
    %v643 = vpop.f32.mrf.mxu0
    %v644 = vadd.f32 0.0, %v643
    %645 = vmatmul.f32.gmra.mxu0 %v618
    %v646 = vpop.f32.mrf.mxu0
    %v647 = vadd.f32 0.0, %v646
    %648 = vdwg.mxu0
    %v650 = vsel %vm473, %v262, 0
    %v653 = vsel %vm473, %v265, 0
    %v656 = vsel %vm473, %v451, 0
    %v659 = vsel %vm473, %v452, 0
    %661 = vmatpush.xpose.msra.mxu0 0.0
    %662 = vmatpush.xpose.msra.mxu0 0.0
    %663 = vmatpush.xpose.msra.mxu0 0.0
    %664 = vmatpush.xpose.msra.mxu0 0.0
    %665 = vmatpush.xpose.msra.mxu0 0.0
    %666 = vmatpush.xpose.msra.mxu0 0.0
    %667 = vmatpush.xpose.msra.mxu0 0.0
    %668 = vmatpush.xpose.msra.mxu0 0.0
    %669 = vmatpush.xpose.msra.mxu0 0.0
    %670 = vmatpush.xpose.msra.mxu0 0.0
    %671 = vmatpush.xpose.msra.mxu0 0.0
    %672 = vmatpush.xpose.msra.mxu0 0.0
    %673 = vmatpush.xpose.msra.mxu0 0.0
    %674 = vmatpush.xpose.msra.mxu0 0.0
    %675 = vmatpush.xpose.msra.mxu0 %v659
    %676 = vmatpush.xpose.msra.mxu0 %v656
    %677 = vmatmul.f32.gmra.mxu0 %v650
    %v678 = vpop.f32.mrf.mxu0
    %v679 = vadd.f32 0.0, %v678
    %680 = vmatmul.f32.gmra.mxu0 %v653
    %v681 = vpop.f32.mrf.mxu0
    %v682 = vadd.f32 0.0, %v681
    %683 = vdwg.mxu0
    %v685 = vsel %vm473, %v268, 0
    %v688 = vsel %vm473, %v271, 0
    %v691 = vsel %vm473, %v453, 0
    %v694 = vsel %vm473, %v454, 0
    %696 = vmatpush.xpose.msra.mxu0 0.0
    %697 = vmatpush.xpose.msra.mxu0 0.0
    %698 = vmatpush.xpose.msra.mxu0 0.0
    %699 = vmatpush.xpose.msra.mxu0 0.0
    %700 = vmatpush.xpose.msra.mxu0 0.0
    %701 = vmatpush.xpose.msra.mxu0 0.0
    %702 = vmatpush.xpose.msra.mxu0 0.0
    %703 = vmatpush.xpose.msra.mxu0 0.0
    %704 = vmatpush.xpose.msra.mxu0 0.0
    %705 = vmatpush.xpose.msra.mxu0 0.0
    %706 = vmatpush.xpose.msra.mxu0 0.0
    %707 = vmatpush.xpose.msra.mxu0 0.0
    %708 = vmatpush.xpose.msra.mxu0 0.0
    %709 = vmatpush.xpose.msra.mxu0 0.0
    %710 = vmatpush.xpose.msra.mxu0 %v694
    %711 = vmatpush.xpose.msra.mxu0 %v691
    %712 = vmatmul.f32.gmra.mxu0 %v685
    %v713 = vpop.f32.mrf.mxu0
    %v714 = vadd.f32 0.0, %v713
    %715 = vmatmul.f32.gmra.mxu0 %v688
    %v716 = vpop.f32.mrf.mxu0
    %v717 = vadd.f32 0.0, %v716
    %718 = vdwg.mxu0
    %v720 = vsel %vm473, %v274, 0
    %v723 = vsel %vm473, %v277, 0
    %v726 = vsel %vm473, %v455, 0
    %v729 = vsel %vm473, %v456, 0
    %731 = vmatpush.xpose.msra.mxu0 0.0
    %732 = vmatpush.xpose.msra.mxu0 0.0
    %733 = vmatpush.xpose.msra.mxu0 0.0
    %734 = vmatpush.xpose.msra.mxu0 0.0
    %735 = vmatpush.xpose.msra.mxu0 0.0
    %736 = vmatpush.xpose.msra.mxu0 0.0
    %737 = vmatpush.xpose.msra.mxu0 0.0
    %738 = vmatpush.xpose.msra.mxu0 0.0
    %739 = vmatpush.xpose.msra.mxu0 0.0
    %740 = vmatpush.xpose.msra.mxu0 0.0
    %741 = vmatpush.xpose.msra.mxu0 0.0
    %742 = vmatpush.xpose.msra.mxu0 0.0
    %743 = vmatpush.xpose.msra.mxu0 0.0
    %744 = vmatpush.xpose.msra.mxu0 0.0
    %745 = vmatpush.xpose.msra.mxu0 %v729
    %746 = vmatpush.xpose.msra.mxu0 %v726
    %747 = vmatmul.f32.gmra.mxu0 %v720
    %v748 = vpop.f32.mrf.mxu0
    %v749 = vadd.f32 0.0, %v748
    %750 = vmatmul.f32.gmra.mxu0 %v723
    %v751 = vpop.f32.mrf.mxu0
    %v752 = vadd.f32 0.0, %v751
    %753 = vdwg.mxu0
    %vm754 = vcmask 130048
    %v755 = vsel %vm754, %v504, -inf
    %756 = vmax.xlane.f32.xlu0 %v755
    %v757 = vpop.xlane.xlu0 %756
    %v758 = vsel %vm754, %v507, -inf
    %759 = vmax.xlane.f32.xlu0 %v758
    %v760 = vpop.xlane.xlu0 %759
    %v761 = vsel %vm754, %v539, -inf
    %762 = vmax.xlane.f32.xlu0 %v761
    %v763 = vpop.xlane.xlu0 %762
    %v764 = vsel %vm754, %v542, -inf
    %765 = vmax.xlane.f32.xlu0 %v764
    %v766 = vpop.xlane.xlu0 %765
    %v767 = vsel %vm754, %v574, -inf
    %768 = vmax.xlane.f32.xlu0 %v767
    %v769 = vpop.xlane.xlu0 %768
    %v770 = vsel %vm754, %v577, -inf
    %771 = vmax.xlane.f32.xlu0 %v770
    %v772 = vpop.xlane.xlu0 %771
    %v773 = vsel %vm754, %v609, -inf
    %774 = vmax.xlane.f32.xlu0 %v773
    %v775 = vpop.xlane.xlu0 %774
    %v776 = vsel %vm754, %v612, -inf
    %777 = vmax.xlane.f32.xlu0 %v776
    %v778 = vpop.xlane.xlu0 %777
    %v779 = vsel %vm754, %v644, -inf
    %780 = vmax.xlane.f32.xlu0 %v779
    %v781 = vpop.xlane.xlu0 %780
    %v782 = vsel %vm754, %v647, -inf
    %783 = vmax.xlane.f32.xlu0 %v782
    %v784 = vpop.xlane.xlu0 %783
    %v785 = vsel %vm754, %v679, -inf
    %786 = vmax.xlane.f32.xlu0 %v785
    %v787 = vpop.xlane.xlu0 %786
    %v788 = vsel %vm754, %v682, -inf
    %789 = vmax.xlane.f32.xlu0 %v788
    %v790 = vpop.xlane.xlu0 %789
    %v791 = vsel %vm754, %v714, -inf
    %792 = vmax.xlane.f32.xlu0 %v791
    %v793 = vpop.xlane.xlu0 %792
    %v794 = vsel %vm754, %v717, -inf
    %795 = vmax.xlane.f32.xlu0 %v794
    %v796 = vpop.xlane.xlu0 %795
    %v797 = vsel %vm754, %v749, -inf
    %798 = vmax.xlane.f32.xlu0 %v797
    %v799 = vpop.xlane.xlu0 %798
    %v800 = vsel %vm754, %v752, -inf
    %801 = vmax.xlane.f32.xlu0 %v800
    %v802 = vpop.xlane.xlu0 %801
    %v803 = vsub.f32 %v504, %v757
    %v804 = vsub.f32 %v507, %v760
    %v805 = vsub.f32 %v539, %v763
    %v806 = vsub.f32 %v542, %v766
    %v807 = vsub.f32 %v574, %v769
    %v808 = vsub.f32 %v577, %v772
    %v809 = vsub.f32 %v609, %v775
    %v810 = vsub.f32 %v612, %v778
    %v811 = vsub.f32 %v644, %v781
    %v812 = vsub.f32 %v647, %v784
    %v813 = vsub.f32 %v679, %v787
    %v814 = vsub.f32 %v682, %v790
    %v815 = vsub.f32 %v714, %v793
    %v816 = vsub.f32 %v717, %v796
    %v817 = vsub.f32 %v749, %v799
    %v818 = vsub.f32 %v752, %v802
    %v819 = vmul.f32 %v803, 1.442695
    %v820 = vpow.pop %v819
    %v821 = vmul.f32 %v804, 1.442695
    %v822 = vpow.pop %v821
    %v823 = vmul.f32 %v805, 1.442695
    %v824 = vpow.pop %v823
    %v825 = vmul.f32 %v806, 1.442695
    %v826 = vpow.pop %v825
    %v827 = vmul.f32 %v807, 1.442695
    %v828 = vpow.pop %v827
    %v829 = vmul.f32 %v808, 1.442695
    %v830 = vpow.pop %v829
    %v831 = vmul.f32 %v809, 1.442695
    %v832 = vpow.pop %v831
    %v833 = vmul.f32 %v810, 1.442695
    %v834 = vpow.pop %v833
    %v835 = vmul.f32 %v811, 1.442695
    %v836 = vpow.pop %v835
    %v837 = vmul.f32 %v812, 1.442695
    %v838 = vpow.pop %v837
    %v839 = vmul.f32 %v813, 1.442695
    %v840 = vpow.pop %v839
    %v841 = vmul.f32 %v814, 1.442695
    %v842 = vpow.pop %v841
    %v843 = vmul.f32 %v815, 1.442695
    %v844 = vpow.pop %v843
    %v845 = vmul.f32 %v816, 1.442695
    %v846 = vpow.pop %v845
    %v847 = vmul.f32 %v817, 1.442695
    %v848 = vpow.pop %v847
    %v849 = vmul.f32 %v818, 1.442695
    %v850 = vpow.pop %v849
    %v851 = vsel %vm754, %v820, 0.0
    %852 = vadd.xlane.f32.xlu0 %v851
    %v853 = vpop.xlane.xlu0 %852
    %v854 = vsel %vm754, %v822, 0.0
    %855 = vadd.xlane.f32.xlu0 %v854
    %v856 = vpop.xlane.xlu0 %855
    %v857 = vsel %vm754, %v824, 0.0
    %858 = vadd.xlane.f32.xlu0 %v857
    %v859 = vpop.xlane.xlu0 %858
    %v860 = vsel %vm754, %v826, 0.0
    %861 = vadd.xlane.f32.xlu0 %v860
    %v862 = vpop.xlane.xlu0 %861
    %v863 = vsel %vm754, %v828, 0.0
    %864 = vadd.xlane.f32.xlu0 %v863
    %v865 = vpop.xlane.xlu0 %864
    %v866 = vsel %vm754, %v830, 0.0
    %867 = vadd.xlane.f32.xlu0 %v866
    %v868 = vpop.xlane.xlu0 %867
    %v869 = vsel %vm754, %v832, 0.0
    %870 = vadd.xlane.f32.xlu0 %v869
    %v871 = vpop.xlane.xlu0 %870
    %v872 = vsel %vm754, %v834, 0.0
    %873 = vadd.xlane.f32.xlu0 %v872
    %v874 = vpop.xlane.xlu0 %873
    %v875 = vsel %vm754, %v836, 0.0
    %876 = vadd.xlane.f32.xlu0 %v875
    %v877 = vpop.xlane.xlu0 %876
    %v878 = vsel %vm754, %v838, 0.0
    %879 = vadd.xlane.f32.xlu0 %v878
    %v880 = vpop.xlane.xlu0 %879
    %v881 = vsel %vm754, %v840, 0.0
    %882 = vadd.xlane.f32.xlu0 %v881
    %v883 = vpop.xlane.xlu0 %882
    %v884 = vsel %vm754, %v842, 0.0
    %885 = vadd.xlane.f32.xlu0 %v884
    %v886 = vpop.xlane.xlu0 %885
    %v887 = vsel %vm754, %v844, 0.0
    %888 = vadd.xlane.f32.xlu0 %v887
    %v889 = vpop.xlane.xlu0 %888
    %v890 = vsel %vm754, %v846, 0.0
    %891 = vadd.xlane.f32.xlu0 %v890
    %v892 = vpop.xlane.xlu0 %891
    %v893 = vsel %vm754, %v848, 0.0
    %894 = vadd.xlane.f32.xlu0 %v893
    %v895 = vpop.xlane.xlu0 %894
    %v896 = vsel %vm754, %v850, 0.0
    %897 = vadd.xlane.f32.xlu0 %v896
    %v898 = vpop.xlane.xlu0 %897
    %v899 = vrcp.pop %v853
    %v900 = vrcp.pop %v856
    %v901 = vrcp.pop %v859
    %v902 = vrcp.pop %v862
    %v903 = vrcp.pop %v865
    %v904 = vrcp.pop %v868
    %v905 = vrcp.pop %v871
    %v906 = vrcp.pop %v874
    %v907 = vrcp.pop %v877
    %v908 = vrcp.pop %v880
    %v909 = vrcp.pop %v883
    %v910 = vrcp.pop %v886
    %v911 = vrcp.pop %v889
    %v912 = vrcp.pop %v892
    %v913 = vrcp.pop %v895
    %v914 = vrcp.pop %v898
    %v915 = vmul.f32 %v820, %v899
    %v916 = vmul.f32 %v822, %v900
    %v917 = vmul.f32 %v824, %v901
    %v918 = vmul.f32 %v826, %v902
    %v919 = vmul.f32 %v828, %v903
    %v920 = vmul.f32 %v830, %v904
    %v921 = vmul.f32 %v832, %v905
    %v922 = vmul.f32 %v834, %v906
    %v923 = vmul.f32 %v836, %v907
    %v924 = vmul.f32 %v838, %v908
    %v925 = vmul.f32 %v840, %v909
    %v926 = vmul.f32 %v842, %v910
    %v927 = vmul.f32 %v844, %v911
    %v928 = vmul.f32 %v846, %v912
    %v929 = vmul.f32 %v848, %v913
    %v930 = vmul.f32 %v850, %v914
    %v932 = vsel %vm754, %v915, 0
    %v935 = vsel %vm754, %v916, 0
    %937 = vmatpush.msra.mxu0 0.0
    %938 = vmatpush.msra.mxu0 0.0
    %939 = vmatpush.msra.mxu0 0.0
    %940 = vmatpush.msra.mxu0 0.0
    %941 = vmatpush.msra.mxu0 0.0
    %942 = vmatpush.msra.mxu0 0.0
    %943 = vmatpush.msra.mxu0 0.0
    %944 = vmatpush.msra.mxu0 0.0
    %945 = vmatpush.msra.mxu0 0.0
    %946 = vmatpush.msra.mxu0 0.0
    %947 = vmatpush.msra.mxu0 0.0
    %948 = vmatpush.msra.mxu0 0.0
    %949 = vmatpush.msra.mxu0 0.0
    %950 = vmatpush.msra.mxu0 0.0
    %951 = vmatpush.msra.mxu0 %v458
    %952 = vmatpush.msra.mxu0 %v457
    %953 = vmatmul.f32.gmra.mxu0 %v932
    %v954 = vpop.f32.mrf.mxu0
    %v955 = vadd.f32 0.0, %v954
    %956 = vmatmul.f32.gmra.mxu0 %v935
    %v957 = vpop.f32.mrf.mxu0
    %v958 = vadd.f32 0.0, %v957
    %959 = vdwg.mxu0
    %v961 = vsel %vm754, %v917, 0
    %v964 = vsel %vm754, %v918, 0
    %966 = vmatpush.msra.mxu0 0.0
    %967 = vmatpush.msra.mxu0 0.0
    %968 = vmatpush.msra.mxu0 0.0
    %969 = vmatpush.msra.mxu0 0.0
    %970 = vmatpush.msra.mxu0 0.0
    %971 = vmatpush.msra.mxu0 0.0
    %972 = vmatpush.msra.mxu0 0.0
    %973 = vmatpush.msra.mxu0 0.0
    %974 = vmatpush.msra.mxu0 0.0
    %975 = vmatpush.msra.mxu0 0.0
    %976 = vmatpush.msra.mxu0 0.0
    %977 = vmatpush.msra.mxu0 0.0
    %978 = vmatpush.msra.mxu0 0.0
    %979 = vmatpush.msra.mxu0 0.0
    %980 = vmatpush.msra.mxu0 %v460
    %981 = vmatpush.msra.mxu0 %v459
    %982 = vmatmul.f32.gmra.mxu0 %v961
    %v983 = vpop.f32.mrf.mxu0
    %v984 = vadd.f32 0.0, %v983
    %985 = vmatmul.f32.gmra.mxu0 %v964
    %v986 = vpop.f32.mrf.mxu0
    %v987 = vadd.f32 0.0, %v986
    %988 = vdwg.mxu0
    %v990 = vsel %vm754, %v919, 0
    %v993 = vsel %vm754, %v920, 0
    %995 = vmatpush.msra.mxu0 0.0
    %996 = vmatpush.msra.mxu0 0.0
    %997 = vmatpush.msra.mxu0 0.0
    %998 = vmatpush.msra.mxu0 0.0
    %999 = vmatpush.msra.mxu0 0.0
    %1000 = vmatpush.msra.mxu0 0.0
    %1001 = vmatpush.msra.mxu0 0.0
    %1002 = vmatpush.msra.mxu0 0.0
    %1003 = vmatpush.msra.mxu0 0.0
    %1004 = vmatpush.msra.mxu0 0.0
    %1005 = vmatpush.msra.mxu0 0.0
    %1006 = vmatpush.msra.mxu0 0.0
    %1007 = vmatpush.msra.mxu0 0.0
    %1008 = vmatpush.msra.mxu0 0.0
    %1009 = vmatpush.msra.mxu0 %v462
    %1010 = vmatpush.msra.mxu0 %v461
    %1011 = vmatmul.f32.gmra.mxu0 %v990
    %v1012 = vpop.f32.mrf.mxu0
    %v1013 = vadd.f32 0.0, %v1012
    %1014 = vmatmul.f32.gmra.mxu0 %v993
    %v1015 = vpop.f32.mrf.mxu0
    %v1016 = vadd.f32 0.0, %v1015
    %1017 = vdwg.mxu0
    %v1019 = vsel %vm754, %v921, 0
    %v1022 = vsel %vm754, %v922, 0
    %1024 = vmatpush.msra.mxu0 0.0
    %1025 = vmatpush.msra.mxu0 0.0
    %1026 = vmatpush.msra.mxu0 0.0
    %1027 = vmatpush.msra.mxu0 0.0
    %1028 = vmatpush.msra.mxu0 0.0
    %1029 = vmatpush.msra.mxu0 0.0
    %1030 = vmatpush.msra.mxu0 0.0
    %1031 = vmatpush.msra.mxu0 0.0
    %1032 = vmatpush.msra.mxu0 0.0
    %1033 = vmatpush.msra.mxu0 0.0
    %1034 = vmatpush.msra.mxu0 0.0
    %1035 = vmatpush.msra.mxu0 0.0
    %1036 = vmatpush.msra.mxu0 0.0
    %1037 = vmatpush.msra.mxu0 0.0
    %1038 = vmatpush.msra.mxu0 %v464
    %1039 = vmatpush.msra.mxu0 %v463
    %1040 = vmatmul.f32.gmra.mxu0 %v1019
    %v1041 = vpop.f32.mrf.mxu0
    %v1042 = vadd.f32 0.0, %v1041
    %1043 = vmatmul.f32.gmra.mxu0 %v1022
    %v1044 = vpop.f32.mrf.mxu0
    %v1045 = vadd.f32 0.0, %v1044
    %1046 = vdwg.mxu0
    %v1048 = vsel %vm754, %v923, 0
    %v1051 = vsel %vm754, %v924, 0
    %1053 = vmatpush.msra.mxu0 0.0
    %1054 = vmatpush.msra.mxu0 0.0
    %1055 = vmatpush.msra.mxu0 0.0
    %1056 = vmatpush.msra.mxu0 0.0
    %1057 = vmatpush.msra.mxu0 0.0
    %1058 = vmatpush.msra.mxu0 0.0
    %1059 = vmatpush.msra.mxu0 0.0
    %1060 = vmatpush.msra.mxu0 0.0
    %1061 = vmatpush.msra.mxu0 0.0
    %1062 = vmatpush.msra.mxu0 0.0
    %1063 = vmatpush.msra.mxu0 0.0
    %1064 = vmatpush.msra.mxu0 0.0
    %1065 = vmatpush.msra.mxu0 0.0
    %1066 = vmatpush.msra.mxu0 0.0
    %1067 = vmatpush.msra.mxu0 %v466
    %1068 = vmatpush.msra.mxu0 %v465
    %1069 = vmatmul.f32.gmra.mxu0 %v1048
    %v1070 = vpop.f32.mrf.mxu0
    %v1071 = vadd.f32 0.0, %v1070
    %1072 = vmatmul.f32.gmra.mxu0 %v1051
    %v1073 = vpop.f32.mrf.mxu0
    %v1074 = vadd.f32 0.0, %v1073
    %1075 = vdwg.mxu0
    %v1077 = vsel %vm754, %v925, 0
    %v1080 = vsel %vm754, %v926, 0
    %1082 = vmatpush.msra.mxu0 0.0
    %1083 = vmatpush.msra.mxu0 0.0
    %1084 = vmatpush.msra.mxu0 0.0
    %1085 = vmatpush.msra.mxu0 0.0
    %1086 = vmatpush.msra.mxu0 0.0
    %1087 = vmatpush.msra.mxu0 0.0
    %1088 = vmatpush.msra.mxu0 0.0
    %1089 = vmatpush.msra.mxu0 0.0
    %1090 = vmatpush.msra.mxu0 0.0
    %1091 = vmatpush.msra.mxu0 0.0
    %1092 = vmatpush.msra.mxu0 0.0
    %1093 = vmatpush.msra.mxu0 0.0
    %1094 = vmatpush.msra.mxu0 0.0
    %1095 = vmatpush.msra.mxu0 0.0
    %1096 = vmatpush.msra.mxu0 %v468
    %1097 = vmatpush.msra.mxu0 %v467
    %1098 = vmatmul.f32.gmra.mxu0 %v1077
    %v1099 = vpop.f32.mrf.mxu0
    %v1100 = vadd.f32 0.0, %v1099
    %1101 = vmatmul.f32.gmra.mxu0 %v1080
    %v1102 = vpop.f32.mrf.mxu0
    %v1103 = vadd.f32 0.0, %v1102
    %1104 = vdwg.mxu0
    %v1106 = vsel %vm754, %v927, 0
    %v1109 = vsel %vm754, %v928, 0
    %1111 = vmatpush.msra.mxu0 0.0
    %1112 = vmatpush.msra.mxu0 0.0
    %1113 = vmatpush.msra.mxu0 0.0
    %1114 = vmatpush.msra.mxu0 0.0
    %1115 = vmatpush.msra.mxu0 0.0
    %1116 = vmatpush.msra.mxu0 0.0
    %1117 = vmatpush.msra.mxu0 0.0
    %1118 = vmatpush.msra.mxu0 0.0
    %1119 = vmatpush.msra.mxu0 0.0
    %1120 = vmatpush.msra.mxu0 0.0
    %1121 = vmatpush.msra.mxu0 0.0
    %1122 = vmatpush.msra.mxu0 0.0
    %1123 = vmatpush.msra.mxu0 0.0
    %1124 = vmatpush.msra.mxu0 0.0
    %1125 = vmatpush.msra.mxu0 %v470
    %1126 = vmatpush.msra.mxu0 %v469
    %1127 = vmatmul.f32.gmra.mxu0 %v1106
    %v1128 = vpop.f32.mrf.mxu0
    %v1129 = vadd.f32 0.0, %v1128
    %1130 = vmatmul.f32.gmra.mxu0 %v1109
    %v1131 = vpop.f32.mrf.mxu0
    %v1132 = vadd.f32 0.0, %v1131
    %1133 = vdwg.mxu0
    %v1135 = vsel %vm754, %v929, 0
    %v1138 = vsel %vm754, %v930, 0
    %1140 = vmatpush.msra.mxu0 0.0
    %1141 = vmatpush.msra.mxu0 0.0
    %1142 = vmatpush.msra.mxu0 0.0
    %1143 = vmatpush.msra.mxu0 0.0
    %1144 = vmatpush.msra.mxu0 0.0
    %1145 = vmatpush.msra.mxu0 0.0
    %1146 = vmatpush.msra.mxu0 0.0
    %1147 = vmatpush.msra.mxu0 0.0
    %1148 = vmatpush.msra.mxu0 0.0
    %1149 = vmatpush.msra.mxu0 0.0
    %1150 = vmatpush.msra.mxu0 0.0
    %1151 = vmatpush.msra.mxu0 0.0
    %1152 = vmatpush.msra.mxu0 0.0
    %1153 = vmatpush.msra.mxu0 0.0
    %1154 = vmatpush.msra.mxu0 %v472
    %1155 = vmatpush.msra.mxu0 %v471
    %1156 = vmatmul.f32.gmra.mxu0 %v1135
    %v1157 = vpop.f32.mrf.mxu0
    %v1158 = vadd.f32 0.0, %v1157
    %1159 = vmatmul.f32.gmra.mxu0 %v1138
    %v1160 = vpop.f32.mrf.mxu0
    %v1161 = vadd.f32 0.0, %v1160
    %1162 = vdwg.mxu0
    %1163 = vst.msk [vmem:[#allocation2] sm:$0xff] %vm473, %v955
    %1164 = vst.msk [vmem:[#allocation2 + $0x8] sm:$0xff] %vm473, %v958
    %1165 = vst.msk [vmem:[#allocation2 + $0x10] sm:$0xff] %vm473, %v984
    %1166 = vst.msk [vmem:[#allocation2 + $0x18] sm:$0xff] %vm473, %v987
    %1167 = vst.msk [vmem:[#allocation2 + $0x20] sm:$0xff] %vm473, %v1013
    %1168 = vst.msk [vmem:[#allocation2 + $0x28] sm:$0xff] %vm473, %v1016
    %1169 = vst.msk [vmem:[#allocation2 + $0x30] sm:$0xff] %vm473, %v1042
    %1170 = vst.msk [vmem:[#allocation2 + $0x38] sm:$0xff] %vm473, %v1045
    %1171 = vst.msk [vmem:[#allocation2 + $0x40] sm:$0xff] %vm473, %v1071
    %1172 = vst.msk [vmem:[#allocation2 + $0x48] sm:$0xff] %vm473, %v1074
    %1173 = vst.msk [vmem:[#allocation2 + $0x50] sm:$0xff] %vm473, %v1100
    %1174 = vst.msk [vmem:[#allocation2 + $0x58] sm:$0xff] %vm473, %v1103
    %1175 = vst.msk [vmem:[#allocation2 + $0x60] sm:$0xff] %vm473, %v1129
    %1176 = vst.msk [vmem:[#allocation2 + $0x68] sm:$0xff] %vm473, %v1132
    %1177 = vst.msk [vmem:[#allocation2 + $0x70] sm:$0xff] %vm473, %v1158
    %1178 = vst.msk [vmem:[#allocation2 + $0x78] sm:$0xff] %vm473, %v1161
    %1179 = vrot.lane.b32.xlu0 %v232, 96
    %v1180 = vpop.permute.xlu0 %1179
    %1181 = vrot.lane.b32.xlu0 %v235, 96
    %v1182 = vpop.permute.xlu0 %1181
    %1183 = vrot.lane.b32.xlu0 %v441, 96
    %v1184 = vpop.permute.xlu0 %1183
    %1185 = vrot.lane.b32.xlu0 %v442, 96
    %v1186 = vpop.permute.xlu0 %1185
    %v1187 = vsel %vm473, %v1180, 0
    %v1189 = vsel %vm473, %v1182, 0
    %v1191 = vsel %vm473, %v1184, 0
    %v1193 = vsel %vm473, %v1186, 0
    %1195 = vmatpush.xpose.msra.mxu0 0.0
    %1196 = vmatpush.xpose.msra.mxu0 0.0
    %1197 = vmatpush.xpose.msra.mxu0 0.0
    %1198 = vmatpush.xpose.msra.mxu0 0.0
    %1199 = vmatpush.xpose.msra.mxu0 0.0
    %1200 = vmatpush.xpose.msra.mxu0 0.0
    %1201 = vmatpush.xpose.msra.mxu0 0.0
    %1202 = vmatpush.xpose.msra.mxu0 0.0
    %1203 = vmatpush.xpose.msra.mxu0 0.0
    %1204 = vmatpush.xpose.msra.mxu0 0.0
    %1205 = vmatpush.xpose.msra.mxu0 0.0
    %1206 = vmatpush.xpose.msra.mxu0 0.0
    %1207 = vmatpush.xpose.msra.mxu0 0.0
    %1208 = vmatpush.xpose.msra.mxu0 0.0
    %1209 = vmatpush.xpose.msra.mxu0 %v1193
    %1210 = vmatpush.xpose.msra.mxu0 %v1191
    %1211 = vmatmul.f32.gmra.mxu0 %v1187
    %v1212 = vpop.f32.mrf.mxu0
    %v1213 = vadd.f32 0.0, %v1212
    %1214 = vmatmul.f32.gmra.mxu0 %v1189
    %v1215 = vpop.f32.mrf.mxu0
    %v1216 = vadd.f32 0.0, %v1215
    %1217 = vdwg.mxu0
    %1218 = vrot.lane.b32.xlu0 %v238, 96
    %v1219 = vpop.permute.xlu0 %1218
    %1220 = vrot.lane.b32.xlu0 %v241, 96
    %v1221 = vpop.permute.xlu0 %1220
    %1222 = vrot.lane.b32.xlu0 %v443, 96
    %v1223 = vpop.permute.xlu0 %1222
    %1224 = vrot.lane.b32.xlu0 %v444, 96
    %v1225 = vpop.permute.xlu0 %1224
    %v1226 = vsel %vm473, %v1219, 0
    %v1228 = vsel %vm473, %v1221, 0
    %v1230 = vsel %vm473, %v1223, 0
    %v1232 = vsel %vm473, %v1225, 0
    %1234 = vmatpush.xpose.msra.mxu0 0.0
    %1235 = vmatpush.xpose.msra.mxu0 0.0
    %1236 = vmatpush.xpose.msra.mxu0 0.0
    %1237 = vmatpush.xpose.msra.mxu0 0.0
    %1238 = vmatpush.xpose.msra.mxu0 0.0
    %1239 = vmatpush.xpose.msra.mxu0 0.0
    %1240 = vmatpush.xpose.msra.mxu0 0.0
    %1241 = vmatpush.xpose.msra.mxu0 0.0
    %1242 = vmatpush.xpose.msra.mxu0 0.0
    %1243 = vmatpush.xpose.msra.mxu0 0.0
    %1244 = vmatpush.xpose.msra.mxu0 0.0
    %1245 = vmatpush.xpose.msra.mxu0 0.0
    %1246 = vmatpush.xpose.msra.mxu0 0.0
    %1247 = vmatpush.xpose.msra.mxu0 0.0
    %1248 = vmatpush.xpose.msra.mxu0 %v1232
    %1249 = vmatpush.xpose.msra.mxu0 %v1230
    %1250 = vmatmul.f32.gmra.mxu0 %v1226
    %v1251 = vpop.f32.mrf.mxu0
    %v1252 = vadd.f32 0.0, %v1251
    %1253 = vmatmul.f32.gmra.mxu0 %v1228
    %v1254 = vpop.f32.mrf.mxu0
    %v1255 = vadd.f32 0.0, %v1254
    %1256 = vdwg.mxu0
    %1257 = vrot.lane.b32.xlu0 %v244, 96
    %v1258 = vpop.permute.xlu0 %1257
    %1259 = vrot.lane.b32.xlu0 %v247, 96
    %v1260 = vpop.permute.xlu0 %1259
    %1261 = vrot.lane.b32.xlu0 %v445, 96
    %v1262 = vpop.permute.xlu0 %1261
    %1263 = vrot.lane.b32.xlu0 %v446, 96
    %v1264 = vpop.permute.xlu0 %1263
    %v1265 = vsel %vm473, %v1258, 0
    %v1267 = vsel %vm473, %v1260, 0
    %v1269 = vsel %vm473, %v1262, 0
    %v1271 = vsel %vm473, %v1264, 0
    %1273 = vmatpush.xpose.msra.mxu0 0.0
    %1274 = vmatpush.xpose.msra.mxu0 0.0
    %1275 = vmatpush.xpose.msra.mxu0 0.0
    %1276 = vmatpush.xpose.msra.mxu0 0.0
    %1277 = vmatpush.xpose.msra.mxu0 0.0
    %1278 = vmatpush.xpose.msra.mxu0 0.0
    %1279 = vmatpush.xpose.msra.mxu0 0.0
    %1280 = vmatpush.xpose.msra.mxu0 0.0
    %1281 = vmatpush.xpose.msra.mxu0 0.0
    %1282 = vmatpush.xpose.msra.mxu0 0.0
    %1283 = vmatpush.xpose.msra.mxu0 0.0
    %1284 = vmatpush.xpose.msra.mxu0 0.0
    %1285 = vmatpush.xpose.msra.mxu0 0.0
    %1286 = vmatpush.xpose.msra.mxu0 0.0
    %1287 = vmatpush.xpose.msra.mxu0 %v1271
    %1288 = vmatpush.xpose.msra.mxu0 %v1269
    %1289 = vmatmul.f32.gmra.mxu0 %v1265
    %v1290 = vpop.f32.mrf.mxu0
    %v1291 = vadd.f32 0.0, %v1290
    %1292 = vmatmul.f32.gmra.mxu0 %v1267
    %v1293 = vpop.f32.mrf.mxu0
    %v1294 = vadd.f32 0.0, %v1293
    %1295 = vdwg.mxu0
    %1296 = vrot.lane.b32.xlu0 %v250, 96
    %v1297 = vpop.permute.xlu0 %1296
    %1298 = vrot.lane.b32.xlu0 %v253, 96
    %v1299 = vpop.permute.xlu0 %1298
    %1300 = vrot.lane.b32.xlu0 %v447, 96
    %v1301 = vpop.permute.xlu0 %1300
    %1302 = vrot.lane.b32.xlu0 %v448, 96
    %v1303 = vpop.permute.xlu0 %1302
    %v1304 = vsel %vm473, %v1297, 0
    %v1306 = vsel %vm473, %v1299, 0
    %v1308 = vsel %vm473, %v1301, 0
    %v1310 = vsel %vm473, %v1303, 0
    %1312 = vmatpush.xpose.msra.mxu0 0.0
    %1313 = vmatpush.xpose.msra.mxu0 0.0
    %1314 = vmatpush.xpose.msra.mxu0 0.0
    %1315 = vmatpush.xpose.msra.mxu0 0.0
    %1316 = vmatpush.xpose.msra.mxu0 0.0
    %1317 = vmatpush.xpose.msra.mxu0 0.0
    %1318 = vmatpush.xpose.msra.mxu0 0.0
    %1319 = vmatpush.xpose.msra.mxu0 0.0
    %1320 = vmatpush.xpose.msra.mxu0 0.0
    %1321 = vmatpush.xpose.msra.mxu0 0.0
    %1322 = vmatpush.xpose.msra.mxu0 0.0
    %1323 = vmatpush.xpose.msra.mxu0 0.0
    %1324 = vmatpush.xpose.msra.mxu0 0.0
    %1325 = vmatpush.xpose.msra.mxu0 0.0
    %1326 = vmatpush.xpose.msra.mxu0 %v1310
    %1327 = vmatpush.xpose.msra.mxu0 %v1308
    %1328 = vmatmul.f32.gmra.mxu0 %v1304
    %v1329 = vpop.f32.mrf.mxu0
    %v1330 = vadd.f32 0.0, %v1329
    %1331 = vmatmul.f32.gmra.mxu0 %v1306
    %v1332 = vpop.f32.mrf.mxu0
    %v1333 = vadd.f32 0.0, %v1332
    %1334 = vdwg.mxu0
    %1335 = vrot.lane.b32.xlu0 %v256, 96
    %v1336 = vpop.permute.xlu0 %1335
    %1337 = vrot.lane.b32.xlu0 %v259, 96
    %v1338 = vpop.permute.xlu0 %1337
    %1339 = vrot.lane.b32.xlu0 %v449, 96
    %v1340 = vpop.permute.xlu0 %1339
    %1341 = vrot.lane.b32.xlu0 %v450, 96
    %v1342 = vpop.permute.xlu0 %1341
    %v1343 = vsel %vm473, %v1336, 0
    %v1345 = vsel %vm473, %v1338, 0
    %v1347 = vsel %vm473, %v1340, 0
    %v1349 = vsel %vm473, %v1342, 0
    %1351 = vmatpush.xpose.msra.mxu0 0.0
    %1352 = vmatpush.xpose.msra.mxu0 0.0
    %1353 = vmatpush.xpose.msra.mxu0 0.0
    %1354 = vmatpush.xpose.msra.mxu0 0.0
    %1355 = vmatpush.xpose.msra.mxu0 0.0
    %1356 = vmatpush.xpose.msra.mxu0 0.0
    %1357 = vmatpush.xpose.msra.mxu0 0.0
    %1358 = vmatpush.xpose.msra.mxu0 0.0
    %1359 = vmatpush.xpose.msra.mxu0 0.0
    %1360 = vmatpush.xpose.msra.mxu0 0.0
    %1361 = vmatpush.xpose.msra.mxu0 0.0
    %1362 = vmatpush.xpose.msra.mxu0 0.0
    %1363 = vmatpush.xpose.msra.mxu0 0.0
    %1364 = vmatpush.xpose.msra.mxu0 0.0
    %1365 = vmatpush.xpose.msra.mxu0 %v1349
    %1366 = vmatpush.xpose.msra.mxu0 %v1347
    %1367 = vmatmul.f32.gmra.mxu0 %v1343
    %v1368 = vpop.f32.mrf.mxu0
    %v1369 = vadd.f32 0.0, %v1368
    %1370 = vmatmul.f32.gmra.mxu0 %v1345
    %v1371 = vpop.f32.mrf.mxu0
    %v1372 = vadd.f32 0.0, %v1371
    %1373 = vdwg.mxu0
    %1374 = vrot.lane.b32.xlu0 %v262, 96
    %v1375 = vpop.permute.xlu0 %1374
    %1376 = vrot.lane.b32.xlu0 %v265, 96
    %v1377 = vpop.permute.xlu0 %1376
    %1378 = vrot.lane.b32.xlu0 %v451, 96
    %v1379 = vpop.permute.xlu0 %1378
    %1380 = vrot.lane.b32.xlu0 %v452, 96
    %v1381 = vpop.permute.xlu0 %1380
    %v1382 = vsel %vm473, %v1375, 0
    %v1384 = vsel %vm473, %v1377, 0
    %v1386 = vsel %vm473, %v1379, 0
    %v1388 = vsel %vm473, %v1381, 0
    %1390 = vmatpush.xpose.msra.mxu0 0.0
    %1391 = vmatpush.xpose.msra.mxu0 0.0
    %1392 = vmatpush.xpose.msra.mxu0 0.0
    %1393 = vmatpush.xpose.msra.mxu0 0.0
    %1394 = vmatpush.xpose.msra.mxu0 0.0
    %1395 = vmatpush.xpose.msra.mxu0 0.0
    %1396 = vmatpush.xpose.msra.mxu0 0.0
    %1397 = vmatpush.xpose.msra.mxu0 0.0
    %1398 = vmatpush.xpose.msra.mxu0 0.0
    %1399 = vmatpush.xpose.msra.mxu0 0.0
    %1400 = vmatpush.xpose.msra.mxu0 0.0
    %1401 = vmatpush.xpose.msra.mxu0 0.0
    %1402 = vmatpush.xpose.msra.mxu0 0.0
    %1403 = vmatpush.xpose.msra.mxu0 0.0
    %1404 = vmatpush.xpose.msra.mxu0 %v1388
    %1405 = vmatpush.xpose.msra.mxu0 %v1386
    %1406 = vmatmul.f32.gmra.mxu0 %v1382
    %v1407 = vpop.f32.mrf.mxu0
    %v1408 = vadd.f32 0.0, %v1407
    %1409 = vmatmul.f32.gmra.mxu0 %v1384
    %v1410 = vpop.f32.mrf.mxu0
    %v1411 = vadd.f32 0.0, %v1410
    %1412 = vdwg.mxu0
    %1413 = vrot.lane.b32.xlu0 %v268, 96
    %v1414 = vpop.permute.xlu0 %1413
    %1415 = vrot.lane.b32.xlu0 %v271, 96
    %v1416 = vpop.permute.xlu0 %1415
    %1417 = vrot.lane.b32.xlu0 %v453, 96
    %v1418 = vpop.permute.xlu0 %1417
    %1419 = vrot.lane.b32.xlu0 %v454, 96
    %v1420 = vpop.permute.xlu0 %1419
    %v1421 = vsel %vm473, %v1414, 0
    %v1423 = vsel %vm473, %v1416, 0
    %v1425 = vsel %vm473, %v1418, 0
    %v1427 = vsel %vm473, %v1420, 0
    %1429 = vmatpush.xpose.msra.mxu0 0.0
    %1430 = vmatpush.xpose.msra.mxu0 0.0
    %1431 = vmatpush.xpose.msra.mxu0 0.0
    %1432 = vmatpush.xpose.msra.mxu0 0.0
    %1433 = vmatpush.xpose.msra.mxu0 0.0
    %1434 = vmatpush.xpose.msra.mxu0 0.0
    %1435 = vmatpush.xpose.msra.mxu0 0.0
    %1436 = vmatpush.xpose.msra.mxu0 0.0
    %1437 = vmatpush.xpose.msra.mxu0 0.0
    %1438 = vmatpush.xpose.msra.mxu0 0.0
    %1439 = vmatpush.xpose.msra.mxu0 0.0
    %1440 = vmatpush.xpose.msra.mxu0 0.0
    %1441 = vmatpush.xpose.msra.mxu0 0.0
    %1442 = vmatpush.xpose.msra.mxu0 0.0
    %1443 = vmatpush.xpose.msra.mxu0 %v1427
    %1444 = vmatpush.xpose.msra.mxu0 %v1425
    %1445 = vmatmul.f32.gmra.mxu0 %v1421
    %v1446 = vpop.f32.mrf.mxu0
    %v1447 = vadd.f32 0.0, %v1446
    %1448 = vmatmul.f32.gmra.mxu0 %v1423
    %v1449 = vpop.f32.mrf.mxu0
    %v1450 = vadd.f32 0.0, %v1449
    %1451 = vdwg.mxu0
    %1452 = vrot.lane.b32.xlu0 %v274, 96
    %v1453 = vpop.permute.xlu0 %1452
    %1454 = vrot.lane.b32.xlu0 %v277, 96
    %v1455 = vpop.permute.xlu0 %1454
    %1456 = vrot.lane.b32.xlu0 %v455, 96
    %v1457 = vpop.permute.xlu0 %1456
    %1458 = vrot.lane.b32.xlu0 %v456, 96
    %v1459 = vpop.permute.xlu0 %1458
    %v1460 = vsel %vm473, %v1453, 0
    %v1462 = vsel %vm473, %v1455, 0
    %v1464 = vsel %vm473, %v1457, 0
    %v1466 = vsel %vm473, %v1459, 0
    %1468 = vmatpush.xpose.msra.mxu0 0.0
    %1469 = vmatpush.xpose.msra.mxu0 0.0
    %1470 = vmatpush.xpose.msra.mxu0 0.0
    %1471 = vmatpush.xpose.msra.mxu0 0.0
    %1472 = vmatpush.xpose.msra.mxu0 0.0
    %1473 = vmatpush.xpose.msra.mxu0 0.0
    %1474 = vmatpush.xpose.msra.mxu0 0.0
    %1475 = vmatpush.xpose.msra.mxu0 0.0
    %1476 = vmatpush.xpose.msra.mxu0 0.0
    %1477 = vmatpush.xpose.msra.mxu0 0.0
    %1478 = vmatpush.xpose.msra.mxu0 0.0
    %1479 = vmatpush.xpose.msra.mxu0 0.0
    %1480 = vmatpush.xpose.msra.mxu0 0.0
    %1481 = vmatpush.xpose.msra.mxu0 0.0
    %1482 = vmatpush.xpose.msra.mxu0 %v1466
    %1483 = vmatpush.xpose.msra.mxu0 %v1464
    %1484 = vmatmul.f32.gmra.mxu0 %v1460
    %v1485 = vpop.f32.mrf.mxu0
    %v1486 = vadd.f32 0.0, %v1485
    %1487 = vmatmul.f32.gmra.mxu0 %v1462
    %v1488 = vpop.f32.mrf.mxu0
    %v1489 = vadd.f32 0.0, %v1488
    %1490 = vdwg.mxu0
    %v1491 = vsel %vm754, %v1213, -inf
    %1492 = vmax.xlane.f32.xlu0 %v1491
    %v1493 = vpop.xlane.xlu0 %1492
    %v1494 = vsel %vm754, %v1216, -inf
    %1495 = vmax.xlane.f32.xlu0 %v1494
    %v1496 = vpop.xlane.xlu0 %1495
    %v1497 = vsel %vm754, %v1252, -inf
    %1498 = vmax.xlane.f32.xlu0 %v1497
    %v1499 = vpop.xlane.xlu0 %1498
    %v1500 = vsel %vm754, %v1255, -inf
    %1501 = vmax.xlane.f32.xlu0 %v1500
    %v1502 = vpop.xlane.xlu0 %1501
    %v1503 = vsel %vm754, %v1291, -inf
    %1504 = vmax.xlane.f32.xlu0 %v1503
    %v1505 = vpop.xlane.xlu0 %1504
    %v1506 = vsel %vm754, %v1294, -inf
    %1507 = vmax.xlane.f32.xlu0 %v1506
    %v1508 = vpop.xlane.xlu0 %1507
    %v1509 = vsel %vm754, %v1330, -inf
    %1510 = vmax.xlane.f32.xlu0 %v1509
    %v1511 = vpop.xlane.xlu0 %1510
    %v1512 = vsel %vm754, %v1333, -inf
    %1513 = vmax.xlane.f32.xlu0 %v1512
    %v1514 = vpop.xlane.xlu0 %1513
    %v1515 = vsel %vm754, %v1369, -inf
    %1516 = vmax.xlane.f32.xlu0 %v1515
    %v1517 = vpop.xlane.xlu0 %1516
    %v1518 = vsel %vm754, %v1372, -inf
    %1519 = vmax.xlane.f32.xlu0 %v1518
    %v1520 = vpop.xlane.xlu0 %1519
    %v1521 = vsel %vm754, %v1408, -inf
    %1522 = vmax.xlane.f32.xlu0 %v1521
    %v1523 = vpop.xlane.xlu0 %1522
    %v1524 = vsel %vm754, %v1411, -inf
    %1525 = vmax.xlane.f32.xlu0 %v1524
    %v1526 = vpop.xlane.xlu0 %1525
    %v1527 = vsel %vm754, %v1447, -inf
    %1528 = vmax.xlane.f32.xlu0 %v1527
    %v1529 = vpop.xlane.xlu0 %1528
    %v1530 = vsel %vm754, %v1450, -inf
    %1531 = vmax.xlane.f32.xlu0 %v1530
    %v1532 = vpop.xlane.xlu0 %1531
    %v1533 = vsel %vm754, %v1486, -inf
    %1534 = vmax.xlane.f32.xlu0 %v1533
    %v1535 = vpop.xlane.xlu0 %1534
    %v1536 = vsel %vm754, %v1489, -inf
    %1537 = vmax.xlane.f32.xlu0 %v1536
    %v1538 = vpop.xlane.xlu0 %1537
    %v1539 = vsub.f32 %v1213, %v1493
    %v1540 = vsub.f32 %v1216, %v1496
    %v1541 = vsub.f32 %v1252, %v1499
    %v1542 = vsub.f32 %v1255, %v1502
    %v1543 = vsub.f32 %v1291, %v1505
    %v1544 = vsub.f32 %v1294, %v1508
    %v1545 = vsub.f32 %v1330, %v1511
    %v1546 = vsub.f32 %v1333, %v1514
    %v1547 = vsub.f32 %v1369, %v1517
    %v1548 = vsub.f32 %v1372, %v1520
    %v1549 = vsub.f32 %v1408, %v1523
    %v1550 = vsub.f32 %v1411, %v1526
    %v1551 = vsub.f32 %v1447, %v1529
    %v1552 = vsub.f32 %v1450, %v1532
    %v1553 = vsub.f32 %v1486, %v1535
    %v1554 = vsub.f32 %v1489, %v1538
    %v1555 = vmul.f32 %v1539, 1.442695
    %v1556 = vpow.pop %v1555
    %v1557 = vmul.f32 %v1540, 1.442695
    %v1558 = vpow.pop %v1557
    %v1559 = vmul.f32 %v1541, 1.442695
    %v1560 = vpow.pop %v1559
    %v1561 = vmul.f32 %v1542, 1.442695
    %v1562 = vpow.pop %v1561
    %v1563 = vmul.f32 %v1543, 1.442695
    %v1564 = vpow.pop %v1563
    %v1565 = vmul.f32 %v1544, 1.442695
    %v1566 = vpow.pop %v1565
    %v1567 = vmul.f32 %v1545, 1.442695
    %v1568 = vpow.pop %v1567
    %v1569 = vmul.f32 %v1546, 1.442695
    %v1570 = vpow.pop %v1569
    %v1571 = vmul.f32 %v1547, 1.442695
    %v1572 = vpow.pop %v1571
    %v1573 = vmul.f32 %v1548, 1.442695
    %v1574 = vpow.pop %v1573
    %v1575 = vmul.f32 %v1549, 1.442695
    %v1576 = vpow.pop %v1575
    %v1577 = vmul.f32 %v1550, 1.442695
    %v1578 = vpow.pop %v1577
    %v1579 = vmul.f32 %v1551, 1.442695
    %v1580 = vpow.pop %v1579
    %v1581 = vmul.f32 %v1552, 1.442695
    %v1582 = vpow.pop %v1581
    %v1583 = vmul.f32 %v1553, 1.442695
    %v1584 = vpow.pop %v1583
    %v1585 = vmul.f32 %v1554, 1.442695
    %v1586 = vpow.pop %v1585
    %v1587 = vsel %vm754, %v1556, 0.0
    %1588 = vadd.xlane.f32.xlu0 %v1587
    %v1589 = vpop.xlane.xlu0 %1588
    %v1590 = vsel %vm754, %v1558, 0.0
    %1591 = vadd.xlane.f32.xlu0 %v1590
    %v1592 = vpop.xlane.xlu0 %1591
    %v1593 = vsel %vm754, %v1560, 0.0
    %1594 = vadd.xlane.f32.xlu0 %v1593
    %v1595 = vpop.xlane.xlu0 %1594
    %v1596 = vsel %vm754, %v1562, 0.0
    %1597 = vadd.xlane.f32.xlu0 %v1596
    %v1598 = vpop.xlane.xlu0 %1597
    %v1599 = vsel %vm754, %v1564, 0.0
    %1600 = vadd.xlane.f32.xlu0 %v1599
    %v1601 = vpop.xlane.xlu0 %1600
    %v1602 = vsel %vm754, %v1566, 0.0
    %1603 = vadd.xlane.f32.xlu0 %v1602
    %v1604 = vpop.xlane.xlu0 %1603
    %v1605 = vsel %vm754, %v1568, 0.0
    %1606 = vadd.xlane.f32.xlu0 %v1605
    %v1607 = vpop.xlane.xlu0 %1606
    %v1608 = vsel %vm754, %v1570, 0.0
    %1609 = vadd.xlane.f32.xlu0 %v1608
    %v1610 = vpop.xlane.xlu0 %1609
    %v1611 = vsel %vm754, %v1572, 0.0
    %1612 = vadd.xlane.f32.xlu0 %v1611
    %v1613 = vpop.xlane.xlu0 %1612
    %v1614 = vsel %vm754, %v1574, 0.0
    %1615 = vadd.xlane.f32.xlu0 %v1614
    %v1616 = vpop.xlane.xlu0 %1615
    %v1617 = vsel %vm754, %v1576, 0.0
    %1618 = vadd.xlane.f32.xlu0 %v1617
    %v1619 = vpop.xlane.xlu0 %1618
    %v1620 = vsel %vm754, %v1578, 0.0
    %1621 = vadd.xlane.f32.xlu0 %v1620
    %v1622 = vpop.xlane.xlu0 %1621
    %v1623 = vsel %vm754, %v1580, 0.0
    %1624 = vadd.xlane.f32.xlu0 %v1623
    %v1625 = vpop.xlane.xlu0 %1624
    %v1626 = vsel %vm754, %v1582, 0.0
    %1627 = vadd.xlane.f32.xlu0 %v1626
    %v1628 = vpop.xlane.xlu0 %1627
    %v1629 = vsel %vm754, %v1584, 0.0
    %1630 = vadd.xlane.f32.xlu0 %v1629
    %v1631 = vpop.xlane.xlu0 %1630
    %v1632 = vsel %vm754, %v1586, 0.0
    %1633 = vadd.xlane.f32.xlu0 %v1632
    %v1634 = vpop.xlane.xlu0 %1633
    %v1635 = vrcp.pop %v1589
    %v1636 = vrcp.pop %v1592
    %v1637 = vrcp.pop %v1595
    %v1638 = vrcp.pop %v1598
    %v1639 = vrcp.pop %v1601
    %v1640 = vrcp.pop %v1604
    %v1641 = vrcp.pop %v1607
    %v1642 = vrcp.pop %v1610
    %v1643 = vrcp.pop %v1613
    %v1644 = vrcp.pop %v1616
    %v1645 = vrcp.pop %v1619
    %v1646 = vrcp.pop %v1622
    %v1647 = vrcp.pop %v1625
    %v1648 = vrcp.pop %v1628
    %v1649 = vrcp.pop %v1631
    %v1650 = vrcp.pop %v1634
    %v1651 = vmul.f32 %v1556, %v1635
    %v1652 = vmul.f32 %v1558, %v1636
    %v1653 = vmul.f32 %v1560, %v1637
    %v1654 = vmul.f32 %v1562, %v1638
    %v1655 = vmul.f32 %v1564, %v1639
    %v1656 = vmul.f32 %v1566, %v1640
    %v1657 = vmul.f32 %v1568, %v1641
    %v1658 = vmul.f32 %v1570, %v1642
    %v1659 = vmul.f32 %v1572, %v1643
    %v1660 = vmul.f32 %v1574, %v1644
    %v1661 = vmul.f32 %v1576, %v1645
    %v1662 = vmul.f32 %v1578, %v1646
    %v1663 = vmul.f32 %v1580, %v1647
    %v1664 = vmul.f32 %v1582, %v1648
    %v1665 = vmul.f32 %v1584, %v1649
    %v1666 = vmul.f32 %v1586, %v1650
    %1669 = vrot.lane.b32.xlu0 %v457, 96
    %v1670 = vpop.permute.xlu0 %1669
    %1671 = vrot.lane.b32.xlu0 %v458, 96
    %v1672 = vpop.permute.xlu0 %1671
    %v1676 = vsel %vm754, %v1651, 0
    %v1679 = vsel %vm754, %v1652, 0
    %1681 = vmatpush.msra.mxu0 0.0
    %1682 = vmatpush.msra.mxu0 0.0
    %1683 = vmatpush.msra.mxu0 0.0
    %1684 = vmatpush.msra.mxu0 0.0
    %1685 = vmatpush.msra.mxu0 0.0
    %1686 = vmatpush.msra.mxu0 0.0
    %1687 = vmatpush.msra.mxu0 0.0
    %1688 = vmatpush.msra.mxu0 0.0
    %1689 = vmatpush.msra.mxu0 0.0
    %1690 = vmatpush.msra.mxu0 0.0
    %1691 = vmatpush.msra.mxu0 0.0
    %1692 = vmatpush.msra.mxu0 0.0
    %1693 = vmatpush.msra.mxu0 0.0
    %1694 = vmatpush.msra.mxu0 0.0
    %1695 = vmatpush.msra.mxu0 %v1672
    %1696 = vmatpush.msra.mxu0 %v1670
    %1697 = vmatmul.f32.gmra.mxu0 %v1676
    %v1698 = vpop.f32.mrf.mxu0
    %v1699 = vadd.f32 0.0, %v1698
    %1700 = vmatmul.f32.gmra.mxu0 %v1679
    %v1701 = vpop.f32.mrf.mxu0
    %v1702 = vadd.f32 0.0, %v1701
    %1703 = vdwg.mxu0
    %1706 = vrot.lane.b32.xlu0 %v459, 96
    %v1707 = vpop.permute.xlu0 %1706
    %1708 = vrot.lane.b32.xlu0 %v460, 96
    %v1709 = vpop.permute.xlu0 %1708
    %v1713 = vsel %vm754, %v1653, 0
    %v1716 = vsel %vm754, %v1654, 0
    %1718 = vmatpush.msra.mxu0 0.0
    %1719 = vmatpush.msra.mxu0 0.0
    %1720 = vmatpush.msra.mxu0 0.0
    %1721 = vmatpush.msra.mxu0 0.0
    %1722 = vmatpush.msra.mxu0 0.0
    %1723 = vmatpush.msra.mxu0 0.0
    %1724 = vmatpush.msra.mxu0 0.0
    %1725 = vmatpush.msra.mxu0 0.0
    %1726 = vmatpush.msra.mxu0 0.0
    %1727 = vmatpush.msra.mxu0 0.0
    %1728 = vmatpush.msra.mxu0 0.0
    %1729 = vmatpush.msra.mxu0 0.0
    %1730 = vmatpush.msra.mxu0 0.0
    %1731 = vmatpush.msra.mxu0 0.0
    %1732 = vmatpush.msra.mxu0 %v1709
    %1733 = vmatpush.msra.mxu0 %v1707
    %1734 = vmatmul.f32.gmra.mxu0 %v1713
    %v1735 = vpop.f32.mrf.mxu0
    %v1736 = vadd.f32 0.0, %v1735
    %1737 = vmatmul.f32.gmra.mxu0 %v1716
    %v1738 = vpop.f32.mrf.mxu0
    %v1739 = vadd.f32 0.0, %v1738
    %1740 = vdwg.mxu0
    %1743 = vrot.lane.b32.xlu0 %v461, 96
    %v1744 = vpop.permute.xlu0 %1743
    %1745 = vrot.lane.b32.xlu0 %v462, 96
    %v1746 = vpop.permute.xlu0 %1745
    %v1750 = vsel %vm754, %v1655, 0
    %v1753 = vsel %vm754, %v1656, 0
    %1755 = vmatpush.msra.mxu0 0.0
    %1756 = vmatpush.msra.mxu0 0.0
    %1757 = vmatpush.msra.mxu0 0.0
    %1758 = vmatpush.msra.mxu0 0.0
    %1759 = vmatpush.msra.mxu0 0.0
    %1760 = vmatpush.msra.mxu0 0.0
    %1761 = vmatpush.msra.mxu0 0.0
    %1762 = vmatpush.msra.mxu0 0.0
    %1763 = vmatpush.msra.mxu0 0.0
    %1764 = vmatpush.msra.mxu0 0.0
    %1765 = vmatpush.msra.mxu0 0.0
    %1766 = vmatpush.msra.mxu0 0.0
    %1767 = vmatpush.msra.mxu0 0.0
    %1768 = vmatpush.msra.mxu0 0.0
    %1769 = vmatpush.msra.mxu0 %v1746
    %1770 = vmatpush.msra.mxu0 %v1744
    %1771 = vmatmul.f32.gmra.mxu0 %v1750
    %v1772 = vpop.f32.mrf.mxu0
    %v1773 = vadd.f32 0.0, %v1772
    %1774 = vmatmul.f32.gmra.mxu0 %v1753
    %v1775 = vpop.f32.mrf.mxu0
    %v1776 = vadd.f32 0.0, %v1775
    %1777 = vdwg.mxu0
    %1780 = vrot.lane.b32.xlu0 %v463, 96
    %v1781 = vpop.permute.xlu0 %1780
    %1782 = vrot.lane.b32.xlu0 %v464, 96
    %v1783 = vpop.permute.xlu0 %1782
    %v1787 = vsel %vm754, %v1657, 0
    %v1790 = vsel %vm754, %v1658, 0
    %1792 = vmatpush.msra.mxu0 0.0
    %1793 = vmatpush.msra.mxu0 0.0
    %1794 = vmatpush.msra.mxu0 0.0
    %1795 = vmatpush.msra.mxu0 0.0
    %1796 = vmatpush.msra.mxu0 0.0
    %1797 = vmatpush.msra.mxu0 0.0
    %1798 = vmatpush.msra.mxu0 0.0
    %1799 = vmatpush.msra.mxu0 0.0
    %1800 = vmatpush.msra.mxu0 0.0
    %1801 = vmatpush.msra.mxu0 0.0
    %1802 = vmatpush.msra.mxu0 0.0
    %1803 = vmatpush.msra.mxu0 0.0
    %1804 = vmatpush.msra.mxu0 0.0
    %1805 = vmatpush.msra.mxu0 0.0
    %1806 = vmatpush.msra.mxu0 %v1783
    %1807 = vmatpush.msra.mxu0 %v1781
    %1808 = vmatmul.f32.gmra.mxu0 %v1787
    %v1809 = vpop.f32.mrf.mxu0
    %v1810 = vadd.f32 0.0, %v1809
    %1811 = vmatmul.f32.gmra.mxu0 %v1790
    %v1812 = vpop.f32.mrf.mxu0
    %v1813 = vadd.f32 0.0, %v1812
    %1814 = vdwg.mxu0
    %1817 = vrot.lane.b32.xlu0 %v465, 96
    %v1818 = vpop.permute.xlu0 %1817
    %1819 = vrot.lane.b32.xlu0 %v466, 96
    %v1820 = vpop.permute.xlu0 %1819
    %v1824 = vsel %vm754, %v1659, 0
    %v1827 = vsel %vm754, %v1660, 0
    %1829 = vmatpush.msra.mxu0 0.0
    %1830 = vmatpush.msra.mxu0 0.0
    %1831 = vmatpush.msra.mxu0 0.0
    %1832 = vmatpush.msra.mxu0 0.0
    %1833 = vmatpush.msra.mxu0 0.0
    %1834 = vmatpush.msra.mxu0 0.0
    %1835 = vmatpush.msra.mxu0 0.0
    %1836 = vmatpush.msra.mxu0 0.0
    %1837 = vmatpush.msra.mxu0 0.0
    %1838 = vmatpush.msra.mxu0 0.0
    %1839 = vmatpush.msra.mxu0 0.0
    %1840 = vmatpush.msra.mxu0 0.0
    %1841 = vmatpush.msra.mxu0 0.0
    %1842 = vmatpush.msra.mxu0 0.0
    %1843 = vmatpush.msra.mxu0 %v1820
    %1844 = vmatpush.msra.mxu0 %v1818
    %1845 = vmatmul.f32.gmra.mxu0 %v1824
    %v1846 = vpop.f32.mrf.mxu0
    %v1847 = vadd.f32 0.0, %v1846
    %1848 = vmatmul.f32.gmra.mxu0 %v1827
    %v1849 = vpop.f32.mrf.mxu0
    %v1850 = vadd.f32 0.0, %v1849
    %1851 = vdwg.mxu0
    %1854 = vrot.lane.b32.xlu0 %v467, 96
    %v1855 = vpop.permute.xlu0 %1854
    %1856 = vrot.lane.b32.xlu0 %v468, 96
    %v1857 = vpop.permute.xlu0 %1856
    %v1861 = vsel %vm754, %v1661, 0
    %v1864 = vsel %vm754, %v1662, 0
    %1866 = vmatpush.msra.mxu0 0.0
    %1867 = vmatpush.msra.mxu0 0.0
    %1868 = vmatpush.msra.mxu0 0.0
    %1869 = vmatpush.msra.mxu0 0.0
    %1870 = vmatpush.msra.mxu0 0.0
    %1871 = vmatpush.msra.mxu0 0.0
    %1872 = vmatpush.msra.mxu0 0.0
    %1873 = vmatpush.msra.mxu0 0.0
    %1874 = vmatpush.msra.mxu0 0.0
    %1875 = vmatpush.msra.mxu0 0.0
    %1876 = vmatpush.msra.mxu0 0.0
    %1877 = vmatpush.msra.mxu0 0.0
    %1878 = vmatpush.msra.mxu0 0.0
    %1879 = vmatpush.msra.mxu0 0.0
    %1880 = vmatpush.msra.mxu0 %v1857
    %1881 = vmatpush.msra.mxu0 %v1855
    %1882 = vmatmul.f32.gmra.mxu0 %v1861
    %v1883 = vpop.f32.mrf.mxu0
    %v1884 = vadd.f32 0.0, %v1883
    %1885 = vmatmul.f32.gmra.mxu0 %v1864
    %v1886 = vpop.f32.mrf.mxu0
    %v1887 = vadd.f32 0.0, %v1886
    %1888 = vdwg.mxu0
    %1891 = vrot.lane.b32.xlu0 %v469, 96
    %v1892 = vpop.permute.xlu0 %1891
    %1893 = vrot.lane.b32.xlu0 %v470, 96
    %v1894 = vpop.permute.xlu0 %1893
    %v1898 = vsel %vm754, %v1663, 0
    %v1901 = vsel %vm754, %v1664, 0
    %1903 = vmatpush.msra.mxu0 0.0
    %1904 = vmatpush.msra.mxu0 0.0
    %1905 = vmatpush.msra.mxu0 0.0
    %1906 = vmatpush.msra.mxu0 0.0
    %1907 = vmatpush.msra.mxu0 0.0
    %1908 = vmatpush.msra.mxu0 0.0
    %1909 = vmatpush.msra.mxu0 0.0
    %1910 = vmatpush.msra.mxu0 0.0
    %1911 = vmatpush.msra.mxu0 0.0
    %1912 = vmatpush.msra.mxu0 0.0
    %1913 = vmatpush.msra.mxu0 0.0
    %1914 = vmatpush.msra.mxu0 0.0
    %1915 = vmatpush.msra.mxu0 0.0
    %1916 = vmatpush.msra.mxu0 0.0
    %1917 = vmatpush.msra.mxu0 %v1894
    %1918 = vmatpush.msra.mxu0 %v1892
    %1919 = vmatmul.f32.gmra.mxu0 %v1898
    %v1920 = vpop.f32.mrf.mxu0
    %v1921 = vadd.f32 0.0, %v1920
    %1922 = vmatmul.f32.gmra.mxu0 %v1901
    %v1923 = vpop.f32.mrf.mxu0
    %v1924 = vadd.f32 0.0, %v1923
    %1925 = vdwg.mxu0
    %1928 = vrot.lane.b32.xlu0 %v471, 96
    %v1929 = vpop.permute.xlu0 %1928
    %1930 = vrot.lane.b32.xlu0 %v472, 96
    %v1931 = vpop.permute.xlu0 %1930
    %v1935 = vsel %vm754, %v1665, 0
    %v1938 = vsel %vm754, %v1666, 0
    %1940 = vmatpush.msra.mxu0 0.0
    %1941 = vmatpush.msra.mxu0 0.0
    %1942 = vmatpush.msra.mxu0 0.0
    %1943 = vmatpush.msra.mxu0 0.0
    %1944 = vmatpush.msra.mxu0 0.0
    %1945 = vmatpush.msra.mxu0 0.0
    %1946 = vmatpush.msra.mxu0 0.0
    %1947 = vmatpush.msra.mxu0 0.0
    %1948 = vmatpush.msra.mxu0 0.0
    %1949 = vmatpush.msra.mxu0 0.0
    %1950 = vmatpush.msra.mxu0 0.0
    %1951 = vmatpush.msra.mxu0 0.0
    %1952 = vmatpush.msra.mxu0 0.0
    %1953 = vmatpush.msra.mxu0 0.0
    %1954 = vmatpush.msra.mxu0 %v1931
    %1955 = vmatpush.msra.mxu0 %v1929
    %1956 = vmatmul.f32.gmra.mxu0 %v1935
    %v1957 = vpop.f32.mrf.mxu0
    %v1958 = vadd.f32 0.0, %v1957
    %1959 = vmatmul.f32.gmra.mxu0 %v1938
    %v1960 = vpop.f32.mrf.mxu0
    %v1961 = vadd.f32 0.0, %v1960
    %1962 = vdwg.mxu0
    %1979 = vrot.lane.b32.xlu0 %v1699, 32
    %v1980 = vpop.permute.xlu0 %1979
    %1981 = vrot.lane.b32.xlu0 %v1702, 32
    %v1982 = vpop.permute.xlu0 %1981
    %1983 = vrot.lane.b32.xlu0 %v1736, 32
    %v1984 = vpop.permute.xlu0 %1983
    %1985 = vrot.lane.b32.xlu0 %v1739, 32
    %v1986 = vpop.permute.xlu0 %1985
    %1987 = vrot.lane.b32.xlu0 %v1773, 32
    %v1988 = vpop.permute.xlu0 %1987
    %1989 = vrot.lane.b32.xlu0 %v1776, 32
    %v1990 = vpop.permute.xlu0 %1989
    %1991 = vrot.lane.b32.xlu0 %v1810, 32
    %v1992 = vpop.permute.xlu0 %1991
    %1993 = vrot.lane.b32.xlu0 %v1813, 32
    %v1994 = vpop.permute.xlu0 %1993
    %1995 = vrot.lane.b32.xlu0 %v1847, 32
    %v1996 = vpop.permute.xlu0 %1995
    %1997 = vrot.lane.b32.xlu0 %v1850, 32
    %v1998 = vpop.permute.xlu0 %1997
    %1999 = vrot.lane.b32.xlu0 %v1884, 32
    %v2000 = vpop.permute.xlu0 %1999
    %2001 = vrot.lane.b32.xlu0 %v1887, 32
    %v2002 = vpop.permute.xlu0 %2001
    %2003 = vrot.lane.b32.xlu0 %v1921, 32
    %v2004 = vpop.permute.xlu0 %2003
    %2005 = vrot.lane.b32.xlu0 %v1924, 32
    %v2006 = vpop.permute.xlu0 %2005
    %2007 = vrot.lane.b32.xlu0 %v1958, 32
    %v2008 = vpop.permute.xlu0 %2007
    %2009 = vrot.lane.b32.xlu0 %v1961, 32
    %v2010 = vpop.permute.xlu0 %2009
    %vm2027 = vcmask 523520
    %2028 = vst.msk [vmem:[#allocation2] sm:$0xff] %vm2027, %v1980
    %2029 = vst.msk [vmem:[#allocation2 + $0x8] sm:$0xff] %vm2027, %v1982
    %2030 = vst.msk [vmem:[#allocation2 + $0x10] sm:$0xff] %vm2027, %v1984
    %2031 = vst.msk [vmem:[#allocation2 + $0x18] sm:$0xff] %vm2027, %v1986
    %2032 = vst.msk [vmem:[#allocation2 + $0x20] sm:$0xff] %vm2027, %v1988
    %2033 = vst.msk [vmem:[#allocation2 + $0x28] sm:$0xff] %vm2027, %v1990
    %2034 = vst.msk [vmem:[#allocation2 + $0x30] sm:$0xff] %vm2027, %v1992
    %2035 = vst.msk [vmem:[#allocation2 + $0x38] sm:$0xff] %vm2027, %v1994
    %2036 = vst.msk [vmem:[#allocation2 + $0x40] sm:$0xff] %vm2027, %v1996
    %2037 = vst.msk [vmem:[#allocation2 + $0x48] sm:$0xff] %vm2027, %v1998
    %2038 = vst.msk [vmem:[#allocation2 + $0x50] sm:$0xff] %vm2027, %v2000
    %2039 = vst.msk [vmem:[#allocation2 + $0x58] sm:$0xff] %vm2027, %v2002
    %2040 = vst.msk [vmem:[#allocation2 + $0x60] sm:$0xff] %vm2027, %v2004
    %2041 = vst.msk [vmem:[#allocation2 + $0x68] sm:$0xff] %vm2027, %v2006
    %2042 = vst.msk [vmem:[#allocation2 + $0x70] sm:$0xff] %vm2027, %v2008
    %2043 = vst.msk [vmem:[#allocation2 + $0x78] sm:$0xff] %vm2027, %v2010
    %2044 = vrot.lane.b32.xlu0 %v232, 64
    %v2045 = vpop.permute.xlu0 %2044
    %2046 = vrot.lane.b32.xlu0 %v235, 64
    %v2047 = vpop.permute.xlu0 %2046
    %2048 = vrot.lane.b32.xlu0 %v441, 64
    %v2049 = vpop.permute.xlu0 %2048
    %2050 = vrot.lane.b32.xlu0 %v442, 64
    %v2051 = vpop.permute.xlu0 %2050
    %v2052 = vsel %vm473, %v2045, 0
    %v2054 = vsel %vm473, %v2047, 0
    %v2056 = vsel %vm473, %v2049, 0
    %v2058 = vsel %vm473, %v2051, 0
    %2060 = vmatpush.xpose.msra.mxu0 0.0
    %2061 = vmatpush.xpose.msra.mxu0 0.0
    %2062 = vmatpush.xpose.msra.mxu0 0.0
    %2063 = vmatpush.xpose.msra.mxu0 0.0
    %2064 = vmatpush.xpose.msra.mxu0 0.0
    %2065 = vmatpush.xpose.msra.mxu0 0.0
    %2066 = vmatpush.xpose.msra.mxu0 0.0
    %2067 = vmatpush.xpose.msra.mxu0 0.0
    %2068 = vmatpush.xpose.msra.mxu0 0.0
    %2069 = vmatpush.xpose.msra.mxu0 0.0
    %2070 = vmatpush.xpose.msra.mxu0 0.0
    %2071 = vmatpush.xpose.msra.mxu0 0.0
    %2072 = vmatpush.xpose.msra.mxu0 0.0
    %2073 = vmatpush.xpose.msra.mxu0 0.0
    %2074 = vmatpush.xpose.msra.mxu0 %v2058
    %2075 = vmatpush.xpose.msra.mxu0 %v2056
    %2076 = vmatmul.f32.gmra.mxu0 %v2052
    %v2077 = vpop.f32.mrf.mxu0
    %v2078 = vadd.f32 0.0, %v2077
    %2079 = vmatmul.f32.gmra.mxu0 %v2054
    %v2080 = vpop.f32.mrf.mxu0
    %v2081 = vadd.f32 0.0, %v2080
    %2082 = vdwg.mxu0
    %2083 = vrot.lane.b32.xlu0 %v238, 64
    %v2084 = vpop.permute.xlu0 %2083
    %2085 = vrot.lane.b32.xlu0 %v241, 64
    %v2086 = vpop.permute.xlu0 %2085
    %2087 = vrot.lane.b32.xlu0 %v443, 64
    %v2088 = vpop.permute.xlu0 %2087
    %2089 = vrot.lane.b32.xlu0 %v444, 64
    %v2090 = vpop.permute.xlu0 %2089
    %v2091 = vsel %vm473, %v2084, 0
    %v2093 = vsel %vm473, %v2086, 0
    %v2095 = vsel %vm473, %v2088, 0
    %v2097 = vsel %vm473, %v2090, 0
    %2099 = vmatpush.xpose.msra.mxu0 0.0
    %2100 = vmatpush.xpose.msra.mxu0 0.0
    %2101 = vmatpush.xpose.msra.mxu0 0.0
    %2102 = vmatpush.xpose.msra.mxu0 0.0
    %2103 = vmatpush.xpose.msra.mxu0 0.0
    %2104 = vmatpush.xpose.msra.mxu0 0.0
    %2105 = vmatpush.xpose.msra.mxu0 0.0
    %2106 = vmatpush.xpose.msra.mxu0 0.0
    %2107 = vmatpush.xpose.msra.mxu0 0.0
    %2108 = vmatpush.xpose.msra.mxu0 0.0
    %2109 = vmatpush.xpose.msra.mxu0 0.0
    %2110 = vmatpush.xpose.msra.mxu0 0.0
    %2111 = vmatpush.xpose.msra.mxu0 0.0
    %2112 = vmatpush.xpose.msra.mxu0 0.0
    %2113 = vmatpush.xpose.msra.mxu0 %v2097
    %2114 = vmatpush.xpose.msra.mxu0 %v2095
    %2115 = vmatmul.f32.gmra.mxu0 %v2091
    %v2116 = vpop.f32.mrf.mxu0
    %v2117 = vadd.f32 0.0, %v2116
    %2118 = vmatmul.f32.gmra.mxu0 %v2093
    %v2119 = vpop.f32.mrf.mxu0
    %v2120 = vadd.f32 0.0, %v2119
    %2121 = vdwg.mxu0
    %2122 = vrot.lane.b32.xlu0 %v244, 64
    %v2123 = vpop.permute.xlu0 %2122
    %2124 = vrot.lane.b32.xlu0 %v247, 64
    %v2125 = vpop.permute.xlu0 %2124
    %2126 = vrot.lane.b32.xlu0 %v445, 64
    %v2127 = vpop.permute.xlu0 %2126
    %2128 = vrot.lane.b32.xlu0 %v446, 64
    %v2129 = vpop.permute.xlu0 %2128
    %v2130 = vsel %vm473, %v2123, 0
    %v2132 = vsel %vm473, %v2125, 0
    %v2134 = vsel %vm473, %v2127, 0
    %v2136 = vsel %vm473, %v2129, 0
    %2138 = vmatpush.xpose.msra.mxu0 0.0
    %2139 = vmatpush.xpose.msra.mxu0 0.0
    %2140 = vmatpush.xpose.msra.mxu0 0.0
    %2141 = vmatpush.xpose.msra.mxu0 0.0
    %2142 = vmatpush.xpose.msra.mxu0 0.0
    %2143 = vmatpush.xpose.msra.mxu0 0.0
    %2144 = vmatpush.xpose.msra.mxu0 0.0
    %2145 = vmatpush.xpose.msra.mxu0 0.0
    %2146 = vmatpush.xpose.msra.mxu0 0.0
    %2147 = vmatpush.xpose.msra.mxu0 0.0
    %2148 = vmatpush.xpose.msra.mxu0 0.0
    %2149 = vmatpush.xpose.msra.mxu0 0.0
    %2150 = vmatpush.xpose.msra.mxu0 0.0
    %2151 = vmatpush.xpose.msra.mxu0 0.0
    %2152 = vmatpush.xpose.msra.mxu0 %v2136
    %2153 = vmatpush.xpose.msra.mxu0 %v2134
    %2154 = vmatmul.f32.gmra.mxu0 %v2130
    %v2155 = vpop.f32.mrf.mxu0
    %v2156 = vadd.f32 0.0, %v2155
    %2157 = vmatmul.f32.gmra.mxu0 %v2132
    %v2158 = vpop.f32.mrf.mxu0
    %v2159 = vadd.f32 0.0, %v2158
    %2160 = vdwg.mxu0
    %2161 = vrot.lane.b32.xlu0 %v250, 64
    %v2162 = vpop.permute.xlu0 %2161
    %2163 = vrot.lane.b32.xlu0 %v253, 64
    %v2164 = vpop.permute.xlu0 %2163
    %2165 = vrot.lane.b32.xlu0 %v447, 64
    %v2166 = vpop.permute.xlu0 %2165
    %2167 = vrot.lane.b32.xlu0 %v448, 64
    %v2168 = vpop.permute.xlu0 %2167
    %v2169 = vsel %vm473, %v2162, 0
    %v2171 = vsel %vm473, %v2164, 0
    %v2173 = vsel %vm473, %v2166, 0
    %v2175 = vsel %vm473, %v2168, 0
    %2177 = vmatpush.xpose.msra.mxu0 0.0
    %2178 = vmatpush.xpose.msra.mxu0 0.0
    %2179 = vmatpush.xpose.msra.mxu0 0.0
    %2180 = vmatpush.xpose.msra.mxu0 0.0
    %2181 = vmatpush.xpose.msra.mxu0 0.0
    %2182 = vmatpush.xpose.msra.mxu0 0.0
    %2183 = vmatpush.xpose.msra.mxu0 0.0
    %2184 = vmatpush.xpose.msra.mxu0 0.0
    %2185 = vmatpush.xpose.msra.mxu0 0.0
    %2186 = vmatpush.xpose.msra.mxu0 0.0
    %2187 = vmatpush.xpose.msra.mxu0 0.0
    %2188 = vmatpush.xpose.msra.mxu0 0.0
    %2189 = vmatpush.xpose.msra.mxu0 0.0
    %2190 = vmatpush.xpose.msra.mxu0 0.0
    %2191 = vmatpush.xpose.msra.mxu0 %v2175
    %2192 = vmatpush.xpose.msra.mxu0 %v2173
    %2193 = vmatmul.f32.gmra.mxu0 %v2169
    %v2194 = vpop.f32.mrf.mxu0
    %v2195 = vadd.f32 0.0, %v2194
    %2196 = vmatmul.f32.gmra.mxu0 %v2171
    %v2197 = vpop.f32.mrf.mxu0
    %v2198 = vadd.f32 0.0, %v2197
    %2199 = vdwg.mxu0
    %2200 = vrot.lane.b32.xlu0 %v256, 64
    %v2201 = vpop.permute.xlu0 %2200
    %2202 = vrot.lane.b32.xlu0 %v259, 64
    %v2203 = vpop.permute.xlu0 %2202
    %2204 = vrot.lane.b32.xlu0 %v449, 64
    %v2205 = vpop.permute.xlu0 %2204
    %2206 = vrot.lane.b32.xlu0 %v450, 64
    %v2207 = vpop.permute.xlu0 %2206
    %v2208 = vsel %vm473, %v2201, 0
    %v2210 = vsel %vm473, %v2203, 0
    %v2212 = vsel %vm473, %v2205, 0
    %v2214 = vsel %vm473, %v2207, 0
    %2216 = vmatpush.xpose.msra.mxu0 0.0
    %2217 = vmatpush.xpose.msra.mxu0 0.0
    %2218 = vmatpush.xpose.msra.mxu0 0.0
    %2219 = vmatpush.xpose.msra.mxu0 0.0
    %2220 = vmatpush.xpose.msra.mxu0 0.0
    %2221 = vmatpush.xpose.msra.mxu0 0.0
    %2222 = vmatpush.xpose.msra.mxu0 0.0
    %2223 = vmatpush.xpose.msra.mxu0 0.0
    %2224 = vmatpush.xpose.msra.mxu0 0.0
    %2225 = vmatpush.xpose.msra.mxu0 0.0
    %2226 = vmatpush.xpose.msra.mxu0 0.0
    %2227 = vmatpush.xpose.msra.mxu0 0.0
    %2228 = vmatpush.xpose.msra.mxu0 0.0
    %2229 = vmatpush.xpose.msra.mxu0 0.0
    %2230 = vmatpush.xpose.msra.mxu0 %v2214
    %2231 = vmatpush.xpose.msra.mxu0 %v2212
    %2232 = vmatmul.f32.gmra.mxu0 %v2208
    %v2233 = vpop.f32.mrf.mxu0
    %v2234 = vadd.f32 0.0, %v2233
    %2235 = vmatmul.f32.gmra.mxu0 %v2210
    %v2236 = vpop.f32.mrf.mxu0
    %v2237 = vadd.f32 0.0, %v2236
    %2238 = vdwg.mxu0
    %2239 = vrot.lane.b32.xlu0 %v262, 64
    %v2240 = vpop.permute.xlu0 %2239
    %2241 = vrot.lane.b32.xlu0 %v265, 64
    %v2242 = vpop.permute.xlu0 %2241
    %2243 = vrot.lane.b32.xlu0 %v451, 64
    %v2244 = vpop.permute.xlu0 %2243
    %2245 = vrot.lane.b32.xlu0 %v452, 64
    %v2246 = vpop.permute.xlu0 %2245
    %v2247 = vsel %vm473, %v2240, 0
    %v2249 = vsel %vm473, %v2242, 0
    %v2251 = vsel %vm473, %v2244, 0
    %v2253 = vsel %vm473, %v2246, 0
    %2255 = vmatpush.xpose.msra.mxu0 0.0
    %2256 = vmatpush.xpose.msra.mxu0 0.0
    %2257 = vmatpush.xpose.msra.mxu0 0.0
    %2258 = vmatpush.xpose.msra.mxu0 0.0
    %2259 = vmatpush.xpose.msra.mxu0 0.0
    %2260 = vmatpush.xpose.msra.mxu0 0.0
    %2261 = vmatpush.xpose.msra.mxu0 0.0
    %2262 = vmatpush.xpose.msra.mxu0 0.0
    %2263 = vmatpush.xpose.msra.mxu0 0.0
    %2264 = vmatpush.xpose.msra.mxu0 0.0
    %2265 = vmatpush.xpose.msra.mxu0 0.0
    %2266 = vmatpush.xpose.msra.mxu0 0.0
    %2267 = vmatpush.xpose.msra.mxu0 0.0
    %2268 = vmatpush.xpose.msra.mxu0 0.0
    %2269 = vmatpush.xpose.msra.mxu0 %v2253
    %2270 = vmatpush.xpose.msra.mxu0 %v2251
    %2271 = vmatmul.f32.gmra.mxu0 %v2247
    %v2272 = vpop.f32.mrf.mxu0
    %v2273 = vadd.f32 0.0, %v2272
    %2274 = vmatmul.f32.gmra.mxu0 %v2249
    %v2275 = vpop.f32.mrf.mxu0
    %v2276 = vadd.f32 0.0, %v2275
    %2277 = vdwg.mxu0
    %2278 = vrot.lane.b32.xlu0 %v268, 64
    %v2279 = vpop.permute.xlu0 %2278
    %2280 = vrot.lane.b32.xlu0 %v271, 64
    %v2281 = vpop.permute.xlu0 %2280
    %2282 = vrot.lane.b32.xlu0 %v453, 64
    %v2283 = vpop.permute.xlu0 %2282
    %2284 = vrot.lane.b32.xlu0 %v454, 64
    %v2285 = vpop.permute.xlu0 %2284
    %v2286 = vsel %vm473, %v2279, 0
    %v2288 = vsel %vm473, %v2281, 0
    %v2290 = vsel %vm473, %v2283, 0
    %v2292 = vsel %vm473, %v2285, 0
    %2294 = vmatpush.xpose.msra.mxu0 0.0
    %2295 = vmatpush.xpose.msra.mxu0 0.0
    %2296 = vmatpush.xpose.msra.mxu0 0.0
    %2297 = vmatpush.xpose.msra.mxu0 0.0
    %2298 = vmatpush.xpose.msra.mxu0 0.0
    %2299 = vmatpush.xpose.msra.mxu0 0.0
    %2300 = vmatpush.xpose.msra.mxu0 0.0
    %2301 = vmatpush.xpose.msra.mxu0 0.0
    %2302 = vmatpush.xpose.msra.mxu0 0.0
    %2303 = vmatpush.xpose.msra.mxu0 0.0
    %2304 = vmatpush.xpose.msra.mxu0 0.0
    %2305 = vmatpush.xpose.msra.mxu0 0.0
    %2306 = vmatpush.xpose.msra.mxu0 0.0
    %2307 = vmatpush.xpose.msra.mxu0 0.0
    %2308 = vmatpush.xpose.msra.mxu0 %v2292
    %2309 = vmatpush.xpose.msra.mxu0 %v2290
    %2310 = vmatmul.f32.gmra.mxu0 %v2286
    %v2311 = vpop.f32.mrf.mxu0
    %v2312 = vadd.f32 0.0, %v2311
    %2313 = vmatmul.f32.gmra.mxu0 %v2288
    %v2314 = vpop.f32.mrf.mxu0
    %v2315 = vadd.f32 0.0, %v2314
    %2316 = vdwg.mxu0
    %2317 = vrot.lane.b32.xlu0 %v274, 64
    %v2318 = vpop.permute.xlu0 %2317
    %2319 = vrot.lane.b32.xlu0 %v277, 64
    %v2320 = vpop.permute.xlu0 %2319
    %2321 = vrot.lane.b32.xlu0 %v455, 64
    %v2322 = vpop.permute.xlu0 %2321
    %2323 = vrot.lane.b32.xlu0 %v456, 64
    %v2324 = vpop.permute.xlu0 %2323
    %v2325 = vsel %vm473, %v2318, 0
    %v2327 = vsel %vm473, %v2320, 0
    %v2329 = vsel %vm473, %v2322, 0
    %v2331 = vsel %vm473, %v2324, 0
    %2333 = vmatpush.xpose.msra.mxu0 0.0
    %2334 = vmatpush.xpose.msra.mxu0 0.0
    %2335 = vmatpush.xpose.msra.mxu0 0.0
    %2336 = vmatpush.xpose.msra.mxu0 0.0
    %2337 = vmatpush.xpose.msra.mxu0 0.0
    %2338 = vmatpush.xpose.msra.mxu0 0.0
    %2339 = vmatpush.xpose.msra.mxu0 0.0
    %2340 = vmatpush.xpose.msra.mxu0 0.0
    %2341 = vmatpush.xpose.msra.mxu0 0.0
    %2342 = vmatpush.xpose.msra.mxu0 0.0
    %2343 = vmatpush.xpose.msra.mxu0 0.0
    %2344 = vmatpush.xpose.msra.mxu0 0.0
    %2345 = vmatpush.xpose.msra.mxu0 0.0
    %2346 = vmatpush.xpose.msra.mxu0 0.0
    %2347 = vmatpush.xpose.msra.mxu0 %v2331
    %2348 = vmatpush.xpose.msra.mxu0 %v2329
    %2349 = vmatmul.f32.gmra.mxu0 %v2325
    %v2350 = vpop.f32.mrf.mxu0
    %v2351 = vadd.f32 0.0, %v2350
    %2352 = vmatmul.f32.gmra.mxu0 %v2327
    %v2353 = vpop.f32.mrf.mxu0
    %v2354 = vadd.f32 0.0, %v2353
    %2355 = vdwg.mxu0
    %v2356 = vsel %vm754, %v2078, -inf
    %2357 = vmax.xlane.f32.xlu0 %v2356
    %v2358 = vpop.xlane.xlu0 %2357
    %v2359 = vsel %vm754, %v2081, -inf
    %2360 = vmax.xlane.f32.xlu0 %v2359
    %v2361 = vpop.xlane.xlu0 %2360
    %v2362 = vsel %vm754, %v2117, -inf
    %2363 = vmax.xlane.f32.xlu0 %v2362
    %v2364 = vpop.xlane.xlu0 %2363
    %v2365 = vsel %vm754, %v2120, -inf
    %2366 = vmax.xlane.f32.xlu0 %v2365
    %v2367 = vpop.xlane.xlu0 %2366
    %v2368 = vsel %vm754, %v2156, -inf
    %2369 = vmax.xlane.f32.xlu0 %v2368
    %v2370 = vpop.xlane.xlu0 %2369
    %v2371 = vsel %vm754, %v2159, -inf
    %2372 = vmax.xlane.f32.xlu0 %v2371
    %v2373 = vpop.xlane.xlu0 %2372
    %v2374 = vsel %vm754, %v2195, -inf
    %2375 = vmax.xlane.f32.xlu0 %v2374
    %v2376 = vpop.xlane.xlu0 %2375
    %v2377 = vsel %vm754, %v2198, -inf
    %2378 = vmax.xlane.f32.xlu0 %v2377
    %v2379 = vpop.xlane.xlu0 %2378
    %v2380 = vsel %vm754, %v2234, -inf
    %2381 = vmax.xlane.f32.xlu0 %v2380
    %v2382 = vpop.xlane.xlu0 %2381
    %v2383 = vsel %vm754, %v2237, -inf
    %2384 = vmax.xlane.f32.xlu0 %v2383
    %v2385 = vpop.xlane.xlu0 %2384
    %v2386 = vsel %vm754, %v2273, -inf
    %2387 = vmax.xlane.f32.xlu0 %v2386
    %v2388 = vpop.xlane.xlu0 %2387
    %v2389 = vsel %vm754, %v2276, -inf
    %2390 = vmax.xlane.f32.xlu0 %v2389
    %v2391 = vpop.xlane.xlu0 %2390
    %v2392 = vsel %vm754, %v2312, -inf
    %2393 = vmax.xlane.f32.xlu0 %v2392
    %v2394 = vpop.xlane.xlu0 %2393
    %v2395 = vsel %vm754, %v2315, -inf
    %2396 = vmax.xlane.f32.xlu0 %v2395
    %v2397 = vpop.xlane.xlu0 %2396
    %v2398 = vsel %vm754, %v2351, -inf
    %2399 = vmax.xlane.f32.xlu0 %v2398
    %v2400 = vpop.xlane.xlu0 %2399
    %v2401 = vsel %vm754, %v2354, -inf
    %2402 = vmax.xlane.f32.xlu0 %v2401
    %v2403 = vpop.xlane.xlu0 %2402
    %v2404 = vsub.f32 %v2078, %v2358
    %v2405 = vsub.f32 %v2081, %v2361
    %v2406 = vsub.f32 %v2117, %v2364
    %v2407 = vsub.f32 %v2120, %v2367
    %v2408 = vsub.f32 %v2156, %v2370
    %v2409 = vsub.f32 %v2159, %v2373
    %v2410 = vsub.f32 %v2195, %v2376
    %v2411 = vsub.f32 %v2198, %v2379
    %v2412 = vsub.f32 %v2234, %v2382
    %v2413 = vsub.f32 %v2237, %v2385
    %v2414 = vsub.f32 %v2273, %v2388
    %v2415 = vsub.f32 %v2276, %v2391
    %v2416 = vsub.f32 %v2312, %v2394
    %v2417 = vsub.f32 %v2315, %v2397
    %v2418 = vsub.f32 %v2351, %v2400
    %v2419 = vsub.f32 %v2354, %v2403
    %v2420 = vmul.f32 %v2404, 1.442695
    %v2421 = vpow.pop %v2420
    %v2422 = vmul.f32 %v2405, 1.442695
    %v2423 = vpow.pop %v2422
    %v2424 = vmul.f32 %v2406, 1.442695
    %v2425 = vpow.pop %v2424
    %v2426 = vmul.f32 %v2407, 1.442695
    %v2427 = vpow.pop %v2426
    %v2428 = vmul.f32 %v2408, 1.442695
    %v2429 = vpow.pop %v2428
    %v2430 = vmul.f32 %v2409, 1.442695
    %v2431 = vpow.pop %v2430
    %v2432 = vmul.f32 %v2410, 1.442695
    %v2433 = vpow.pop %v2432
    %v2434 = vmul.f32 %v2411, 1.442695
    %v2435 = vpow.pop %v2434
    %v2436 = vmul.f32 %v2412, 1.442695
    %v2437 = vpow.pop %v2436
    %v2438 = vmul.f32 %v2413, 1.442695
    %v2439 = vpow.pop %v2438
    %v2440 = vmul.f32 %v2414, 1.442695
    %v2441 = vpow.pop %v2440
    %v2442 = vmul.f32 %v2415, 1.442695
    %v2443 = vpow.pop %v2442
    %v2444 = vmul.f32 %v2416, 1.442695
    %v2445 = vpow.pop %v2444
    %v2446 = vmul.f32 %v2417, 1.442695
    %v2447 = vpow.pop %v2446
    %v2448 = vmul.f32 %v2418, 1.442695
    %v2449 = vpow.pop %v2448
    %v2450 = vmul.f32 %v2419, 1.442695
    %v2451 = vpow.pop %v2450
    %v2452 = vsel %vm754, %v2421, 0.0
    %2453 = vadd.xlane.f32.xlu0 %v2452
    %v2454 = vpop.xlane.xlu0 %2453
    %v2455 = vsel %vm754, %v2423, 0.0
    %2456 = vadd.xlane.f32.xlu0 %v2455
    %v2457 = vpop.xlane.xlu0 %2456
    %v2458 = vsel %vm754, %v2425, 0.0
    %2459 = vadd.xlane.f32.xlu0 %v2458
    %v2460 = vpop.xlane.xlu0 %2459
    %v2461 = vsel %vm754, %v2427, 0.0
    %2462 = vadd.xlane.f32.xlu0 %v2461
    %v2463 = vpop.xlane.xlu0 %2462
    %v2464 = vsel %vm754, %v2429, 0.0
    %2465 = vadd.xlane.f32.xlu0 %v2464
    %v2466 = vpop.xlane.xlu0 %2465
    %v2467 = vsel %vm754, %v2431, 0.0
    %2468 = vadd.xlane.f32.xlu0 %v2467
    %v2469 = vpop.xlane.xlu0 %2468
    %v2470 = vsel %vm754, %v2433, 0.0
    %2471 = vadd.xlane.f32.xlu0 %v2470
    %v2472 = vpop.xlane.xlu0 %2471
    %v2473 = vsel %vm754, %v2435, 0.0
    %2474 = vadd.xlane.f32.xlu0 %v2473
    %v2475 = vpop.xlane.xlu0 %2474
    %v2476 = vsel %vm754, %v2437, 0.0
    %2477 = vadd.xlane.f32.xlu0 %v2476
    %v2478 = vpop.xlane.xlu0 %2477
    %v2479 = vsel %vm754, %v2439, 0.0
    %2480 = vadd.xlane.f32.xlu0 %v2479
    %v2481 = vpop.xlane.xlu0 %2480
    %v2482 = vsel %vm754, %v2441, 0.0
    %2483 = vadd.xlane.f32.xlu0 %v2482
    %v2484 = vpop.xlane.xlu0 %2483
    %v2485 = vsel %vm754, %v2443, 0.0
    %2486 = vadd.xlane.f32.xlu0 %v2485
    %v2487 = vpop.xlane.xlu0 %2486
    %v2488 = vsel %vm754, %v2445, 0.0
    %2489 = vadd.xlane.f32.xlu0 %v2488
    %v2490 = vpop.xlane.xlu0 %2489
    %v2491 = vsel %vm754, %v2447, 0.0
    %2492 = vadd.xlane.f32.xlu0 %v2491
    %v2493 = vpop.xlane.xlu0 %2492
    %v2494 = vsel %vm754, %v2449, 0.0
    %2495 = vadd.xlane.f32.xlu0 %v2494
    %v2496 = vpop.xlane.xlu0 %2495
    %v2497 = vsel %vm754, %v2451, 0.0
    %2498 = vadd.xlane.f32.xlu0 %v2497
    %v2499 = vpop.xlane.xlu0 %2498
    %v2500 = vrcp.pop %v2454
    %v2501 = vrcp.pop %v2457
    %v2502 = vrcp.pop %v2460
    %v2503 = vrcp.pop %v2463
    %v2504 = vrcp.pop %v2466
    %v2505 = vrcp.pop %v2469
    %v2506 = vrcp.pop %v2472
    %v2507 = vrcp.pop %v2475
    %v2508 = vrcp.pop %v2478
    %v2509 = vrcp.pop %v2481
    %v2510 = vrcp.pop %v2484
    %v2511 = vrcp.pop %v2487
    %v2512 = vrcp.pop %v2490
    %v2513 = vrcp.pop %v2493
    %v2514 = vrcp.pop %v2496
    %v2515 = vrcp.pop %v2499
    %v2516 = vmul.f32 %v2421, %v2500
    %v2517 = vmul.f32 %v2423, %v2501
    %v2518 = vmul.f32 %v2425, %v2502
    %v2519 = vmul.f32 %v2427, %v2503
    %v2520 = vmul.f32 %v2429, %v2504
    %v2521 = vmul.f32 %v2431, %v2505
    %v2522 = vmul.f32 %v2433, %v2506
    %v2523 = vmul.f32 %v2435, %v2507
    %v2524 = vmul.f32 %v2437, %v2508
    %v2525 = vmul.f32 %v2439, %v2509
    %v2526 = vmul.f32 %v2441, %v2510
    %v2527 = vmul.f32 %v2443, %v2511
    %v2528 = vmul.f32 %v2445, %v2512
    %v2529 = vmul.f32 %v2447, %v2513
    %v2530 = vmul.f32 %v2449, %v2514
    %v2531 = vmul.f32 %v2451, %v2515
    %2532 = vrot.lane.b32.xlu0 %v457, 64
    %v2533 = vpop.permute.xlu0 %2532
    %2534 = vrot.lane.b32.xlu0 %v458, 64
    %v2535 = vpop.permute.xlu0 %2534
    %v2539 = vsel %vm754, %v2516, 0
    %v2542 = vsel %vm754, %v2517, 0
    %2544 = vmatpush.msra.mxu0 0.0
    %2545 = vmatpush.msra.mxu0 0.0
    %2546 = vmatpush.msra.mxu0 0.0
    %2547 = vmatpush.msra.mxu0 0.0
    %2548 = vmatpush.msra.mxu0 0.0
    %2549 = vmatpush.msra.mxu0 0.0
    %2550 = vmatpush.msra.mxu0 0.0
    %2551 = vmatpush.msra.mxu0 0.0
    %2552 = vmatpush.msra.mxu0 0.0
    %2553 = vmatpush.msra.mxu0 0.0
    %2554 = vmatpush.msra.mxu0 0.0
    %2555 = vmatpush.msra.mxu0 0.0
    %2556 = vmatpush.msra.mxu0 0.0
    %2557 = vmatpush.msra.mxu0 0.0
    %2558 = vmatpush.msra.mxu0 %v2535
    %2559 = vmatpush.msra.mxu0 %v2533
    %2560 = vmatmul.f32.gmra.mxu0 %v2539
    %v2561 = vpop.f32.mrf.mxu0
    %v2562 = vadd.f32 0.0, %v2561
    %2563 = vmatmul.f32.gmra.mxu0 %v2542
    %v2564 = vpop.f32.mrf.mxu0
    %v2565 = vadd.f32 0.0, %v2564
    %2566 = vdwg.mxu0
    %2567 = vrot.lane.b32.xlu0 %v459, 64
    %v2568 = vpop.permute.xlu0 %2567
    %2569 = vrot.lane.b32.xlu0 %v460, 64
    %v2570 = vpop.permute.xlu0 %2569
    %v2574 = vsel %vm754, %v2518, 0
    %v2577 = vsel %vm754, %v2519, 0
    %2579 = vmatpush.msra.mxu0 0.0
    %2580 = vmatpush.msra.mxu0 0.0
    %2581 = vmatpush.msra.mxu0 0.0
    %2582 = vmatpush.msra.mxu0 0.0
    %2583 = vmatpush.msra.mxu0 0.0
    %2584 = vmatpush.msra.mxu0 0.0
    %2585 = vmatpush.msra.mxu0 0.0
    %2586 = vmatpush.msra.mxu0 0.0
    %2587 = vmatpush.msra.mxu0 0.0
    %2588 = vmatpush.msra.mxu0 0.0
    %2589 = vmatpush.msra.mxu0 0.0
    %2590 = vmatpush.msra.mxu0 0.0
    %2591 = vmatpush.msra.mxu0 0.0
    %2592 = vmatpush.msra.mxu0 0.0
    %2593 = vmatpush.msra.mxu0 %v2570
    %2594 = vmatpush.msra.mxu0 %v2568
    %2595 = vmatmul.f32.gmra.mxu0 %v2574
    %v2596 = vpop.f32.mrf.mxu0
    %v2597 = vadd.f32 0.0, %v2596
    %2598 = vmatmul.f32.gmra.mxu0 %v2577
    %v2599 = vpop.f32.mrf.mxu0
    %v2600 = vadd.f32 0.0, %v2599
    %2601 = vdwg.mxu0
    %2602 = vrot.lane.b32.xlu0 %v461, 64
    %v2603 = vpop.permute.xlu0 %2602
    %2604 = vrot.lane.b32.xlu0 %v462, 64
    %v2605 = vpop.permute.xlu0 %2604
    %v2609 = vsel %vm754, %v2520, 0
    %v2612 = vsel %vm754, %v2521, 0
    %2614 = vmatpush.msra.mxu0 0.0
    %2615 = vmatpush.msra.mxu0 0.0
    %2616 = vmatpush.msra.mxu0 0.0
    %2617 = vmatpush.msra.mxu0 0.0
    %2618 = vmatpush.msra.mxu0 0.0
    %2619 = vmatpush.msra.mxu0 0.0
    %2620 = vmatpush.msra.mxu0 0.0
    %2621 = vmatpush.msra.mxu0 0.0
    %2622 = vmatpush.msra.mxu0 0.0
    %2623 = vmatpush.msra.mxu0 0.0
    %2624 = vmatpush.msra.mxu0 0.0
    %2625 = vmatpush.msra.mxu0 0.0
    %2626 = vmatpush.msra.mxu0 0.0
    %2627 = vmatpush.msra.mxu0 0.0
    %2628 = vmatpush.msra.mxu0 %v2605
    %2629 = vmatpush.msra.mxu0 %v2603
    %2630 = vmatmul.f32.gmra.mxu0 %v2609
    %v2631 = vpop.f32.mrf.mxu0
    %v2632 = vadd.f32 0.0, %v2631
    %2633 = vmatmul.f32.gmra.mxu0 %v2612
    %v2634 = vpop.f32.mrf.mxu0
    %v2635 = vadd.f32 0.0, %v2634
    %2636 = vdwg.mxu0
    %2637 = vrot.lane.b32.xlu0 %v463, 64
    %v2638 = vpop.permute.xlu0 %2637
    %2639 = vrot.lane.b32.xlu0 %v464, 64
    %v2640 = vpop.permute.xlu0 %2639
    %v2644 = vsel %vm754, %v2522, 0
    %v2647 = vsel %vm754, %v2523, 0
    %2649 = vmatpush.msra.mxu0 0.0
    %2650 = vmatpush.msra.mxu0 0.0
    %2651 = vmatpush.msra.mxu0 0.0
    %2652 = vmatpush.msra.mxu0 0.0
    %2653 = vmatpush.msra.mxu0 0.0
    %2654 = vmatpush.msra.mxu0 0.0
    %2655 = vmatpush.msra.mxu0 0.0
    %2656 = vmatpush.msra.mxu0 0.0
    %2657 = vmatpush.msra.mxu0 0.0
    %2658 = vmatpush.msra.mxu0 0.0
    %2659 = vmatpush.msra.mxu0 0.0
    %2660 = vmatpush.msra.mxu0 0.0
    %2661 = vmatpush.msra.mxu0 0.0
    %2662 = vmatpush.msra.mxu0 0.0
    %2663 = vmatpush.msra.mxu0 %v2640
    %2664 = vmatpush.msra.mxu0 %v2638
    %2665 = vmatmul.f32.gmra.mxu0 %v2644
    %v2666 = vpop.f32.mrf.mxu0
    %v2667 = vadd.f32 0.0, %v2666
    %2668 = vmatmul.f32.gmra.mxu0 %v2647
    %v2669 = vpop.f32.mrf.mxu0
    %v2670 = vadd.f32 0.0, %v2669
    %2671 = vdwg.mxu0
    %2672 = vrot.lane.b32.xlu0 %v465, 64
    %v2673 = vpop.permute.xlu0 %2672
    %2674 = vrot.lane.b32.xlu0 %v466, 64
    %v2675 = vpop.permute.xlu0 %2674
    %v2679 = vsel %vm754, %v2524, 0
    %v2682 = vsel %vm754, %v2525, 0
    %2684 = vmatpush.msra.mxu0 0.0
    %2685 = vmatpush.msra.mxu0 0.0
    %2686 = vmatpush.msra.mxu0 0.0
    %2687 = vmatpush.msra.mxu0 0.0
    %2688 = vmatpush.msra.mxu0 0.0
    %2689 = vmatpush.msra.mxu0 0.0
    %2690 = vmatpush.msra.mxu0 0.0
    %2691 = vmatpush.msra.mxu0 0.0
    %2692 = vmatpush.msra.mxu0 0.0
    %2693 = vmatpush.msra.mxu0 0.0
    %2694 = vmatpush.msra.mxu0 0.0
    %2695 = vmatpush.msra.mxu0 0.0
    %2696 = vmatpush.msra.mxu0 0.0
    %2697 = vmatpush.msra.mxu0 0.0
    %2698 = vmatpush.msra.mxu0 %v2675
    %2699 = vmatpush.msra.mxu0 %v2673
    %2700 = vmatmul.f32.gmra.mxu0 %v2679
    %v2701 = vpop.f32.mrf.mxu0
    %v2702 = vadd.f32 0.0, %v2701
    %2703 = vmatmul.f32.gmra.mxu0 %v2682
    %v2704 = vpop.f32.mrf.mxu0
    %v2705 = vadd.f32 0.0, %v2704
    %2706 = vdwg.mxu0
    %2707 = vrot.lane.b32.xlu0 %v467, 64
    %v2708 = vpop.permute.xlu0 %2707
    %2709 = vrot.lane.b32.xlu0 %v468, 64
    %v2710 = vpop.permute.xlu0 %2709
    %v2714 = vsel %vm754, %v2526, 0
    %v2717 = vsel %vm754, %v2527, 0
    %2719 = vmatpush.msra.mxu0 0.0
    %2720 = vmatpush.msra.mxu0 0.0
    %2721 = vmatpush.msra.mxu0 0.0
    %2722 = vmatpush.msra.mxu0 0.0
    %2723 = vmatpush.msra.mxu0 0.0
    %2724 = vmatpush.msra.mxu0 0.0
    %2725 = vmatpush.msra.mxu0 0.0
    %2726 = vmatpush.msra.mxu0 0.0
    %2727 = vmatpush.msra.mxu0 0.0
    %2728 = vmatpush.msra.mxu0 0.0
    %2729 = vmatpush.msra.mxu0 0.0
    %2730 = vmatpush.msra.mxu0 0.0
    %2731 = vmatpush.msra.mxu0 0.0
    %2732 = vmatpush.msra.mxu0 0.0
    %2733 = vmatpush.msra.mxu0 %v2710
    %2734 = vmatpush.msra.mxu0 %v2708
    %2735 = vmatmul.f32.gmra.mxu0 %v2714
    %v2736 = vpop.f32.mrf.mxu0
    %v2737 = vadd.f32 0.0, %v2736
    %2738 = vmatmul.f32.gmra.mxu0 %v2717
    %v2739 = vpop.f32.mrf.mxu0
    %v2740 = vadd.f32 0.0, %v2739
    %2741 = vdwg.mxu0
    %2742 = vrot.lane.b32.xlu0 %v469, 64
    %v2743 = vpop.permute.xlu0 %2742
    %2744 = vrot.lane.b32.xlu0 %v470, 64
    %v2745 = vpop.permute.xlu0 %2744
    %v2749 = vsel %vm754, %v2528, 0
    %v2752 = vsel %vm754, %v2529, 0
    %2754 = vmatpush.msra.mxu0 0.0
    %2755 = vmatpush.msra.mxu0 0.0
    %2756 = vmatpush.msra.mxu0 0.0
    %2757 = vmatpush.msra.mxu0 0.0
    %2758 = vmatpush.msra.mxu0 0.0
    %2759 = vmatpush.msra.mxu0 0.0
    %2760 = vmatpush.msra.mxu0 0.0
    %2761 = vmatpush.msra.mxu0 0.0
    %2762 = vmatpush.msra.mxu0 0.0
    %2763 = vmatpush.msra.mxu0 0.0
    %2764 = vmatpush.msra.mxu0 0.0
    %2765 = vmatpush.msra.mxu0 0.0
    %2766 = vmatpush.msra.mxu0 0.0
    %2767 = vmatpush.msra.mxu0 0.0
    %2768 = vmatpush.msra.mxu0 %v2745
    %2769 = vmatpush.msra.mxu0 %v2743
    %2770 = vmatmul.f32.gmra.mxu0 %v2749
    %v2771 = vpop.f32.mrf.mxu0
    %v2772 = vadd.f32 0.0, %v2771
    %2773 = vmatmul.f32.gmra.mxu0 %v2752
    %v2774 = vpop.f32.mrf.mxu0
    %v2775 = vadd.f32 0.0, %v2774
    %2776 = vdwg.mxu0
    %2777 = vrot.lane.b32.xlu0 %v471, 64
    %v2778 = vpop.permute.xlu0 %2777
    %2779 = vrot.lane.b32.xlu0 %v472, 64
    %v2780 = vpop.permute.xlu0 %2779
    %v2784 = vsel %vm754, %v2530, 0
    %v2787 = vsel %vm754, %v2531, 0
    %2789 = vmatpush.msra.mxu0 0.0
    %2790 = vmatpush.msra.mxu0 0.0
    %2791 = vmatpush.msra.mxu0 0.0
    %2792 = vmatpush.msra.mxu0 0.0
    %2793 = vmatpush.msra.mxu0 0.0
    %2794 = vmatpush.msra.mxu0 0.0
    %2795 = vmatpush.msra.mxu0 0.0
    %2796 = vmatpush.msra.mxu0 0.0
    %2797 = vmatpush.msra.mxu0 0.0
    %2798 = vmatpush.msra.mxu0 0.0
    %2799 = vmatpush.msra.mxu0 0.0
    %2800 = vmatpush.msra.mxu0 0.0
    %2801 = vmatpush.msra.mxu0 0.0
    %2802 = vmatpush.msra.mxu0 0.0
    %2803 = vmatpush.msra.mxu0 %v2780
    %2804 = vmatpush.msra.mxu0 %v2778
    %2805 = vmatmul.f32.gmra.mxu0 %v2784
    %v2806 = vpop.f32.mrf.mxu0
    %v2807 = vadd.f32 0.0, %v2806
    %2808 = vmatmul.f32.gmra.mxu0 %v2787
    %v2809 = vpop.f32.mrf.mxu0
    %v2810 = vadd.f32 0.0, %v2809
    %2811 = vdwg.mxu0
    %2828 = vrot.lane.b32.xlu0 %v2562, 64
    %v2829 = vpop.permute.xlu0 %2828
    %2830 = vrot.lane.b32.xlu0 %v2565, 64
    %v2831 = vpop.permute.xlu0 %2830
    %2832 = vrot.lane.b32.xlu0 %v2597, 64
    %v2833 = vpop.permute.xlu0 %2832
    %2834 = vrot.lane.b32.xlu0 %v2600, 64
    %v2835 = vpop.permute.xlu0 %2834
    %2836 = vrot.lane.b32.xlu0 %v2632, 64
    %v2837 = vpop.permute.xlu0 %2836
    %2838 = vrot.lane.b32.xlu0 %v2635, 64
    %v2839 = vpop.permute.xlu0 %2838
    %2840 = vrot.lane.b32.xlu0 %v2667, 64
    %v2841 = vpop.permute.xlu0 %2840
    %2842 = vrot.lane.b32.xlu0 %v2670, 64
    %v2843 = vpop.permute.xlu0 %2842
    %2844 = vrot.lane.b32.xlu0 %v2702, 64
    %v2845 = vpop.permute.xlu0 %2844
    %2846 = vrot.lane.b32.xlu0 %v2705, 64
    %v2847 = vpop.permute.xlu0 %2846
    %2848 = vrot.lane.b32.xlu0 %v2737, 64
    %v2849 = vpop.permute.xlu0 %2848
    %2850 = vrot.lane.b32.xlu0 %v2740, 64
    %v2851 = vpop.permute.xlu0 %2850
    %2852 = vrot.lane.b32.xlu0 %v2772, 64
    %v2853 = vpop.permute.xlu0 %2852
    %2854 = vrot.lane.b32.xlu0 %v2775, 64
    %v2855 = vpop.permute.xlu0 %2854
    %2856 = vrot.lane.b32.xlu0 %v2807, 64
    %v2857 = vpop.permute.xlu0 %2856
    %2858 = vrot.lane.b32.xlu0 %v2810, 64
    %v2859 = vpop.permute.xlu0 %2858
    %vm2876 = vcmask 785920
    %2877 = vst.msk [vmem:[#allocation2] sm:$0xff] %vm2876, %v2829
    %2878 = vst.msk [vmem:[#allocation2 + $0x8] sm:$0xff] %vm2876, %v2831
    %2879 = vst.msk [vmem:[#allocation2 + $0x10] sm:$0xff] %vm2876, %v2833
    %2880 = vst.msk [vmem:[#allocation2 + $0x18] sm:$0xff] %vm2876, %v2835
    %2881 = vst.msk [vmem:[#allocation2 + $0x20] sm:$0xff] %vm2876, %v2837
    %2882 = vst.msk [vmem:[#allocation2 + $0x28] sm:$0xff] %vm2876, %v2839
    %2883 = vst.msk [vmem:[#allocation2 + $0x30] sm:$0xff] %vm2876, %v2841
    %2884 = vst.msk [vmem:[#allocation2 + $0x38] sm:$0xff] %vm2876, %v2843
    %2885 = vst.msk [vmem:[#allocation2 + $0x40] sm:$0xff] %vm2876, %v2845
    %2886 = vst.msk [vmem:[#allocation2 + $0x48] sm:$0xff] %vm2876, %v2847
    %2887 = vst.msk [vmem:[#allocation2 + $0x50] sm:$0xff] %vm2876, %v2849
    %2888 = vst.msk [vmem:[#allocation2 + $0x58] sm:$0xff] %vm2876, %v2851
    %2889 = vst.msk [vmem:[#allocation2 + $0x60] sm:$0xff] %vm2876, %v2853
    %2890 = vst.msk [vmem:[#allocation2 + $0x68] sm:$0xff] %vm2876, %v2855
    %2891 = vst.msk [vmem:[#allocation2 + $0x70] sm:$0xff] %vm2876, %v2857
    %2892 = vst.msk [vmem:[#allocation2 + $0x78] sm:$0xff] %vm2876, %v2859
    %2893 = vrot.lane.b32.xlu0 %v232, 32
    %v2894 = vpop.permute.xlu0 %2893
    %2895 = vrot.lane.b32.xlu0 %v235, 32
    %v2896 = vpop.permute.xlu0 %2895
    %2897 = vrot.lane.b32.xlu0 %v441, 32
    %v2898 = vpop.permute.xlu0 %2897
    %2899 = vrot.lane.b32.xlu0 %v442, 32
    %v2900 = vpop.permute.xlu0 %2899
    %v2901 = vsel %vm473, %v2894, 0
    %v2903 = vsel %vm473, %v2896, 0
    %v2905 = vsel %vm473, %v2898, 0
    %v2907 = vsel %vm473, %v2900, 0
    %2909 = vmatpush.xpose.msra.mxu0 0.0
    %2910 = vmatpush.xpose.msra.mxu0 0.0
    %2911 = vmatpush.xpose.msra.mxu0 0.0
    %2912 = vmatpush.xpose.msra.mxu0 0.0
    %2913 = vmatpush.xpose.msra.mxu0 0.0
    %2914 = vmatpush.xpose.msra.mxu0 0.0
    %2915 = vmatpush.xpose.msra.mxu0 0.0
    %2916 = vmatpush.xpose.msra.mxu0 0.0
    %2917 = vmatpush.xpose.msra.mxu0 0.0
    %2918 = vmatpush.xpose.msra.mxu0 0.0
    %2919 = vmatpush.xpose.msra.mxu0 0.0
    %2920 = vmatpush.xpose.msra.mxu0 0.0
    %2921 = vmatpush.xpose.msra.mxu0 0.0
    %2922 = vmatpush.xpose.msra.mxu0 0.0
    %2923 = vmatpush.xpose.msra.mxu0 %v2907
    %2924 = vmatpush.xpose.msra.mxu0 %v2905
    %2925 = vmatmul.f32.gmra.mxu0 %v2901
    %v2926 = vpop.f32.mrf.mxu0
    %v2927 = vadd.f32 0.0, %v2926
    %2928 = vmatmul.f32.gmra.mxu0 %v2903
    %v2929 = vpop.f32.mrf.mxu0
    %v2930 = vadd.f32 0.0, %v2929
    %2931 = vdwg.mxu0
    %2932 = vrot.lane.b32.xlu0 %v238, 32
    %v2933 = vpop.permute.xlu0 %2932
    %2934 = vrot.lane.b32.xlu0 %v241, 32
    %v2935 = vpop.permute.xlu0 %2934
    %2936 = vrot.lane.b32.xlu0 %v443, 32
    %v2937 = vpop.permute.xlu0 %2936
    %2938 = vrot.lane.b32.xlu0 %v444, 32
    %v2939 = vpop.permute.xlu0 %2938
    %v2940 = vsel %vm473, %v2933, 0
    %v2942 = vsel %vm473, %v2935, 0
    %v2944 = vsel %vm473, %v2937, 0
    %v2946 = vsel %vm473, %v2939, 0
    %2948 = vmatpush.xpose.msra.mxu0 0.0
    %2949 = vmatpush.xpose.msra.mxu0 0.0
    %2950 = vmatpush.xpose.msra.mxu0 0.0
    %2951 = vmatpush.xpose.msra.mxu0 0.0
    %2952 = vmatpush.xpose.msra.mxu0 0.0
    %2953 = vmatpush.xpose.msra.mxu0 0.0
    %2954 = vmatpush.xpose.msra.mxu0 0.0
    %2955 = vmatpush.xpose.msra.mxu0 0.0
    %2956 = vmatpush.xpose.msra.mxu0 0.0
    %2957 = vmatpush.xpose.msra.mxu0 0.0
    %2958 = vmatpush.xpose.msra.mxu0 0.0
    %2959 = vmatpush.xpose.msra.mxu0 0.0
    %2960 = vmatpush.xpose.msra.mxu0 0.0
    %2961 = vmatpush.xpose.msra.mxu0 0.0
    %2962 = vmatpush.xpose.msra.mxu0 %v2946
    %2963 = vmatpush.xpose.msra.mxu0 %v2944
    %2964 = vmatmul.f32.gmra.mxu0 %v2940
    %v2965 = vpop.f32.mrf.mxu0
    %v2966 = vadd.f32 0.0, %v2965
    %2967 = vmatmul.f32.gmra.mxu0 %v2942
    %v2968 = vpop.f32.mrf.mxu0
    %v2969 = vadd.f32 0.0, %v2968
    %2970 = vdwg.mxu0
    %2971 = vrot.lane.b32.xlu0 %v244, 32
    %v2972 = vpop.permute.xlu0 %2971
    %2973 = vrot.lane.b32.xlu0 %v247, 32
    %v2974 = vpop.permute.xlu0 %2973
    %2975 = vrot.lane.b32.xlu0 %v445, 32
    %v2976 = vpop.permute.xlu0 %2975
    %2977 = vrot.lane.b32.xlu0 %v446, 32
    %v2978 = vpop.permute.xlu0 %2977
    %v2979 = vsel %vm473, %v2972, 0
    %v2981 = vsel %vm473, %v2974, 0
    %v2983 = vsel %vm473, %v2976, 0
    %v2985 = vsel %vm473, %v2978, 0
    %2987 = vmatpush.xpose.msra.mxu0 0.0
    %2988 = vmatpush.xpose.msra.mxu0 0.0
    %2989 = vmatpush.xpose.msra.mxu0 0.0
    %2990 = vmatpush.xpose.msra.mxu0 0.0
    %2991 = vmatpush.xpose.msra.mxu0 0.0
    %2992 = vmatpush.xpose.msra.mxu0 0.0
    %2993 = vmatpush.xpose.msra.mxu0 0.0
    %2994 = vmatpush.xpose.msra.mxu0 0.0
    %2995 = vmatpush.xpose.msra.mxu0 0.0
    %2996 = vmatpush.xpose.msra.mxu0 0.0
    %2997 = vmatpush.xpose.msra.mxu0 0.0
    %2998 = vmatpush.xpose.msra.mxu0 0.0
    %2999 = vmatpush.xpose.msra.mxu0 0.0
    %3000 = vmatpush.xpose.msra.mxu0 0.0
    %3001 = vmatpush.xpose.msra.mxu0 %v2985
    %3002 = vmatpush.xpose.msra.mxu0 %v2983
    %3003 = vmatmul.f32.gmra.mxu0 %v2979
    %v3004 = vpop.f32.mrf.mxu0
    %v3005 = vadd.f32 0.0, %v3004
    %3006 = vmatmul.f32.gmra.mxu0 %v2981
    %v3007 = vpop.f32.mrf.mxu0
    %v3008 = vadd.f32 0.0, %v3007
    %3009 = vdwg.mxu0
    %3010 = vrot.lane.b32.xlu0 %v250, 32
    %v3011 = vpop.permute.xlu0 %3010
    %3012 = vrot.lane.b32.xlu0 %v253, 32
    %v3013 = vpop.permute.xlu0 %3012
    %3014 = vrot.lane.b32.xlu0 %v447, 32
    %v3015 = vpop.permute.xlu0 %3014
    %3016 = vrot.lane.b32.xlu0 %v448, 32
    %v3017 = vpop.permute.xlu0 %3016
    %v3018 = vsel %vm473, %v3011, 0
    %v3020 = vsel %vm473, %v3013, 0
    %v3022 = vsel %vm473, %v3015, 0
    %v3024 = vsel %vm473, %v3017, 0
    %3026 = vmatpush.xpose.msra.mxu0 0.0
    %3027 = vmatpush.xpose.msra.mxu0 0.0
    %3028 = vmatpush.xpose.msra.mxu0 0.0
    %3029 = vmatpush.xpose.msra.mxu0 0.0
    %3030 = vmatpush.xpose.msra.mxu0 0.0
    %3031 = vmatpush.xpose.msra.mxu0 0.0
    %3032 = vmatpush.xpose.msra.mxu0 0.0
    %3033 = vmatpush.xpose.msra.mxu0 0.0
    %3034 = vmatpush.xpose.msra.mxu0 0.0
    %3035 = vmatpush.xpose.msra.mxu0 0.0
    %3036 = vmatpush.xpose.msra.mxu0 0.0
    %3037 = vmatpush.xpose.msra.mxu0 0.0
    %3038 = vmatpush.xpose.msra.mxu0 0.0
    %3039 = vmatpush.xpose.msra.mxu0 0.0
    %3040 = vmatpush.xpose.msra.mxu0 %v3024
    %3041 = vmatpush.xpose.msra.mxu0 %v3022
    %3042 = vmatmul.f32.gmra.mxu0 %v3018
    %v3043 = vpop.f32.mrf.mxu0
    %v3044 = vadd.f32 0.0, %v3043
    %3045 = vmatmul.f32.gmra.mxu0 %v3020
    %v3046 = vpop.f32.mrf.mxu0
    %v3047 = vadd.f32 0.0, %v3046
    %3048 = vdwg.mxu0
    %3049 = vrot.lane.b32.xlu0 %v256, 32
    %v3050 = vpop.permute.xlu0 %3049
    %3051 = vrot.lane.b32.xlu0 %v259, 32
    %v3052 = vpop.permute.xlu0 %3051
    %3053 = vrot.lane.b32.xlu0 %v449, 32
    %v3054 = vpop.permute.xlu0 %3053
    %3055 = vrot.lane.b32.xlu0 %v450, 32
    %v3056 = vpop.permute.xlu0 %3055
    %v3057 = vsel %vm473, %v3050, 0
    %v3059 = vsel %vm473, %v3052, 0
    %v3061 = vsel %vm473, %v3054, 0
    %v3063 = vsel %vm473, %v3056, 0
    %3065 = vmatpush.xpose.msra.mxu0 0.0
    %3066 = vmatpush.xpose.msra.mxu0 0.0
    %3067 = vmatpush.xpose.msra.mxu0 0.0
    %3068 = vmatpush.xpose.msra.mxu0 0.0
    %3069 = vmatpush.xpose.msra.mxu0 0.0
    %3070 = vmatpush.xpose.msra.mxu0 0.0
    %3071 = vmatpush.xpose.msra.mxu0 0.0
    %3072 = vmatpush.xpose.msra.mxu0 0.0
    %3073 = vmatpush.xpose.msra.mxu0 0.0
    %3074 = vmatpush.xpose.msra.mxu0 0.0
    %3075 = vmatpush.xpose.msra.mxu0 0.0
    %3076 = vmatpush.xpose.msra.mxu0 0.0
    %3077 = vmatpush.xpose.msra.mxu0 0.0
    %3078 = vmatpush.xpose.msra.mxu0 0.0
    %3079 = vmatpush.xpose.msra.mxu0 %v3063
    %3080 = vmatpush.xpose.msra.mxu0 %v3061
    %3081 = vmatmul.f32.gmra.mxu0 %v3057
    %v3082 = vpop.f32.mrf.mxu0
    %v3083 = vadd.f32 0.0, %v3082
    %3084 = vmatmul.f32.gmra.mxu0 %v3059
    %v3085 = vpop.f32.mrf.mxu0
    %v3086 = vadd.f32 0.0, %v3085
    %3087 = vdwg.mxu0
    %3088 = vrot.lane.b32.xlu0 %v262, 32
    %v3089 = vpop.permute.xlu0 %3088
    %3090 = vrot.lane.b32.xlu0 %v265, 32
    %v3091 = vpop.permute.xlu0 %3090
    %3092 = vrot.lane.b32.xlu0 %v451, 32
    %v3093 = vpop.permute.xlu0 %3092
    %3094 = vrot.lane.b32.xlu0 %v452, 32
    %v3095 = vpop.permute.xlu0 %3094
    %v3096 = vsel %vm473, %v3089, 0
    %v3098 = vsel %vm473, %v3091, 0
    %v3100 = vsel %vm473, %v3093, 0
    %v3102 = vsel %vm473, %v3095, 0
    %3104 = vmatpush.xpose.msra.mxu0 0.0
    %3105 = vmatpush.xpose.msra.mxu0 0.0
    %3106 = vmatpush.xpose.msra.mxu0 0.0
    %3107 = vmatpush.xpose.msra.mxu0 0.0
    %3108 = vmatpush.xpose.msra.mxu0 0.0
    %3109 = vmatpush.xpose.msra.mxu0 0.0
    %3110 = vmatpush.xpose.msra.mxu0 0.0
    %3111 = vmatpush.xpose.msra.mxu0 0.0
    %3112 = vmatpush.xpose.msra.mxu0 0.0
    %3113 = vmatpush.xpose.msra.mxu0 0.0
    %3114 = vmatpush.xpose.msra.mxu0 0.0
    %3115 = vmatpush.xpose.msra.mxu0 0.0
    %3116 = vmatpush.xpose.msra.mxu0 0.0
    %3117 = vmatpush.xpose.msra.mxu0 0.0
    %3118 = vmatpush.xpose.msra.mxu0 %v3102
    %3119 = vmatpush.xpose.msra.mxu0 %v3100
    %3120 = vmatmul.f32.gmra.mxu0 %v3096
    %v3121 = vpop.f32.mrf.mxu0
    %v3122 = vadd.f32 0.0, %v3121
    %3123 = vmatmul.f32.gmra.mxu0 %v3098
    %v3124 = vpop.f32.mrf.mxu0
    %v3125 = vadd.f32 0.0, %v3124
    %3126 = vdwg.mxu0
    %3127 = vrot.lane.b32.xlu0 %v268, 32
    %v3128 = vpop.permute.xlu0 %3127
    %3129 = vrot.lane.b32.xlu0 %v271, 32
    %v3130 = vpop.permute.xlu0 %3129
    %3131 = vrot.lane.b32.xlu0 %v453, 32
    %v3132 = vpop.permute.xlu0 %3131
    %3133 = vrot.lane.b32.xlu0 %v454, 32
    %v3134 = vpop.permute.xlu0 %3133
    %v3135 = vsel %vm473, %v3128, 0
    %v3137 = vsel %vm473, %v3130, 0
    %v3139 = vsel %vm473, %v3132, 0
    %v3141 = vsel %vm473, %v3134, 0
    %3143 = vmatpush.xpose.msra.mxu0 0.0
    %3144 = vmatpush.xpose.msra.mxu0 0.0
    %3145 = vmatpush.xpose.msra.mxu0 0.0
    %3146 = vmatpush.xpose.msra.mxu0 0.0
    %3147 = vmatpush.xpose.msra.mxu0 0.0
    %3148 = vmatpush.xpose.msra.mxu0 0.0
    %3149 = vmatpush.xpose.msra.mxu0 0.0
    %3150 = vmatpush.xpose.msra.mxu0 0.0
    %3151 = vmatpush.xpose.msra.mxu0 0.0
    %3152 = vmatpush.xpose.msra.mxu0 0.0
    %3153 = vmatpush.xpose.msra.mxu0 0.0
    %3154 = vmatpush.xpose.msra.mxu0 0.0
    %3155 = vmatpush.xpose.msra.mxu0 0.0
    %3156 = vmatpush.xpose.msra.mxu0 0.0
    %3157 = vmatpush.xpose.msra.mxu0 %v3141
    %3158 = vmatpush.xpose.msra.mxu0 %v3139
    %3159 = vmatmul.f32.gmra.mxu0 %v3135
    %v3160 = vpop.f32.mrf.mxu0
    %v3161 = vadd.f32 0.0, %v3160
    %3162 = vmatmul.f32.gmra.mxu0 %v3137
    %v3163 = vpop.f32.mrf.mxu0
    %v3164 = vadd.f32 0.0, %v3163
    %3165 = vdwg.mxu0
    %3166 = vrot.lane.b32.xlu0 %v274, 32
    %v3167 = vpop.permute.xlu0 %3166
    %3168 = vrot.lane.b32.xlu0 %v277, 32
    %v3169 = vpop.permute.xlu0 %3168
    %3170 = vrot.lane.b32.xlu0 %v455, 32
    %v3171 = vpop.permute.xlu0 %3170
    %3172 = vrot.lane.b32.xlu0 %v456, 32
    %v3173 = vpop.permute.xlu0 %3172
    %v3174 = vsel %vm473, %v3167, 0
    %v3176 = vsel %vm473, %v3169, 0
    %v3178 = vsel %vm473, %v3171, 0
    %v3180 = vsel %vm473, %v3173, 0
    %3182 = vmatpush.xpose.msra.mxu0 0.0
    %3183 = vmatpush.xpose.msra.mxu0 0.0
    %3184 = vmatpush.xpose.msra.mxu0 0.0
    %3185 = vmatpush.xpose.msra.mxu0 0.0
    %3186 = vmatpush.xpose.msra.mxu0 0.0
    %3187 = vmatpush.xpose.msra.mxu0 0.0
    %3188 = vmatpush.xpose.msra.mxu0 0.0
    %3189 = vmatpush.xpose.msra.mxu0 0.0
    %3190 = vmatpush.xpose.msra.mxu0 0.0
    %3191 = vmatpush.xpose.msra.mxu0 0.0
    %3192 = vmatpush.xpose.msra.mxu0 0.0
    %3193 = vmatpush.xpose.msra.mxu0 0.0
    %3194 = vmatpush.xpose.msra.mxu0 0.0
    %3195 = vmatpush.xpose.msra.mxu0 0.0
    %3196 = vmatpush.xpose.msra.mxu0 %v3180
    %3197 = vmatpush.xpose.msra.mxu0 %v3178
    %3198 = vmatmul.f32.gmra.mxu0 %v3174
    %v3199 = vpop.f32.mrf.mxu0
    %v3200 = vadd.f32 0.0, %v3199
    %3201 = vmatmul.f32.gmra.mxu0 %v3176
    %v3202 = vpop.f32.mrf.mxu0
    %v3203 = vadd.f32 0.0, %v3202
    %3204 = vdwg.mxu0
    %v3205 = vsel %vm754, %v2927, -inf
    %3206 = vmax.xlane.f32.xlu0 %v3205
    %v3207 = vpop.xlane.xlu0 %3206
    %v3208 = vsel %vm754, %v2930, -inf
    %3209 = vmax.xlane.f32.xlu0 %v3208
    %v3210 = vpop.xlane.xlu0 %3209
    %v3211 = vsel %vm754, %v2966, -inf
    %3212 = vmax.xlane.f32.xlu0 %v3211
    %v3213 = vpop.xlane.xlu0 %3212
    %v3214 = vsel %vm754, %v2969, -inf
    %3215 = vmax.xlane.f32.xlu0 %v3214
    %v3216 = vpop.xlane.xlu0 %3215
    %v3217 = vsel %vm754, %v3005, -inf
    %3218 = vmax.xlane.f32.xlu0 %v3217
    %v3219 = vpop.xlane.xlu0 %3218
    %v3220 = vsel %vm754, %v3008, -inf
    %3221 = vmax.xlane.f32.xlu0 %v3220
    %v3222 = vpop.xlane.xlu0 %3221
    %v3223 = vsel %vm754, %v3044, -inf
    %3224 = vmax.xlane.f32.xlu0 %v3223
    %v3225 = vpop.xlane.xlu0 %3224
    %v3226 = vsel %vm754, %v3047, -inf
    %3227 = vmax.xlane.f32.xlu0 %v3226
    %v3228 = vpop.xlane.xlu0 %3227
    %v3229 = vsel %vm754, %v3083, -inf
    %3230 = vmax.xlane.f32.xlu0 %v3229
    %v3231 = vpop.xlane.xlu0 %3230
    %v3232 = vsel %vm754, %v3086, -inf
    %3233 = vmax.xlane.f32.xlu0 %v3232
    %v3234 = vpop.xlane.xlu0 %3233
    %v3235 = vsel %vm754, %v3122, -inf
    %3236 = vmax.xlane.f32.xlu0 %v3235
    %v3237 = vpop.xlane.xlu0 %3236
    %v3238 = vsel %vm754, %v3125, -inf
    %3239 = vmax.xlane.f32.xlu0 %v3238
    %v3240 = vpop.xlane.xlu0 %3239
    %v3241 = vsel %vm754, %v3161, -inf
    %3242 = vmax.xlane.f32.xlu0 %v3241
    %v3243 = vpop.xlane.xlu0 %3242
    %v3244 = vsel %vm754, %v3164, -inf
    %3245 = vmax.xlane.f32.xlu0 %v3244
    %v3246 = vpop.xlane.xlu0 %3245
    %v3247 = vsel %vm754, %v3200, -inf
    %3248 = vmax.xlane.f32.xlu0 %v3247
    %v3249 = vpop.xlane.xlu0 %3248
    %v3250 = vsel %vm754, %v3203, -inf
    %3251 = vmax.xlane.f32.xlu0 %v3250
    %v3252 = vpop.xlane.xlu0 %3251
    %v3253 = vsub.f32 %v2927, %v3207
    %v3254 = vsub.f32 %v2930, %v3210
    %v3255 = vsub.f32 %v2966, %v3213
    %v3256 = vsub.f32 %v2969, %v3216
    %v3257 = vsub.f32 %v3005, %v3219
    %v3258 = vsub.f32 %v3008, %v3222
    %v3259 = vsub.f32 %v3044, %v3225
    %v3260 = vsub.f32 %v3047, %v3228
    %v3261 = vsub.f32 %v3083, %v3231
    %v3262 = vsub.f32 %v3086, %v3234
    %v3263 = vsub.f32 %v3122, %v3237
    %v3264 = vsub.f32 %v3125, %v3240
    %v3265 = vsub.f32 %v3161, %v3243
    %v3266 = vsub.f32 %v3164, %v3246
    %v3267 = vsub.f32 %v3200, %v3249
    %v3268 = vsub.f32 %v3203, %v3252
    %v3269 = vmul.f32 %v3253, 1.442695
    %v3270 = vpow.pop %v3269
    %v3271 = vmul.f32 %v3254, 1.442695
    %v3272 = vpow.pop %v3271
    %v3273 = vmul.f32 %v3255, 1.442695
    %v3274 = vpow.pop %v3273
    %v3275 = vmul.f32 %v3256, 1.442695
    %v3276 = vpow.pop %v3275
    %v3277 = vmul.f32 %v3257, 1.442695
    %v3278 = vpow.pop %v3277
    %v3279 = vmul.f32 %v3258, 1.442695
    %v3280 = vpow.pop %v3279
    %v3281 = vmul.f32 %v3259, 1.442695
    %v3282 = vpow.pop %v3281
    %v3283 = vmul.f32 %v3260, 1.442695
    %v3284 = vpow.pop %v3283
    %v3285 = vmul.f32 %v3261, 1.442695
    %v3286 = vpow.pop %v3285
    %v3287 = vmul.f32 %v3262, 1.442695
    %v3288 = vpow.pop %v3287
    %v3289 = vmul.f32 %v3263, 1.442695
    %v3290 = vpow.pop %v3289
    %v3291 = vmul.f32 %v3264, 1.442695
    %v3292 = vpow.pop %v3291
    %v3293 = vmul.f32 %v3265, 1.442695
    %v3294 = vpow.pop %v3293
    %v3295 = vmul.f32 %v3266, 1.442695
    %v3296 = vpow.pop %v3295
    %v3297 = vmul.f32 %v3267, 1.442695
    %v3298 = vpow.pop %v3297
    %v3299 = vmul.f32 %v3268, 1.442695
    %v3300 = vpow.pop %v3299
    %v3301 = vsel %vm754, %v3270, 0.0
    %3302 = vadd.xlane.f32.xlu0 %v3301
    %v3303 = vpop.xlane.xlu0 %3302
    %v3304 = vsel %vm754, %v3272, 0.0
    %3305 = vadd.xlane.f32.xlu0 %v3304
    %v3306 = vpop.xlane.xlu0 %3305
    %v3307 = vsel %vm754, %v3274, 0.0
    %3308 = vadd.xlane.f32.xlu0 %v3307
    %v3309 = vpop.xlane.xlu0 %3308
    %v3310 = vsel %vm754, %v3276, 0.0
    %3311 = vadd.xlane.f32.xlu0 %v3310
    %v3312 = vpop.xlane.xlu0 %3311
    %v3313 = vsel %vm754, %v3278, 0.0
    %3314 = vadd.xlane.f32.xlu0 %v3313
    %v3315 = vpop.xlane.xlu0 %3314
    %v3316 = vsel %vm754, %v3280, 0.0
    %3317 = vadd.xlane.f32.xlu0 %v3316
    %v3318 = vpop.xlane.xlu0 %3317
    %v3319 = vsel %vm754, %v3282, 0.0
    %3320 = vadd.xlane.f32.xlu0 %v3319
    %v3321 = vpop.xlane.xlu0 %3320
    %v3322 = vsel %vm754, %v3284, 0.0
    %3323 = vadd.xlane.f32.xlu0 %v3322
    %v3324 = vpop.xlane.xlu0 %3323
    %v3325 = vsel %vm754, %v3286, 0.0
    %3326 = vadd.xlane.f32.xlu0 %v3325
    %v3327 = vpop.xlane.xlu0 %3326
    %v3328 = vsel %vm754, %v3288, 0.0
    %3329 = vadd.xlane.f32.xlu0 %v3328
    %v3330 = vpop.xlane.xlu0 %3329
    %v3331 = vsel %vm754, %v3290, 0.0
    %3332 = vadd.xlane.f32.xlu0 %v3331
    %v3333 = vpop.xlane.xlu0 %3332
    %v3334 = vsel %vm754, %v3292, 0.0
    %3335 = vadd.xlane.f32.xlu0 %v3334
    %v3336 = vpop.xlane.xlu0 %3335
    %v3337 = vsel %vm754, %v3294, 0.0
    %3338 = vadd.xlane.f32.xlu0 %v3337
    %v3339 = vpop.xlane.xlu0 %3338
    %v3340 = vsel %vm754, %v3296, 0.0
    %3341 = vadd.xlane.f32.xlu0 %v3340
    %v3342 = vpop.xlane.xlu0 %3341
    %v3343 = vsel %vm754, %v3298, 0.0
    %3344 = vadd.xlane.f32.xlu0 %v3343
    %v3345 = vpop.xlane.xlu0 %3344
    %v3346 = vsel %vm754, %v3300, 0.0
    %3347 = vadd.xlane.f32.xlu0 %v3346
    %v3348 = vpop.xlane.xlu0 %3347
    %v3349 = vrcp.pop %v3303
    %v3350 = vrcp.pop %v3306
    %v3351 = vrcp.pop %v3309
    %v3352 = vrcp.pop %v3312
    %v3353 = vrcp.pop %v3315
    %v3354 = vrcp.pop %v3318
    %v3355 = vrcp.pop %v3321
    %v3356 = vrcp.pop %v3324
    %v3357 = vrcp.pop %v3327
    %v3358 = vrcp.pop %v3330
    %v3359 = vrcp.pop %v3333
    %v3360 = vrcp.pop %v3336
    %v3361 = vrcp.pop %v3339
    %v3362 = vrcp.pop %v3342
    %v3363 = vrcp.pop %v3345
    %v3364 = vrcp.pop %v3348
    %v3365 = vmul.f32 %v3270, %v3349
    %v3366 = vmul.f32 %v3272, %v3350
    %v3367 = vmul.f32 %v3274, %v3351
    %v3368 = vmul.f32 %v3276, %v3352
    %v3369 = vmul.f32 %v3278, %v3353
    %v3370 = vmul.f32 %v3280, %v3354
    %v3371 = vmul.f32 %v3282, %v3355
    %v3372 = vmul.f32 %v3284, %v3356
    %v3373 = vmul.f32 %v3286, %v3357
    %v3374 = vmul.f32 %v3288, %v3358
    %v3375 = vmul.f32 %v3290, %v3359
    %v3376 = vmul.f32 %v3292, %v3360
    %v3377 = vmul.f32 %v3294, %v3361
    %v3378 = vmul.f32 %v3296, %v3362
    %v3379 = vmul.f32 %v3298, %v3363
    %v3380 = vmul.f32 %v3300, %v3364
    %3381 = vrot.lane.b32.xlu0 %v457, 32
    %v3382 = vpop.permute.xlu0 %3381
    %3383 = vrot.lane.b32.xlu0 %v458, 32
    %v3384 = vpop.permute.xlu0 %3383
    %v3388 = vsel %vm754, %v3365, 0
    %v3391 = vsel %vm754, %v3366, 0
    %3393 = vmatpush.msra.mxu0 0.0
    %3394 = vmatpush.msra.mxu0 0.0
    %3395 = vmatpush.msra.mxu0 0.0
    %3396 = vmatpush.msra.mxu0 0.0
    %3397 = vmatpush.msra.mxu0 0.0
    %3398 = vmatpush.msra.mxu0 0.0
    %3399 = vmatpush.msra.mxu0 0.0
    %3400 = vmatpush.msra.mxu0 0.0
    %3401 = vmatpush.msra.mxu0 0.0
    %3402 = vmatpush.msra.mxu0 0.0
    %3403 = vmatpush.msra.mxu0 0.0
    %3404 = vmatpush.msra.mxu0 0.0
    %3405 = vmatpush.msra.mxu0 0.0
    %3406 = vmatpush.msra.mxu0 0.0
    %3407 = vmatpush.msra.mxu0 %v3384
    %3408 = vmatpush.msra.mxu0 %v3382
    %3409 = vmatmul.f32.gmra.mxu0 %v3388
    %v3410 = vpop.f32.mrf.mxu0
    %v3411 = vadd.f32 0.0, %v3410
    %3412 = vmatmul.f32.gmra.mxu0 %v3391
    %v3413 = vpop.f32.mrf.mxu0
    %v3414 = vadd.f32 0.0, %v3413
    %3415 = vdwg.mxu0
    %3416 = vrot.lane.b32.xlu0 %v459, 32
    %v3417 = vpop.permute.xlu0 %3416
    %3418 = vrot.lane.b32.xlu0 %v460, 32
    %v3419 = vpop.permute.xlu0 %3418
    %v3423 = vsel %vm754, %v3367, 0
    %v3426 = vsel %vm754, %v3368, 0
    %3428 = vmatpush.msra.mxu0 0.0
    %3429 = vmatpush.msra.mxu0 0.0
    %3430 = vmatpush.msra.mxu0 0.0
    %3431 = vmatpush.msra.mxu0 0.0
    %3432 = vmatpush.msra.mxu0 0.0
    %3433 = vmatpush.msra.mxu0 0.0
    %3434 = vmatpush.msra.mxu0 0.0
    %3435 = vmatpush.msra.mxu0 0.0
    %3436 = vmatpush.msra.mxu0 0.0
    %3437 = vmatpush.msra.mxu0 0.0
    %3438 = vmatpush.msra.mxu0 0.0
    %3439 = vmatpush.msra.mxu0 0.0
    %3440 = vmatpush.msra.mxu0 0.0
    %3441 = vmatpush.msra.mxu0 0.0
    %3442 = vmatpush.msra.mxu0 %v3419
    %3443 = vmatpush.msra.mxu0 %v3417
    %3444 = vmatmul.f32.gmra.mxu0 %v3423
    %v3445 = vpop.f32.mrf.mxu0
    %v3446 = vadd.f32 0.0, %v3445
    %3447 = vmatmul.f32.gmra.mxu0 %v3426
    %v3448 = vpop.f32.mrf.mxu0
    %v3449 = vadd.f32 0.0, %v3448
    %3450 = vdwg.mxu0
    %3451 = vrot.lane.b32.xlu0 %v461, 32
    %v3452 = vpop.permute.xlu0 %3451
    %3453 = vrot.lane.b32.xlu0 %v462, 32
    %v3454 = vpop.permute.xlu0 %3453
    %v3458 = vsel %vm754, %v3369, 0
    %v3461 = vsel %vm754, %v3370, 0
    %3463 = vmatpush.msra.mxu0 0.0
    %3464 = vmatpush.msra.mxu0 0.0
    %3465 = vmatpush.msra.mxu0 0.0
    %3466 = vmatpush.msra.mxu0 0.0
    %3467 = vmatpush.msra.mxu0 0.0
    %3468 = vmatpush.msra.mxu0 0.0
    %3469 = vmatpush.msra.mxu0 0.0
    %3470 = vmatpush.msra.mxu0 0.0
    %3471 = vmatpush.msra.mxu0 0.0
    %3472 = vmatpush.msra.mxu0 0.0
    %3473 = vmatpush.msra.mxu0 0.0
    %3474 = vmatpush.msra.mxu0 0.0
    %3475 = vmatpush.msra.mxu0 0.0
    %3476 = vmatpush.msra.mxu0 0.0
    %3477 = vmatpush.msra.mxu0 %v3454
    %3478 = vmatpush.msra.mxu0 %v3452
    %3479 = vmatmul.f32.gmra.mxu0 %v3458
    %v3480 = vpop.f32.mrf.mxu0
    %v3481 = vadd.f32 0.0, %v3480
    %3482 = vmatmul.f32.gmra.mxu0 %v3461
    %v3483 = vpop.f32.mrf.mxu0
    %v3484 = vadd.f32 0.0, %v3483
    %3485 = vdwg.mxu0
    %3486 = vrot.lane.b32.xlu0 %v463, 32
    %v3487 = vpop.permute.xlu0 %3486
    %3488 = vrot.lane.b32.xlu0 %v464, 32
    %v3489 = vpop.permute.xlu0 %3488
    %v3493 = vsel %vm754, %v3371, 0
    %v3496 = vsel %vm754, %v3372, 0
    %3498 = vmatpush.msra.mxu0 0.0
    %3499 = vmatpush.msra.mxu0 0.0
    %3500 = vmatpush.msra.mxu0 0.0
    %3501 = vmatpush.msra.mxu0 0.0
    %3502 = vmatpush.msra.mxu0 0.0
    %3503 = vmatpush.msra.mxu0 0.0
    %3504 = vmatpush.msra.mxu0 0.0
    %3505 = vmatpush.msra.mxu0 0.0
    %3506 = vmatpush.msra.mxu0 0.0
    %3507 = vmatpush.msra.mxu0 0.0
    %3508 = vmatpush.msra.mxu0 0.0
    %3509 = vmatpush.msra.mxu0 0.0
    %3510 = vmatpush.msra.mxu0 0.0
    %3511 = vmatpush.msra.mxu0 0.0
    %3512 = vmatpush.msra.mxu0 %v3489
    %3513 = vmatpush.msra.mxu0 %v3487
    %3514 = vmatmul.f32.gmra.mxu0 %v3493
    %v3515 = vpop.f32.mrf.mxu0
    %v3516 = vadd.f32 0.0, %v3515
    %3517 = vmatmul.f32.gmra.mxu0 %v3496
    %v3518 = vpop.f32.mrf.mxu0
    %v3519 = vadd.f32 0.0, %v3518
    %3520 = vdwg.mxu0
    %3521 = vrot.lane.b32.xlu0 %v465, 32
    %v3522 = vpop.permute.xlu0 %3521
    %3523 = vrot.lane.b32.xlu0 %v466, 32
    %v3524 = vpop.permute.xlu0 %3523
    %v3528 = vsel %vm754, %v3373, 0
    %v3531 = vsel %vm754, %v3374, 0
    %3533 = vmatpush.msra.mxu0 0.0
    %3534 = vmatpush.msra.mxu0 0.0
    %3535 = vmatpush.msra.mxu0 0.0
    %3536 = vmatpush.msra.mxu0 0.0
    %3537 = vmatpush.msra.mxu0 0.0
    %3538 = vmatpush.msra.mxu0 0.0
    %3539 = vmatpush.msra.mxu0 0.0
    %3540 = vmatpush.msra.mxu0 0.0
    %3541 = vmatpush.msra.mxu0 0.0
    %3542 = vmatpush.msra.mxu0 0.0
    %3543 = vmatpush.msra.mxu0 0.0
    %3544 = vmatpush.msra.mxu0 0.0
    %3545 = vmatpush.msra.mxu0 0.0
    %3546 = vmatpush.msra.mxu0 0.0
    %3547 = vmatpush.msra.mxu0 %v3524
    %3548 = vmatpush.msra.mxu0 %v3522
    %3549 = vmatmul.f32.gmra.mxu0 %v3528
    %v3550 = vpop.f32.mrf.mxu0
    %v3551 = vadd.f32 0.0, %v3550
    %3552 = vmatmul.f32.gmra.mxu0 %v3531
    %v3553 = vpop.f32.mrf.mxu0
    %v3554 = vadd.f32 0.0, %v3553
    %3555 = vdwg.mxu0
    %3556 = vrot.lane.b32.xlu0 %v467, 32
    %v3557 = vpop.permute.xlu0 %3556
    %3558 = vrot.lane.b32.xlu0 %v468, 32
    %v3559 = vpop.permute.xlu0 %3558
    %v3563 = vsel %vm754, %v3375, 0
    %v3566 = vsel %vm754, %v3376, 0
    %3568 = vmatpush.msra.mxu0 0.0
    %3569 = vmatpush.msra.mxu0 0.0
    %3570 = vmatpush.msra.mxu0 0.0
    %3571 = vmatpush.msra.mxu0 0.0
    %3572 = vmatpush.msra.mxu0 0.0
    %3573 = vmatpush.msra.mxu0 0.0
    %3574 = vmatpush.msra.mxu0 0.0
    %3575 = vmatpush.msra.mxu0 0.0
    %3576 = vmatpush.msra.mxu0 0.0
    %3577 = vmatpush.msra.mxu0 0.0
    %3578 = vmatpush.msra.mxu0 0.0
    %3579 = vmatpush.msra.mxu0 0.0
    %3580 = vmatpush.msra.mxu0 0.0
    %3581 = vmatpush.msra.mxu0 0.0
    %3582 = vmatpush.msra.mxu0 %v3559
    %3583 = vmatpush.msra.mxu0 %v3557
    %3584 = vmatmul.f32.gmra.mxu0 %v3563
    %v3585 = vpop.f32.mrf.mxu0
    %v3586 = vadd.f32 0.0, %v3585
    %3587 = vmatmul.f32.gmra.mxu0 %v3566
    %v3588 = vpop.f32.mrf.mxu0
    %v3589 = vadd.f32 0.0, %v3588
    %3590 = vdwg.mxu0
    %3591 = vrot.lane.b32.xlu0 %v469, 32
    %v3592 = vpop.permute.xlu0 %3591
    %3593 = vrot.lane.b32.xlu0 %v470, 32
    %v3594 = vpop.permute.xlu0 %3593
    %v3598 = vsel %vm754, %v3377, 0
    %v3601 = vsel %vm754, %v3378, 0
    %3603 = vmatpush.msra.mxu0 0.0
    %3604 = vmatpush.msra.mxu0 0.0
    %3605 = vmatpush.msra.mxu0 0.0
    %3606 = vmatpush.msra.mxu0 0.0
    %3607 = vmatpush.msra.mxu0 0.0
    %3608 = vmatpush.msra.mxu0 0.0
    %3609 = vmatpush.msra.mxu0 0.0
    %3610 = vmatpush.msra.mxu0 0.0
    %3611 = vmatpush.msra.mxu0 0.0
    %3612 = vmatpush.msra.mxu0 0.0
    %3613 = vmatpush.msra.mxu0 0.0
    %3614 = vmatpush.msra.mxu0 0.0
    %3615 = vmatpush.msra.mxu0 0.0
    %3616 = vmatpush.msra.mxu0 0.0
    %3617 = vmatpush.msra.mxu0 %v3594
    %3618 = vmatpush.msra.mxu0 %v3592
    %3619 = vmatmul.f32.gmra.mxu0 %v3598
    %v3620 = vpop.f32.mrf.mxu0
    %v3621 = vadd.f32 0.0, %v3620
    %3622 = vmatmul.f32.gmra.mxu0 %v3601
    %v3623 = vpop.f32.mrf.mxu0
    %v3624 = vadd.f32 0.0, %v3623
    %3625 = vdwg.mxu0
    %3626 = vrot.lane.b32.xlu0 %v471, 32
    %v3627 = vpop.permute.xlu0 %3626
    %3628 = vrot.lane.b32.xlu0 %v472, 32
    %v3629 = vpop.permute.xlu0 %3628
    %v3633 = vsel %vm754, %v3379, 0
    %v3636 = vsel %vm754, %v3380, 0
    %3638 = vmatpush.msra.mxu0 0.0
    %3639 = vmatpush.msra.mxu0 0.0
    %3640 = vmatpush.msra.mxu0 0.0
    %3641 = vmatpush.msra.mxu0 0.0
    %3642 = vmatpush.msra.mxu0 0.0
    %3643 = vmatpush.msra.mxu0 0.0
    %3644 = vmatpush.msra.mxu0 0.0
    %3645 = vmatpush.msra.mxu0 0.0
    %3646 = vmatpush.msra.mxu0 0.0
    %3647 = vmatpush.msra.mxu0 0.0
    %3648 = vmatpush.msra.mxu0 0.0
    %3649 = vmatpush.msra.mxu0 0.0
    %3650 = vmatpush.msra.mxu0 0.0
    %3651 = vmatpush.msra.mxu0 0.0
    %3652 = vmatpush.msra.mxu0 %v3629
    %3653 = vmatpush.msra.mxu0 %v3627
    %3654 = vmatmul.f32.gmra.mxu0 %v3633
    %v3655 = vpop.f32.mrf.mxu0
    %v3656 = vadd.f32 0.0, %v3655
    %3657 = vmatmul.f32.gmra.mxu0 %v3636
    %v3658 = vpop.f32.mrf.mxu0
    %v3659 = vadd.f32 0.0, %v3658
    %3660 = vdwg.mxu0
    %3677 = vrot.lane.b32.xlu0 %v3411, 96
    %v3678 = vpop.permute.xlu0 %3677
    %3679 = vrot.lane.b32.xlu0 %v3414, 96
    %v3680 = vpop.permute.xlu0 %3679
    %3681 = vrot.lane.b32.xlu0 %v3446, 96
    %v3682 = vpop.permute.xlu0 %3681
    %3683 = vrot.lane.b32.xlu0 %v3449, 96
    %v3684 = vpop.permute.xlu0 %3683
    %3685 = vrot.lane.b32.xlu0 %v3481, 96
    %v3686 = vpop.permute.xlu0 %3685
    %3687 = vrot.lane.b32.xlu0 %v3484, 96
    %v3688 = vpop.permute.xlu0 %3687
    %3689 = vrot.lane.b32.xlu0 %v3516, 96
    %v3690 = vpop.permute.xlu0 %3689
    %3691 = vrot.lane.b32.xlu0 %v3519, 96
    %v3692 = vpop.permute.xlu0 %3691
    %3693 = vrot.lane.b32.xlu0 %v3551, 96
    %v3694 = vpop.permute.xlu0 %3693
    %3695 = vrot.lane.b32.xlu0 %v3554, 96
    %v3696 = vpop.permute.xlu0 %3695
    %3697 = vrot.lane.b32.xlu0 %v3586, 96
    %v3698 = vpop.permute.xlu0 %3697
    %3699 = vrot.lane.b32.xlu0 %v3589, 96
    %v3700 = vpop.permute.xlu0 %3699
    %3701 = vrot.lane.b32.xlu0 %v3621, 96
    %v3702 = vpop.permute.xlu0 %3701
    %3703 = vrot.lane.b32.xlu0 %v3624, 96
    %v3704 = vpop.permute.xlu0 %3703
    %3705 = vrot.lane.b32.xlu0 %v3656, 96
    %v3706 = vpop.permute.xlu0 %3705
    %3707 = vrot.lane.b32.xlu0 %v3659, 96
    %v3708 = vpop.permute.xlu0 %3707
    %vm3725 = vcmask 1048320
    %3726 = vst.msk [vmem:[#allocation2] sm:$0xff] %vm3725, %v3678
    %3727 = vst.msk [vmem:[#allocation2 + $0x8] sm:$0xff] %vm3725, %v3680
    %3728 = vst.msk [vmem:[#allocation2 + $0x10] sm:$0xff] %vm3725, %v3682
    %3729 = vst.msk [vmem:[#allocation2 + $0x18] sm:$0xff] %vm3725, %v3684
    %3730 = vst.msk [vmem:[#allocation2 + $0x20] sm:$0xff] %vm3725, %v3686
    %3731 = vst.msk [vmem:[#allocation2 + $0x28] sm:$0xff] %vm3725, %v3688
    %3732 = vst.msk [vmem:[#allocation2 + $0x30] sm:$0xff] %vm3725, %v3690
    %3733 = vst.msk [vmem:[#allocation2 + $0x38] sm:$0xff] %vm3725, %v3692
    %3734 = vst.msk [vmem:[#allocation2 + $0x40] sm:$0xff] %vm3725, %v3694
    %3735 = vst.msk [vmem:[#allocation2 + $0x48] sm:$0xff] %vm3725, %v3696
    %3736 = vst.msk [vmem:[#allocation2 + $0x50] sm:$0xff] %vm3725, %v3698
    %3737 = vst.msk [vmem:[#allocation2 + $0x58] sm:$0xff] %vm3725, %v3700
    %3738 = vst.msk [vmem:[#allocation2 + $0x60] sm:$0xff] %vm3725, %v3702
    %3739 = vst.msk [vmem:[#allocation2 + $0x68] sm:$0xff] %vm3725, %v3704
    %3740 = vst.msk [vmem:[#allocation2 + $0x70] sm:$0xff] %vm3725, %v3706
    %3741 = vst.msk [vmem:[#allocation2 + $0x78] sm:$0xff] %vm3725, %v3708
    %v3742 = vld [vmem:[#allocation2] sm:$0xff]
    %v3743 = vld [vmem:[#allocation2 + $0x8] sm:$0xff]
    %v3744 = vld [vmem:[#allocation2 + $0x10] sm:$0xff]
    %v3745 = vld [vmem:[#allocation2 + $0x18] sm:$0xff]
    %v3746 = vld [vmem:[#allocation2 + $0x20] sm:$0xff]
    %v3747 = vld [vmem:[#allocation2 + $0x28] sm:$0xff]
    %v3748 = vld [vmem:[#allocation2 + $0x30] sm:$0xff]
    %v3749 = vld [vmem:[#allocation2 + $0x38] sm:$0xff]
    %v3750 = vld [vmem:[#allocation2 + $0x40] sm:$0xff]
    %v3751 = vld [vmem:[#allocation2 + $0x48] sm:$0xff]
    %v3752 = vld [vmem:[#allocation2 + $0x50] sm:$0xff]
    %v3753 = vld [vmem:[#allocation2 + $0x58] sm:$0xff]
    %v3754 = vld [vmem:[#allocation2 + $0x60] sm:$0xff]
    %v3755 = vld [vmem:[#allocation2 + $0x68] sm:$0xff]
    %v3756 = vld [vmem:[#allocation2 + $0x70] sm:$0xff]
    %v3757 = vld [vmem:[#allocation2 + $0x78] sm:$0xff]
    %v3758 = vld [vmem:[#allocation11] sm:$0xff]
    %v3759 = vld [vmem:[#allocation11 + $0x8] sm:$0xff]
    %v3760 = vld [vmem:[#allocation11 + $0x10] sm:$0xff]
    %v3761 = vld [vmem:[#allocation11 + $0x18] sm:$0xff]
    %v3762 = vld [vmem:[#allocation11 + $0x20] sm:$0xff]
    %v3763 = vld [vmem:[#allocation11 + $0x28] sm:$0xff]
    %v3764 = vld [vmem:[#allocation11 + $0x30] sm:$0xff]
    %v3765 = vld [vmem:[#allocation11 + $0x38] sm:$0xff]
    %v3766 = vld [vmem:[#allocation11 + $0x40] sm:$0xff]
    %v3767 = vld [vmem:[#allocation11 + $0x48] sm:$0xff]
    %v3768 = vld [vmem:[#allocation11 + $0x50] sm:$0xff]
    %v3769 = vld [vmem:[#allocation11 + $0x58] sm:$0xff]
    %v3770 = vld [vmem:[#allocation11 + $0x60] sm:$0xff]
    %v3771 = vld [vmem:[#allocation11 + $0x68] sm:$0xff]
    %v3772 = vld [vmem:[#allocation11 + $0x70] sm:$0xff]
    %v3773 = vld [vmem:[#allocation11 + $0x78] sm:$0xff]
    %3774 = vmatpush.msra.mxu0 %v3773
    %3775 = vmatpush.msra.mxu0 %v3772
    %3776 = vmatpush.msra.mxu0 %v3771
    %3777 = vmatpush.msra.mxu0 %v3770
    %3778 = vmatpush.msra.mxu0 %v3769
    %3779 = vmatpush.msra.mxu0 %v3768
    %3780 = vmatpush.msra.mxu0 %v3767
    %3781 = vmatpush.msra.mxu0 %v3766
    %3782 = vmatpush.msra.mxu0 %v3765
    %3783 = vmatpush.msra.mxu0 %v3764
    %3784 = vmatpush.msra.mxu0 %v3763
    %3785 = vmatpush.msra.mxu0 %v3762
    %3786 = vmatpush.msra.mxu0 %v3761
    %3787 = vmatpush.msra.mxu0 %v3760
    %3788 = vmatpush.msra.mxu0 %v3759
    %3789 = vmatpush.msra.mxu0 %v3758
    %3790 = vmatmul.f32.gmra.mxu0 %v3742
    %v3791 = vpop.f32.mrf.mxu0
    %v3792 = vadd.f32 %v194, %v3791
    %3793 = vmatmul.f32.gmra.mxu0 %v3743
    %v3794 = vpop.f32.mrf.mxu0
    %v3795 = vadd.f32 %v194, %v3794
    %3796 = vmatmul.f32.gmra.mxu0 %v3744
    %v3797 = vpop.f32.mrf.mxu0
    %v3798 = vadd.f32 %v194, %v3797
    %3799 = vmatmul.f32.gmra.mxu0 %v3745
    %v3800 = vpop.f32.mrf.mxu0
    %v3801 = vadd.f32 %v194, %v3800
    %3802 = vmatmul.f32.gmra.mxu0 %v3746
    %v3803 = vpop.f32.mrf.mxu0
    %v3804 = vadd.f32 %v194, %v3803
    %3805 = vmatmul.f32.gmra.mxu0 %v3747
    %v3806 = vpop.f32.mrf.mxu0
    %v3807 = vadd.f32 %v194, %v3806
    %3808 = vmatmul.f32.gmra.mxu0 %v3748
    %v3809 = vpop.f32.mrf.mxu0
    %v3810 = vadd.f32 %v194, %v3809
    %3811 = vmatmul.f32.gmra.mxu0 %v3749
    %v3812 = vpop.f32.mrf.mxu0
    %v3813 = vadd.f32 %v194, %v3812
    %3814 = vmatmul.f32.gmra.mxu0 %v3750
    %v3815 = vpop.f32.mrf.mxu0
    %v3816 = vadd.f32 %v194, %v3815
    %3817 = vmatmul.f32.gmra.mxu0 %v3751
    %v3818 = vpop.f32.mrf.mxu0
    %v3819 = vadd.f32 %v194, %v3818
    %3820 = vmatmul.f32.gmra.mxu0 %v3752
    %v3821 = vpop.f32.mrf.mxu0
    %v3822 = vadd.f32 %v194, %v3821
    %3823 = vmatmul.f32.gmra.mxu0 %v3753
    %v3824 = vpop.f32.mrf.mxu0
    %v3825 = vadd.f32 %v194, %v3824
    %3826 = vmatmul.f32.gmra.mxu0 %v3754
    %v3827 = vpop.f32.mrf.mxu0
    %v3828 = vadd.f32 %v194, %v3827
    %3829 = vmatmul.f32.gmra.mxu0 %v3755
    %v3830 = vpop.f32.mrf.mxu0
    %v3831 = vadd.f32 %v194, %v3830
    %3832 = vmatmul.f32.gmra.mxu0 %v3756
    %v3833 = vpop.f32.mrf.mxu0
    %v3834 = vadd.f32 %v194, %v3833
    %3835 = vmatmul.f32.gmra.mxu0 %v3757
    %v3836 = vpop.f32.mrf.mxu0
    %v3837 = vadd.f32 %v194, %v3836
    %3838 = vdwg.mxu0
    %v3839 = vadd.f32 %v155, %v3792
    %v3840 = vadd.f32 %v156, %v3795
    %v3841 = vadd.f32 %v157, %v3798
    %v3842 = vadd.f32 %v158, %v3801
    %v3843 = vadd.f32 %v159, %v3804
    %v3844 = vadd.f32 %v160, %v3807
    %v3845 = vadd.f32 %v161, %v3810
    %v3846 = vadd.f32 %v162, %v3813
    %v3847 = vadd.f32 %v163, %v3816
    %v3848 = vadd.f32 %v164, %v3819
    %v3849 = vadd.f32 %v165, %v3822
    %v3850 = vadd.f32 %v166, %v3825
    %v3851 = vadd.f32 %v167, %v3828
    %v3852 = vadd.f32 %v168, %v3831
    %v3853 = vadd.f32 %v169, %v3834
    %v3854 = vadd.f32 %v170, %v3837
    %3855 = vadd.xlane.f32.xlu0 %v3839
    %v3856 = vpop.xlane.xlu0 %3855
    %3857 = vadd.xlane.f32.xlu0 %v3840
    %v3858 = vpop.xlane.xlu0 %3857
    %3859 = vadd.xlane.f32.xlu0 %v3841
    %v3860 = vpop.xlane.xlu0 %3859
    %3861 = vadd.xlane.f32.xlu0 %v3842
    %v3862 = vpop.xlane.xlu0 %3861
    %3863 = vadd.xlane.f32.xlu0 %v3843
    %v3864 = vpop.xlane.xlu0 %3863
    %3865 = vadd.xlane.f32.xlu0 %v3844
    %v3866 = vpop.xlane.xlu0 %3865
    %3867 = vadd.xlane.f32.xlu0 %v3845
    %v3868 = vpop.xlane.xlu0 %3867
    %3869 = vadd.xlane.f32.xlu0 %v3846
    %v3870 = vpop.xlane.xlu0 %3869
    %3871 = vadd.xlane.f32.xlu0 %v3847
    %v3872 = vpop.xlane.xlu0 %3871
    %3873 = vadd.xlane.f32.xlu0 %v3848
    %v3874 = vpop.xlane.xlu0 %3873
    %3875 = vadd.xlane.f32.xlu0 %v3849
    %v3876 = vpop.xlane.xlu0 %3875
    %3877 = vadd.xlane.f32.xlu0 %v3850
    %v3878 = vpop.xlane.xlu0 %3877
    %3879 = vadd.xlane.f32.xlu0 %v3851
    %v3880 = vpop.xlane.xlu0 %3879
    %3881 = vadd.xlane.f32.xlu0 %v3852
    %v3882 = vpop.xlane.xlu0 %3881
    %3883 = vadd.xlane.f32.xlu0 %v3853
    %v3884 = vpop.xlane.xlu0 %3883
    %3885 = vadd.xlane.f32.xlu0 %v3854
    %v3886 = vpop.xlane.xlu0 %3885
    %v3887 = vrcp.pop 128.0
    %v3888 = vmul.f32 128.0, %v3887
    %v3889 = vsub.f32 1.0, %v3888
    %v3890 = vmul.f32 %v3887, %v3889
    %v3891 = vadd.f32 %v3887, %v3890
    %vm3892 = vweird.f32 %v3887
    %v3893 = vsel %vm3892, %v3887, %v3891
    %v3894 = vmul.f32 %v3856, %v3893
    %v3895 = vmul.f32 %v3858, %v3893
    %v3896 = vmul.f32 %v3860, %v3893
    %v3897 = vmul.f32 %v3862, %v3893
    %v3898 = vmul.f32 %v3864, %v3893
    %v3899 = vmul.f32 %v3866, %v3893
    %v3900 = vmul.f32 %v3868, %v3893
    %v3901 = vmul.f32 %v3870, %v3893
    %v3902 = vmul.f32 %v3872, %v3893
    %v3903 = vmul.f32 %v3874, %v3893
    %v3904 = vmul.f32 %v3876, %v3893
    %v3905 = vmul.f32 %v3878, %v3893
    %v3906 = vmul.f32 %v3880, %v3893
    %v3907 = vmul.f32 %v3882, %v3893
    %v3908 = vmul.f32 %v3884, %v3893
    %v3909 = vmul.f32 %v3886, %v3893
    %v3910 = vsub.f32 %v3839, %v3894
    %v3911 = vsub.f32 %v3840, %v3895
    %v3912 = vsub.f32 %v3841, %v3896
    %v3913 = vsub.f32 %v3842, %v3897
    %v3914 = vsub.f32 %v3843, %v3898
    %v3915 = vsub.f32 %v3844, %v3899
    %v3916 = vsub.f32 %v3845, %v3900
    %v3917 = vsub.f32 %v3846, %v3901
    %v3918 = vsub.f32 %v3847, %v3902
    %v3919 = vsub.f32 %v3848, %v3903
    %v3920 = vsub.f32 %v3849, %v3904
    %v3921 = vsub.f32 %v3850, %v3905
    %v3922 = vsub.f32 %v3851, %v3906
    %v3923 = vsub.f32 %v3852, %v3907
    %v3924 = vsub.f32 %v3853, %v3908
    %v3925 = vsub.f32 %v3854, %v3909
    %v3926 = vmul.f32 %v3910, %v3910
    %v3927 = vmul.f32 %v3911, %v3911
    %v3928 = vmul.f32 %v3912, %v3912
    %v3929 = vmul.f32 %v3913, %v3913
    %v3930 = vmul.f32 %v3914, %v3914
    %v3931 = vmul.f32 %v3915, %v3915
    %v3932 = vmul.f32 %v3916, %v3916
    %v3933 = vmul.f32 %v3917, %v3917
    %v3934 = vmul.f32 %v3918, %v3918
    %v3935 = vmul.f32 %v3919, %v3919
    %v3936 = vmul.f32 %v3920, %v3920
    %v3937 = vmul.f32 %v3921, %v3921
    %v3938 = vmul.f32 %v3922, %v3922
    %v3939 = vmul.f32 %v3923, %v3923
    %v3940 = vmul.f32 %v3924, %v3924
    %v3941 = vmul.f32 %v3925, %v3925
    %3942 = vadd.xlane.f32.xlu0 %v3926
    %v3943 = vpop.xlane.xlu0 %3942
    %3944 = vadd.xlane.f32.xlu0 %v3927
    %v3945 = vpop.xlane.xlu0 %3944
    %3946 = vadd.xlane.f32.xlu0 %v3928
    %v3947 = vpop.xlane.xlu0 %3946
    %3948 = vadd.xlane.f32.xlu0 %v3929
    %v3949 = vpop.xlane.xlu0 %3948
    %3950 = vadd.xlane.f32.xlu0 %v3930
    %v3951 = vpop.xlane.xlu0 %3950
    %3952 = vadd.xlane.f32.xlu0 %v3931
    %v3953 = vpop.xlane.xlu0 %3952
    %3954 = vadd.xlane.f32.xlu0 %v3932
    %v3955 = vpop.xlane.xlu0 %3954
    %3956 = vadd.xlane.f32.xlu0 %v3933
    %v3957 = vpop.xlane.xlu0 %3956
    %3958 = vadd.xlane.f32.xlu0 %v3934
    %v3959 = vpop.xlane.xlu0 %3958
    %3960 = vadd.xlane.f32.xlu0 %v3935
    %v3961 = vpop.xlane.xlu0 %3960
    %3962 = vadd.xlane.f32.xlu0 %v3936
    %v3963 = vpop.xlane.xlu0 %3962
    %3964 = vadd.xlane.f32.xlu0 %v3937
    %v3965 = vpop.xlane.xlu0 %3964
    %3966 = vadd.xlane.f32.xlu0 %v3938
    %v3967 = vpop.xlane.xlu0 %3966
    %3968 = vadd.xlane.f32.xlu0 %v3939
    %v3969 = vpop.xlane.xlu0 %3968
    %3970 = vadd.xlane.f32.xlu0 %v3940
    %v3971 = vpop.xlane.xlu0 %3970
    %3972 = vadd.xlane.f32.xlu0 %v3941
    %v3973 = vpop.xlane.xlu0 %3972
    %v3974 = vmul.f32 %v3943, %v3893
    %v3975 = vmul.f32 %v3945, %v3893
    %v3976 = vmul.f32 %v3947, %v3893
    %v3977 = vmul.f32 %v3949, %v3893
    %v3978 = vmul.f32 %v3951, %v3893
    %v3979 = vmul.f32 %v3953, %v3893
    %v3980 = vmul.f32 %v3955, %v3893
    %v3981 = vmul.f32 %v3957, %v3893
    %v3982 = vmul.f32 %v3959, %v3893
    %v3983 = vmul.f32 %v3961, %v3893
    %v3984 = vmul.f32 %v3963, %v3893
    %v3985 = vmul.f32 %v3965, %v3893
    %v3986 = vmul.f32 %v3967, %v3893
    %v3987 = vmul.f32 %v3969, %v3893
    %v3988 = vmul.f32 %v3971, %v3893
    %v3989 = vmul.f32 %v3973, %v3893
    %v3990 = vadd.f32 %v3974, 1e-05
    %v3991 = vadd.f32 %v3975, 1e-05
    %v3992 = vadd.f32 %v3976, 1e-05
    %v3993 = vadd.f32 %v3977, 1e-05
    %v3994 = vadd.f32 %v3978, 1e-05
    %v3995 = vadd.f32 %v3979, 1e-05
    %v3996 = vadd.f32 %v3980, 1e-05
    %v3997 = vadd.f32 %v3981, 1e-05
    %v3998 = vadd.f32 %v3982, 1e-05
    %v3999 = vadd.f32 %v3983, 1e-05
    %v4000 = vadd.f32 %v3984, 1e-05
    %v4001 = vadd.f32 %v3985, 1e-05
    %v4002 = vadd.f32 %v3986, 1e-05
    %v4003 = vadd.f32 %v3987, 1e-05
    %v4004 = vadd.f32 %v3988, 1e-05
    %v4005 = vadd.f32 %v3989, 1e-05
    %v4006 = vrsqrt.pop %v3990
    %v4007 = vmul.f32 %v4006, %v3990
    %v4008 = vmul.f32 %v4007, %v4006
    %v4009 = vmul.f32 0.5, %v4008
    %v4010 = vsub.f32 1.5, %v4009
    %v4011 = vmul.f32 %v4006, %v4010
    %vm4012 = vweird.f32 %v3990
    %vm4013 = vweird.f32 %v4006
    %vm4014 = vmor %vm4012, %vm4013
    %v4015 = vsel %vm4014, %v4006, %v4011
    %v4016 = vrsqrt.pop %v3991
    %v4017 = vmul.f32 %v4016, %v3991
    %v4018 = vmul.f32 %v4017, %v4016
    %v4019 = vmul.f32 0.5, %v4018
    %v4020 = vsub.f32 1.5, %v4019
    %v4021 = vmul.f32 %v4016, %v4020
    %vm4022 = vweird.f32 %v3991
    %vm4023 = vweird.f32 %v4016
    %vm4024 = vmor %vm4022, %vm4023
    %v4025 = vsel %vm4024, %v4016, %v4021
    %v4026 = vrsqrt.pop %v3992
    %v4027 = vmul.f32 %v4026, %v3992
    %v4028 = vmul.f32 %v4027, %v4026
    %v4029 = vmul.f32 0.5, %v4028
    %v4030 = vsub.f32 1.5, %v4029
    %v4031 = vmul.f32 %v4026, %v4030
    %vm4032 = vweird.f32 %v3992
    %vm4033 = vweird.f32 %v4026
    %vm4034 = vmor %vm4032, %vm4033
    %v4035 = vsel %vm4034, %v4026, %v4031
    %v4036 = vrsqrt.pop %v3993
    %v4037 = vmul.f32 %v4036, %v3993
    %v4038 = vmul.f32 %v4037, %v4036
    %v4039 = vmul.f32 0.5, %v4038
    %v4040 = vsub.f32 1.5, %v4039
    %v4041 = vmul.f32 %v4036, %v4040
    %vm4042 = vweird.f32 %v3993
    %vm4043 = vweird.f32 %v4036
    %vm4044 = vmor %vm4042, %vm4043
    %v4045 = vsel %vm4044, %v4036, %v4041
    %v4046 = vrsqrt.pop %v3994
    %v4047 = vmul.f32 %v4046, %v3994
    %v4048 = vmul.f32 %v4047, %v4046
    %v4049 = vmul.f32 0.5, %v4048
    %v4050 = vsub.f32 1.5, %v4049
    %v4051 = vmul.f32 %v4046, %v4050
    %vm4052 = vweird.f32 %v3994
    %vm4053 = vweird.f32 %v4046
    %vm4054 = vmor %vm4052, %vm4053
    %v4055 = vsel %vm4054, %v4046, %v4051
    %v4056 = vrsqrt.pop %v3995
    %v4057 = vmul.f32 %v4056, %v3995
    %v4058 = vmul.f32 %v4057, %v4056
    %v4059 = vmul.f32 0.5, %v4058
    %v4060 = vsub.f32 1.5, %v4059
    %v4061 = vmul.f32 %v4056, %v4060
    %vm4062 = vweird.f32 %v3995
    %vm4063 = vweird.f32 %v4056
    %vm4064 = vmor %vm4062, %vm4063
    %v4065 = vsel %vm4064, %v4056, %v4061
    %v4066 = vrsqrt.pop %v3996
    %v4067 = vmul.f32 %v4066, %v3996
    %v4068 = vmul.f32 %v4067, %v4066
    %v4069 = vmul.f32 0.5, %v4068
    %v4070 = vsub.f32 1.5, %v4069
    %v4071 = vmul.f32 %v4066, %v4070
    %vm4072 = vweird.f32 %v3996
    %vm4073 = vweird.f32 %v4066
    %vm4074 = vmor %vm4072, %vm4073
    %v4075 = vsel %vm4074, %v4066, %v4071
    %v4076 = vrsqrt.pop %v3997
    %v4077 = vmul.f32 %v4076, %v3997
    %v4078 = vmul.f32 %v4077, %v4076
    %v4079 = vmul.f32 0.5, %v4078
    %v4080 = vsub.f32 1.5, %v4079
    %v4081 = vmul.f32 %v4076, %v4080
    %vm4082 = vweird.f32 %v3997
    %vm4083 = vweird.f32 %v4076
    %vm4084 = vmor %vm4082, %vm4083
    %v4085 = vsel %vm4084, %v4076, %v4081
    %v4086 = vrsqrt.pop %v3998
    %v4087 = vmul.f32 %v4086, %v3998
    %v4088 = vmul.f32 %v4087, %v4086
    %v4089 = vmul.f32 0.5, %v4088
    %v4090 = vsub.f32 1.5, %v4089
    %v4091 = vmul.f32 %v4086, %v4090
    %vm4092 = vweird.f32 %v3998
    %vm4093 = vweird.f32 %v4086
    %vm4094 = vmor %vm4092, %vm4093
    %v4095 = vsel %vm4094, %v4086, %v4091
    %v4096 = vrsqrt.pop %v3999
    %v4097 = vmul.f32 %v4096, %v3999
    %v4098 = vmul.f32 %v4097, %v4096
    %v4099 = vmul.f32 0.5, %v4098
    %v4100 = vsub.f32 1.5, %v4099
    %v4101 = vmul.f32 %v4096, %v4100
    %vm4102 = vweird.f32 %v3999
    %vm4103 = vweird.f32 %v4096
    %vm4104 = vmor %vm4102, %vm4103
    %v4105 = vsel %vm4104, %v4096, %v4101
    %v4106 = vrsqrt.pop %v4000
    %v4107 = vmul.f32 %v4106, %v4000
    %v4108 = vmul.f32 %v4107, %v4106
    %v4109 = vmul.f32 0.5, %v4108
    %v4110 = vsub.f32 1.5, %v4109
    %v4111 = vmul.f32 %v4106, %v4110
    %vm4112 = vweird.f32 %v4000
    %vm4113 = vweird.f32 %v4106
    %vm4114 = vmor %vm4112, %vm4113
    %v4115 = vsel %vm4114, %v4106, %v4111
    %v4116 = vrsqrt.pop %v4001
    %v4117 = vmul.f32 %v4116, %v4001
    %v4118 = vmul.f32 %v4117, %v4116
    %v4119 = vmul.f32 0.5, %v4118
    %v4120 = vsub.f32 1.5, %v4119
    %v4121 = vmul.f32 %v4116, %v4120
    %vm4122 = vweird.f32 %v4001
    %vm4123 = vweird.f32 %v4116
    %vm4124 = vmor %vm4122, %vm4123
    %v4125 = vsel %vm4124, %v4116, %v4121
    %v4126 = vrsqrt.pop %v4002
    %v4127 = vmul.f32 %v4126, %v4002
    %v4128 = vmul.f32 %v4127, %v4126
    %v4129 = vmul.f32 0.5, %v4128
    %v4130 = vsub.f32 1.5, %v4129
    %v4131 = vmul.f32 %v4126, %v4130
    %vm4132 = vweird.f32 %v4002
    %vm4133 = vweird.f32 %v4126
    %vm4134 = vmor %vm4132, %vm4133
    %v4135 = vsel %vm4134, %v4126, %v4131
    %v4136 = vrsqrt.pop %v4003
    %v4137 = vmul.f32 %v4136, %v4003
    %v4138 = vmul.f32 %v4137, %v4136
    %v4139 = vmul.f32 0.5, %v4138
    %v4140 = vsub.f32 1.5, %v4139
    %v4141 = vmul.f32 %v4136, %v4140
    %vm4142 = vweird.f32 %v4003
    %vm4143 = vweird.f32 %v4136
    %vm4144 = vmor %vm4142, %vm4143
    %v4145 = vsel %vm4144, %v4136, %v4141
    %v4146 = vrsqrt.pop %v4004
    %v4147 = vmul.f32 %v4146, %v4004
    %v4148 = vmul.f32 %v4147, %v4146
    %v4149 = vmul.f32 0.5, %v4148
    %v4150 = vsub.f32 1.5, %v4149
    %v4151 = vmul.f32 %v4146, %v4150
    %vm4152 = vweird.f32 %v4004
    %vm4153 = vweird.f32 %v4146
    %vm4154 = vmor %vm4152, %vm4153
    %v4155 = vsel %vm4154, %v4146, %v4151
    %v4156 = vrsqrt.pop %v4005
    %v4157 = vmul.f32 %v4156, %v4005
    %v4158 = vmul.f32 %v4157, %v4156
    %v4159 = vmul.f32 0.5, %v4158
    %v4160 = vsub.f32 1.5, %v4159
    %v4161 = vmul.f32 %v4156, %v4160
    %vm4162 = vweird.f32 %v4005
    %vm4163 = vweird.f32 %v4156
    %vm4164 = vmor %vm4162, %vm4163
    %v4165 = vsel %vm4164, %v4156, %v4161
    %v4166 = vmul.f32 %v3910, %v4015
    %v4167 = vmul.f32 %v3911, %v4025
    %v4168 = vmul.f32 %v3912, %v4035
    %v4169 = vmul.f32 %v3913, %v4045
    %v4170 = vmul.f32 %v3914, %v4055
    %v4171 = vmul.f32 %v3915, %v4065
    %v4172 = vmul.f32 %v3916, %v4075
    %v4173 = vmul.f32 %v3917, %v4085
    %v4174 = vmul.f32 %v3918, %v4095
    %v4175 = vmul.f32 %v3919, %v4105
    %v4176 = vmul.f32 %v3920, %v4115
    %v4177 = vmul.f32 %v3921, %v4125
    %v4178 = vmul.f32 %v3922, %v4135
    %v4179 = vmul.f32 %v3923, %v4145
    %v4180 = vmul.f32 %v3924, %v4155
    %v4181 = vmul.f32 %v3925, %v4165
    %v4182 = vmul.f32 %v4166, %v187
    %v4183 = vmul.f32 %v4167, %v187
    %v4184 = vmul.f32 %v4168, %v187
    %v4185 = vmul.f32 %v4169, %v187
    %v4186 = vmul.f32 %v4170, %v187
    %v4187 = vmul.f32 %v4171, %v187
    %v4188 = vmul.f32 %v4172, %v187
    %v4189 = vmul.f32 %v4173, %v187
    %v4190 = vmul.f32 %v4174, %v187
    %v4191 = vmul.f32 %v4175, %v187
    %v4192 = vmul.f32 %v4176, %v187
    %v4193 = vmul.f32 %v4177, %v187
    %v4194 = vmul.f32 %v4178, %v187
    %v4195 = vmul.f32 %v4179, %v187
    %v4196 = vmul.f32 %v4180, %v187
    %v4197 = vmul.f32 %v4181, %v187
    %v4198 = vadd.f32 %v4182, %v188
    %v4199 = vadd.f32 %v4183, %v188
    %v4200 = vadd.f32 %v4184, %v188
    %v4201 = vadd.f32 %v4185, %v188
    %v4202 = vadd.f32 %v4186, %v188
    %v4203 = vadd.f32 %v4187, %v188
    %v4204 = vadd.f32 %v4188, %v188
    %v4205 = vadd.f32 %v4189, %v188
    %v4206 = vadd.f32 %v4190, %v188
    %v4207 = vadd.f32 %v4191, %v188
    %v4208 = vadd.f32 %v4192, %v188
    %v4209 = vadd.f32 %v4193, %v188
    %v4210 = vadd.f32 %v4194, %v188
    %v4211 = vadd.f32 %v4195, %v188
    %v4212 = vadd.f32 %v4196, %v188
    %v4213 = vadd.f32 %v4197, %v188
    %v4214 = vld [vmem:[#allocation12] sm:$0xff]
    %v4215 = vld [vmem:[#allocation12 + $0x8] sm:$0xff]
    %v4216 = vld [vmem:[#allocation12 + $0x10] sm:$0xff]
    %v4217 = vld [vmem:[#allocation12 + $0x18] sm:$0xff]
    %v4218 = vld [vmem:[#allocation12 + $0x20] sm:$0xff]
    %v4219 = vld [vmem:[#allocation12 + $0x28] sm:$0xff]
    %v4220 = vld [vmem:[#allocation12 + $0x30] sm:$0xff]
    %v4221 = vld [vmem:[#allocation12 + $0x38] sm:$0xff]
    %v4222 = vld [vmem:[#allocation12 + $0x40] sm:$0xff]
    %v4223 = vld [vmem:[#allocation12 + $0x48] sm:$0xff]
    %v4224 = vld [vmem:[#allocation12 + $0x50] sm:$0xff]
    %v4225 = vld [vmem:[#allocation12 + $0x58] sm:$0xff]
    %v4226 = vld [vmem:[#allocation12 + $0x60] sm:$0xff]
    %v4227 = vld [vmem:[#allocation12 + $0x68] sm:$0xff]
    %v4228 = vld [vmem:[#allocation12 + $0x70] sm:$0xff]
    %v4229 = vld [vmem:[#allocation12 + $0x78] sm:$0xff]
    %v4230 = vld [vmem:[#allocation12 + $0x80] sm:$0xff]
    %v4231 = vld [vmem:[#allocation12 + $0x88] sm:$0xff]
    %v4232 = vld [vmem:[#allocation12 + $0x90] sm:$0xff]
    %v4233 = vld [vmem:[#allocation12 + $0x98] sm:$0xff]
    %v4234 = vld [vmem:[#allocation12 + $0xa0] sm:$0xff]
    %v4235 = vld [vmem:[#allocation12 + $0xa8] sm:$0xff]
    %v4236 = vld [vmem:[#allocation12 + $0xb0] sm:$0xff]
    %v4237 = vld [vmem:[#allocation12 + $0xb8] sm:$0xff]
    %v4238 = vld [vmem:[#allocation12 + $0xc0] sm:$0xff]
    %v4239 = vld [vmem:[#allocation12 + $0xc8] sm:$0xff]
    %v4240 = vld [vmem:[#allocation12 + $0xd0] sm:$0xff]
    %v4241 = vld [vmem:[#allocation12 + $0xd8] sm:$0xff]
    %v4242 = vld [vmem:[#allocation12 + $0xe0] sm:$0xff]
    %v4243 = vld [vmem:[#allocation12 + $0xe8] sm:$0xff]
    %v4244 = vld [vmem:[#allocation12 + $0xf0] sm:$0xff]
    %v4245 = vld [vmem:[#allocation12 + $0xf8] sm:$0xff]
    %v4247 = vperm.slane %v197, 0
    %v4248 = vperm.slane %v197, 1
    %4251 = vmatpush.msra.mxu0 %v4244
    %4252 = vmatpush.msra.mxu0 %v4242
    %4253 = vmatpush.msra.mxu0 %v4240
    %4254 = vmatpush.msra.mxu0 %v4238
    %4255 = vmatpush.msra.mxu0 %v4236
    %4256 = vmatpush.msra.mxu0 %v4234
    %4257 = vmatpush.msra.mxu0 %v4232
    %4258 = vmatpush.msra.mxu0 %v4230
    %4259 = vmatpush.msra.mxu0 %v4228
    %4260 = vmatpush.msra.mxu0 %v4226
    %4261 = vmatpush.msra.mxu0 %v4224
    %4262 = vmatpush.msra.mxu0 %v4222
    %4263 = vmatpush.msra.mxu0 %v4220
    %4264 = vmatpush.msra.mxu0 %v4218
    %4265 = vmatpush.msra.mxu0 %v4216
    %4266 = vmatpush.msra.mxu0 %v4214
    %4267 = vmatmul.f32.gmra.mxu0 %v4198
    %v4268 = vpop.f32.mrf.mxu0
    %v4269 = vadd.f32 %v4247, %v4268
    %4270 = vmatmul.f32.gmra.mxu0 %v4199
    %v4271 = vpop.f32.mrf.mxu0
    %v4272 = vadd.f32 %v4247, %v4271
    %4273 = vmatmul.f32.gmra.mxu0 %v4200
    %v4274 = vpop.f32.mrf.mxu0
    %v4275 = vadd.f32 %v4247, %v4274
    %4276 = vmatmul.f32.gmra.mxu0 %v4201
    %v4277 = vpop.f32.mrf.mxu0
    %v4278 = vadd.f32 %v4247, %v4277
    %4279 = vmatmul.f32.gmra.mxu0 %v4202
    %v4280 = vpop.f32.mrf.mxu0
    %v4281 = vadd.f32 %v4247, %v4280
    %4282 = vmatmul.f32.gmra.mxu0 %v4203
    %v4283 = vpop.f32.mrf.mxu0
    %v4284 = vadd.f32 %v4247, %v4283
    %4285 = vmatmul.f32.gmra.mxu0 %v4204
    %v4286 = vpop.f32.mrf.mxu0
    %v4287 = vadd.f32 %v4247, %v4286
    %4288 = vmatmul.f32.gmra.mxu0 %v4205
    %v4289 = vpop.f32.mrf.mxu0
    %v4290 = vadd.f32 %v4247, %v4289
    %4291 = vmatmul.f32.gmra.mxu0 %v4206
    %v4292 = vpop.f32.mrf.mxu0
    %v4293 = vadd.f32 %v4247, %v4292
    %4294 = vmatmul.f32.gmra.mxu0 %v4207
    %v4295 = vpop.f32.mrf.mxu0
    %v4296 = vadd.f32 %v4247, %v4295
    %4297 = vmatmul.f32.gmra.mxu0 %v4208
    %v4298 = vpop.f32.mrf.mxu0
    %v4299 = vadd.f32 %v4247, %v4298
    %4300 = vmatmul.f32.gmra.mxu0 %v4209
    %v4301 = vpop.f32.mrf.mxu0
    %v4302 = vadd.f32 %v4247, %v4301
    %4303 = vmatmul.f32.gmra.mxu0 %v4210
    %v4304 = vpop.f32.mrf.mxu0
    %v4305 = vadd.f32 %v4247, %v4304
    %4306 = vmatmul.f32.gmra.mxu0 %v4211
    %v4307 = vpop.f32.mrf.mxu0
    %v4308 = vadd.f32 %v4247, %v4307
    %4309 = vmatmul.f32.gmra.mxu0 %v4212
    %v4310 = vpop.f32.mrf.mxu0
    %v4311 = vadd.f32 %v4247, %v4310
    %4312 = vmatmul.f32.gmra.mxu0 %v4213
    %v4313 = vpop.f32.mrf.mxu0
    %v4314 = vadd.f32 %v4247, %v4313
    %4315 = vdwg.mxu0
    %4316 = vmatpush.msra.mxu0 %v4245
    %4317 = vmatpush.msra.mxu0 %v4243
    %4318 = vmatpush.msra.mxu0 %v4241
    %4319 = vmatpush.msra.mxu0 %v4239
    %4320 = vmatpush.msra.mxu0 %v4237
    %4321 = vmatpush.msra.mxu0 %v4235
    %4322 = vmatpush.msra.mxu0 %v4233
    %4323 = vmatpush.msra.mxu0 %v4231
    %4324 = vmatpush.msra.mxu0 %v4229
    %4325 = vmatpush.msra.mxu0 %v4227
    %4326 = vmatpush.msra.mxu0 %v4225
    %4327 = vmatpush.msra.mxu0 %v4223
    %4328 = vmatpush.msra.mxu0 %v4221
    %4329 = vmatpush.msra.mxu0 %v4219
    %4330 = vmatpush.msra.mxu0 %v4217
    %4331 = vmatpush.msra.mxu0 %v4215
    %4332 = vmatmul.f32.gmra.mxu0 %v4198
    %v4333 = vpop.f32.mrf.mxu0
    %v4334 = vadd.f32 %v4248, %v4333
    %4335 = vmatmul.f32.gmra.mxu0 %v4199
    %v4336 = vpop.f32.mrf.mxu0
    %v4337 = vadd.f32 %v4248, %v4336
    %4338 = vmatmul.f32.gmra.mxu0 %v4200
    %v4339 = vpop.f32.mrf.mxu0
    %v4340 = vadd.f32 %v4248, %v4339
    %4341 = vmatmul.f32.gmra.mxu0 %v4201
    %v4342 = vpop.f32.mrf.mxu0
    %v4343 = vadd.f32 %v4248, %v4342
    %4344 = vmatmul.f32.gmra.mxu0 %v4202
    %v4345 = vpop.f32.mrf.mxu0
    %v4346 = vadd.f32 %v4248, %v4345
    %4347 = vmatmul.f32.gmra.mxu0 %v4203
    %v4348 = vpop.f32.mrf.mxu0
    %v4349 = vadd.f32 %v4248, %v4348
    %4350 = vmatmul.f32.gmra.mxu0 %v4204
    %v4351 = vpop.f32.mrf.mxu0
    %v4352 = vadd.f32 %v4248, %v4351
    %4353 = vmatmul.f32.gmra.mxu0 %v4205
    %v4354 = vpop.f32.mrf.mxu0
    %v4355 = vadd.f32 %v4248, %v4354
    %4356 = vmatmul.f32.gmra.mxu0 %v4206
    %v4357 = vpop.f32.mrf.mxu0
    %v4358 = vadd.f32 %v4248, %v4357
    %4359 = vmatmul.f32.gmra.mxu0 %v4207
    %v4360 = vpop.f32.mrf.mxu0
    %v4361 = vadd.f32 %v4248, %v4360
    %4362 = vmatmul.f32.gmra.mxu0 %v4208
    %v4363 = vpop.f32.mrf.mxu0
    %v4364 = vadd.f32 %v4248, %v4363
    %4365 = vmatmul.f32.gmra.mxu0 %v4209
    %v4366 = vpop.f32.mrf.mxu0
    %v4367 = vadd.f32 %v4248, %v4366
    %4368 = vmatmul.f32.gmra.mxu0 %v4210
    %v4369 = vpop.f32.mrf.mxu0
    %v4370 = vadd.f32 %v4248, %v4369
    %4371 = vmatmul.f32.gmra.mxu0 %v4211
    %v4372 = vpop.f32.mrf.mxu0
    %v4373 = vadd.f32 %v4248, %v4372
    %4374 = vmatmul.f32.gmra.mxu0 %v4212
    %v4375 = vpop.f32.mrf.mxu0
    %v4376 = vadd.f32 %v4248, %v4375
    %4377 = vmatmul.f32.gmra.mxu0 %v4213
    %v4378 = vpop.f32.mrf.mxu0
    %v4379 = vadd.f32 %v4248, %v4378
    %4380 = vdwg.mxu0
    %v4381 = vmax.f32 %v4269, 0.0
    %v4382 = vmax.f32 %v4334, 0.0
    %v4383 = vmax.f32 %v4272, 0.0
    %v4384 = vmax.f32 %v4337, 0.0
    %v4385 = vmax.f32 %v4275, 0.0
    %v4386 = vmax.f32 %v4340, 0.0
    %v4387 = vmax.f32 %v4278, 0.0
    %v4388 = vmax.f32 %v4343, 0.0
    %v4389 = vmax.f32 %v4281, 0.0
    %v4390 = vmax.f32 %v4346, 0.0
    %v4391 = vmax.f32 %v4284, 0.0
    %v4392 = vmax.f32 %v4349, 0.0
    %v4393 = vmax.f32 %v4287, 0.0
    %v4394 = vmax.f32 %v4352, 0.0
    %v4395 = vmax.f32 %v4290, 0.0
    %v4396 = vmax.f32 %v4355, 0.0
    %v4397 = vmax.f32 %v4293, 0.0
    %v4398 = vmax.f32 %v4358, 0.0
    %v4399 = vmax.f32 %v4296, 0.0
    %v4400 = vmax.f32 %v4361, 0.0
    %v4401 = vmax.f32 %v4299, 0.0
    %v4402 = vmax.f32 %v4364, 0.0
    %v4403 = vmax.f32 %v4302, 0.0
    %v4404 = vmax.f32 %v4367, 0.0
    %v4405 = vmax.f32 %v4305, 0.0
    %v4406 = vmax.f32 %v4370, 0.0
    %v4407 = vmax.f32 %v4308, 0.0
    %v4408 = vmax.f32 %v4373, 0.0
    %v4409 = vmax.f32 %v4311, 0.0
    %v4410 = vmax.f32 %v4376, 0.0
    %v4411 = vmax.f32 %v4314, 0.0
    %v4412 = vmax.f32 %v4379, 0.0
    %v4413 = vld [vmem:[#allocation14] sm:$0xff]
    %v4414 = vld [vmem:[#allocation14 + $0x8] sm:$0xff]
    %v4415 = vld [vmem:[#allocation14 + $0x10] sm:$0xff]
    %v4416 = vld [vmem:[#allocation14 + $0x18] sm:$0xff]
    %v4417 = vld [vmem:[#allocation14 + $0x20] sm:$0xff]
    %v4418 = vld [vmem:[#allocation14 + $0x28] sm:$0xff]
    %v4419 = vld [vmem:[#allocation14 + $0x30] sm:$0xff]
    %v4420 = vld [vmem:[#allocation14 + $0x38] sm:$0xff]
    %v4421 = vld [vmem:[#allocation14 + $0x40] sm:$0xff]
    %v4422 = vld [vmem:[#allocation14 + $0x48] sm:$0xff]
    %v4423 = vld [vmem:[#allocation14 + $0x50] sm:$0xff]
    %v4424 = vld [vmem:[#allocation14 + $0x58] sm:$0xff]
    %v4425 = vld [vmem:[#allocation14 + $0x60] sm:$0xff]
    %v4426 = vld [vmem:[#allocation14 + $0x68] sm:$0xff]
    %v4427 = vld [vmem:[#allocation14 + $0x70] sm:$0xff]
    %v4428 = vld [vmem:[#allocation14 + $0x78] sm:$0xff]
    %v4429 = vld [vmem:[#allocation14 + $0x80] sm:$0xff]
    %v4430 = vld [vmem:[#allocation14 + $0x88] sm:$0xff]
    %v4431 = vld [vmem:[#allocation14 + $0x90] sm:$0xff]
    %v4432 = vld [vmem:[#allocation14 + $0x98] sm:$0xff]
    %v4433 = vld [vmem:[#allocation14 + $0xa0] sm:$0xff]
    %v4434 = vld [vmem:[#allocation14 + $0xa8] sm:$0xff]
    %v4435 = vld [vmem:[#allocation14 + $0xb0] sm:$0xff]
    %v4436 = vld [vmem:[#allocation14 + $0xb8] sm:$0xff]
    %v4437 = vld [vmem:[#allocation14 + $0xc0] sm:$0xff]
    %v4438 = vld [vmem:[#allocation14 + $0xc8] sm:$0xff]
    %v4439 = vld [vmem:[#allocation14 + $0xd0] sm:$0xff]
    %v4440 = vld [vmem:[#allocation14 + $0xd8] sm:$0xff]
    %v4441 = vld [vmem:[#allocation14 + $0xe0] sm:$0xff]
    %v4442 = vld [vmem:[#allocation14 + $0xe8] sm:$0xff]
    %v4443 = vld [vmem:[#allocation14 + $0xf0] sm:$0xff]
    %v4444 = vld [vmem:[#allocation14 + $0xf8] sm:$0xff]
    %4445 = vmatpush.msra.mxu0 %v4428
    %4446 = vmatpush.msra.mxu0 %v4427
    %4447 = vmatpush.msra.mxu0 %v4426
    %4448 = vmatpush.msra.mxu0 %v4425
    %4449 = vmatpush.msra.mxu0 %v4424
    %4450 = vmatpush.msra.mxu0 %v4423
    %4451 = vmatpush.msra.mxu0 %v4422
    %4452 = vmatpush.msra.mxu0 %v4421
    %4453 = vmatpush.msra.mxu0 %v4420
    %4454 = vmatpush.msra.mxu0 %v4419
    %4455 = vmatpush.msra.mxu0 %v4418
    %4456 = vmatpush.msra.mxu0 %v4417
    %4457 = vmatpush.msra.mxu0 %v4416
    %4458 = vmatpush.msra.mxu0 %v4415
    %4459 = vmatpush.msra.mxu0 %v4414
    %4460 = vmatpush.msra.mxu0 %v4413
    %4461 = vmatmul.f32.gmra.mxu0 %v4381
    %v4462 = vpop.f32.mrf.mxu0
    %v4463 = vadd.f32 %v195, %v4462
    %4464 = vmatmul.f32.gmra.mxu0 %v4383
    %v4465 = vpop.f32.mrf.mxu0
    %v4466 = vadd.f32 %v195, %v4465
    %4467 = vmatmul.f32.gmra.mxu0 %v4385
    %v4468 = vpop.f32.mrf.mxu0
    %v4469 = vadd.f32 %v195, %v4468
    %4470 = vmatmul.f32.gmra.mxu0 %v4387
    %v4471 = vpop.f32.mrf.mxu0
    %v4472 = vadd.f32 %v195, %v4471
    %4473 = vmatmul.f32.gmra.mxu0 %v4389
    %v4474 = vpop.f32.mrf.mxu0
    %v4475 = vadd.f32 %v195, %v4474
    %4476 = vmatmul.f32.gmra.mxu0 %v4391
    %v4477 = vpop.f32.mrf.mxu0
    %v4478 = vadd.f32 %v195, %v4477
    %4479 = vmatmul.f32.gmra.mxu0 %v4393
    %v4480 = vpop.f32.mrf.mxu0
    %v4481 = vadd.f32 %v195, %v4480
    %4482 = vmatmul.f32.gmra.mxu0 %v4395
    %v4483 = vpop.f32.mrf.mxu0
    %v4484 = vadd.f32 %v195, %v4483
    %4485 = vmatmul.f32.gmra.mxu0 %v4397
    %v4486 = vpop.f32.mrf.mxu0
    %v4487 = vadd.f32 %v195, %v4486
    %4488 = vmatmul.f32.gmra.mxu0 %v4399
    %v4489 = vpop.f32.mrf.mxu0
    %v4490 = vadd.f32 %v195, %v4489
    %4491 = vmatmul.f32.gmra.mxu0 %v4401
    %v4492 = vpop.f32.mrf.mxu0
    %v4493 = vadd.f32 %v195, %v4492
    %4494 = vmatmul.f32.gmra.mxu0 %v4403
    %v4495 = vpop.f32.mrf.mxu0
    %v4496 = vadd.f32 %v195, %v4495
    %4497 = vmatmul.f32.gmra.mxu0 %v4405
    %v4498 = vpop.f32.mrf.mxu0
    %v4499 = vadd.f32 %v195, %v4498
    %4500 = vmatmul.f32.gmra.mxu0 %v4407
    %v4501 = vpop.f32.mrf.mxu0
    %v4502 = vadd.f32 %v195, %v4501
    %4503 = vmatmul.f32.gmra.mxu0 %v4409
    %v4504 = vpop.f32.mrf.mxu0
    %v4505 = vadd.f32 %v195, %v4504
    %4506 = vmatmul.f32.gmra.mxu0 %v4411
    %v4507 = vpop.f32.mrf.mxu0
    %v4508 = vadd.f32 %v195, %v4507
    %4509 = vdwg.mxu0
    %4510 = vmatpush.msra.mxu0 %v4444
    %4511 = vmatpush.msra.mxu0 %v4443
    %4512 = vmatpush.msra.mxu0 %v4442
    %4513 = vmatpush.msra.mxu0 %v4441
    %4514 = vmatpush.msra.mxu0 %v4440
    %4515 = vmatpush.msra.mxu0 %v4439
    %4516 = vmatpush.msra.mxu0 %v4438
    %4517 = vmatpush.msra.mxu0 %v4437
    %4518 = vmatpush.msra.mxu0 %v4436
    %4519 = vmatpush.msra.mxu0 %v4435
    %4520 = vmatpush.msra.mxu0 %v4434
    %4521 = vmatpush.msra.mxu0 %v4433
    %4522 = vmatpush.msra.mxu0 %v4432
    %4523 = vmatpush.msra.mxu0 %v4431
    %4524 = vmatpush.msra.mxu0 %v4430
    %4525 = vmatpush.msra.mxu0 %v4429
    %4526 = vmatmul.f32.gmra.mxu0 %v4382
    %v4527 = vpop.f32.mrf.mxu0
    %v4528 = vadd.f32 %v4463, %v4527
    %4529 = vmatmul.f32.gmra.mxu0 %v4384
    %v4530 = vpop.f32.mrf.mxu0
    %v4531 = vadd.f32 %v4466, %v4530
    %4532 = vmatmul.f32.gmra.mxu0 %v4386
    %v4533 = vpop.f32.mrf.mxu0
    %v4534 = vadd.f32 %v4469, %v4533
    %4535 = vmatmul.f32.gmra.mxu0 %v4388
    %v4536 = vpop.f32.mrf.mxu0
    %v4537 = vadd.f32 %v4472, %v4536
    %4538 = vmatmul.f32.gmra.mxu0 %v4390
    %v4539 = vpop.f32.mrf.mxu0
    %v4540 = vadd.f32 %v4475, %v4539
    %4541 = vmatmul.f32.gmra.mxu0 %v4392
    %v4542 = vpop.f32.mrf.mxu0
    %v4543 = vadd.f32 %v4478, %v4542
    %4544 = vmatmul.f32.gmra.mxu0 %v4394
    %v4545 = vpop.f32.mrf.mxu0
    %v4546 = vadd.f32 %v4481, %v4545
    %4547 = vmatmul.f32.gmra.mxu0 %v4396
    %v4548 = vpop.f32.mrf.mxu0
    %v4549 = vadd.f32 %v4484, %v4548
    %4550 = vmatmul.f32.gmra.mxu0 %v4398
    %v4551 = vpop.f32.mrf.mxu0
    %v4552 = vadd.f32 %v4487, %v4551
    %4553 = vmatmul.f32.gmra.mxu0 %v4400
    %v4554 = vpop.f32.mrf.mxu0
    %v4555 = vadd.f32 %v4490, %v4554
    %4556 = vmatmul.f32.gmra.mxu0 %v4402
    %v4557 = vpop.f32.mrf.mxu0
    %v4558 = vadd.f32 %v4493, %v4557
    %4559 = vmatmul.f32.gmra.mxu0 %v4404
    %v4560 = vpop.f32.mrf.mxu0
    %v4561 = vadd.f32 %v4496, %v4560
    %4562 = vmatmul.f32.gmra.mxu0 %v4406
    %v4563 = vpop.f32.mrf.mxu0
    %v4564 = vadd.f32 %v4499, %v4563
    %4565 = vmatmul.f32.gmra.mxu0 %v4408
    %v4566 = vpop.f32.mrf.mxu0
    %v4567 = vadd.f32 %v4502, %v4566
    %4568 = vmatmul.f32.gmra.mxu0 %v4410
    %v4569 = vpop.f32.mrf.mxu0
    %v4570 = vadd.f32 %v4505, %v4569
    %4571 = vmatmul.f32.gmra.mxu0 %v4412
    %v4572 = vpop.f32.mrf.mxu0
    %v4573 = vadd.f32 %v4508, %v4572
    %4574 = vdwg.mxu0
    %v4575 = vadd.f32 %v4198, %v4528
    %v4576 = vadd.f32 %v4199, %v4531
    %v4577 = vadd.f32 %v4200, %v4534
    %v4578 = vadd.f32 %v4201, %v4537
    %v4579 = vadd.f32 %v4202, %v4540
    %v4580 = vadd.f32 %v4203, %v4543
    %v4581 = vadd.f32 %v4204, %v4546
    %v4582 = vadd.f32 %v4205, %v4549
    %v4583 = vadd.f32 %v4206, %v4552
    %v4584 = vadd.f32 %v4207, %v4555
    %v4585 = vadd.f32 %v4208, %v4558
    %v4586 = vadd.f32 %v4209, %v4561
    %v4587 = vadd.f32 %v4210, %v4564
    %v4588 = vadd.f32 %v4211, %v4567
    %v4589 = vadd.f32 %v4212, %v4570
    %v4590 = vadd.f32 %v4213, %v4573
    %4591 = vadd.xlane.f32.xlu0 %v4575
    %v4592 = vpop.xlane.xlu0 %4591
    %4593 = vadd.xlane.f32.xlu0 %v4576
    %v4594 = vpop.xlane.xlu0 %4593
    %4595 = vadd.xlane.f32.xlu0 %v4577
    %v4596 = vpop.xlane.xlu0 %4595
    %4597 = vadd.xlane.f32.xlu0 %v4578
    %v4598 = vpop.xlane.xlu0 %4597
    %4599 = vadd.xlane.f32.xlu0 %v4579
    %v4600 = vpop.xlane.xlu0 %4599
    %4601 = vadd.xlane.f32.xlu0 %v4580
    %v4602 = vpop.xlane.xlu0 %4601
    %4603 = vadd.xlane.f32.xlu0 %v4581
    %v4604 = vpop.xlane.xlu0 %4603
    %4605 = vadd.xlane.f32.xlu0 %v4582
    %v4606 = vpop.xlane.xlu0 %4605
    %4607 = vadd.xlane.f32.xlu0 %v4583
    %v4608 = vpop.xlane.xlu0 %4607
    %4609 = vadd.xlane.f32.xlu0 %v4584
    %v4610 = vpop.xlane.xlu0 %4609
    %4611 = vadd.xlane.f32.xlu0 %v4585
    %v4612 = vpop.xlane.xlu0 %4611
    %4613 = vadd.xlane.f32.xlu0 %v4586
    %v4614 = vpop.xlane.xlu0 %4613
    %4615 = vadd.xlane.f32.xlu0 %v4587
    %v4616 = vpop.xlane.xlu0 %4615
    %4617 = vadd.xlane.f32.xlu0 %v4588
    %v4618 = vpop.xlane.xlu0 %4617
    %4619 = vadd.xlane.f32.xlu0 %v4589
    %v4620 = vpop.xlane.xlu0 %4619
    %4621 = vadd.xlane.f32.xlu0 %v4590
    %v4622 = vpop.xlane.xlu0 %4621
    %v4623 = vmul.f32 %v4592, %v3893
    %v4624 = vmul.f32 %v4594, %v3893
    %v4625 = vmul.f32 %v4596, %v3893
    %v4626 = vmul.f32 %v4598, %v3893
    %v4627 = vmul.f32 %v4600, %v3893
    %v4628 = vmul.f32 %v4602, %v3893
    %v4629 = vmul.f32 %v4604, %v3893
    %v4630 = vmul.f32 %v4606, %v3893
    %v4631 = vmul.f32 %v4608, %v3893
    %v4632 = vmul.f32 %v4610, %v3893
    %v4633 = vmul.f32 %v4612, %v3893
    %v4634 = vmul.f32 %v4614, %v3893
    %v4635 = vmul.f32 %v4616, %v3893
    %v4636 = vmul.f32 %v4618, %v3893
    %v4637 = vmul.f32 %v4620, %v3893
    %v4638 = vmul.f32 %v4622, %v3893
    %v4639 = vsub.f32 %v4575, %v4623
    %v4640 = vsub.f32 %v4576, %v4624
    %v4641 = vsub.f32 %v4577, %v4625
    %v4642 = vsub.f32 %v4578, %v4626
    %v4643 = vsub.f32 %v4579, %v4627
    %v4644 = vsub.f32 %v4580, %v4628
    %v4645 = vsub.f32 %v4581, %v4629
    %v4646 = vsub.f32 %v4582, %v4630
    %v4647 = vsub.f32 %v4583, %v4631
    %v4648 = vsub.f32 %v4584, %v4632
    %v4649 = vsub.f32 %v4585, %v4633
    %v4650 = vsub.f32 %v4586, %v4634
    %v4651 = vsub.f32 %v4587, %v4635
    %v4652 = vsub.f32 %v4588, %v4636
    %v4653 = vsub.f32 %v4589, %v4637
    %v4654 = vsub.f32 %v4590, %v4638
    %v4655 = vmul.f32 %v4639, %v4639
    %v4656 = vmul.f32 %v4640, %v4640
    %v4657 = vmul.f32 %v4641, %v4641
    %v4658 = vmul.f32 %v4642, %v4642
    %v4659 = vmul.f32 %v4643, %v4643
    %v4660 = vmul.f32 %v4644, %v4644
    %v4661 = vmul.f32 %v4645, %v4645
    %v4662 = vmul.f32 %v4646, %v4646
    %v4663 = vmul.f32 %v4647, %v4647
    %v4664 = vmul.f32 %v4648, %v4648
    %v4665 = vmul.f32 %v4649, %v4649
    %v4666 = vmul.f32 %v4650, %v4650
    %v4667 = vmul.f32 %v4651, %v4651
    %v4668 = vmul.f32 %v4652, %v4652
    %v4669 = vmul.f32 %v4653, %v4653
    %v4670 = vmul.f32 %v4654, %v4654
    %4671 = vadd.xlane.f32.xlu0 %v4655
    %v4672 = vpop.xlane.xlu0 %4671
    %4673 = vadd.xlane.f32.xlu0 %v4656
    %v4674 = vpop.xlane.xlu0 %4673
    %4675 = vadd.xlane.f32.xlu0 %v4657
    %v4676 = vpop.xlane.xlu0 %4675
    %4677 = vadd.xlane.f32.xlu0 %v4658
    %v4678 = vpop.xlane.xlu0 %4677
    %4679 = vadd.xlane.f32.xlu0 %v4659
    %v4680 = vpop.xlane.xlu0 %4679
    %4681 = vadd.xlane.f32.xlu0 %v4660
    %v4682 = vpop.xlane.xlu0 %4681
    %4683 = vadd.xlane.f32.xlu0 %v4661
    %v4684 = vpop.xlane.xlu0 %4683
    %4685 = vadd.xlane.f32.xlu0 %v4662
    %v4686 = vpop.xlane.xlu0 %4685
    %4687 = vadd.xlane.f32.xlu0 %v4663
    %v4688 = vpop.xlane.xlu0 %4687
    %4689 = vadd.xlane.f32.xlu0 %v4664
    %v4690 = vpop.xlane.xlu0 %4689
    %4691 = vadd.xlane.f32.xlu0 %v4665
    %v4692 = vpop.xlane.xlu0 %4691
    %4693 = vadd.xlane.f32.xlu0 %v4666
    %v4694 = vpop.xlane.xlu0 %4693
    %4695 = vadd.xlane.f32.xlu0 %v4667
    %v4696 = vpop.xlane.xlu0 %4695
    %4697 = vadd.xlane.f32.xlu0 %v4668
    %v4698 = vpop.xlane.xlu0 %4697
    %4699 = vadd.xlane.f32.xlu0 %v4669
    %v4700 = vpop.xlane.xlu0 %4699
    %4701 = vadd.xlane.f32.xlu0 %v4670
    %v4702 = vpop.xlane.xlu0 %4701
    %v4703 = vmul.f32 %v4672, %v3893
    %v4704 = vmul.f32 %v4674, %v3893
    %v4705 = vmul.f32 %v4676, %v3893
    %v4706 = vmul.f32 %v4678, %v3893
    %v4707 = vmul.f32 %v4680, %v3893
    %v4708 = vmul.f32 %v4682, %v3893
    %v4709 = vmul.f32 %v4684, %v3893
    %v4710 = vmul.f32 %v4686, %v3893
    %v4711 = vmul.f32 %v4688, %v3893
    %v4712 = vmul.f32 %v4690, %v3893
    %v4713 = vmul.f32 %v4692, %v3893
    %v4714 = vmul.f32 %v4694, %v3893
    %v4715 = vmul.f32 %v4696, %v3893
    %v4716 = vmul.f32 %v4698, %v3893
    %v4717 = vmul.f32 %v4700, %v3893
    %v4718 = vmul.f32 %v4702, %v3893
    %v4719 = vadd.f32 %v4703, 1e-05
    %v4720 = vadd.f32 %v4704, 1e-05
    %v4721 = vadd.f32 %v4705, 1e-05
    %v4722 = vadd.f32 %v4706, 1e-05
    %v4723 = vadd.f32 %v4707, 1e-05
    %v4724 = vadd.f32 %v4708, 1e-05
    %v4725 = vadd.f32 %v4709, 1e-05
    %v4726 = vadd.f32 %v4710, 1e-05
    %v4727 = vadd.f32 %v4711, 1e-05
    %v4728 = vadd.f32 %v4712, 1e-05
    %v4729 = vadd.f32 %v4713, 1e-05
    %v4730 = vadd.f32 %v4714, 1e-05
    %v4731 = vadd.f32 %v4715, 1e-05
    %v4732 = vadd.f32 %v4716, 1e-05
    %v4733 = vadd.f32 %v4717, 1e-05
    %v4734 = vadd.f32 %v4718, 1e-05
    %v4735 = vrsqrt.pop %v4719
    %v4736 = vmul.f32 %v4735, %v4719
    %v4737 = vmul.f32 %v4736, %v4735
    %v4738 = vmul.f32 0.5, %v4737
    %v4739 = vsub.f32 1.5, %v4738
    %v4740 = vmul.f32 %v4735, %v4739
    %vm4741 = vweird.f32 %v4719
    %vm4742 = vweird.f32 %v4735
    %vm4743 = vmor %vm4741, %vm4742
    %v4744 = vsel %vm4743, %v4735, %v4740
    %v4745 = vrsqrt.pop %v4720
    %v4746 = vmul.f32 %v4745, %v4720
    %v4747 = vmul.f32 %v4746, %v4745
    %v4748 = vmul.f32 0.5, %v4747
    %v4749 = vsub.f32 1.5, %v4748
    %v4750 = vmul.f32 %v4745, %v4749
    %vm4751 = vweird.f32 %v4720
    %vm4752 = vweird.f32 %v4745
    %vm4753 = vmor %vm4751, %vm4752
    %v4754 = vsel %vm4753, %v4745, %v4750
    %v4755 = vrsqrt.pop %v4721
    %v4756 = vmul.f32 %v4755, %v4721
    %v4757 = vmul.f32 %v4756, %v4755
    %v4758 = vmul.f32 0.5, %v4757
    %v4759 = vsub.f32 1.5, %v4758
    %v4760 = vmul.f32 %v4755, %v4759
    %vm4761 = vweird.f32 %v4721
    %vm4762 = vweird.f32 %v4755
    %vm4763 = vmor %vm4761, %vm4762
    %v4764 = vsel %vm4763, %v4755, %v4760
    %v4765 = vrsqrt.pop %v4722
    %v4766 = vmul.f32 %v4765, %v4722
    %v4767 = vmul.f32 %v4766, %v4765
    %v4768 = vmul.f32 0.5, %v4767
    %v4769 = vsub.f32 1.5, %v4768
    %v4770 = vmul.f32 %v4765, %v4769
    %vm4771 = vweird.f32 %v4722
    %vm4772 = vweird.f32 %v4765
    %vm4773 = vmor %vm4771, %vm4772
    %v4774 = vsel %vm4773, %v4765, %v4770
    %v4775 = vrsqrt.pop %v4723
    %v4776 = vmul.f32 %v4775, %v4723
    %v4777 = vmul.f32 %v4776, %v4775
    %v4778 = vmul.f32 0.5, %v4777
    %v4779 = vsub.f32 1.5, %v4778
    %v4780 = vmul.f32 %v4775, %v4779
    %vm4781 = vweird.f32 %v4723
    %vm4782 = vweird.f32 %v4775
    %vm4783 = vmor %vm4781, %vm4782
    %v4784 = vsel %vm4783, %v4775, %v4780
    %v4785 = vrsqrt.pop %v4724
    %v4786 = vmul.f32 %v4785, %v4724
    %v4787 = vmul.f32 %v4786, %v4785
    %v4788 = vmul.f32 0.5, %v4787
    %v4789 = vsub.f32 1.5, %v4788
    %v4790 = vmul.f32 %v4785, %v4789
    %vm4791 = vweird.f32 %v4724
    %vm4792 = vweird.f32 %v4785
    %vm4793 = vmor %vm4791, %vm4792
    %v4794 = vsel %vm4793, %v4785, %v4790
    %v4795 = vrsqrt.pop %v4725
    %v4796 = vmul.f32 %v4795, %v4725
    %v4797 = vmul.f32 %v4796, %v4795
    %v4798 = vmul.f32 0.5, %v4797
    %v4799 = vsub.f32 1.5, %v4798
    %v4800 = vmul.f32 %v4795, %v4799
    %vm4801 = vweird.f32 %v4725
    %vm4802 = vweird.f32 %v4795
    %vm4803 = vmor %vm4801, %vm4802
    %v4804 = vsel %vm4803, %v4795, %v4800
    %v4805 = vrsqrt.pop %v4726
    %v4806 = vmul.f32 %v4805, %v4726
    %v4807 = vmul.f32 %v4806, %v4805
    %v4808 = vmul.f32 0.5, %v4807
    %v4809 = vsub.f32 1.5, %v4808
    %v4810 = vmul.f32 %v4805, %v4809
    %vm4811 = vweird.f32 %v4726
    %vm4812 = vweird.f32 %v4805
    %vm4813 = vmor %vm4811, %vm4812
    %v4814 = vsel %vm4813, %v4805, %v4810
    %v4815 = vrsqrt.pop %v4727
    %v4816 = vmul.f32 %v4815, %v4727
    %v4817 = vmul.f32 %v4816, %v4815
    %v4818 = vmul.f32 0.5, %v4817
    %v4819 = vsub.f32 1.5, %v4818
    %v4820 = vmul.f32 %v4815, %v4819
    %vm4821 = vweird.f32 %v4727
    %vm4822 = vweird.f32 %v4815
    %vm4823 = vmor %vm4821, %vm4822
    %v4824 = vsel %vm4823, %v4815, %v4820
    %v4825 = vrsqrt.pop %v4728
    %v4826 = vmul.f32 %v4825, %v4728
    %v4827 = vmul.f32 %v4826, %v4825
    %v4828 = vmul.f32 0.5, %v4827
    %v4829 = vsub.f32 1.5, %v4828
    %v4830 = vmul.f32 %v4825, %v4829
    %vm4831 = vweird.f32 %v4728
    %vm4832 = vweird.f32 %v4825
    %vm4833 = vmor %vm4831, %vm4832
    %v4834 = vsel %vm4833, %v4825, %v4830
    %v4835 = vrsqrt.pop %v4729
    %v4836 = vmul.f32 %v4835, %v4729
    %v4837 = vmul.f32 %v4836, %v4835
    %v4838 = vmul.f32 0.5, %v4837
    %v4839 = vsub.f32 1.5, %v4838
    %v4840 = vmul.f32 %v4835, %v4839
    %vm4841 = vweird.f32 %v4729
    %vm4842 = vweird.f32 %v4835
    %vm4843 = vmor %vm4841, %vm4842
    %v4844 = vsel %vm4843, %v4835, %v4840
    %v4845 = vrsqrt.pop %v4730
    %v4846 = vmul.f32 %v4845, %v4730
    %v4847 = vmul.f32 %v4846, %v4845
    %v4848 = vmul.f32 0.5, %v4847
    %v4849 = vsub.f32 1.5, %v4848
    %v4850 = vmul.f32 %v4845, %v4849
    %vm4851 = vweird.f32 %v4730
    %vm4852 = vweird.f32 %v4845
    %vm4853 = vmor %vm4851, %vm4852
    %v4854 = vsel %vm4853, %v4845, %v4850
    %v4855 = vrsqrt.pop %v4731
    %v4856 = vmul.f32 %v4855, %v4731
    %v4857 = vmul.f32 %v4856, %v4855
    %v4858 = vmul.f32 0.5, %v4857
    %v4859 = vsub.f32 1.5, %v4858
    %v4860 = vmul.f32 %v4855, %v4859
    %vm4861 = vweird.f32 %v4731
    %vm4862 = vweird.f32 %v4855
    %vm4863 = vmor %vm4861, %vm4862
    %v4864 = vsel %vm4863, %v4855, %v4860
    %v4865 = vrsqrt.pop %v4732
    %v4866 = vmul.f32 %v4865, %v4732
    %v4867 = vmul.f32 %v4866, %v4865
    %v4868 = vmul.f32 0.5, %v4867
    %v4869 = vsub.f32 1.5, %v4868
    %v4870 = vmul.f32 %v4865, %v4869
    %vm4871 = vweird.f32 %v4732
    %vm4872 = vweird.f32 %v4865
    %vm4873 = vmor %vm4871, %vm4872
    %v4874 = vsel %vm4873, %v4865, %v4870
    %v4875 = vrsqrt.pop %v4733
    %v4876 = vmul.f32 %v4875, %v4733
    %v4877 = vmul.f32 %v4876, %v4875
    %v4878 = vmul.f32 0.5, %v4877
    %v4879 = vsub.f32 1.5, %v4878
    %v4880 = vmul.f32 %v4875, %v4879
    %vm4881 = vweird.f32 %v4733
    %vm4882 = vweird.f32 %v4875
    %vm4883 = vmor %vm4881, %vm4882
    %v4884 = vsel %vm4883, %v4875, %v4880
    %v4885 = vrsqrt.pop %v4734
    %v4886 = vmul.f32 %v4885, %v4734
    %v4887 = vmul.f32 %v4886, %v4885
    %v4888 = vmul.f32 0.5, %v4887
    %v4889 = vsub.f32 1.5, %v4888
    %v4890 = vmul.f32 %v4885, %v4889
    %vm4891 = vweird.f32 %v4734
    %vm4892 = vweird.f32 %v4885
    %vm4893 = vmor %vm4891, %vm4892
    %v4894 = vsel %vm4893, %v4885, %v4890
    %v4895 = vmul.f32 %v4639, %v4744
    %v4896 = vmul.f32 %v4640, %v4754
    %v4897 = vmul.f32 %v4641, %v4764
    %v4898 = vmul.f32 %v4642, %v4774
    %v4899 = vmul.f32 %v4643, %v4784
    %v4900 = vmul.f32 %v4644, %v4794
    %v4901 = vmul.f32 %v4645, %v4804
    %v4902 = vmul.f32 %v4646, %v4814
    %v4903 = vmul.f32 %v4647, %v4824
    %v4904 = vmul.f32 %v4648, %v4834
    %v4905 = vmul.f32 %v4649, %v4844
    %v4906 = vmul.f32 %v4650, %v4854
    %v4907 = vmul.f32 %v4651, %v4864
    %v4908 = vmul.f32 %v4652, %v4874
    %v4909 = vmul.f32 %v4653, %v4884
    %v4910 = vmul.f32 %v4654, %v4894
    %v4911 = vmul.f32 %v4895, %v189
    %v4912 = vmul.f32 %v4896, %v189
    %v4913 = vmul.f32 %v4897, %v189
    %v4914 = vmul.f32 %v4898, %v189
    %v4915 = vmul.f32 %v4899, %v189
    %v4916 = vmul.f32 %v4900, %v189
    %v4917 = vmul.f32 %v4901, %v189
    %v4918 = vmul.f32 %v4902, %v189
    %v4919 = vmul.f32 %v4903, %v189
    %v4920 = vmul.f32 %v4904, %v189
    %v4921 = vmul.f32 %v4905, %v189
    %v4922 = vmul.f32 %v4906, %v189
    %v4923 = vmul.f32 %v4907, %v189
    %v4924 = vmul.f32 %v4908, %v189
    %v4925 = vmul.f32 %v4909, %v189
    %v4926 = vmul.f32 %v4910, %v189
    %v4927 = vadd.f32 %v4911, %v190
    %v4928 = vadd.f32 %v4912, %v190
    %v4929 = vadd.f32 %v4913, %v190
    %v4930 = vadd.f32 %v4914, %v190
    %v4931 = vadd.f32 %v4915, %v190
    %v4932 = vadd.f32 %v4916, %v190
    %v4933 = vadd.f32 %v4917, %v190
    %v4934 = vadd.f32 %v4918, %v190
    %v4935 = vadd.f32 %v4919, %v190
    %v4936 = vadd.f32 %v4920, %v190
    %v4937 = vadd.f32 %v4921, %v190
    %v4938 = vadd.f32 %v4922, %v190
    %v4939 = vadd.f32 %v4923, %v190
    %v4940 = vadd.f32 %v4924, %v190
    %v4941 = vadd.f32 %v4925, %v190
    %v4942 = vadd.f32 %v4926, %v190
    %4943 = vst [vmem:[#allocation17] sm:$0xff] %v4927
    %4944 = vst [vmem:[#allocation17 + $0x8] sm:$0xff] %v4928
    %4945 = vst [vmem:[#allocation17 + $0x10] sm:$0xff] %v4929
    %4946 = vst [vmem:[#allocation17 + $0x18] sm:$0xff] %v4930
    %4947 = vst [vmem:[#allocation17 + $0x20] sm:$0xff] %v4931
    %4948 = vst [vmem:[#allocation17 + $0x28] sm:$0xff] %v4932
    %4949 = vst [vmem:[#allocation17 + $0x30] sm:$0xff] %v4933
    %4950 = vst [vmem:[#allocation17 + $0x38] sm:$0xff] %v4934
    %4951 = vst [vmem:[#allocation17 + $0x40] sm:$0xff] %v4935
    %4952 = vst [vmem:[#allocation17 + $0x48] sm:$0xff] %v4936
    %4953 = vst [vmem:[#allocation17 + $0x50] sm:$0xff] %v4937
    %4954 = vst [vmem:[#allocation17 + $0x58] sm:$0xff] %v4938
    %4955 = vst [vmem:[#allocation17 + $0x60] sm:$0xff] %v4939
    %4956 = vst [vmem:[#allocation17 + $0x68] sm:$0xff] %v4940
    %4957 = vst [vmem:[#allocation17 + $0x70] sm:$0xff] %v4941
    %4958 = vst [vmem:[#allocation17 + $0x78] sm:$0xff] %v4942
    // Predicated region
    $region66: #{tpu_custom_call.1} parent=1 // pred_check
      _
    $region67: #{tpu_custom_call.1} parent=1 // pred_check_branch
      %4960 = sbr.rel (0) target = $region69
    $region68: #{tpu_custom_call.1} parent=1 // pred_region
      %4962 = vsyncadd [#allocation5], 0
      %s4963 = sshll.u32 [#allocation17], 4
      %s4964 = int_to_ptr.vmem [resolvable:$true] %s4963
      %s4965 = sshll.u32 %s8, 4
      %s4966 = int_to_ptr.hbm [resolvable:$true] %s4965
      %4971 = dma.vmem_to_hbm [thread:$0]  %s4964, 2048, %s4966, [#allocation5], 128, 128, 8
    $region69: #{tpu_custom_call.1} parent=1 // pred_fallthru
      _
    // Predicated region
    $region70: #{tpu_custom_call.1} parent=1 // pred_check
      _
    $region71: #{tpu_custom_call.1} parent=1 // pred_check_branch
      %4973 = sbr.rel (0) target = $region73
    $region72: #{tpu_custom_call.1} parent=1 // pred_region
      %4975 = dma.done [#allocation5], 2048
    $region73: #{tpu_custom_call.1} parent=1 // pred_fallthru
      _
    %4976 = vsyncpa [#allocation4], 1
    %4977 = vsyncpa [#allocation7], 1
    %4978 = vsyncpa [#allocation10], 1
    %4979 = vsyncpa [#allocation13], 1
    %4980 = vsyncpa [#allocation16], 1
    %4981 = vsyncpa [#allocation5], 1

</llo_original>
